<compile_context>
chip_gen: v6e
topology: v6e:2x2x1
jax: 0.10.0
libtpu: 0.0.40
codegen_flags: <defaults>
</compile_context>

<pallas_src>
import jax
import jax.numpy as jnp
from jax.experimental import pallas as pl
from jax.experimental.pallas import tpu as pltpu


# ----------------------------------------------------------------------------
# Fused head kernel:
#   acc1 += x[:, k*tk : (k+1)*tk] @ w1[k, n]                 (f32 accumulation)
#   at last k:  z = relu((acc1 + b1) * drop_scale)           (epilogue, f32)
#               out[n] = z.bf16 @ w2[n]                      (per-n fc2 partial)
# grid = (N // tn, K // tk); K (reduction) is the last grid axis, n is parallel.
# ----------------------------------------------------------------------------
def _make_fused_head_kernel(tk, with_dropout):
    def kernel(x_ref, w1_ref, b1_ref, w2_ref, *rest):
        if with_dropout:
            s_ref, o_ref, acc_ref = rest
        else:
            o_ref, acc_ref = rest

        k = pl.program_id(1)

        @pl.when(k == 0)
        def _():
            acc_ref[...] = jnp.zeros_like(acc_ref)

        kk = pl.multiple_of(k * tk, tk)
        x_blk = x_ref[:, pl.ds(kk, tk)]                       # (B, tk), resident x
        acc_ref[...] += jnp.dot(
            x_blk, w1_ref[...], preferred_element_type=jnp.float32
        )

        @pl.when(k == pl.num_programs(1) - 1)
        def _():
            z = acc_ref[...] + b1_ref[...]                    # bias in f32
            if with_dropout:
                z = z * s_ref[...]                            # 0.0 or 1/keep_prob
            z = jnp.maximum(z, 0.0)                           # ReLU
            # fc2 partial for this n block (lane-dense 128-wide output).
            o_ref[0] = jnp.dot(
                z.astype(w2_ref.dtype), w2_ref[...],
                preferred_element_type=jnp.float32,
            )

    return kernel


def fused_head_forward(x, w1, b1, w2, drop_scale=None, *, tn=2048, tk=1024):
    """x: (B, K) bf16; w1: (K, N) bf16; b1: (1, N) f32; w2: (N, Np) bf16;
    drop_scale: (B, N) f32 or None. Returns per-n-block fc2 partials
    (N//tn, B, Np) in f32 (sum over axis 0 and add b2 outside)."""
    B, K = x.shape
    Kw, N = w1.shape
    Nw, Np = w2.shape
    assert K == Kw and N == Nw
    assert N % tn == 0 and K % tk == 0 and Np % 128 == 0
    n_blocks = N // tn

    with_dropout = drop_scale is not None
    kernel = _make_fused_head_kernel(tk, with_dropout)

    in_specs = [
        pl.BlockSpec((B, K), lambda n, k: (0, 0)),            # x: resident, 1 DMA
        pl.BlockSpec((tk, tn), lambda n, k: (k, n)),          # w1 tile (4 MiB bf16)
        pl.BlockSpec((1, tn), lambda n, k: (0, n)),           # b1 (f32)
        pl.BlockSpec((tn, Np), lambda n, k: (n, 0)),          # w2 tile (512 KiB bf16)
    ]
    args = [x, w1, b1, w2]
    if with_dropout:
        in_specs.append(pl.BlockSpec((B, tn), lambda n, k: (0, n)))
        args.append(drop_scale)

    return pl.pallas_call(
        kernel,
        out_shape=jax.ShapeDtypeStruct((n_blocks, B, Np), jnp.float32),
        grid_spec=pltpu.PrefetchScalarGridSpec(
            num_scalar_prefetch=0,
            grid=(n_blocks, K // tk),
            in_specs=in_specs,
            out_specs=pl.BlockSpec((1, B, Np), lambda n, k: (n, 0, 0)),
            scratch_shapes=[pltpu.VMEM((B, tn), jnp.float32)],
        ),
        compiler_params=pltpu.CompilerParams(
            dimension_semantics=("parallel", "arbitrary")
        ),
    )(*args)


# ----------------------------------------------------------------------------
# Module mirror (fusion head only).
# ----------------------------------------------------------------------------
class BqvsModelFusionHead:
    """JAX/Pallas mirror of bqvsModelfusion's forward() head.

    Consumes the two backbones' pooled feature maps (B, feat_dim, 1, 1).
    """

    def __init__(self, num_classes=10, feat_dim=2048, key=None,
                 param_dtype=jnp.bfloat16):
        if key is None:
            key = jax.random.PRNGKey(0)
        k1, k2, k3 = jax.random.split(key, 3)

        in_dim = 2 * feat_dim          # 4096 after channel-concat
        hidden = 4096
        self.num_classes = num_classes
        self.hidden = hidden
        self.drop_prob = 0.1
        self.training = True

        # fc1: kaiming_normal_(fan_in) -> std = sqrt(2 / fan_in); stored (in, out).
        std1 = (2.0 / in_dim) ** 0.5
        self.w1 = (jax.random.normal(k1, (in_dim, hidden), jnp.float32) * std1
                   ).astype(param_dtype)
        self.b1 = jnp.zeros((1, hidden), jnp.float32)

        # fc2: torch Linear default init, padded to 128 output lanes at init time.
        self.n_pad = 128
        bound = 1.0 / (hidden ** 0.5)
        w2 = jax.random.uniform(k2, (hidden, num_classes), jnp.float32, -bound, bound)
        b2 = jax.random.uniform(k3, (num_classes,), jnp.float32, -bound, bound)
        self.w2 = (
            jnp.zeros((hidden, self.n_pad), param_dtype)
            .at[:, :num_classes].set(w2.astype(param_dtype))
        )
        self.b2 = jnp.zeros((1, self.n_pad), jnp.float32).at[0, :num_classes].set(b2)

    def __call__(self, feat1, feat2, *, key=None):
        B = feat1.shape[0]
        x1 = feat1.reshape(B, -1)
        x2 = feat2.reshape(B, -1)
        fused = jnp.concatenate([x1, x2], axis=1)             # cat(dim=1) + squeeze
        fused = fused.astype(self.w1.dtype)                   # bf16 activations

        if self.training and self.drop_prob > 0.0:
            if key is None:
                raise ValueError("training-mode dropout requires an explicit PRNG key")
            keep = 1.0 - self.drop_prob
            mask = jax.random.bernoulli(key, keep, (B, self.hidden))
            drop_scale = mask.astype(jnp.float32) / keep
        else:
            drop_scale = None                                 # no-dropout kernel variant

        partials = fused_head_forward(fused, self.w1, self.b1, self.w2, drop_scale)
        out_padded = partials.sum(axis=0) + self.b2           # tiny (B, 128) XLA add
        return out_padded[:, : self.num_classes]


if __name__ == "__main__":
    root = jax.random.PRNGKey(0)
    k_params, k_f1, k_f2, k_drop = jax.random.split(root, 4)

    B, C = 2, 2048
    feat1 = jax.random.normal(k_f1, (B, C, 1, 1), dtype=jnp.float32)
    feat2 = jax.random.normal(k_f2, (B, C, 1, 1), dtype=jnp.float32)

    model = BqvsModelFusionHead(num_classes=10, feat_dim=C, key=k_params)

    # Reference computed with the same bf16-quantized weights/activations,
    # f32 accumulation (matching the kernel's numerics).
    fused_bf = jnp.concatenate([feat1.reshape(B, -1), feat2.reshape(B, -1)],
                               axis=1).astype(jnp.bfloat16)
    xf = fused_bf.astype(jnp.float32)
    w1f = model.w1.astype(jnp.float32)
    w2f = model.w2.astype(jnp.float32)

    # --- eval mode (dropout = identity; no-dropout kernel variant) ---
    model.training = False
    y_eval = jax.block_until_ready(model(feat1, feat2))
    h = jnp.maximum(xf @ w1f + model.b1, 0.0)
    h = h.astype(jnp.bfloat16).astype(jnp.float32)            # kernel feeds bf16 into fc2
    ref_eval = (h @ w2f + model.b2)[:, :10]
    assert y_eval.shape == (B, 10)
    assert jnp.allclose(y_eval, ref_eval, atol=2e-3, rtol=2e-3)

    # --- training mode (dropout active, fixed key) ---
    model.training = True
    y_train = jax.block_until_ready(model(feat1, feat2, key=k_drop))
    keep = 1.0 - model.drop_prob
    mask = jax.random.bernoulli(k_drop, keep, (B, model.hidden)).astype(jnp.float32) / keep
    h_t = jnp.maximum((xf @ w1f + model.b1) * mask, 0.0)
    h_t = h_t.astype(jnp.bfloat16).astype(jnp.float32)
    ref_train = (h_t @ w2f + model.b2)[:, :10]
    assert jnp.allclose(y_train, ref_train, atol=2e-3, rtol=2e-3)

    print("KERNEL_OK")
</pallas_src>

<mosaic_0001>
module attributes {stable_mosaic.version = 11 : i64} {
  func.func @kernel(%arg0: i32, %arg1: i32, %arg2: memref<2x4096xbf16, #tpu.memory_space<vmem>>, %arg3: memref<1024x2048xbf16, #tpu.memory_space<vmem>>, %arg4: memref<1x2048xf32, #tpu.memory_space<vmem>>, %arg5: memref<2048x128xbf16, #tpu.memory_space<vmem>>, %arg6: memref<1x2x128xf32, #tpu.memory_space<vmem>>, %arg7: memref<2x2048xf32, #tpu.memory_space<vmem>>) attributes {dimension_semantics = [#tpu.dimension_semantics<parallel>, #tpu.dimension_semantics<arbitrary>], iteration_bounds = array<i64: 2, 4>, scalar_prefetch = 0 : i64, scratch_operands = 1 : i64, tpu.core_type = #tpu.core_type<tc>, window_params = [{pipeline_mode = #tpu.pipeline_mode<synchronous>, transform_indices = @transform_0, window_bounds = array<i64: 2, 4096>}, {transform_indices = @transform_1, window_bounds = array<i64: 1024, 2048>}, {transform_indices = @transform_2, window_bounds = array<i64: 1, 2048>}, {transform_indices = @transform_3, window_bounds = array<i64: 2048, 128>}, {transform_indices = @transform_4, window_bounds = array<i64: 1, 2, 128>}]} {
    %c0_i32 = arith.constant 0 : i32
    %0 = arith.cmpi eq, %arg1, %c0_i32 : i32
    %1 = arith.extui %0 : i1 to i32
    %c0_i32_0 = arith.constant 0 : i32
    %2 = arith.cmpi ne, %1, %c0_i32_0 : i32
    scf.if %2 {
      %cst_8 = arith.constant 0.000000e+00 : f32
      %15 = vector.broadcast %cst_8 : f32 to vector<2x2048xf32>
      %c0_9 = arith.constant 0 : index
      %c0_10 = arith.constant 0 : index
      %16 = vector.load %arg7[%c0_9, %c0_10] : memref<2x2048xf32, #tpu.memory_space<vmem>>, vector<2x2048xf32>
      tpu.vector_store %arg7[%c0_9, %c0_10], %15 {strides = array<i32>} : memref<2x2048xf32, #tpu.memory_space<vmem>>, vector<2x2048xf32>,
    } else {
    }
    %c1024_i32 = arith.constant 1024 : i32
    %3 = arith.muli %arg1, %c1024_i32 : i32
    %4 = tpu.assume_multiple %3, 1024 : i32
    %c0 = arith.constant 0 : index
    %5 = arith.index_cast %4 : i32 to index
    %6 = vector.load %arg2[%c0, %5] : memref<2x4096xbf16, #tpu.memory_space<vmem>>, vector<2x1024xbf16>
    %c0_1 = arith.constant 0 : index
    %c0_2 = arith.constant 0 : index
    %7 = vector.load %arg7[%c0_1, %c0_2] : memref<2x2048xf32, #tpu.memory_space<vmem>>, vector<2x2048xf32>
    %c0_3 = arith.constant 0 : index
    %c0_4 = arith.constant 0 : index
    %8 = vector.load %arg3[%c0_3, %c0_4] : memref<1024x2048xbf16, #tpu.memory_space<vmem>>, vector<1024x2048xbf16>
    %cst = arith.constant dense<0.000000e+00> : vector<2x2048xf32>
    %9 = tpu.matmul %6, %8, %cst {dimension_numbers = #tpu.dot_dimension_numbers<[1], [0], [0], [1], [0, 0, 1, 1], [], []>} : vector<2x1024xbf16>, vector<1024x2048xbf16>, vector<2x2048xf32> -> vector<2x2048xf32>
    %10 = arith.addf %7, %9 : vector<2x2048xf32>
    %c0_5 = arith.constant 0 : index
    %c0_6 = arith.constant 0 : index
    %11 = vector.load %arg7[%c0_5, %c0_6] : memref<2x2048xf32, #tpu.memory_space<vmem>>, vector<2x2048xf32>
    tpu.vector_store %arg7[%c0_5, %c0_6], %10 {strides = array<i32>} : memref<2x2048xf32, #tpu.memory_space<vmem>>, vector<2x2048xf32>,
    %c3_i32 = arith.constant 3 : i32
    %12 = arith.cmpi eq, %arg1, %c3_i32 : i32
    %13 = arith.extui %12 : i1 to i32
    %c0_i32_7 = arith.constant 0 : i32
    %14 = arith.cmpi ne, %13, %c0_i32_7 : i32
    scf.if %14 {
      %c0_8 = arith.constant 0 : index
      %c0_9 = arith.constant 0 : index
      %15 = vector.load %arg7[%c0_8, %c0_9] : memref<2x2048xf32, #tpu.memory_space<vmem>>, vector<2x2048xf32>
      %c0_10 = arith.constant 0 : index
      %c0_11 = arith.constant 0 : index
      %16 = vector.load %arg4[%c0_10, %c0_11] : memref<1x2048xf32, #tpu.memory_space<vmem>>, vector<1x2048xf32>
      %17 = vector.broadcast %16 : vector<1x2048xf32> to vector<2x2048xf32>
      %18 = arith.addf %15, %17 : vector<2x2048xf32>
      %cst_12 = arith.constant 0.000000e+00 : f32
      %19 = vector.broadcast %cst_12 : f32 to vector<2x2048xf32>
      %20 = arith.maximumf %18, %19 : vector<2x2048xf32>
      %21 = arith.truncf %20 : vector<2x2048xf32> to vector<2x2048xbf16>
      %c0_13 = arith.constant 0 : index
      %c0_14 = arith.constant 0 : index
      %22 = vector.load %arg5[%c0_13, %c0_14] : memref<2048x128xbf16, #tpu.memory_space<vmem>>, vector<2048x128xbf16>
      %cst_15 = arith.constant dense<0.000000e+00> : vector<2x128xf32>
      %23 = tpu.matmul %21, %22, %cst_15 {dimension_numbers = #tpu.dot_dimension_numbers<[1], [0], [0], [1], [0, 0, 1, 1], [], []>} : vector<2x2048xbf16>, vector<2048x128xbf16>, vector<2x128xf32> -> vector<2x128xf32>
      %c0_16 = arith.constant 0 : index
      %c0_17 = arith.constant 0 : index
      %c0_18 = arith.constant 0 : index
      %24 = vector.load %arg6[%c0_16, %c0_17, %c0_18] : memref<1x2x128xf32, #tpu.memory_space<vmem>>, vector<1x2x128xf32>
      %25 = vector.shape_cast %24 : vector<1x2x128xf32> to vector<2x128xf32>
      %26 = vector.shape_cast %23 : vector<2x128xf32> to vector<1x2x128xf32>
      tpu.vector_store %arg6[%c0_16, %c0_17, %c0_18], %26 {strides = array<i32>} : memref<1x2x128xf32, #tpu.memory_space<vmem>>, vector<1x2x128xf32>,
    } else {
    }
    return
  }
  func.func @transform_0(%arg0: i32, %arg1: i32) -> (i32, i32) {
    %c0_i32 = arith.constant 0 : i32
    %c0_i32_0 = arith.constant 0 : i32
    %c0_i32_1 = arith.constant 0 : i32
    return %c0_i32, %c0_i32_0 : i32, i32
  }
  func.func @transform_1(%arg0: i32, %arg1: i32) -> (i32, i32) {
    %c0_i32 = arith.constant 0 : i32
    return %arg1, %arg0 : i32, i32
  }
  func.func @transform_2(%arg0: i32, %arg1: i32) -> (i32, i32) {
    %c0_i32 = arith.constant 0 : i32
    %c0_i32_0 = arith.constant 0 : i32
    return %c0_i32, %arg0 : i32, i32
  }
  func.func @transform_3(%arg0: i32, %arg1: i32) -> (i32, i32) {
    %c0_i32 = arith.constant 0 : i32
    %c0_i32_0 = arith.constant 0 : i32
    return %arg0, %c0_i32 : i32, i32
  }
  func.func @transform_4(%arg0: i32, %arg1: i32) -> (i32, i32, i32) {
    %c0_i32 = arith.constant 0 : i32
    %c0_i32_0 = arith.constant 0 : i32
    %c0_i32_1 = arith.constant 0 : i32
    return %arg0, %c0_i32, %c0_i32_0 : i32, i32, i32
  }
}

</mosaic_0001>

<llo_original>
// kernel: tpu_custom_call.1
$region0: #{tpu_custom_call.1}
  #allocation0 [shape = 'u32[]', space=smem, size = 0x4, offset = 0x4, fixed_abs, tag = 'smem constant byte address 0x4 - core index']
  #allocation1 [shape = 'u32[144,128]{1,0:T(1,128)}', space=vmem, size = 0x12000, scoped, tag = 'internal scratch']
  #allocation2 [shape = 'f32[2,2048]{1,0:T(2,128)}', space=vmem, size = 0x4000, scoped, tag = 'scratch operand']
  %s0 = inlined_call_operand.hbm [shape: bf16[2,4096], index: 0, kind: input, shape index: {}]
  %s1 = inlined_call_operand.hbm [shape: bf16[4096,4096], index: 1, kind: input, shape index: {}]
  %s2 = inlined_call_operand.hbm [shape: f32[1,4096], index: 2, kind: input, shape index: {}]
  %s3 = inlined_call_operand.hbm [shape: bf16[4096,128], index: 3, kind: input, shape index: {}]
  %s4 = inlined_call_operand.hbm [shape: f32[2,2,128], index: 4, kind: output, shape index: {}]
  %s5 = sld [smem:[#allocation0]]
  $region73: #{tpu_custom_call.1} parent=0
    _
  %s7 = ssub.s32 1, %s5
  %s8 = scalar_select 0, %s7, %s5
  $region1: #{tpu_custom_call.1} parent=0
    #allocation3 [shape = 'u8[16384]{0}', space=vmem, size = 0x4000, scoped, tag = 'input window, operand 0, single buffered']
    #allocation4 [shape = 's32[2]{0}', space=sflag, size = 0x8, scoped, tag = 'scoped memory for tpu_custom_call.1']
    #allocation5 [shape = 's32[2]{0}', space=sflag, size = 0x8, scoped, tag = 'scoped memory for tpu_custom_call.1']
    #allocation6 [shape = 'u8[8388608]{0}', space=vmem, size = 0x800000, scoped, tag = 'input window, operand 1']
    #allocation7 [shape = 's32[2]{0}', space=sflag, size = 0x8, scoped, tag = 'scoped memory for tpu_custom_call.1']
    #allocation8 [shape = 'u8[16384]{0}', space=vmem, size = 0x4000, scoped, tag = 'input window, operand 2']
    #allocation9 [shape = 'u8[1048576]{0}', space=vmem, size = 0x100000, scoped, tag = 'input window, operand 3']
    #allocation10 [shape = 's32[2]{0}', space=sflag, size = 0x8, scoped, tag = 'scoped memory for tpu_custom_call.1']
    #allocation11 [shape = 'u8[2048]{0}', space=vmem, size = 0x800, scoped, tag = 'output window, operand 0']
    %9 = vsyncpa [#allocation4], 0
    %10 = vsyncpa [#allocation7], 0
    %s11 = scalar_lea.sflag [#allocation7], 1
    %12 = vsyncpa %s11, 0
    %13 = vsyncpa [#allocation10], 0
    %s14 = scalar_lea.sflag [#allocation10], 1
    %15 = vsyncpa %s14, 0
    %16 = vsyncpa [#allocation5], 0
    %s17 = scalar_lea.sflag [#allocation5], 1
    %18 = vsyncpa %s17, 0
    loop: start=0, step=1, limit=10
    $region2: #{tpu_custom_call.1} parent=1 // loop_pre_header
      _
    $region3: #{tpu_custom_call.1} parent=1 // loop_header
      %s20 = sphi 0, %s24
      %p21 = scmp.ge.s32.totalorder %s20, 10
      %s27 = sphi 0, %s39
      %s28 = sphi 0, %s35
      %s29 = sphi 0, %s27
      %s30 = sphi 0, %s28
      %s31 = sphi 0, %s29
      %s32 = sphi 0, %s30
      %s40 = sphi 0, %s40
      %s42 = sphi 0, %s40
      %s43 = sphi 0, %s42
      %s57 = sphi 0, %s43
      %s65 = sphi 0, %s67
      %s68 = sphi 0, %s65
      %s69 = sphi 0, %s68
      %s85 = sphi 0, %s69
      %s91 = sphi 0, %s93
      %s94 = sphi 0, %s91
      %s95 = sphi 0, %s94
      %s111 = sphi 0, %s95
      %s117 = sphi 0, %s119
      %s120 = sphi 0, %s117
      %s121 = sphi 0, %s120
      %s137 = sphi 0, %s121
      %s143 = sphi 0, %s145
      %s146 = sphi 0, %s143
      %s147 = sphi 0, %s146
      %s163 = sphi 0, %s147
    $region4: #{tpu_custom_call.1} parent=1 // loop_header_branch
      %23 = sbr.rel (%p21) target = $region8
    $region5: #{tpu_custom_call.1} parent=1 // loop_body
      %s25 = ssub.s32 %s20, 1
      %s26 = ssub.s32 %s20, 2
      %s33 = sadd.s32 1, %s28
      %p34 = scmp.ge.s32.totalorder %s33, 4
      %s35 = scalar_select %p34, 0, %s33
      %s36 = sadd.s32 1, %s27
      %s37 = scalar_select %p34, %s36, %s27
      %p38 = scmp.ge.s32.totalorder %s37, 2
      %s39 = scalar_select %p38, 0, %s37
      %s41 = sadd.s32 %s40, 1
      %p44 = scmp.eq.s32.totalorder %s20, 7
      %p45 = scmp.ne.s32.totalorder %s40, %s42
      %p46 = scmp.eq.s32.totalorder %s20, 0
      %p47 = por %p45, %p46
      %p48 = scmp.ne.s32.totalorder %s40, %s42
      %p49 = scmp.eq.s32.totalorder %s25, 7
      %p50 = por %p48, %p49
      %p51 = scmp.ne.s32.totalorder %s42, %s43
      %p52 = scmp.eq.s32.totalorder %s25, 0
      %p53 = por %p51, %p52
      %p54 = scmp.ne.s32.totalorder %s42, %s43
      %p55 = scmp.eq.s32.totalorder %s26, 7
      %p56 = por %p54, %p55
      %p58 = scmp.ne.s32.totalorder %s43, %s57
      %p59 = scmp.eq.s32.totalorder %s26, 0
      %p60 = por %p58, %p59
      %s61 = ssub.s32 %s28, %s35
      %s62 = ssub.s32 %s27, %s39
      %s63 = sor.u32 %s61, %s62
      %p64 = scmp.eq.s32.totalorder %s63, 0
      %s66 = sadd.s32 %s65, 1
      %s67 = scalar_select %p64, %s65, %s66
      %p70 = pneg %p64
      %p71 = scmp.eq.s32.totalorder %s20, 7
      %p72 = por %p70, %p71
      %p73 = scmp.ne.s32.totalorder %s65, %s68
      %p74 = scmp.eq.s32.totalorder %s20, 0
      %p75 = por %p73, %p74
      %p76 = scmp.ne.s32.totalorder %s65, %s68
      %p77 = scmp.eq.s32.totalorder %s25, 7
      %p78 = por %p76, %p77
      %p79 = scmp.ne.s32.totalorder %s68, %s69
      %p80 = scmp.eq.s32.totalorder %s25, 0
      %p81 = por %p79, %p80
      %p82 = scmp.ne.s32.totalorder %s68, %s69
      %p83 = scmp.eq.s32.totalorder %s26, 7
      %p84 = por %p82, %p83
      %p86 = scmp.ne.s32.totalorder %s69, %s85
      %p87 = scmp.eq.s32.totalorder %s26, 0
      %p88 = por %p86, %p87
      %s89 = ssub.s32 %s27, %s39
      %p90 = scmp.eq.s32.totalorder %s89, 0
      %s92 = sadd.s32 %s91, 1
      %s93 = scalar_select %p90, %s91, %s92
      %p96 = pneg %p90
      %p97 = scmp.eq.s32.totalorder %s20, 7
      %p98 = por %p96, %p97
      %p99 = scmp.ne.s32.totalorder %s91, %s94
      %p100 = scmp.eq.s32.totalorder %s20, 0
      %p101 = por %p99, %p100
      %p102 = scmp.ne.s32.totalorder %s91, %s94
      %p103 = scmp.eq.s32.totalorder %s25, 7
      %p104 = por %p102, %p103
      %p105 = scmp.ne.s32.totalorder %s94, %s95
      %p106 = scmp.eq.s32.totalorder %s25, 0
      %p107 = por %p105, %p106
      %p108 = scmp.ne.s32.totalorder %s94, %s95
      %p109 = scmp.eq.s32.totalorder %s26, 7
      %p110 = por %p108, %p109
      %p112 = scmp.ne.s32.totalorder %s95, %s111
      %p113 = scmp.eq.s32.totalorder %s26, 0
      %p114 = por %p112, %p113
      %s115 = ssub.s32 %s27, %s39
      %p116 = scmp.eq.s32.totalorder %s115, 0
      %s118 = sadd.s32 %s117, 1
      %s119 = scalar_select %p116, %s117, %s118
      %p122 = pneg %p116
      %p123 = scmp.eq.s32.totalorder %s20, 7
      %p124 = por %p122, %p123
      %p125 = scmp.ne.s32.totalorder %s117, %s120
      %p126 = scmp.eq.s32.totalorder %s20, 0
      %p127 = por %p125, %p126
      %p128 = scmp.ne.s32.totalorder %s117, %s120
      %p129 = scmp.eq.s32.totalorder %s25, 7
      %p130 = por %p128, %p129
      %p131 = scmp.ne.s32.totalorder %s120, %s121
      %p132 = scmp.eq.s32.totalorder %s25, 0
      %p133 = por %p131, %p132
      %p134 = scmp.ne.s32.totalorder %s120, %s121
      %p135 = scmp.eq.s32.totalorder %s26, 7
      %p136 = por %p134, %p135
      %p138 = scmp.ne.s32.totalorder %s121, %s137
      %p139 = scmp.eq.s32.totalorder %s26, 0
      %p140 = por %p138, %p139
      %s141 = ssub.s32 %s27, %s39
      %p142 = scmp.eq.s32.totalorder %s141, 0
      %s144 = sadd.s32 %s143, 1
      %s145 = scalar_select %p142, %s143, %s144
      %p148 = pneg %p142
      %p149 = scmp.eq.s32.totalorder %s20, 7
      %p150 = por %p148, %p149
      %p151 = scmp.ne.s32.totalorder %s143, %s146
      %p152 = scmp.eq.s32.totalorder %s20, 0
      %p153 = por %p151, %p152
      %p154 = scmp.ne.s32.totalorder %s143, %s146
      %p155 = scmp.eq.s32.totalorder %s25, 7
      %p156 = por %p154, %p155
      %p157 = scmp.ne.s32.totalorder %s146, %s147
      %p158 = scmp.eq.s32.totalorder %s25, 0
      %p159 = por %p157, %p158
      %p160 = scmp.ne.s32.totalorder %s146, %s147
      %p161 = scmp.eq.s32.totalorder %s26, 7
      %p162 = por %p160, %p161
      %p164 = scmp.ne.s32.totalorder %s147, %s163
      %p165 = scmp.eq.s32.totalorder %s26, 0
      %p166 = por %p164, %p165
      %p167 = scmp.le.s32.totalorder 1, %s20
      %p168 = scmp.lt.s32.totalorder %s20, 9
      %p169 = pnand %p167, %p168
      %p170 = pneg %p169
      // Predicated region
      $region9: #{tpu_custom_call.1} parent=5 // pred_check
        _
      $region10: #{tpu_custom_call.1} parent=5 // pred_check_branch
        %172 = sbr.rel (%p169) target = $region12
      $region11: #{tpu_custom_call.1} parent=5 // pred_region
        %s173 = ssub.s32 %s20, 1
        // Predicated region
        $region13: #{tpu_custom_call.1} parent=11 // pred_check
          %p174 = pneg %p53
        $region14: #{tpu_custom_call.1} parent=11 // pred_check_branch
          %176 = sbr.rel (%p174) target = $region16
        $region15: #{tpu_custom_call.1} parent=11 // pred_region
          %s178 = ssub.s32 512, 512
          %179 = vsyncadd [#allocation4], %s178
          %s181 = sshll.u32 [#allocation3], 4
          %s182 = int_to_ptr.vmem [resolvable:$true] %s181
          %184 = dma.hbm_to_vmem [thread:$0]  %s0, 512, %s182, [#allocation4]
        $region16: #{tpu_custom_call.1} parent=11 // pred_fallthru
          _
      $region12: #{tpu_custom_call.1} parent=5 // pred_fallthru
        _
      %p185 = scmp.lt.s32.totalorder %s20, 8
      // Predicated region
      $region17: #{tpu_custom_call.1} parent=5 // pred_check
        %p186 = pneg %p185
      $region18: #{tpu_custom_call.1} parent=5 // pred_check_branch
        %188 = sbr.rel (%p186) target = $region20
      $region19: #{tpu_custom_call.1} parent=5 // pred_region
        // Predicated region
        $region21: #{tpu_custom_call.1} parent=19 // pred_check
          %p189 = pneg %p75
        $region22: #{tpu_custom_call.1} parent=19 // pred_check_branch
          %191 = sbr.rel (%p189) target = $region24
        $region23: #{tpu_custom_call.1} parent=19 // pred_region
          %s192 = sand.u32 %s20, 1
          %s193 = scalar_lea.sflag [#allocation7], %s192
          %s194 = sand.u32 %s65, 1
          %s195 = smul.addr %s194, 8192
          %s196 = scalar_lea.vmem [#allocation6], %s195
          %s197 = smul.u32 128, %s28
          %s198 = smul.u32 16, %s27
          %s200 = ssub.s32 131072, 131072
          %201 = vsyncadd %s193, %s200
          %s202 = smul.addr %s197, 32
          %s203 = sadd.s32 %s198, %s202
          %s204 = smul.addr %s203, 64
          %s205 = scalar_lea.hbm %s1, %s204
          %s206 = sshll.u32 %s196, 4
          %s207 = int_to_ptr.vmem [resolvable:$true] %s206
          %212 = dma.hbm_to_vmem [thread:$0]  %s205, 131072, %s207, %s193, 2048, 1024, 64
        $region24: #{tpu_custom_call.1} parent=19 // pred_fallthru
          _
        // Predicated region
        $region25: #{tpu_custom_call.1} parent=19 // pred_check
          %p213 = pneg %p101
        $region26: #{tpu_custom_call.1} parent=19 // pred_check_branch
          %215 = sbr.rel (%p213) target = $region28
        $region27: #{tpu_custom_call.1} parent=19 // pred_region
          %s216 = sand.u32 %s20, 1
          %s217 = scalar_lea.sflag [#allocation7], %s216
          %s218 = sand.u32 %s91, 1
          %s219 = smul.addr %s218, 16
          %s220 = scalar_lea.vmem [#allocation8], %s219
          %s221 = smul.u32 16, %s27
          %s223 = ssub.s32 256, 256
          %224 = vsyncadd %s217, %s223
          %s225 = smul.addr %s221, 16
          %s226 = scalar_lea.hbm %s2, %s225
          %s228 = sshll.u32 %s220, 4
          %s229 = int_to_ptr.vmem [resolvable:$true] %s228
          %231 = dma.hbm_to_vmem [thread:$0]  %s226, 256, %s229, %s217
        $region28: #{tpu_custom_call.1} parent=19 // pred_fallthru
          _
        // Predicated region
        $region29: #{tpu_custom_call.1} parent=19 // pred_check
          %p232 = pneg %p127
        $region30: #{tpu_custom_call.1} parent=19 // pred_check_branch
          %234 = sbr.rel (%p232) target = $region32
        $region31: #{tpu_custom_call.1} parent=19 // pred_region
          %s235 = sand.u32 %s117, 1
          %s236 = scalar_lea.sflag [#allocation10], %s235
          %s237 = sand.u32 %s117, 1
          %s238 = smul.addr %s237, 1024
          %s239 = scalar_lea.vmem [#allocation9], %s238
          %s240 = smul.u32 256, %s27
          %s242 = ssub.s32 16384, 16384
          %243 = vsyncadd %s236, %s242
          %s244 = smul.addr %s240, 64
          %s245 = scalar_lea.hbm %s3, %s244
          %s246 = sshll.u32 %s239, 4
          %s247 = int_to_ptr.vmem [resolvable:$true] %s246
          %252 = dma.hbm_to_vmem [thread:$0]  %s245, 16384, %s247, %s236, 64, 64, 4
        $region32: #{tpu_custom_call.1} parent=19 // pred_fallthru
          _
      $region20: #{tpu_custom_call.1} parent=5 // pred_fallthru
        _
      %p253 = scmp.le.s32.totalorder 1, %s20
      %p254 = scmp.lt.s32.totalorder %s20, 9
      %p255 = pnand %p253, %p254
      %p256 = pneg %p255
      // Predicated region
      $region33: #{tpu_custom_call.1} parent=5 // pred_check
        _
      $region34: #{tpu_custom_call.1} parent=5 // pred_check_branch
        %258 = sbr.rel (%p255) target = $region36
      $region35: #{tpu_custom_call.1} parent=5 // pred_region
        %s259 = ssub.s32 %s20, 1
        // Predicated region
        $region37: #{tpu_custom_call.1} parent=35 // pred_check
          %p260 = pneg %p53
        $region38: #{tpu_custom_call.1} parent=35 // pred_check_branch
          %262 = sbr.rel (%p260) target = $region40
        $region39: #{tpu_custom_call.1} parent=35 // pred_region
          %263 = dma.done [#allocation4], 512
        $region40: #{tpu_custom_call.1} parent=35 // pred_fallthru
          _
        %s264 = sand.u32 %s25, 1
        %s265 = scalar_lea.sflag [#allocation7], %s264
        %s266 = sand.u32 %s68, 1
        %s267 = smul.addr %s266, 8192
        %s268 = scalar_lea.vmem [#allocation6], %s267
        // Predicated region
        $region41: #{tpu_custom_call.1} parent=35 // pred_check
          %p269 = pneg %p81
        $region42: #{tpu_custom_call.1} parent=35 // pred_check_branch
          %271 = sbr.rel (%p269) target = $region44
        $region43: #{tpu_custom_call.1} parent=35 // pred_region
          %272 = dma.done %s265, 131072
        $region44: #{tpu_custom_call.1} parent=35 // pred_fallthru
          _
        %s273 = sand.u32 %s25, 1
        %s274 = scalar_lea.sflag [#allocation7], %s273
        %s275 = sand.u32 %s94, 1
        %s276 = smul.addr %s275, 16
        %s277 = scalar_lea.vmem [#allocation8], %s276
        // Predicated region
        $region45: #{tpu_custom_call.1} parent=35 // pred_check
          %p278 = pneg %p107
        $region46: #{tpu_custom_call.1} parent=35 // pred_check_branch
          %280 = sbr.rel (%p278) target = $region48
        $region47: #{tpu_custom_call.1} parent=35 // pred_region
          %281 = dma.done %s274, 256
        $region48: #{tpu_custom_call.1} parent=35 // pred_fallthru
          _
        %s282 = sand.u32 %s120, 1
        %s283 = scalar_lea.sflag [#allocation10], %s282
        %s284 = sand.u32 %s120, 1
        %s285 = smul.addr %s284, 1024
        %s286 = scalar_lea.vmem [#allocation9], %s285
        // Predicated region
        $region49: #{tpu_custom_call.1} parent=35 // pred_check
          %p287 = pneg %p133
        $region50: #{tpu_custom_call.1} parent=35 // pred_check_branch
          %289 = sbr.rel (%p287) target = $region52
        $region51: #{tpu_custom_call.1} parent=35 // pred_region
          %290 = dma.done %s283, 16384
        $region52: #{tpu_custom_call.1} parent=35 // pred_fallthru
          _
        %p291 = pneg %p53
        %p292 = pneg %p50
        %s293 = sand.u32 %s25, 1
        %s294 = scalar_lea.sflag [#allocation7], %s293
        %s295 = sand.u32 %s68, 1
        %s296 = smul.addr %s295, 8192
        %s297 = scalar_lea.vmem [#allocation6], %s296
        %p298 = pneg %p81
        %p299 = pneg %p78
        %s300 = sand.u32 %s25, 1
        %s301 = scalar_lea.sflag [#allocation7], %s300
        %s302 = sand.u32 %s94, 1
        %s303 = smul.addr %s302, 16
        %s304 = scalar_lea.vmem [#allocation8], %s303
        %p305 = pneg %p107
        %p306 = pneg %p104
        %s307 = sand.u32 %s120, 1
        %s308 = scalar_lea.sflag [#allocation10], %s307
        %s309 = sand.u32 %s120, 1
        %s310 = smul.addr %s309, 1024
        %s311 = scalar_lea.vmem [#allocation9], %s310
        %p312 = pneg %p133
        %p313 = pneg %p130
        %p314 = pneg %p159
        %p315 = pneg %p156
        %s316 = sand.u32 %s146, 1
        %s317 = scalar_lea.sflag [#allocation5], %s316
        %s318 = sand.u32 %s146, 1
        %s319 = smul.addr %s318, 2
        %s320 = scalar_lea.vmem [#allocation11], %s319
        %s321 = smul.u32 128, %s30
        %s322 = smul.u32 16, %s29
        %s323 = smul.u32 16, %s29
        %s324 = smul.u32 256, %s29
        %p326 = scmp.eq.s32.totalorder %s30, 0
        // Predicated region
        $region53: #{tpu_custom_call.1} parent=35 // pred_check
          %p327 = pneg %p326
        $region54: #{tpu_custom_call.1} parent=35 // pred_check_branch
          %329 = sbr.rel (%p327) target = $region56
        $region55: #{tpu_custom_call.1} parent=35 // pred_region
          %330 = vst [vmem:[#allocation2] sm:$0xff] 0.0
          %331 = vst [vmem:[#allocation2 + $0x8] sm:$0xff] 0.0
          %332 = vst [vmem:[#allocation2 + $0x10] sm:$0xff] 0.0
          %333 = vst [vmem:[#allocation2 + $0x18] sm:$0xff] 0.0
        $region56: #{tpu_custom_call.1} parent=35 // pred_fallthru
          _
        %s334 = smul.u32 %s30, 1024
        %s335 = sshra.s32 %s334, 7
        %s336 = sand.u32 %s334, 127
        %s337 = scalar_lea.vmem [#allocation3], %s335
        %v338 = vld [vmem:[%s337] sm:$0xff]
        %v339 = vld [vmem:[#allocation2] sm:$0xff]
        %v340 = vld [vmem:[#allocation2 + $0x8] sm:$0xff]
        %v341 = vld [vmem:[#allocation2 + $0x10] sm:$0xff]
        %v342 = vld [vmem:[#allocation2 + $0x18] sm:$0xff]
        %v343 = vld [vmem:[%s268] sm:$0xff]
        %v344 = vld [vmem:[%s268 + $0x8] sm:$0xff]
        %v345 = vld [vmem:[%s268 + $0x10] sm:$0xff]
        %v346 = vld [vmem:[%s268 + $0x18] sm:$0xff]
        %v347 = vld [vmem:[%s268 + $0x20] sm:$0xff]
        %v348 = vld [vmem:[%s268 + $0x28] sm:$0xff]
        %v349 = vld [vmem:[%s268 + $0x30] sm:$0xff]
        %v350 = vld [vmem:[%s268 + $0x38] sm:$0xff]
        %v351 = vld [vmem:[%s268 + $0x40] sm:$0xff]
        %v352 = vld [vmem:[%s268 + $0x48] sm:$0xff]
        %v353 = vld [vmem:[%s268 + $0x50] sm:$0xff]
        %v354 = vld [vmem:[%s268 + $0x58] sm:$0xff]
        %v355 = vld [vmem:[%s268 + $0x60] sm:$0xff]
        %v356 = vld [vmem:[%s268 + $0x68] sm:$0xff]
        %v357 = vld [vmem:[%s268 + $0x70] sm:$0xff]
        %v358 = vld [vmem:[%s268 + $0x78] sm:$0xff]
        %v359 = vld [vmem:[%s268 + $0x80] sm:$0xff]
        %v360 = vld [vmem:[%s268 + $0x88] sm:$0xff]
        %v361 = vld [vmem:[%s268 + $0x90] sm:$0xff]
        %v362 = vld [vmem:[%s268 + $0x98] sm:$0xff]
        %v363 = vld [vmem:[%s268 + $0xa0] sm:$0xff]
        %v364 = vld [vmem:[%s268 + $0xa8] sm:$0xff]
        %v365 = vld [vmem:[%s268 + $0xb0] sm:$0xff]
        %v366 = vld [vmem:[%s268 + $0xb8] sm:$0xff]
        %v367 = vld [vmem:[%s268 + $0xc0] sm:$0xff]
        %v368 = vld [vmem:[%s268 + $0xc8] sm:$0xff]
        %v369 = vld [vmem:[%s268 + $0xd0] sm:$0xff]
        %v370 = vld [vmem:[%s268 + $0xd8] sm:$0xff]
        %v371 = vld [vmem:[%s268 + $0xe0] sm:$0xff]
        %v372 = vld [vmem:[%s268 + $0xe8] sm:$0xff]
        %v373 = vld [vmem:[%s268 + $0xf0] sm:$0xff]
        %v374 = vld [vmem:[%s268 + $0xf8] sm:$0xff]
        %v375 = vld [vmem:[%s268 + $0x100] sm:$0xff]
        %v376 = vld [vmem:[%s268 + $0x108] sm:$0xff]
        %v377 = vld [vmem:[%s268 + $0x110] sm:$0xff]
        %v378 = vld [vmem:[%s268 + $0x118] sm:$0xff]
        %v379 = vld [vmem:[%s268 + $0x120] sm:$0xff]
        %v380 = vld [vmem:[%s268 + $0x128] sm:$0xff]
        %v381 = vld [vmem:[%s268 + $0x130] sm:$0xff]
        %v382 = vld [vmem:[%s268 + $0x138] sm:$0xff]
        %v383 = vld [vmem:[%s268 + $0x140] sm:$0xff]
        %v384 = vld [vmem:[%s268 + $0x148] sm:$0xff]
        %v385 = vld [vmem:[%s268 + $0x150] sm:$0xff]
        %v386 = vld [vmem:[%s268 + $0x158] sm:$0xff]
        %v387 = vld [vmem:[%s268 + $0x160] sm:$0xff]
        %v388 = vld [vmem:[%s268 + $0x168] sm:$0xff]
        %v389 = vld [vmem:[%s268 + $0x170] sm:$0xff]
        %v390 = vld [vmem:[%s268 + $0x178] sm:$0xff]
        %v391 = vld [vmem:[%s268 + $0x180] sm:$0xff]
        %v392 = vld [vmem:[%s268 + $0x188] sm:$0xff]
        %v393 = vld [vmem:[%s268 + $0x190] sm:$0xff]
        %v394 = vld [vmem:[%s268 + $0x198] sm:$0xff]
        %v395 = vld [vmem:[%s268 + $0x1a0] sm:$0xff]
        %v396 = vld [vmem:[%s268 + $0x1a8] sm:$0xff]
        %v397 = vld [vmem:[%s268 + $0x1b0] sm:$0xff]
        %v398 = vld [vmem:[%s268 + $0x1b8] sm:$0xff]
        %v399 = vld [vmem:[%s268 + $0x1c0] sm:$0xff]
        %v400 = vld [vmem:[%s268 + $0x1c8] sm:$0xff]
        %v401 = vld [vmem:[%s268 + $0x1d0] sm:$0xff]
        %v402 = vld [vmem:[%s268 + $0x1d8] sm:$0xff]
        %v403 = vld [vmem:[%s268 + $0x1e0] sm:$0xff]
        %v404 = vld [vmem:[%s268 + $0x1e8] sm:$0xff]
        %v405 = vld [vmem:[%s268 + $0x1f0] sm:$0xff]
        %v406 = vld [vmem:[%s268 + $0x1f8] sm:$0xff]
        %v407 = vld [vmem:[%s268 + $0x200] sm:$0xff]
        %v408 = vld [vmem:[%s268 + $0x208] sm:$0xff]
        %v409 = vld [vmem:[%s268 + $0x210] sm:$0xff]
        %v410 = vld [vmem:[%s268 + $0x218] sm:$0xff]
        %v411 = vld [vmem:[%s268 + $0x220] sm:$0xff]
        %v412 = vld [vmem:[%s268 + $0x228] sm:$0xff]
        %v413 = vld [vmem:[%s268 + $0x230] sm:$0xff]
        %v414 = vld [vmem:[%s268 + $0x238] sm:$0xff]
        %v415 = vld [vmem:[%s268 + $0x240] sm:$0xff]
        %v416 = vld [vmem:[%s268 + $0x248] sm:$0xff]
        %v417 = vld [vmem:[%s268 + $0x250] sm:$0xff]
        %v418 = vld [vmem:[%s268 + $0x258] sm:$0xff]
        %v419 = vld [vmem:[%s268 + $0x260] sm:$0xff]
        %v420 = vld [vmem:[%s268 + $0x268] sm:$0xff]
        %v421 = vld [vmem:[%s268 + $0x270] sm:$0xff]
        %v422 = vld [vmem:[%s268 + $0x278] sm:$0xff]
        %v423 = vld [vmem:[%s268 + $0x280] sm:$0xff]
        %v424 = vld [vmem:[%s268 + $0x288] sm:$0xff]
        %v425 = vld [vmem:[%s268 + $0x290] sm:$0xff]
        %v426 = vld [vmem:[%s268 + $0x298] sm:$0xff]
        %v427 = vld [vmem:[%s268 + $0x2a0] sm:$0xff]
        %v428 = vld [vmem:[%s268 + $0x2a8] sm:$0xff]
        %v429 = vld [vmem:[%s268 + $0x2b0] sm:$0xff]
        %v430 = vld [vmem:[%s268 + $0x2b8] sm:$0xff]
        %v431 = vld [vmem:[%s268 + $0x2c0] sm:$0xff]
        %v432 = vld [vmem:[%s268 + $0x2c8] sm:$0xff]
        %v433 = vld [vmem:[%s268 + $0x2d0] sm:$0xff]
        %v434 = vld [vmem:[%s268 + $0x2d8] sm:$0xff]
        %v435 = vld [vmem:[%s268 + $0x2e0] sm:$0xff]
        %v436 = vld [vmem:[%s268 + $0x2e8] sm:$0xff]
        %v437 = vld [vmem:[%s268 + $0x2f0] sm:$0xff]
        %v438 = vld [vmem:[%s268 + $0x2f8] sm:$0xff]
        %v439 = vld [vmem:[%s268 + $0x300] sm:$0xff]
        %v440 = vld [vmem:[%s268 + $0x308] sm:$0xff]
        %v441 = vld [vmem:[%s268 + $0x310] sm:$0xff]
        %v442 = vld [vmem:[%s268 + $0x318] sm:$0xff]
        %v443 = vld [vmem:[%s268 + $0x320] sm:$0xff]
        %v444 = vld [vmem:[%s268 + $0x328] sm:$0xff]
        %v445 = vld [vmem:[%s268 + $0x330] sm:$0xff]
        %v446 = vld [vmem:[%s268 + $0x338] sm:$0xff]
        %v447 = vld [vmem:[%s268 + $0x340] sm:$0xff]
        %v448 = vld [vmem:[%s268 + $0x348] sm:$0xff]
        %v449 = vld [vmem:[%s268 + $0x350] sm:$0xff]
        %v450 = vld [vmem:[%s268 + $0x358] sm:$0xff]
        %v451 = vld [vmem:[%s268 + $0x360] sm:$0xff]
        %v452 = vld [vmem:[%s268 + $0x368] sm:$0xff]
        %v453 = vld [vmem:[%s268 + $0x370] sm:$0xff]
        %v454 = vld [vmem:[%s268 + $0x378] sm:$0xff]
        %v455 = vld [vmem:[%s268 + $0x380] sm:$0xff]
        %v456 = vld [vmem:[%s268 + $0x388] sm:$0xff]
        %v457 = vld [vmem:[%s268 + $0x390] sm:$0xff]
        %v458 = vld [vmem:[%s268 + $0x398] sm:$0xff]
        %v459 = vld [vmem:[%s268 + $0x3a0] sm:$0xff]
        %v460 = vld [vmem:[%s268 + $0x3a8] sm:$0xff]
        %v461 = vld [vmem:[%s268 + $0x3b0] sm:$0xff]
        %v462 = vld [vmem:[%s268 + $0x3b8] sm:$0xff]
        %v463 = vld [vmem:[%s268 + $0x3c0] sm:$0xff]
        %v464 = vld [vmem:[%s268 + $0x3c8] sm:$0xff]
        %v465 = vld [vmem:[%s268 + $0x3d0] sm:$0xff]
        %v466 = vld [vmem:[%s268 + $0x3d8] sm:$0xff]
        %v467 = vld [vmem:[%s268 + $0x3e0] sm:$0xff]
        %v468 = vld [vmem:[%s268 + $0x3e8] sm:$0xff]
        %v469 = vld [vmem:[%s268 + $0x3f0] sm:$0xff]
        %v470 = vld [vmem:[%s268 + $0x3f8] sm:$0xff]
        %v471 = vld [vmem:[%s268 + $0x400] sm:$0xff]
        %v472 = vld [vmem:[%s268 + $0x408] sm:$0xff]
        %v473 = vld [vmem:[%s268 + $0x410] sm:$0xff]
        %v474 = vld [vmem:[%s268 + $0x418] sm:$0xff]
        %v475 = vld [vmem:[%s268 + $0x420] sm:$0xff]
        %v476 = vld [vmem:[%s268 + $0x428] sm:$0xff]
        %v477 = vld [vmem:[%s268 + $0x430] sm:$0xff]
        %v478 = vld [vmem:[%s268 + $0x438] sm:$0xff]
        %v479 = vld [vmem:[%s268 + $0x440] sm:$0xff]
        %v480 = vld [vmem:[%s268 + $0x448] sm:$0xff]
        %v481 = vld [vmem:[%s268 + $0x450] sm:$0xff]
        %v482 = vld [vmem:[%s268 + $0x458] sm:$0xff]
        %v483 = vld [vmem:[%s268 + $0x460] sm:$0xff]
        %v484 = vld [vmem:[%s268 + $0x468] sm:$0xff]
        %v485 = vld [vmem:[%s268 + $0x470] sm:$0xff]
        %v486 = vld [vmem:[%s268 + $0x478] sm:$0xff]
        %v487 = vld [vmem:[%s268 + $0x480] sm:$0xff]
        %v488 = vld [vmem:[%s268 + $0x488] sm:$0xff]
        %v489 = vld [vmem:[%s268 + $0x490] sm:$0xff]
        %v490 = vld [vmem:[%s268 + $0x498] sm:$0xff]
        %v491 = vld [vmem:[%s268 + $0x4a0] sm:$0xff]
        %v492 = vld [vmem:[%s268 + $0x4a8] sm:$0xff]
        %v493 = vld [vmem:[%s268 + $0x4b0] sm:$0xff]
        %v494 = vld [vmem:[%s268 + $0x4b8] sm:$0xff]
        %v495 = vld [vmem:[%s268 + $0x4c0] sm:$0xff]
        %v496 = vld [vmem:[%s268 + $0x4c8] sm:$0xff]
        %v497 = vld [vmem:[%s268 + $0x4d0] sm:$0xff]
        %v498 = vld [vmem:[%s268 + $0x4d8] sm:$0xff]
        %v499 = vld [vmem:[%s268 + $0x4e0] sm:$0xff]
        %v500 = vld [vmem:[%s268 + $0x4e8] sm:$0xff]
        %v501 = vld [vmem:[%s268 + $0x4f0] sm:$0xff]
        %v502 = vld [vmem:[%s268 + $0x4f8] sm:$0xff]
        %v503 = vld [vmem:[%s268 + $0x500] sm:$0xff]
        %v504 = vld [vmem:[%s268 + $0x508] sm:$0xff]
        %v505 = vld [vmem:[%s268 + $0x510] sm:$0xff]
        %v506 = vld [vmem:[%s268 + $0x518] sm:$0xff]
        %v507 = vld [vmem:[%s268 + $0x520] sm:$0xff]
        %v508 = vld [vmem:[%s268 + $0x528] sm:$0xff]
        %v509 = vld [vmem:[%s268 + $0x530] sm:$0xff]
        %v510 = vld [vmem:[%s268 + $0x538] sm:$0xff]
        %v511 = vld [vmem:[%s268 + $0x540] sm:$0xff]
        %v512 = vld [vmem:[%s268 + $0x548] sm:$0xff]
        %v513 = vld [vmem:[%s268 + $0x550] sm:$0xff]
        %v514 = vld [vmem:[%s268 + $0x558] sm:$0xff]
        %v515 = vld [vmem:[%s268 + $0x560] sm:$0xff]
        %v516 = vld [vmem:[%s268 + $0x568] sm:$0xff]
        %v517 = vld [vmem:[%s268 + $0x570] sm:$0xff]
        %v518 = vld [vmem:[%s268 + $0x578] sm:$0xff]
        %v519 = vld [vmem:[%s268 + $0x580] sm:$0xff]
        %v520 = vld [vmem:[%s268 + $0x588] sm:$0xff]
        %v521 = vld [vmem:[%s268 + $0x590] sm:$0xff]
        %v522 = vld [vmem:[%s268 + $0x598] sm:$0xff]
        %v523 = vld [vmem:[%s268 + $0x5a0] sm:$0xff]
        %v524 = vld [vmem:[%s268 + $0x5a8] sm:$0xff]
        %v525 = vld [vmem:[%s268 + $0x5b0] sm:$0xff]
        %v526 = vld [vmem:[%s268 + $0x5b8] sm:$0xff]
        %v527 = vld [vmem:[%s268 + $0x5c0] sm:$0xff]
        %v528 = vld [vmem:[%s268 + $0x5c8] sm:$0xff]
        %v529 = vld [vmem:[%s268 + $0x5d0] sm:$0xff]
        %v530 = vld [vmem:[%s268 + $0x5d8] sm:$0xff]
        %v531 = vld [vmem:[%s268 + $0x5e0] sm:$0xff]
        %v532 = vld [vmem:[%s268 + $0x5e8] sm:$0xff]
        %v533 = vld [vmem:[%s268 + $0x5f0] sm:$0xff]
        %v534 = vld [vmem:[%s268 + $0x5f8] sm:$0xff]
        %v535 = vld [vmem:[%s268 + $0x600] sm:$0xff]
        %v536 = vld [vmem:[%s268 + $0x608] sm:$0xff]
        %v537 = vld [vmem:[%s268 + $0x610] sm:$0xff]
        %v538 = vld [vmem:[%s268 + $0x618] sm:$0xff]
        %v539 = vld [vmem:[%s268 + $0x620] sm:$0xff]
        %v540 = vld [vmem:[%s268 + $0x628] sm:$0xff]
        %v541 = vld [vmem:[%s268 + $0x630] sm:$0xff]
        %v542 = vld [vmem:[%s268 + $0x638] sm:$0xff]
        %v543 = vld [vmem:[%s268 + $0x640] sm:$0xff]
        %v544 = vld [vmem:[%s268 + $0x648] sm:$0xff]
        %v545 = vld [vmem:[%s268 + $0x650] sm:$0xff]
        %v546 = vld [vmem:[%s268 + $0x658] sm:$0xff]
        %v547 = vld [vmem:[%s268 + $0x660] sm:$0xff]
        %v548 = vld [vmem:[%s268 + $0x668] sm:$0xff]
        %v549 = vld [vmem:[%s268 + $0x670] sm:$0xff]
        %v550 = vld [vmem:[%s268 + $0x678] sm:$0xff]
        %v551 = vld [vmem:[%s268 + $0x680] sm:$0xff]
        %v552 = vld [vmem:[%s268 + $0x688] sm:$0xff]
        %v553 = vld [vmem:[%s268 + $0x690] sm:$0xff]
        %v554 = vld [vmem:[%s268 + $0x698] sm:$0xff]
        %v555 = vld [vmem:[%s268 + $0x6a0] sm:$0xff]
        %v556 = vld [vmem:[%s268 + $0x6a8] sm:$0xff]
        %v557 = vld [vmem:[%s268 + $0x6b0] sm:$0xff]
        %v558 = vld [vmem:[%s268 + $0x6b8] sm:$0xff]
        %v559 = vld [vmem:[%s268 + $0x6c0] sm:$0xff]
        %v560 = vld [vmem:[%s268 + $0x6c8] sm:$0xff]
        %v561 = vld [vmem:[%s268 + $0x6d0] sm:$0xff]
        %v562 = vld [vmem:[%s268 + $0x6d8] sm:$0xff]
        %v563 = vld [vmem:[%s268 + $0x6e0] sm:$0xff]
        %v564 = vld [vmem:[%s268 + $0x6e8] sm:$0xff]
        %v565 = vld [vmem:[%s268 + $0x6f0] sm:$0xff]
        %v566 = vld [vmem:[%s268 + $0x6f8] sm:$0xff]
        %v567 = vld [vmem:[%s268 + $0x700] sm:$0xff]
        %v568 = vld [vmem:[%s268 + $0x708] sm:$0xff]
        %v569 = vld [vmem:[%s268 + $0x710] sm:$0xff]
        %v570 = vld [vmem:[%s268 + $0x718] sm:$0xff]
        %v571 = vld [vmem:[%s268 + $0x720] sm:$0xff]
        %v572 = vld [vmem:[%s268 + $0x728] sm:$0xff]
        %v573 = vld [vmem:[%s268 + $0x730] sm:$0xff]
        %v574 = vld [vmem:[%s268 + $0x738] sm:$0xff]
        %v575 = vld [vmem:[%s268 + $0x740] sm:$0xff]
        %v576 = vld [vmem:[%s268 + $0x748] sm:$0xff]
        %v577 = vld [vmem:[%s268 + $0x750] sm:$0xff]
        %v578 = vld [vmem:[%s268 + $0x758] sm:$0xff]
        %v579 = vld [vmem:[%s268 + $0x760] sm:$0xff]
        %v580 = vld [vmem:[%s268 + $0x768] sm:$0xff]
        %v581 = vld [vmem:[%s268 + $0x770] sm:$0xff]
        %v582 = vld [vmem:[%s268 + $0x778] sm:$0xff]
        %v583 = vld [vmem:[%s268 + $0x780] sm:$0xff]
        %v584 = vld [vmem:[%s268 + $0x788] sm:$0xff]
        %v585 = vld [vmem:[%s268 + $0x790] sm:$0xff]
        %v586 = vld [vmem:[%s268 + $0x798] sm:$0xff]
        %v587 = vld [vmem:[%s268 + $0x7a0] sm:$0xff]
        %v588 = vld [vmem:[%s268 + $0x7a8] sm:$0xff]
        %v589 = vld [vmem:[%s268 + $0x7b0] sm:$0xff]
        %v590 = vld [vmem:[%s268 + $0x7b8] sm:$0xff]
        %v591 = vld [vmem:[%s268 + $0x7c0] sm:$0xff]
        %v592 = vld [vmem:[%s268 + $0x7c8] sm:$0xff]
        %v593 = vld [vmem:[%s268 + $0x7d0] sm:$0xff]
        %v594 = vld [vmem:[%s268 + $0x7d8] sm:$0xff]
        %v595 = vld [vmem:[%s268 + $0x7e0] sm:$0xff]
        %v596 = vld [vmem:[%s268 + $0x7e8] sm:$0xff]
        %v597 = vld [vmem:[%s268 + $0x7f0] sm:$0xff]
        %v598 = vld [vmem:[%s268 + $0x7f8] sm:$0xff]
        %v599 = vld [vmem:[%s268 + $0x800] sm:$0xff]
        %v600 = vld [vmem:[%s268 + $0x808] sm:$0xff]
        %v601 = vld [vmem:[%s268 + $0x810] sm:$0xff]
        %v602 = vld [vmem:[%s268 + $0x818] sm:$0xff]
        %v603 = vld [vmem:[%s268 + $0x820] sm:$0xff]
        %v604 = vld [vmem:[%s268 + $0x828] sm:$0xff]
        %v605 = vld [vmem:[%s268 + $0x830] sm:$0xff]
        %v606 = vld [vmem:[%s268 + $0x838] sm:$0xff]
        %v607 = vld [vmem:[%s268 + $0x840] sm:$0xff]
        %v608 = vld [vmem:[%s268 + $0x848] sm:$0xff]
        %v609 = vld [vmem:[%s268 + $0x850] sm:$0xff]
        %v610 = vld [vmem:[%s268 + $0x858] sm:$0xff]
        %v611 = vld [vmem:[%s268 + $0x860] sm:$0xff]
        %v612 = vld [vmem:[%s268 + $0x868] sm:$0xff]
        %v613 = vld [vmem:[%s268 + $0x870] sm:$0xff]
        %v614 = vld [vmem:[%s268 + $0x878] sm:$0xff]
        %v615 = vld [vmem:[%s268 + $0x880] sm:$0xff]
        %v616 = vld [vmem:[%s268 + $0x888] sm:$0xff]
        %v617 = vld [vmem:[%s268 + $0x890] sm:$0xff]
        %v618 = vld [vmem:[%s268 + $0x898] sm:$0xff]
        %v619 = vld [vmem:[%s268 + $0x8a0] sm:$0xff]
        %v620 = vld [vmem:[%s268 + $0x8a8] sm:$0xff]
        %v621 = vld [vmem:[%s268 + $0x8b0] sm:$0xff]
        %v622 = vld [vmem:[%s268 + $0x8b8] sm:$0xff]
        %v623 = vld [vmem:[%s268 + $0x8c0] sm:$0xff]
        %v624 = vld [vmem:[%s268 + $0x8c8] sm:$0xff]
        %v625 = vld [vmem:[%s268 + $0x8d0] sm:$0xff]
        %v626 = vld [vmem:[%s268 + $0x8d8] sm:$0xff]
        %v627 = vld [vmem:[%s268 + $0x8e0] sm:$0xff]
        %v628 = vld [vmem:[%s268 + $0x8e8] sm:$0xff]
        %v629 = vld [vmem:[%s268 + $0x8f0] sm:$0xff]
        %v630 = vld [vmem:[%s268 + $0x8f8] sm:$0xff]
        %v631 = vld [vmem:[%s268 + $0x900] sm:$0xff]
        %v632 = vld [vmem:[%s268 + $0x908] sm:$0xff]
        %v633 = vld [vmem:[%s268 + $0x910] sm:$0xff]
        %v634 = vld [vmem:[%s268 + $0x918] sm:$0xff]
        %v635 = vld [vmem:[%s268 + $0x920] sm:$0xff]
        %v636 = vld [vmem:[%s268 + $0x928] sm:$0xff]
        %v637 = vld [vmem:[%s268 + $0x930] sm:$0xff]
        %v638 = vld [vmem:[%s268 + $0x938] sm:$0xff]
        %v639 = vld [vmem:[%s268 + $0x940] sm:$0xff]
        %v640 = vld [vmem:[%s268 + $0x948] sm:$0xff]
        %v641 = vld [vmem:[%s268 + $0x950] sm:$0xff]
        %v642 = vld [vmem:[%s268 + $0x958] sm:$0xff]
        %v643 = vld [vmem:[%s268 + $0x960] sm:$0xff]
        %v644 = vld [vmem:[%s268 + $0x968] sm:$0xff]
        %v645 = vld [vmem:[%s268 + $0x970] sm:$0xff]
        %v646 = vld [vmem:[%s268 + $0x978] sm:$0xff]
        %v647 = vld [vmem:[%s268 + $0x980] sm:$0xff]
        %v648 = vld [vmem:[%s268 + $0x988] sm:$0xff]
        %v649 = vld [vmem:[%s268 + $0x990] sm:$0xff]
        %v650 = vld [vmem:[%s268 + $0x998] sm:$0xff]
        %v651 = vld [vmem:[%s268 + $0x9a0] sm:$0xff]
        %v652 = vld [vmem:[%s268 + $0x9a8] sm:$0xff]
        %v653 = vld [vmem:[%s268 + $0x9b0] sm:$0xff]
        %v654 = vld [vmem:[%s268 + $0x9b8] sm:$0xff]
        %v655 = vld [vmem:[%s268 + $0x9c0] sm:$0xff]
        %v656 = vld [vmem:[%s268 + $0x9c8] sm:$0xff]
        %v657 = vld [vmem:[%s268 + $0x9d0] sm:$0xff]
        %v658 = vld [vmem:[%s268 + $0x9d8] sm:$0xff]
        %v659 = vld [vmem:[%s268 + $0x9e0] sm:$0xff]
        %v660 = vld [vmem:[%s268 + $0x9e8] sm:$0xff]
        %v661 = vld [vmem:[%s268 + $0x9f0] sm:$0xff]
        %v662 = vld [vmem:[%s268 + $0x9f8] sm:$0xff]
        %v663 = vld [vmem:[%s268 + $0xa00] sm:$0xff]
        %v664 = vld [vmem:[%s268 + $0xa08] sm:$0xff]
        %v665 = vld [vmem:[%s268 + $0xa10] sm:$0xff]
        %v666 = vld [vmem:[%s268 + $0xa18] sm:$0xff]
        %v667 = vld [vmem:[%s268 + $0xa20] sm:$0xff]
        %v668 = vld [vmem:[%s268 + $0xa28] sm:$0xff]
        %v669 = vld [vmem:[%s268 + $0xa30] sm:$0xff]
        %v670 = vld [vmem:[%s268 + $0xa38] sm:$0xff]
        %v671 = vld [vmem:[%s268 + $0xa40] sm:$0xff]
        %v672 = vld [vmem:[%s268 + $0xa48] sm:$0xff]
        %v673 = vld [vmem:[%s268 + $0xa50] sm:$0xff]
        %v674 = vld [vmem:[%s268 + $0xa58] sm:$0xff]
        %v675 = vld [vmem:[%s268 + $0xa60] sm:$0xff]
        %v676 = vld [vmem:[%s268 + $0xa68] sm:$0xff]
        %v677 = vld [vmem:[%s268 + $0xa70] sm:$0xff]
        %v678 = vld [vmem:[%s268 + $0xa78] sm:$0xff]
        %v679 = vld [vmem:[%s268 + $0xa80] sm:$0xff]
        %v680 = vld [vmem:[%s268 + $0xa88] sm:$0xff]
        %v681 = vld [vmem:[%s268 + $0xa90] sm:$0xff]
        %v682 = vld [vmem:[%s268 + $0xa98] sm:$0xff]
        %v683 = vld [vmem:[%s268 + $0xaa0] sm:$0xff]
        %v684 = vld [vmem:[%s268 + $0xaa8] sm:$0xff]
        %v685 = vld [vmem:[%s268 + $0xab0] sm:$0xff]
        %v686 = vld [vmem:[%s268 + $0xab8] sm:$0xff]
        %v687 = vld [vmem:[%s268 + $0xac0] sm:$0xff]
        %v688 = vld [vmem:[%s268 + $0xac8] sm:$0xff]
        %v689 = vld [vmem:[%s268 + $0xad0] sm:$0xff]
        %v690 = vld [vmem:[%s268 + $0xad8] sm:$0xff]
        %v691 = vld [vmem:[%s268 + $0xae0] sm:$0xff]
        %v692 = vld [vmem:[%s268 + $0xae8] sm:$0xff]
        %v693 = vld [vmem:[%s268 + $0xaf0] sm:$0xff]
        %v694 = vld [vmem:[%s268 + $0xaf8] sm:$0xff]
        %v695 = vld [vmem:[%s268 + $0xb00] sm:$0xff]
        %v696 = vld [vmem:[%s268 + $0xb08] sm:$0xff]
        %v697 = vld [vmem:[%s268 + $0xb10] sm:$0xff]
        %v698 = vld [vmem:[%s268 + $0xb18] sm:$0xff]
        %v699 = vld [vmem:[%s268 + $0xb20] sm:$0xff]
        %v700 = vld [vmem:[%s268 + $0xb28] sm:$0xff]
        %v701 = vld [vmem:[%s268 + $0xb30] sm:$0xff]
        %v702 = vld [vmem:[%s268 + $0xb38] sm:$0xff]
        %v703 = vld [vmem:[%s268 + $0xb40] sm:$0xff]
        %v704 = vld [vmem:[%s268 + $0xb48] sm:$0xff]
        %v705 = vld [vmem:[%s268 + $0xb50] sm:$0xff]
        %v706 = vld [vmem:[%s268 + $0xb58] sm:$0xff]
        %v707 = vld [vmem:[%s268 + $0xb60] sm:$0xff]
        %v708 = vld [vmem:[%s268 + $0xb68] sm:$0xff]
        %v709 = vld [vmem:[%s268 + $0xb70] sm:$0xff]
        %v710 = vld [vmem:[%s268 + $0xb78] sm:$0xff]
        %v711 = vld [vmem:[%s268 + $0xb80] sm:$0xff]
        %v712 = vld [vmem:[%s268 + $0xb88] sm:$0xff]
        %v713 = vld [vmem:[%s268 + $0xb90] sm:$0xff]
        %v714 = vld [vmem:[%s268 + $0xb98] sm:$0xff]
        %v715 = vld [vmem:[%s268 + $0xba0] sm:$0xff]
        %v716 = vld [vmem:[%s268 + $0xba8] sm:$0xff]
        %v717 = vld [vmem:[%s268 + $0xbb0] sm:$0xff]
        %v718 = vld [vmem:[%s268 + $0xbb8] sm:$0xff]
        %v719 = vld [vmem:[%s268 + $0xbc0] sm:$0xff]
        %v720 = vld [vmem:[%s268 + $0xbc8] sm:$0xff]
        %v721 = vld [vmem:[%s268 + $0xbd0] sm:$0xff]
        %v722 = vld [vmem:[%s268 + $0xbd8] sm:$0xff]
        %v723 = vld [vmem:[%s268 + $0xbe0] sm:$0xff]
        %v724 = vld [vmem:[%s268 + $0xbe8] sm:$0xff]
        %v725 = vld [vmem:[%s268 + $0xbf0] sm:$0xff]
        %v726 = vld [vmem:[%s268 + $0xbf8] sm:$0xff]
        %v727 = vld [vmem:[%s268 + $0xc00] sm:$0xff]
        %v728 = vld [vmem:[%s268 + $0xc08] sm:$0xff]
        %v729 = vld [vmem:[%s268 + $0xc10] sm:$0xff]
        %v730 = vld [vmem:[%s268 + $0xc18] sm:$0xff]
        %v731 = vld [vmem:[%s268 + $0xc20] sm:$0xff]
        %v732 = vld [vmem:[%s268 + $0xc28] sm:$0xff]
        %v733 = vld [vmem:[%s268 + $0xc30] sm:$0xff]
        %v734 = vld [vmem:[%s268 + $0xc38] sm:$0xff]
        %v735 = vld [vmem:[%s268 + $0xc40] sm:$0xff]
        %v736 = vld [vmem:[%s268 + $0xc48] sm:$0xff]
        %v737 = vld [vmem:[%s268 + $0xc50] sm:$0xff]
        %v738 = vld [vmem:[%s268 + $0xc58] sm:$0xff]
        %v739 = vld [vmem:[%s268 + $0xc60] sm:$0xff]
        %v740 = vld [vmem:[%s268 + $0xc68] sm:$0xff]
        %v741 = vld [vmem:[%s268 + $0xc70] sm:$0xff]
        %v742 = vld [vmem:[%s268 + $0xc78] sm:$0xff]
        %v743 = vld [vmem:[%s268 + $0xc80] sm:$0xff]
        %v744 = vld [vmem:[%s268 + $0xc88] sm:$0xff]
        %v745 = vld [vmem:[%s268 + $0xc90] sm:$0xff]
        %v746 = vld [vmem:[%s268 + $0xc98] sm:$0xff]
        %v747 = vld [vmem:[%s268 + $0xca0] sm:$0xff]
        %v748 = vld [vmem:[%s268 + $0xca8] sm:$0xff]
        %v749 = vld [vmem:[%s268 + $0xcb0] sm:$0xff]
        %v750 = vld [vmem:[%s268 + $0xcb8] sm:$0xff]
        %v751 = vld [vmem:[%s268 + $0xcc0] sm:$0xff]
        %v752 = vld [vmem:[%s268 + $0xcc8] sm:$0xff]
        %v753 = vld [vmem:[%s268 + $0xcd0] sm:$0xff]
        %v754 = vld [vmem:[%s268 + $0xcd8] sm:$0xff]
        %v755 = vld [vmem:[%s268 + $0xce0] sm:$0xff]
        %v756 = vld [vmem:[%s268 + $0xce8] sm:$0xff]
        %v757 = vld [vmem:[%s268 + $0xcf0] sm:$0xff]
        %v758 = vld [vmem:[%s268 + $0xcf8] sm:$0xff]
        %v759 = vld [vmem:[%s268 + $0xd00] sm:$0xff]
        %v760 = vld [vmem:[%s268 + $0xd08] sm:$0xff]
        %v761 = vld [vmem:[%s268 + $0xd10] sm:$0xff]
        %v762 = vld [vmem:[%s268 + $0xd18] sm:$0xff]
        %v763 = vld [vmem:[%s268 + $0xd20] sm:$0xff]
        %v764 = vld [vmem:[%s268 + $0xd28] sm:$0xff]
        %v765 = vld [vmem:[%s268 + $0xd30] sm:$0xff]
        %v766 = vld [vmem:[%s268 + $0xd38] sm:$0xff]
        %v767 = vld [vmem:[%s268 + $0xd40] sm:$0xff]
        %v768 = vld [vmem:[%s268 + $0xd48] sm:$0xff]
        %v769 = vld [vmem:[%s268 + $0xd50] sm:$0xff]
        %v770 = vld [vmem:[%s268 + $0xd58] sm:$0xff]
        %v771 = vld [vmem:[%s268 + $0xd60] sm:$0xff]
        %v772 = vld [vmem:[%s268 + $0xd68] sm:$0xff]
        %v773 = vld [vmem:[%s268 + $0xd70] sm:$0xff]
        %v774 = vld [vmem:[%s268 + $0xd78] sm:$0xff]
        %v775 = vld [vmem:[%s268 + $0xd80] sm:$0xff]
        %v776 = vld [vmem:[%s268 + $0xd88] sm:$0xff]
        %v777 = vld [vmem:[%s268 + $0xd90] sm:$0xff]
        %v778 = vld [vmem:[%s268 + $0xd98] sm:$0xff]
        %v779 = vld [vmem:[%s268 + $0xda0] sm:$0xff]
        %v780 = vld [vmem:[%s268 + $0xda8] sm:$0xff]
        %v781 = vld [vmem:[%s268 + $0xdb0] sm:$0xff]
        %v782 = vld [vmem:[%s268 + $0xdb8] sm:$0xff]
        %v783 = vld [vmem:[%s268 + $0xdc0] sm:$0xff]
        %v784 = vld [vmem:[%s268 + $0xdc8] sm:$0xff]
        %v785 = vld [vmem:[%s268 + $0xdd0] sm:$0xff]
        %v786 = vld [vmem:[%s268 + $0xdd8] sm:$0xff]
        %v787 = vld [vmem:[%s268 + $0xde0] sm:$0xff]
        %v788 = vld [vmem:[%s268 + $0xde8] sm:$0xff]
        %v789 = vld [vmem:[%s268 + $0xdf0] sm:$0xff]
        %v790 = vld [vmem:[%s268 + $0xdf8] sm:$0xff]
        %v791 = vld [vmem:[%s268 + $0xe00] sm:$0xff]
        %v792 = vld [vmem:[%s268 + $0xe08] sm:$0xff]
        %v793 = vld [vmem:[%s268 + $0xe10] sm:$0xff]
        %v794 = vld [vmem:[%s268 + $0xe18] sm:$0xff]
        %v795 = vld [vmem:[%s268 + $0xe20] sm:$0xff]
        %v796 = vld [vmem:[%s268 + $0xe28] sm:$0xff]
        %v797 = vld [vmem:[%s268 + $0xe30] sm:$0xff]
        %v798 = vld [vmem:[%s268 + $0xe38] sm:$0xff]
        %v799 = vld [vmem:[%s268 + $0xe40] sm:$0xff]
        %v800 = vld [vmem:[%s268 + $0xe48] sm:$0xff]
        %v801 = vld [vmem:[%s268 + $0xe50] sm:$0xff]
        %v802 = vld [vmem:[%s268 + $0xe58] sm:$0xff]
        %v803 = vld [vmem:[%s268 + $0xe60] sm:$0xff]
        %v804 = vld [vmem:[%s268 + $0xe68] sm:$0xff]
        %v805 = vld [vmem:[%s268 + $0xe70] sm:$0xff]
        %v806 = vld [vmem:[%s268 + $0xe78] sm:$0xff]
        %v807 = vld [vmem:[%s268 + $0xe80] sm:$0xff]
        %v808 = vld [vmem:[%s268 + $0xe88] sm:$0xff]
        %v809 = vld [vmem:[%s268 + $0xe90] sm:$0xff]
        %v810 = vld [vmem:[%s268 + $0xe98] sm:$0xff]
        %v811 = vld [vmem:[%s268 + $0xea0] sm:$0xff]
        %v812 = vld [vmem:[%s268 + $0xea8] sm:$0xff]
        %v813 = vld [vmem:[%s268 + $0xeb0] sm:$0xff]
        %v814 = vld [vmem:[%s268 + $0xeb8] sm:$0xff]
        %v815 = vld [vmem:[%s268 + $0xec0] sm:$0xff]
        %v816 = vld [vmem:[%s268 + $0xec8] sm:$0xff]
        %v817 = vld [vmem:[%s268 + $0xed0] sm:$0xff]
        %v818 = vld [vmem:[%s268 + $0xed8] sm:$0xff]
        %v819 = vld [vmem:[%s268 + $0xee0] sm:$0xff]
        %v820 = vld [vmem:[%s268 + $0xee8] sm:$0xff]
        %v821 = vld [vmem:[%s268 + $0xef0] sm:$0xff]
        %v822 = vld [vmem:[%s268 + $0xef8] sm:$0xff]
        %v823 = vld [vmem:[%s268 + $0xf00] sm:$0xff]
        %v824 = vld [vmem:[%s268 + $0xf08] sm:$0xff]
        %v825 = vld [vmem:[%s268 + $0xf10] sm:$0xff]
        %v826 = vld [vmem:[%s268 + $0xf18] sm:$0xff]
        %v827 = vld [vmem:[%s268 + $0xf20] sm:$0xff]
        %v828 = vld [vmem:[%s268 + $0xf28] sm:$0xff]
        %v829 = vld [vmem:[%s268 + $0xf30] sm:$0xff]
        %v830 = vld [vmem:[%s268 + $0xf38] sm:$0xff]
        %v831 = vld [vmem:[%s268 + $0xf40] sm:$0xff]
        %v832 = vld [vmem:[%s268 + $0xf48] sm:$0xff]
        %v833 = vld [vmem:[%s268 + $0xf50] sm:$0xff]
        %v834 = vld [vmem:[%s268 + $0xf58] sm:$0xff]
        %v835 = vld [vmem:[%s268 + $0xf60] sm:$0xff]
        %v836 = vld [vmem:[%s268 + $0xf68] sm:$0xff]
        %v837 = vld [vmem:[%s268 + $0xf70] sm:$0xff]
        %v838 = vld [vmem:[%s268 + $0xf78] sm:$0xff]
        %v839 = vld [vmem:[%s268 + $0xf80] sm:$0xff]
        %v840 = vld [vmem:[%s268 + $0xf88] sm:$0xff]
        %v841 = vld [vmem:[%s268 + $0xf90] sm:$0xff]
        %v842 = vld [vmem:[%s268 + $0xf98] sm:$0xff]
        %v843 = vld [vmem:[%s268 + $0xfa0] sm:$0xff]
        %v844 = vld [vmem:[%s268 + $0xfa8] sm:$0xff]
        %v845 = vld [vmem:[%s268 + $0xfb0] sm:$0xff]
        %v846 = vld [vmem:[%s268 + $0xfb8] sm:$0xff]
        %v847 = vld [vmem:[%s268 + $0xfc0] sm:$0xff]
        %v848 = vld [vmem:[%s268 + $0xfc8] sm:$0xff]
        %v849 = vld [vmem:[%s268 + $0xfd0] sm:$0xff]
        %v850 = vld [vmem:[%s268 + $0xfd8] sm:$0xff]
        %v851 = vld [vmem:[%s268 + $0xfe0] sm:$0xff]
        %v852 = vld [vmem:[%s268 + $0xfe8] sm:$0xff]
        %v853 = vld [vmem:[%s268 + $0xff0] sm:$0xff]
        %v854 = vld [vmem:[%s268 + $0xff8] sm:$0xff]
        %v855 = vld [vmem:[%s268 + $0x1000] sm:$0xff]
        %v856 = vld [vmem:[%s268 + $0x1008] sm:$0xff]
        %v857 = vld [vmem:[%s268 + $0x1010] sm:$0xff]
        %v858 = vld [vmem:[%s268 + $0x1018] sm:$0xff]
        %v859 = vld [vmem:[%s268 + $0x1020] sm:$0xff]
        %v860 = vld [vmem:[%s268 + $0x1028] sm:$0xff]
        %v861 = vld [vmem:[%s268 + $0x1030] sm:$0xff]
        %v862 = vld [vmem:[%s268 + $0x1038] sm:$0xff]
        %v863 = vld [vmem:[%s268 + $0x1040] sm:$0xff]
        %v864 = vld [vmem:[%s268 + $0x1048] sm:$0xff]
        %v865 = vld [vmem:[%s268 + $0x1050] sm:$0xff]
        %v866 = vld [vmem:[%s268 + $0x1058] sm:$0xff]
        %v867 = vld [vmem:[%s268 + $0x1060] sm:$0xff]
        %v868 = vld [vmem:[%s268 + $0x1068] sm:$0xff]
        %v869 = vld [vmem:[%s268 + $0x1070] sm:$0xff]
        %v870 = vld [vmem:[%s268 + $0x1078] sm:$0xff]
        %v871 = vld [vmem:[%s268 + $0x1080] sm:$0xff]
        %v872 = vld [vmem:[%s268 + $0x1088] sm:$0xff]
        %v873 = vld [vmem:[%s268 + $0x1090] sm:$0xff]
        %v874 = vld [vmem:[%s268 + $0x1098] sm:$0xff]
        %v875 = vld [vmem:[%s268 + $0x10a0] sm:$0xff]
        %v876 = vld [vmem:[%s268 + $0x10a8] sm:$0xff]
        %v877 = vld [vmem:[%s268 + $0x10b0] sm:$0xff]
        %v878 = vld [vmem:[%s268 + $0x10b8] sm:$0xff]
        %v879 = vld [vmem:[%s268 + $0x10c0] sm:$0xff]
        %v880 = vld [vmem:[%s268 + $0x10c8] sm:$0xff]
        %v881 = vld [vmem:[%s268 + $0x10d0] sm:$0xff]
        %v882 = vld [vmem:[%s268 + $0x10d8] sm:$0xff]
        %v883 = vld [vmem:[%s268 + $0x10e0] sm:$0xff]
        %v884 = vld [vmem:[%s268 + $0x10e8] sm:$0xff]
        %v885 = vld [vmem:[%s268 + $0x10f0] sm:$0xff]
        %v886 = vld [vmem:[%s268 + $0x10f8] sm:$0xff]
        %v887 = vld [vmem:[%s268 + $0x1100] sm:$0xff]
        %v888 = vld [vmem:[%s268 + $0x1108] sm:$0xff]
        %v889 = vld [vmem:[%s268 + $0x1110] sm:$0xff]
        %v890 = vld [vmem:[%s268 + $0x1118] sm:$0xff]
        %v891 = vld [vmem:[%s268 + $0x1120] sm:$0xff]
        %v892 = vld [vmem:[%s268 + $0x1128] sm:$0xff]
        %v893 = vld [vmem:[%s268 + $0x1130] sm:$0xff]
        %v894 = vld [vmem:[%s268 + $0x1138] sm:$0xff]
        %v895 = vld [vmem:[%s268 + $0x1140] sm:$0xff]
        %v896 = vld [vmem:[%s268 + $0x1148] sm:$0xff]
        %v897 = vld [vmem:[%s268 + $0x1150] sm:$0xff]
        %v898 = vld [vmem:[%s268 + $0x1158] sm:$0xff]
        %v899 = vld [vmem:[%s268 + $0x1160] sm:$0xff]
        %v900 = vld [vmem:[%s268 + $0x1168] sm:$0xff]
        %v901 = vld [vmem:[%s268 + $0x1170] sm:$0xff]
        %v902 = vld [vmem:[%s268 + $0x1178] sm:$0xff]
        %v903 = vld [vmem:[%s268 + $0x1180] sm:$0xff]
        %v904 = vld [vmem:[%s268 + $0x1188] sm:$0xff]
        %v905 = vld [vmem:[%s268 + $0x1190] sm:$0xff]
        %v906 = vld [vmem:[%s268 + $0x1198] sm:$0xff]
        %v907 = vld [vmem:[%s268 + $0x11a0] sm:$0xff]
        %v908 = vld [vmem:[%s268 + $0x11a8] sm:$0xff]
        %v909 = vld [vmem:[%s268 + $0x11b0] sm:$0xff]
        %v910 = vld [vmem:[%s268 + $0x11b8] sm:$0xff]
        %v911 = vld [vmem:[%s268 + $0x11c0] sm:$0xff]
        %v912 = vld [vmem:[%s268 + $0x11c8] sm:$0xff]
        %v913 = vld [vmem:[%s268 + $0x11d0] sm:$0xff]
        %v914 = vld [vmem:[%s268 + $0x11d8] sm:$0xff]
        %v915 = vld [vmem:[%s268 + $0x11e0] sm:$0xff]
        %v916 = vld [vmem:[%s268 + $0x11e8] sm:$0xff]
        %v917 = vld [vmem:[%s268 + $0x11f0] sm:$0xff]
        %v918 = vld [vmem:[%s268 + $0x11f8] sm:$0xff]
        %v919 = vld [vmem:[%s268 + $0x1200] sm:$0xff]
        %v920 = vld [vmem:[%s268 + $0x1208] sm:$0xff]
        %v921 = vld [vmem:[%s268 + $0x1210] sm:$0xff]
        %v922 = vld [vmem:[%s268 + $0x1218] sm:$0xff]
        %v923 = vld [vmem:[%s268 + $0x1220] sm:$0xff]
        %v924 = vld [vmem:[%s268 + $0x1228] sm:$0xff]
        %v925 = vld [vmem:[%s268 + $0x1230] sm:$0xff]
        %v926 = vld [vmem:[%s268 + $0x1238] sm:$0xff]
        %v927 = vld [vmem:[%s268 + $0x1240] sm:$0xff]
        %v928 = vld [vmem:[%s268 + $0x1248] sm:$0xff]
        %v929 = vld [vmem:[%s268 + $0x1250] sm:$0xff]
        %v930 = vld [vmem:[%s268 + $0x1258] sm:$0xff]
        %v931 = vld [vmem:[%s268 + $0x1260] sm:$0xff]
        %v932 = vld [vmem:[%s268 + $0x1268] sm:$0xff]
        %v933 = vld [vmem:[%s268 + $0x1270] sm:$0xff]
        %v934 = vld [vmem:[%s268 + $0x1278] sm:$0xff]
        %v935 = vld [vmem:[%s268 + $0x1280] sm:$0xff]
        %v936 = vld [vmem:[%s268 + $0x1288] sm:$0xff]
        %v937 = vld [vmem:[%s268 + $0x1290] sm:$0xff]
        %v938 = vld [vmem:[%s268 + $0x1298] sm:$0xff]
        %v939 = vld [vmem:[%s268 + $0x12a0] sm:$0xff]
        %v940 = vld [vmem:[%s268 + $0x12a8] sm:$0xff]
        %v941 = vld [vmem:[%s268 + $0x12b0] sm:$0xff]
        %v942 = vld [vmem:[%s268 + $0x12b8] sm:$0xff]
        %v943 = vld [vmem:[%s268 + $0x12c0] sm:$0xff]
        %v944 = vld [vmem:[%s268 + $0x12c8] sm:$0xff]
        %v945 = vld [vmem:[%s268 + $0x12d0] sm:$0xff]
        %v946 = vld [vmem:[%s268 + $0x12d8] sm:$0xff]
        %v947 = vld [vmem:[%s268 + $0x12e0] sm:$0xff]
        %v948 = vld [vmem:[%s268 + $0x12e8] sm:$0xff]
        %v949 = vld [vmem:[%s268 + $0x12f0] sm:$0xff]
        %v950 = vld [vmem:[%s268 + $0x12f8] sm:$0xff]
        %v951 = vld [vmem:[%s268 + $0x1300] sm:$0xff]
        %v952 = vld [vmem:[%s268 + $0x1308] sm:$0xff]
        %v953 = vld [vmem:[%s268 + $0x1310] sm:$0xff]
        %v954 = vld [vmem:[%s268 + $0x1318] sm:$0xff]
        %v955 = vld [vmem:[%s268 + $0x1320] sm:$0xff]
        %v956 = vld [vmem:[%s268 + $0x1328] sm:$0xff]
        %v957 = vld [vmem:[%s268 + $0x1330] sm:$0xff]
        %v958 = vld [vmem:[%s268 + $0x1338] sm:$0xff]
        %v959 = vld [vmem:[%s268 + $0x1340] sm:$0xff]
        %v960 = vld [vmem:[%s268 + $0x1348] sm:$0xff]
        %v961 = vld [vmem:[%s268 + $0x1350] sm:$0xff]
        %v962 = vld [vmem:[%s268 + $0x1358] sm:$0xff]
        %v963 = vld [vmem:[%s268 + $0x1360] sm:$0xff]
        %v964 = vld [vmem:[%s268 + $0x1368] sm:$0xff]
        %v965 = vld [vmem:[%s268 + $0x1370] sm:$0xff]
        %v966 = vld [vmem:[%s268 + $0x1378] sm:$0xff]
        %v967 = vld [vmem:[%s268 + $0x1380] sm:$0xff]
        %v968 = vld [vmem:[%s268 + $0x1388] sm:$0xff]
        %v969 = vld [vmem:[%s268 + $0x1390] sm:$0xff]
        %v970 = vld [vmem:[%s268 + $0x1398] sm:$0xff]
        %v971 = vld [vmem:[%s268 + $0x13a0] sm:$0xff]
        %v972 = vld [vmem:[%s268 + $0x13a8] sm:$0xff]
        %v973 = vld [vmem:[%s268 + $0x13b0] sm:$0xff]
        %v974 = vld [vmem:[%s268 + $0x13b8] sm:$0xff]
        %v975 = vld [vmem:[%s268 + $0x13c0] sm:$0xff]
        %v976 = vld [vmem:[%s268 + $0x13c8] sm:$0xff]
        %v977 = vld [vmem:[%s268 + $0x13d0] sm:$0xff]
        %v978 = vld [vmem:[%s268 + $0x13d8] sm:$0xff]
        %v979 = vld [vmem:[%s268 + $0x13e0] sm:$0xff]
        %v980 = vld [vmem:[%s268 + $0x13e8] sm:$0xff]
        %v981 = vld [vmem:[%s268 + $0x13f0] sm:$0xff]
        %v982 = vld [vmem:[%s268 + $0x13f8] sm:$0xff]
        %v983 = vld [vmem:[%s268 + $0x1400] sm:$0xff]
        %v984 = vld [vmem:[%s268 + $0x1408] sm:$0xff]
        %v985 = vld [vmem:[%s268 + $0x1410] sm:$0xff]
        %v986 = vld [vmem:[%s268 + $0x1418] sm:$0xff]
        %v987 = vld [vmem:[%s268 + $0x1420] sm:$0xff]
        %v988 = vld [vmem:[%s268 + $0x1428] sm:$0xff]
        %v989 = vld [vmem:[%s268 + $0x1430] sm:$0xff]
        %v990 = vld [vmem:[%s268 + $0x1438] sm:$0xff]
        %v991 = vld [vmem:[%s268 + $0x1440] sm:$0xff]
        %v992 = vld [vmem:[%s268 + $0x1448] sm:$0xff]
        %v993 = vld [vmem:[%s268 + $0x1450] sm:$0xff]
        %v994 = vld [vmem:[%s268 + $0x1458] sm:$0xff]
        %v995 = vld [vmem:[%s268 + $0x1460] sm:$0xff]
        %v996 = vld [vmem:[%s268 + $0x1468] sm:$0xff]
        %v997 = vld [vmem:[%s268 + $0x1470] sm:$0xff]
        %v998 = vld [vmem:[%s268 + $0x1478] sm:$0xff]
        %v999 = vld [vmem:[%s268 + $0x1480] sm:$0xff]
        %v1000 = vld [vmem:[%s268 + $0x1488] sm:$0xff]
        %v1001 = vld [vmem:[%s268 + $0x1490] sm:$0xff]
        %v1002 = vld [vmem:[%s268 + $0x1498] sm:$0xff]
        %v1003 = vld [vmem:[%s268 + $0x14a0] sm:$0xff]
        %v1004 = vld [vmem:[%s268 + $0x14a8] sm:$0xff]
        %v1005 = vld [vmem:[%s268 + $0x14b0] sm:$0xff]
        %v1006 = vld [vmem:[%s268 + $0x14b8] sm:$0xff]
        %v1007 = vld [vmem:[%s268 + $0x14c0] sm:$0xff]
        %v1008 = vld [vmem:[%s268 + $0x14c8] sm:$0xff]
        %v1009 = vld [vmem:[%s268 + $0x14d0] sm:$0xff]
        %v1010 = vld [vmem:[%s268 + $0x14d8] sm:$0xff]
        %v1011 = vld [vmem:[%s268 + $0x14e0] sm:$0xff]
        %v1012 = vld [vmem:[%s268 + $0x14e8] sm:$0xff]
        %v1013 = vld [vmem:[%s268 + $0x14f0] sm:$0xff]
        %v1014 = vld [vmem:[%s268 + $0x14f8] sm:$0xff]
        %v1015 = vld [vmem:[%s268 + $0x1500] sm:$0xff]
        %v1016 = vld [vmem:[%s268 + $0x1508] sm:$0xff]
        %v1017 = vld [vmem:[%s268 + $0x1510] sm:$0xff]
        %v1018 = vld [vmem:[%s268 + $0x1518] sm:$0xff]
        %v1019 = vld [vmem:[%s268 + $0x1520] sm:$0xff]
        %v1020 = vld [vmem:[%s268 + $0x1528] sm:$0xff]
        %v1021 = vld [vmem:[%s268 + $0x1530] sm:$0xff]
        %v1022 = vld [vmem:[%s268 + $0x1538] sm:$0xff]
        %v1023 = vld [vmem:[%s268 + $0x1540] sm:$0xff]
        %v1024 = vld [vmem:[%s268 + $0x1548] sm:$0xff]
        %v1025 = vld [vmem:[%s268 + $0x1550] sm:$0xff]
        %v1026 = vld [vmem:[%s268 + $0x1558] sm:$0xff]
        %v1027 = vld [vmem:[%s268 + $0x1560] sm:$0xff]
        %v1028 = vld [vmem:[%s268 + $0x1568] sm:$0xff]
        %v1029 = vld [vmem:[%s268 + $0x1570] sm:$0xff]
        %v1030 = vld [vmem:[%s268 + $0x1578] sm:$0xff]
        %v1031 = vld [vmem:[%s268 + $0x1580] sm:$0xff]
        %v1032 = vld [vmem:[%s268 + $0x1588] sm:$0xff]
        %v1033 = vld [vmem:[%s268 + $0x1590] sm:$0xff]
        %v1034 = vld [vmem:[%s268 + $0x1598] sm:$0xff]
        %v1035 = vld [vmem:[%s268 + $0x15a0] sm:$0xff]
        %v1036 = vld [vmem:[%s268 + $0x15a8] sm:$0xff]
        %v1037 = vld [vmem:[%s268 + $0x15b0] sm:$0xff]
        %v1038 = vld [vmem:[%s268 + $0x15b8] sm:$0xff]
        %v1039 = vld [vmem:[%s268 + $0x15c0] sm:$0xff]
        %v1040 = vld [vmem:[%s268 + $0x15c8] sm:$0xff]
        %v1041 = vld [vmem:[%s268 + $0x15d0] sm:$0xff]
        %v1042 = vld [vmem:[%s268 + $0x15d8] sm:$0xff]
        %v1043 = vld [vmem:[%s268 + $0x15e0] sm:$0xff]
        %v1044 = vld [vmem:[%s268 + $0x15e8] sm:$0xff]
        %v1045 = vld [vmem:[%s268 + $0x15f0] sm:$0xff]
        %v1046 = vld [vmem:[%s268 + $0x15f8] sm:$0xff]
        %v1047 = vld [vmem:[%s268 + $0x1600] sm:$0xff]
        %v1048 = vld [vmem:[%s268 + $0x1608] sm:$0xff]
        %v1049 = vld [vmem:[%s268 + $0x1610] sm:$0xff]
        %v1050 = vld [vmem:[%s268 + $0x1618] sm:$0xff]
        %v1051 = vld [vmem:[%s268 + $0x1620] sm:$0xff]
        %v1052 = vld [vmem:[%s268 + $0x1628] sm:$0xff]
        %v1053 = vld [vmem:[%s268 + $0x1630] sm:$0xff]
        %v1054 = vld [vmem:[%s268 + $0x1638] sm:$0xff]
        %v1055 = vld [vmem:[%s268 + $0x1640] sm:$0xff]
        %v1056 = vld [vmem:[%s268 + $0x1648] sm:$0xff]
        %v1057 = vld [vmem:[%s268 + $0x1650] sm:$0xff]
        %v1058 = vld [vmem:[%s268 + $0x1658] sm:$0xff]
        %v1059 = vld [vmem:[%s268 + $0x1660] sm:$0xff]
        %v1060 = vld [vmem:[%s268 + $0x1668] sm:$0xff]
        %v1061 = vld [vmem:[%s268 + $0x1670] sm:$0xff]
        %v1062 = vld [vmem:[%s268 + $0x1678] sm:$0xff]
        %v1063 = vld [vmem:[%s268 + $0x1680] sm:$0xff]
        %v1064 = vld [vmem:[%s268 + $0x1688] sm:$0xff]
        %v1065 = vld [vmem:[%s268 + $0x1690] sm:$0xff]
        %v1066 = vld [vmem:[%s268 + $0x1698] sm:$0xff]
        %v1067 = vld [vmem:[%s268 + $0x16a0] sm:$0xff]
        %v1068 = vld [vmem:[%s268 + $0x16a8] sm:$0xff]
        %v1069 = vld [vmem:[%s268 + $0x16b0] sm:$0xff]
        %v1070 = vld [vmem:[%s268 + $0x16b8] sm:$0xff]
        %v1071 = vld [vmem:[%s268 + $0x16c0] sm:$0xff]
        %v1072 = vld [vmem:[%s268 + $0x16c8] sm:$0xff]
        %v1073 = vld [vmem:[%s268 + $0x16d0] sm:$0xff]
        %v1074 = vld [vmem:[%s268 + $0x16d8] sm:$0xff]
        %v1075 = vld [vmem:[%s268 + $0x16e0] sm:$0xff]
        %v1076 = vld [vmem:[%s268 + $0x16e8] sm:$0xff]
        %v1077 = vld [vmem:[%s268 + $0x16f0] sm:$0xff]
        %v1078 = vld [vmem:[%s268 + $0x16f8] sm:$0xff]
        %v1079 = vld [vmem:[%s268 + $0x1700] sm:$0xff]
        %v1080 = vld [vmem:[%s268 + $0x1708] sm:$0xff]
        %v1081 = vld [vmem:[%s268 + $0x1710] sm:$0xff]
        %v1082 = vld [vmem:[%s268 + $0x1718] sm:$0xff]
        %v1083 = vld [vmem:[%s268 + $0x1720] sm:$0xff]
        %v1084 = vld [vmem:[%s268 + $0x1728] sm:$0xff]
        %v1085 = vld [vmem:[%s268 + $0x1730] sm:$0xff]
        %v1086 = vld [vmem:[%s268 + $0x1738] sm:$0xff]
        %v1087 = vld [vmem:[%s268 + $0x1740] sm:$0xff]
        %v1088 = vld [vmem:[%s268 + $0x1748] sm:$0xff]
        %v1089 = vld [vmem:[%s268 + $0x1750] sm:$0xff]
        %v1090 = vld [vmem:[%s268 + $0x1758] sm:$0xff]
        %v1091 = vld [vmem:[%s268 + $0x1760] sm:$0xff]
        %v1092 = vld [vmem:[%s268 + $0x1768] sm:$0xff]
        %v1093 = vld [vmem:[%s268 + $0x1770] sm:$0xff]
        %v1094 = vld [vmem:[%s268 + $0x1778] sm:$0xff]
        %v1095 = vld [vmem:[%s268 + $0x1780] sm:$0xff]
        %v1096 = vld [vmem:[%s268 + $0x1788] sm:$0xff]
        %v1097 = vld [vmem:[%s268 + $0x1790] sm:$0xff]
        %v1098 = vld [vmem:[%s268 + $0x1798] sm:$0xff]
        %v1099 = vld [vmem:[%s268 + $0x17a0] sm:$0xff]
        %v1100 = vld [vmem:[%s268 + $0x17a8] sm:$0xff]
        %v1101 = vld [vmem:[%s268 + $0x17b0] sm:$0xff]
        %v1102 = vld [vmem:[%s268 + $0x17b8] sm:$0xff]
        %v1103 = vld [vmem:[%s268 + $0x17c0] sm:$0xff]
        %v1104 = vld [vmem:[%s268 + $0x17c8] sm:$0xff]
        %v1105 = vld [vmem:[%s268 + $0x17d0] sm:$0xff]
        %v1106 = vld [vmem:[%s268 + $0x17d8] sm:$0xff]
        %v1107 = vld [vmem:[%s268 + $0x17e0] sm:$0xff]
        %v1108 = vld [vmem:[%s268 + $0x17e8] sm:$0xff]
        %v1109 = vld [vmem:[%s268 + $0x17f0] sm:$0xff]
        %v1110 = vld [vmem:[%s268 + $0x17f8] sm:$0xff]
        %v1111 = vld [vmem:[%s268 + $0x1800] sm:$0xff]
        %v1112 = vld [vmem:[%s268 + $0x1808] sm:$0xff]
        %v1113 = vld [vmem:[%s268 + $0x1810] sm:$0xff]
        %v1114 = vld [vmem:[%s268 + $0x1818] sm:$0xff]
        %v1115 = vld [vmem:[%s268 + $0x1820] sm:$0xff]
        %v1116 = vld [vmem:[%s268 + $0x1828] sm:$0xff]
        %v1117 = vld [vmem:[%s268 + $0x1830] sm:$0xff]
        %v1118 = vld [vmem:[%s268 + $0x1838] sm:$0xff]
        %v1119 = vld [vmem:[%s268 + $0x1840] sm:$0xff]
        %v1120 = vld [vmem:[%s268 + $0x1848] sm:$0xff]
        %v1121 = vld [vmem:[%s268 + $0x1850] sm:$0xff]
        %v1122 = vld [vmem:[%s268 + $0x1858] sm:$0xff]
        %v1123 = vld [vmem:[%s268 + $0x1860] sm:$0xff]
        %v1124 = vld [vmem:[%s268 + $0x1868] sm:$0xff]
        %v1125 = vld [vmem:[%s268 + $0x1870] sm:$0xff]
        %v1126 = vld [vmem:[%s268 + $0x1878] sm:$0xff]
        %v1127 = vld [vmem:[%s268 + $0x1880] sm:$0xff]
        %v1128 = vld [vmem:[%s268 + $0x1888] sm:$0xff]
        %v1129 = vld [vmem:[%s268 + $0x1890] sm:$0xff]
        %v1130 = vld [vmem:[%s268 + $0x1898] sm:$0xff]
        %v1131 = vld [vmem:[%s268 + $0x18a0] sm:$0xff]
        %v1132 = vld [vmem:[%s268 + $0x18a8] sm:$0xff]
        %v1133 = vld [vmem:[%s268 + $0x18b0] sm:$0xff]
        %v1134 = vld [vmem:[%s268 + $0x18b8] sm:$0xff]
        %v1135 = vld [vmem:[%s268 + $0x18c0] sm:$0xff]
        %v1136 = vld [vmem:[%s268 + $0x18c8] sm:$0xff]
        %v1137 = vld [vmem:[%s268 + $0x18d0] sm:$0xff]
        %v1138 = vld [vmem:[%s268 + $0x18d8] sm:$0xff]
        %v1139 = vld [vmem:[%s268 + $0x18e0] sm:$0xff]
        %v1140 = vld [vmem:[%s268 + $0x18e8] sm:$0xff]
        %v1141 = vld [vmem:[%s268 + $0x18f0] sm:$0xff]
        %v1142 = vld [vmem:[%s268 + $0x18f8] sm:$0xff]
        %v1143 = vld [vmem:[%s268 + $0x1900] sm:$0xff]
        %v1144 = vld [vmem:[%s268 + $0x1908] sm:$0xff]
        %v1145 = vld [vmem:[%s268 + $0x1910] sm:$0xff]
        %v1146 = vld [vmem:[%s268 + $0x1918] sm:$0xff]
        %v1147 = vld [vmem:[%s268 + $0x1920] sm:$0xff]
        %v1148 = vld [vmem:[%s268 + $0x1928] sm:$0xff]
        %v1149 = vld [vmem:[%s268 + $0x1930] sm:$0xff]
        %v1150 = vld [vmem:[%s268 + $0x1938] sm:$0xff]
        %v1151 = vld [vmem:[%s268 + $0x1940] sm:$0xff]
        %v1152 = vld [vmem:[%s268 + $0x1948] sm:$0xff]
        %v1153 = vld [vmem:[%s268 + $0x1950] sm:$0xff]
        %v1154 = vld [vmem:[%s268 + $0x1958] sm:$0xff]
        %v1155 = vld [vmem:[%s268 + $0x1960] sm:$0xff]
        %v1156 = vld [vmem:[%s268 + $0x1968] sm:$0xff]
        %v1157 = vld [vmem:[%s268 + $0x1970] sm:$0xff]
        %v1158 = vld [vmem:[%s268 + $0x1978] sm:$0xff]
        %v1159 = vld [vmem:[%s268 + $0x1980] sm:$0xff]
        %v1160 = vld [vmem:[%s268 + $0x1988] sm:$0xff]
        %v1161 = vld [vmem:[%s268 + $0x1990] sm:$0xff]
        %v1162 = vld [vmem:[%s268 + $0x1998] sm:$0xff]
        %v1163 = vld [vmem:[%s268 + $0x19a0] sm:$0xff]
        %v1164 = vld [vmem:[%s268 + $0x19a8] sm:$0xff]
        %v1165 = vld [vmem:[%s268 + $0x19b0] sm:$0xff]
        %v1166 = vld [vmem:[%s268 + $0x19b8] sm:$0xff]
        %v1167 = vld [vmem:[%s268 + $0x19c0] sm:$0xff]
        %v1168 = vld [vmem:[%s268 + $0x19c8] sm:$0xff]
        %v1169 = vld [vmem:[%s268 + $0x19d0] sm:$0xff]
        %v1170 = vld [vmem:[%s268 + $0x19d8] sm:$0xff]
        %v1171 = vld [vmem:[%s268 + $0x19e0] sm:$0xff]
        %v1172 = vld [vmem:[%s268 + $0x19e8] sm:$0xff]
        %v1173 = vld [vmem:[%s268 + $0x19f0] sm:$0xff]
        %v1174 = vld [vmem:[%s268 + $0x19f8] sm:$0xff]
        %v1175 = vld [vmem:[%s268 + $0x1a00] sm:$0xff]
        %v1176 = vld [vmem:[%s268 + $0x1a08] sm:$0xff]
        %v1177 = vld [vmem:[%s268 + $0x1a10] sm:$0xff]
        %v1178 = vld [vmem:[%s268 + $0x1a18] sm:$0xff]
        %v1179 = vld [vmem:[%s268 + $0x1a20] sm:$0xff]
        %v1180 = vld [vmem:[%s268 + $0x1a28] sm:$0xff]
        %v1181 = vld [vmem:[%s268 + $0x1a30] sm:$0xff]
        %v1182 = vld [vmem:[%s268 + $0x1a38] sm:$0xff]
        %v1183 = vld [vmem:[%s268 + $0x1a40] sm:$0xff]
        %v1184 = vld [vmem:[%s268 + $0x1a48] sm:$0xff]
        %v1185 = vld [vmem:[%s268 + $0x1a50] sm:$0xff]
        %v1186 = vld [vmem:[%s268 + $0x1a58] sm:$0xff]
        %v1187 = vld [vmem:[%s268 + $0x1a60] sm:$0xff]
        %v1188 = vld [vmem:[%s268 + $0x1a68] sm:$0xff]
        %v1189 = vld [vmem:[%s268 + $0x1a70] sm:$0xff]
        %v1190 = vld [vmem:[%s268 + $0x1a78] sm:$0xff]
        %v1191 = vld [vmem:[%s268 + $0x1a80] sm:$0xff]
        %v1192 = vld [vmem:[%s268 + $0x1a88] sm:$0xff]
        %v1193 = vld [vmem:[%s268 + $0x1a90] sm:$0xff]
        %v1194 = vld [vmem:[%s268 + $0x1a98] sm:$0xff]
        %v1195 = vld [vmem:[%s268 + $0x1aa0] sm:$0xff]
        %v1196 = vld [vmem:[%s268 + $0x1aa8] sm:$0xff]
        %v1197 = vld [vmem:[%s268 + $0x1ab0] sm:$0xff]
        %v1198 = vld [vmem:[%s268 + $0x1ab8] sm:$0xff]
        %v1199 = vld [vmem:[%s268 + $0x1ac0] sm:$0xff]
        %v1200 = vld [vmem:[%s268 + $0x1ac8] sm:$0xff]
        %v1201 = vld [vmem:[%s268 + $0x1ad0] sm:$0xff]
        %v1202 = vld [vmem:[%s268 + $0x1ad8] sm:$0xff]
        %v1203 = vld [vmem:[%s268 + $0x1ae0] sm:$0xff]
        %v1204 = vld [vmem:[%s268 + $0x1ae8] sm:$0xff]
        %v1205 = vld [vmem:[%s268 + $0x1af0] sm:$0xff]
        %v1206 = vld [vmem:[%s268 + $0x1af8] sm:$0xff]
        %v1207 = vld [vmem:[%s268 + $0x1b00] sm:$0xff]
        %v1208 = vld [vmem:[%s268 + $0x1b08] sm:$0xff]
        %v1209 = vld [vmem:[%s268 + $0x1b10] sm:$0xff]
        %v1210 = vld [vmem:[%s268 + $0x1b18] sm:$0xff]
        %v1211 = vld [vmem:[%s268 + $0x1b20] sm:$0xff]
        %v1212 = vld [vmem:[%s268 + $0x1b28] sm:$0xff]
        %v1213 = vld [vmem:[%s268 + $0x1b30] sm:$0xff]
        %v1214 = vld [vmem:[%s268 + $0x1b38] sm:$0xff]
        %v1215 = vld [vmem:[%s268 + $0x1b40] sm:$0xff]
        %v1216 = vld [vmem:[%s268 + $0x1b48] sm:$0xff]
        %v1217 = vld [vmem:[%s268 + $0x1b50] sm:$0xff]
        %v1218 = vld [vmem:[%s268 + $0x1b58] sm:$0xff]
        %v1219 = vld [vmem:[%s268 + $0x1b60] sm:$0xff]
        %v1220 = vld [vmem:[%s268 + $0x1b68] sm:$0xff]
        %v1221 = vld [vmem:[%s268 + $0x1b70] sm:$0xff]
        %v1222 = vld [vmem:[%s268 + $0x1b78] sm:$0xff]
        %v1223 = vld [vmem:[%s268 + $0x1b80] sm:$0xff]
        %v1224 = vld [vmem:[%s268 + $0x1b88] sm:$0xff]
        %v1225 = vld [vmem:[%s268 + $0x1b90] sm:$0xff]
        %v1226 = vld [vmem:[%s268 + $0x1b98] sm:$0xff]
        %v1227 = vld [vmem:[%s268 + $0x1ba0] sm:$0xff]
        %v1228 = vld [vmem:[%s268 + $0x1ba8] sm:$0xff]
        %v1229 = vld [vmem:[%s268 + $0x1bb0] sm:$0xff]
        %v1230 = vld [vmem:[%s268 + $0x1bb8] sm:$0xff]
        %v1231 = vld [vmem:[%s268 + $0x1bc0] sm:$0xff]
        %v1232 = vld [vmem:[%s268 + $0x1bc8] sm:$0xff]
        %v1233 = vld [vmem:[%s268 + $0x1bd0] sm:$0xff]
        %v1234 = vld [vmem:[%s268 + $0x1bd8] sm:$0xff]
        %v1235 = vld [vmem:[%s268 + $0x1be0] sm:$0xff]
        %v1236 = vld [vmem:[%s268 + $0x1be8] sm:$0xff]
        %v1237 = vld [vmem:[%s268 + $0x1bf0] sm:$0xff]
        %v1238 = vld [vmem:[%s268 + $0x1bf8] sm:$0xff]
        %v1239 = vld [vmem:[%s268 + $0x1c00] sm:$0xff]
        %v1240 = vld [vmem:[%s268 + $0x1c08] sm:$0xff]
        %v1241 = vld [vmem:[%s268 + $0x1c10] sm:$0xff]
        %v1242 = vld [vmem:[%s268 + $0x1c18] sm:$0xff]
        %v1243 = vld [vmem:[%s268 + $0x1c20] sm:$0xff]
        %v1244 = vld [vmem:[%s268 + $0x1c28] sm:$0xff]
        %v1245 = vld [vmem:[%s268 + $0x1c30] sm:$0xff]
        %v1246 = vld [vmem:[%s268 + $0x1c38] sm:$0xff]
        %v1247 = vld [vmem:[%s268 + $0x1c40] sm:$0xff]
        %v1248 = vld [vmem:[%s268 + $0x1c48] sm:$0xff]
        %v1249 = vld [vmem:[%s268 + $0x1c50] sm:$0xff]
        %v1250 = vld [vmem:[%s268 + $0x1c58] sm:$0xff]
        %v1251 = vld [vmem:[%s268 + $0x1c60] sm:$0xff]
        %v1252 = vld [vmem:[%s268 + $0x1c68] sm:$0xff]
        %v1253 = vld [vmem:[%s268 + $0x1c70] sm:$0xff]
        %v1254 = vld [vmem:[%s268 + $0x1c78] sm:$0xff]
        %v1255 = vld [vmem:[%s268 + $0x1c80] sm:$0xff]
        %v1256 = vld [vmem:[%s268 + $0x1c88] sm:$0xff]
        %v1257 = vld [vmem:[%s268 + $0x1c90] sm:$0xff]
        %v1258 = vld [vmem:[%s268 + $0x1c98] sm:$0xff]
        %v1259 = vld [vmem:[%s268 + $0x1ca0] sm:$0xff]
        %v1260 = vld [vmem:[%s268 + $0x1ca8] sm:$0xff]
        %v1261 = vld [vmem:[%s268 + $0x1cb0] sm:$0xff]
        %v1262 = vld [vmem:[%s268 + $0x1cb8] sm:$0xff]
        %v1263 = vld [vmem:[%s268 + $0x1cc0] sm:$0xff]
        %v1264 = vld [vmem:[%s268 + $0x1cc8] sm:$0xff]
        %v1265 = vld [vmem:[%s268 + $0x1cd0] sm:$0xff]
        %v1266 = vld [vmem:[%s268 + $0x1cd8] sm:$0xff]
        %v1267 = vld [vmem:[%s268 + $0x1ce0] sm:$0xff]
        %v1268 = vld [vmem:[%s268 + $0x1ce8] sm:$0xff]
        %v1269 = vld [vmem:[%s268 + $0x1cf0] sm:$0xff]
        %v1270 = vld [vmem:[%s268 + $0x1cf8] sm:$0xff]
        %v1271 = vld [vmem:[%s268 + $0x1d00] sm:$0xff]
        %v1272 = vld [vmem:[%s268 + $0x1d08] sm:$0xff]
        %v1273 = vld [vmem:[%s268 + $0x1d10] sm:$0xff]
        %v1274 = vld [vmem:[%s268 + $0x1d18] sm:$0xff]
        %v1275 = vld [vmem:[%s268 + $0x1d20] sm:$0xff]
        %v1276 = vld [vmem:[%s268 + $0x1d28] sm:$0xff]
        %v1277 = vld [vmem:[%s268 + $0x1d30] sm:$0xff]
        %v1278 = vld [vmem:[%s268 + $0x1d38] sm:$0xff]
        %v1279 = vld [vmem:[%s268 + $0x1d40] sm:$0xff]
        %v1280 = vld [vmem:[%s268 + $0x1d48] sm:$0xff]
        %v1281 = vld [vmem:[%s268 + $0x1d50] sm:$0xff]
        %v1282 = vld [vmem:[%s268 + $0x1d58] sm:$0xff]
        %v1283 = vld [vmem:[%s268 + $0x1d60] sm:$0xff]
        %v1284 = vld [vmem:[%s268 + $0x1d68] sm:$0xff]
        %v1285 = vld [vmem:[%s268 + $0x1d70] sm:$0xff]
        %v1286 = vld [vmem:[%s268 + $0x1d78] sm:$0xff]
        %v1287 = vld [vmem:[%s268 + $0x1d80] sm:$0xff]
        %v1288 = vld [vmem:[%s268 + $0x1d88] sm:$0xff]
        %v1289 = vld [vmem:[%s268 + $0x1d90] sm:$0xff]
        %v1290 = vld [vmem:[%s268 + $0x1d98] sm:$0xff]
        %v1291 = vld [vmem:[%s268 + $0x1da0] sm:$0xff]
        %v1292 = vld [vmem:[%s268 + $0x1da8] sm:$0xff]
        %v1293 = vld [vmem:[%s268 + $0x1db0] sm:$0xff]
        %v1294 = vld [vmem:[%s268 + $0x1db8] sm:$0xff]
        %v1295 = vld [vmem:[%s268 + $0x1dc0] sm:$0xff]
        %v1296 = vld [vmem:[%s268 + $0x1dc8] sm:$0xff]
        %v1297 = vld [vmem:[%s268 + $0x1dd0] sm:$0xff]
        %v1298 = vld [vmem:[%s268 + $0x1dd8] sm:$0xff]
        %v1299 = vld [vmem:[%s268 + $0x1de0] sm:$0xff]
        %v1300 = vld [vmem:[%s268 + $0x1de8] sm:$0xff]
        %v1301 = vld [vmem:[%s268 + $0x1df0] sm:$0xff]
        %v1302 = vld [vmem:[%s268 + $0x1df8] sm:$0xff]
        %v1303 = vld [vmem:[%s268 + $0x1e00] sm:$0xff]
        %v1304 = vld [vmem:[%s268 + $0x1e08] sm:$0xff]
        %v1305 = vld [vmem:[%s268 + $0x1e10] sm:$0xff]
        %v1306 = vld [vmem:[%s268 + $0x1e18] sm:$0xff]
        %v1307 = vld [vmem:[%s268 + $0x1e20] sm:$0xff]
        %v1308 = vld [vmem:[%s268 + $0x1e28] sm:$0xff]
        %v1309 = vld [vmem:[%s268 + $0x1e30] sm:$0xff]
        %v1310 = vld [vmem:[%s268 + $0x1e38] sm:$0xff]
        %v1311 = vld [vmem:[%s268 + $0x1e40] sm:$0xff]
        %v1312 = vld [vmem:[%s268 + $0x1e48] sm:$0xff]
        %v1313 = vld [vmem:[%s268 + $0x1e50] sm:$0xff]
        %v1314 = vld [vmem:[%s268 + $0x1e58] sm:$0xff]
        %v1315 = vld [vmem:[%s268 + $0x1e60] sm:$0xff]
        %v1316 = vld [vmem:[%s268 + $0x1e68] sm:$0xff]
        %v1317 = vld [vmem:[%s268 + $0x1e70] sm:$0xff]
        %v1318 = vld [vmem:[%s268 + $0x1e78] sm:$0xff]
        %v1319 = vld [vmem:[%s268 + $0x1e80] sm:$0xff]
        %v1320 = vld [vmem:[%s268 + $0x1e88] sm:$0xff]
        %v1321 = vld [vmem:[%s268 + $0x1e90] sm:$0xff]
        %v1322 = vld [vmem:[%s268 + $0x1e98] sm:$0xff]
        %v1323 = vld [vmem:[%s268 + $0x1ea0] sm:$0xff]
        %v1324 = vld [vmem:[%s268 + $0x1ea8] sm:$0xff]
        %v1325 = vld [vmem:[%s268 + $0x1eb0] sm:$0xff]
        %v1326 = vld [vmem:[%s268 + $0x1eb8] sm:$0xff]
        %v1327 = vld [vmem:[%s268 + $0x1ec0] sm:$0xff]
        %v1328 = vld [vmem:[%s268 + $0x1ec8] sm:$0xff]
        %v1329 = vld [vmem:[%s268 + $0x1ed0] sm:$0xff]
        %v1330 = vld [vmem:[%s268 + $0x1ed8] sm:$0xff]
        %v1331 = vld [vmem:[%s268 + $0x1ee0] sm:$0xff]
        %v1332 = vld [vmem:[%s268 + $0x1ee8] sm:$0xff]
        %v1333 = vld [vmem:[%s268 + $0x1ef0] sm:$0xff]
        %v1334 = vld [vmem:[%s268 + $0x1ef8] sm:$0xff]
        %v1335 = vld [vmem:[%s268 + $0x1f00] sm:$0xff]
        %v1336 = vld [vmem:[%s268 + $0x1f08] sm:$0xff]
        %v1337 = vld [vmem:[%s268 + $0x1f10] sm:$0xff]
        %v1338 = vld [vmem:[%s268 + $0x1f18] sm:$0xff]
        %v1339 = vld [vmem:[%s268 + $0x1f20] sm:$0xff]
        %v1340 = vld [vmem:[%s268 + $0x1f28] sm:$0xff]
        %v1341 = vld [vmem:[%s268 + $0x1f30] sm:$0xff]
        %v1342 = vld [vmem:[%s268 + $0x1f38] sm:$0xff]
        %v1343 = vld [vmem:[%s268 + $0x1f40] sm:$0xff]
        %v1344 = vld [vmem:[%s268 + $0x1f48] sm:$0xff]
        %v1345 = vld [vmem:[%s268 + $0x1f50] sm:$0xff]
        %v1346 = vld [vmem:[%s268 + $0x1f58] sm:$0xff]
        %v1347 = vld [vmem:[%s268 + $0x1f60] sm:$0xff]
        %v1348 = vld [vmem:[%s268 + $0x1f68] sm:$0xff]
        %v1349 = vld [vmem:[%s268 + $0x1f70] sm:$0xff]
        %v1350 = vld [vmem:[%s268 + $0x1f78] sm:$0xff]
        %v1351 = vld [vmem:[%s268 + $0x1f80] sm:$0xff]
        %v1352 = vld [vmem:[%s268 + $0x1f88] sm:$0xff]
        %v1353 = vld [vmem:[%s268 + $0x1f90] sm:$0xff]
        %v1354 = vld [vmem:[%s268 + $0x1f98] sm:$0xff]
        %v1355 = vld [vmem:[%s268 + $0x1fa0] sm:$0xff]
        %v1356 = vld [vmem:[%s268 + $0x1fa8] sm:$0xff]
        %v1357 = vld [vmem:[%s268 + $0x1fb0] sm:$0xff]
        %v1358 = vld [vmem:[%s268 + $0x1fb8] sm:$0xff]
        %v1359 = vld [vmem:[%s268 + $0x1fc0] sm:$0xff]
        %v1360 = vld [vmem:[%s268 + $0x1fc8] sm:$0xff]
        %v1361 = vld [vmem:[%s268 + $0x1fd0] sm:$0xff]
        %v1362 = vld [vmem:[%s268 + $0x1fd8] sm:$0xff]
        %v1363 = vld [vmem:[%s268 + $0x1fe0] sm:$0xff]
        %v1364 = vld [vmem:[%s268 + $0x1fe8] sm:$0xff]
        %v1365 = vld [vmem:[%s268 + $0x1ff0] sm:$0xff]
        %v1366 = vld [vmem:[%s268 + $0x1ff8] sm:$0xff]
        %v1368 = vcombine.high %v338, %v338
        %v1370 = vunpack.c.l.s4 1966171168
        %v1371 = vunpack.c.0.s8 %v1370
        %v1372 = vlaneseq
        %v1373 = vshrl.u32 %v1372, 7
        %v1374 = vsub.s32 %v1371, %v1373
        %v1375 = vrot.slane %v338, %v1374
        %v1377 = vunpack.c.l.s4 1966171168
        %v1378 = vunpack.c.0.s8 %v1377
        %v1379 = vlaneseq
        %v1380 = vshrl.u32 %v1379, 7
        %v1381 = vsub.s32 %v1378, %v1380
        %v1382 = vrot.slane %v1368, %v1381
        %v1383 = vcombine.high %v1375, %v1375
        %v1384 = vcombine.high %v1382, %v1382
        %v1386 = vunpack.c.l.s4 1966171168
        %v1387 = vunpack.c.0.s8 %v1386
        %v1388 = vlaneseq
        %v1389 = vshrl.u32 %v1388, 7
        %v1390 = vsub.s32 %v1387, %v1389
        %v1391 = vrot.slane %v1375, %v1390
        %v1393 = vunpack.c.l.s4 1966171168
        %v1394 = vunpack.c.0.s8 %v1393
        %v1395 = vlaneseq
        %v1396 = vshrl.u32 %v1395, 7
        %v1397 = vsub.s32 %v1394, %v1396
        %v1398 = vrot.slane %v1382, %v1397
        %v1400 = vunpack.c.l.s4 1966171168
        %v1401 = vunpack.c.0.s8 %v1400
        %v1402 = vlaneseq
        %v1403 = vshrl.u32 %v1402, 7
        %v1404 = vsub.s32 %v1401, %v1403
        %v1405 = vrot.slane %v1383, %v1404
        %v1407 = vunpack.c.l.s4 1966171168
        %v1408 = vunpack.c.0.s8 %v1407
        %v1409 = vlaneseq
        %v1410 = vshrl.u32 %v1409, 7
        %v1411 = vsub.s32 %v1408, %v1410
        %v1412 = vrot.slane %v1384, %v1411
        %v1413 = vcombine.high %v1391, %v1391
        %v1414 = vcombine.high %v1398, %v1398
        %v1415 = vcombine.high %v1405, %v1405
        %v1416 = vcombine.high %v1412, %v1412
        %v2449 = vunpack.c.l.b16 %v343
        %v2450 = vunpack.c.h.b16 %v343
        %v2451 = vunpack.c.l.b16 %v344
        %v2452 = vunpack.c.h.b16 %v344
        %v2453 = vunpack.c.l.b16 %v345
        %v2454 = vunpack.c.h.b16 %v345
        %v2455 = vunpack.c.l.b16 %v346
        %v2456 = vunpack.c.h.b16 %v346
        %v2457 = vunpack.c.l.b16 %v347
        %v2458 = vunpack.c.h.b16 %v347
        %v2459 = vunpack.c.l.b16 %v348
        %v2460 = vunpack.c.h.b16 %v348
        %v2461 = vunpack.c.l.b16 %v349
        %v2462 = vunpack.c.h.b16 %v349
        %v2463 = vunpack.c.l.b16 %v350
        %v2464 = vunpack.c.h.b16 %v350
        %v2465 = vunpack.c.l.b16 %v351
        %v2466 = vunpack.c.h.b16 %v351
        %v2467 = vunpack.c.l.b16 %v352
        %v2468 = vunpack.c.h.b16 %v352
        %v2469 = vunpack.c.l.b16 %v353
        %v2470 = vunpack.c.h.b16 %v353
        %v2471 = vunpack.c.l.b16 %v354
        %v2472 = vunpack.c.h.b16 %v354
        %v2473 = vunpack.c.l.b16 %v355
        %v2474 = vunpack.c.h.b16 %v355
        %v2475 = vunpack.c.l.b16 %v356
        %v2476 = vunpack.c.h.b16 %v356
        %v2477 = vunpack.c.l.b16 %v357
        %v2478 = vunpack.c.h.b16 %v357
        %v2479 = vunpack.c.l.b16 %v358
        %v2480 = vunpack.c.h.b16 %v358
        %v2481 = vunpack.c.l.b16 %v359
        %v2482 = vunpack.c.h.b16 %v359
        %v2483 = vunpack.c.l.b16 %v360
        %v2484 = vunpack.c.h.b16 %v360
        %v2485 = vunpack.c.l.b16 %v361
        %v2486 = vunpack.c.h.b16 %v361
        %v2487 = vunpack.c.l.b16 %v362
        %v2488 = vunpack.c.h.b16 %v362
        %v2489 = vunpack.c.l.b16 %v363
        %v2490 = vunpack.c.h.b16 %v363
        %v2491 = vunpack.c.l.b16 %v364
        %v2492 = vunpack.c.h.b16 %v364
        %v2493 = vunpack.c.l.b16 %v365
        %v2494 = vunpack.c.h.b16 %v365
        %v2495 = vunpack.c.l.b16 %v366
        %v2496 = vunpack.c.h.b16 %v366
        %v2497 = vunpack.c.l.b16 %v367
        %v2498 = vunpack.c.h.b16 %v367
        %v2499 = vunpack.c.l.b16 %v368
        %v2500 = vunpack.c.h.b16 %v368
        %v2501 = vunpack.c.l.b16 %v369
        %v2502 = vunpack.c.h.b16 %v369
        %v2503 = vunpack.c.l.b16 %v370
        %v2504 = vunpack.c.h.b16 %v370
        %v2505 = vunpack.c.l.b16 %v371
        %v2506 = vunpack.c.h.b16 %v371
        %v2507 = vunpack.c.l.b16 %v372
        %v2508 = vunpack.c.h.b16 %v372
        %v2509 = vunpack.c.l.b16 %v373
        %v2510 = vunpack.c.h.b16 %v373
        %v2511 = vunpack.c.l.b16 %v374
        %v2512 = vunpack.c.h.b16 %v374
        %v2513 = vunpack.c.l.b16 %v375
        %v2514 = vunpack.c.h.b16 %v375
        %v2515 = vunpack.c.l.b16 %v376
        %v2516 = vunpack.c.h.b16 %v376
        %v2517 = vunpack.c.l.b16 %v377
        %v2518 = vunpack.c.h.b16 %v377
        %v2519 = vunpack.c.l.b16 %v378
        %v2520 = vunpack.c.h.b16 %v378
        %v2521 = vunpack.c.l.b16 %v379
        %v2522 = vunpack.c.h.b16 %v379
        %v2523 = vunpack.c.l.b16 %v380
        %v2524 = vunpack.c.h.b16 %v380
        %v2525 = vunpack.c.l.b16 %v381
        %v2526 = vunpack.c.h.b16 %v381
        %v2527 = vunpack.c.l.b16 %v382
        %v2528 = vunpack.c.h.b16 %v382
        %v2529 = vunpack.c.l.b16 %v383
        %v2530 = vunpack.c.h.b16 %v383
        %v2531 = vunpack.c.l.b16 %v384
        %v2532 = vunpack.c.h.b16 %v384
        %v2533 = vunpack.c.l.b16 %v385
        %v2534 = vunpack.c.h.b16 %v385
        %v2535 = vunpack.c.l.b16 %v386
        %v2536 = vunpack.c.h.b16 %v386
        %v2537 = vunpack.c.l.b16 %v387
        %v2538 = vunpack.c.h.b16 %v387
        %v2539 = vunpack.c.l.b16 %v388
        %v2540 = vunpack.c.h.b16 %v388
        %v2541 = vunpack.c.l.b16 %v389
        %v2542 = vunpack.c.h.b16 %v389
        %v2543 = vunpack.c.l.b16 %v390
        %v2544 = vunpack.c.h.b16 %v390
        %v2545 = vunpack.c.l.b16 %v391
        %v2546 = vunpack.c.h.b16 %v391
        %v2547 = vunpack.c.l.b16 %v392
        %v2548 = vunpack.c.h.b16 %v392
        %v2549 = vunpack.c.l.b16 %v393
        %v2550 = vunpack.c.h.b16 %v393
        %v2551 = vunpack.c.l.b16 %v394
        %v2552 = vunpack.c.h.b16 %v394
        %v2553 = vunpack.c.l.b16 %v395
        %v2554 = vunpack.c.h.b16 %v395
        %v2555 = vunpack.c.l.b16 %v396
        %v2556 = vunpack.c.h.b16 %v396
        %v2557 = vunpack.c.l.b16 %v397
        %v2558 = vunpack.c.h.b16 %v397
        %v2559 = vunpack.c.l.b16 %v398
        %v2560 = vunpack.c.h.b16 %v398
        %v2561 = vunpack.c.l.b16 %v399
        %v2562 = vunpack.c.h.b16 %v399
        %v2563 = vunpack.c.l.b16 %v400
        %v2564 = vunpack.c.h.b16 %v400
        %v2565 = vunpack.c.l.b16 %v401
        %v2566 = vunpack.c.h.b16 %v401
        %v2567 = vunpack.c.l.b16 %v402
        %v2568 = vunpack.c.h.b16 %v402
        %v2569 = vunpack.c.l.b16 %v403
        %v2570 = vunpack.c.h.b16 %v403
        %v2571 = vunpack.c.l.b16 %v404
        %v2572 = vunpack.c.h.b16 %v404
        %v2573 = vunpack.c.l.b16 %v405
        %v2574 = vunpack.c.h.b16 %v405
        %v2575 = vunpack.c.l.b16 %v406
        %v2576 = vunpack.c.h.b16 %v406
        %v2577 = vunpack.c.l.b16 %v407
        %v2578 = vunpack.c.h.b16 %v407
        %v2579 = vunpack.c.l.b16 %v408
        %v2580 = vunpack.c.h.b16 %v408
        %v2581 = vunpack.c.l.b16 %v409
        %v2582 = vunpack.c.h.b16 %v409
        %v2583 = vunpack.c.l.b16 %v410
        %v2584 = vunpack.c.h.b16 %v410
        %v2585 = vunpack.c.l.b16 %v411
        %v2586 = vunpack.c.h.b16 %v411
        %v2587 = vunpack.c.l.b16 %v412
        %v2588 = vunpack.c.h.b16 %v412
        %v2589 = vunpack.c.l.b16 %v413
        %v2590 = vunpack.c.h.b16 %v413
        %v2591 = vunpack.c.l.b16 %v414
        %v2592 = vunpack.c.h.b16 %v414
        %v2593 = vunpack.c.l.b16 %v415
        %v2594 = vunpack.c.h.b16 %v415
        %v2595 = vunpack.c.l.b16 %v416
        %v2596 = vunpack.c.h.b16 %v416
        %v2597 = vunpack.c.l.b16 %v417
        %v2598 = vunpack.c.h.b16 %v417
        %v2599 = vunpack.c.l.b16 %v418
        %v2600 = vunpack.c.h.b16 %v418
        %v2601 = vunpack.c.l.b16 %v419
        %v2602 = vunpack.c.h.b16 %v419
        %v2603 = vunpack.c.l.b16 %v420
        %v2604 = vunpack.c.h.b16 %v420
        %v2605 = vunpack.c.l.b16 %v421
        %v2606 = vunpack.c.h.b16 %v421
        %v2607 = vunpack.c.l.b16 %v422
        %v2608 = vunpack.c.h.b16 %v422
        %v2609 = vunpack.c.l.b16 %v423
        %v2610 = vunpack.c.h.b16 %v423
        %v2611 = vunpack.c.l.b16 %v424
        %v2612 = vunpack.c.h.b16 %v424
        %v2613 = vunpack.c.l.b16 %v425
        %v2614 = vunpack.c.h.b16 %v425
        %v2615 = vunpack.c.l.b16 %v426
        %v2616 = vunpack.c.h.b16 %v426
        %v2617 = vunpack.c.l.b16 %v427
        %v2618 = vunpack.c.h.b16 %v427
        %v2619 = vunpack.c.l.b16 %v428
        %v2620 = vunpack.c.h.b16 %v428
        %v2621 = vunpack.c.l.b16 %v429
        %v2622 = vunpack.c.h.b16 %v429
        %v2623 = vunpack.c.l.b16 %v430
        %v2624 = vunpack.c.h.b16 %v430
        %v2625 = vunpack.c.l.b16 %v431
        %v2626 = vunpack.c.h.b16 %v431
        %v2627 = vunpack.c.l.b16 %v432
        %v2628 = vunpack.c.h.b16 %v432
        %v2629 = vunpack.c.l.b16 %v433
        %v2630 = vunpack.c.h.b16 %v433
        %v2631 = vunpack.c.l.b16 %v434
        %v2632 = vunpack.c.h.b16 %v434
        %v2633 = vunpack.c.l.b16 %v435
        %v2634 = vunpack.c.h.b16 %v435
        %v2635 = vunpack.c.l.b16 %v436
        %v2636 = vunpack.c.h.b16 %v436
        %v2637 = vunpack.c.l.b16 %v437
        %v2638 = vunpack.c.h.b16 %v437
        %v2639 = vunpack.c.l.b16 %v438
        %v2640 = vunpack.c.h.b16 %v438
        %v2641 = vunpack.c.l.b16 %v439
        %v2642 = vunpack.c.h.b16 %v439
        %v2643 = vunpack.c.l.b16 %v440
        %v2644 = vunpack.c.h.b16 %v440
        %v2645 = vunpack.c.l.b16 %v441
        %v2646 = vunpack.c.h.b16 %v441
        %v2647 = vunpack.c.l.b16 %v442
        %v2648 = vunpack.c.h.b16 %v442
        %v2649 = vunpack.c.l.b16 %v443
        %v2650 = vunpack.c.h.b16 %v443
        %v2651 = vunpack.c.l.b16 %v444
        %v2652 = vunpack.c.h.b16 %v444
        %v2653 = vunpack.c.l.b16 %v445
        %v2654 = vunpack.c.h.b16 %v445
        %v2655 = vunpack.c.l.b16 %v446
        %v2656 = vunpack.c.h.b16 %v446
        %v2657 = vunpack.c.l.b16 %v447
        %v2658 = vunpack.c.h.b16 %v447
        %v2659 = vunpack.c.l.b16 %v448
        %v2660 = vunpack.c.h.b16 %v448
        %v2661 = vunpack.c.l.b16 %v449
        %v2662 = vunpack.c.h.b16 %v449
        %v2663 = vunpack.c.l.b16 %v450
        %v2664 = vunpack.c.h.b16 %v450
        %v2665 = vunpack.c.l.b16 %v451
        %v2666 = vunpack.c.h.b16 %v451
        %v2667 = vunpack.c.l.b16 %v452
        %v2668 = vunpack.c.h.b16 %v452
        %v2669 = vunpack.c.l.b16 %v453
        %v2670 = vunpack.c.h.b16 %v453
        %v2671 = vunpack.c.l.b16 %v454
        %v2672 = vunpack.c.h.b16 %v454
        %v2673 = vunpack.c.l.b16 %v455
        %v2674 = vunpack.c.h.b16 %v455
        %v2675 = vunpack.c.l.b16 %v456
        %v2676 = vunpack.c.h.b16 %v456
        %v2677 = vunpack.c.l.b16 %v457
        %v2678 = vunpack.c.h.b16 %v457
        %v2679 = vunpack.c.l.b16 %v458
        %v2680 = vunpack.c.h.b16 %v458
        %v2681 = vunpack.c.l.b16 %v459
        %v2682 = vunpack.c.h.b16 %v459
        %v2683 = vunpack.c.l.b16 %v460
        %v2684 = vunpack.c.h.b16 %v460
        %v2685 = vunpack.c.l.b16 %v461
        %v2686 = vunpack.c.h.b16 %v461
        %v2687 = vunpack.c.l.b16 %v462
        %v2688 = vunpack.c.h.b16 %v462
        %v2689 = vunpack.c.l.b16 %v463
        %v2690 = vunpack.c.h.b16 %v463
        %v2691 = vunpack.c.l.b16 %v464
        %v2692 = vunpack.c.h.b16 %v464
        %v2693 = vunpack.c.l.b16 %v465
        %v2694 = vunpack.c.h.b16 %v465
        %v2695 = vunpack.c.l.b16 %v466
        %v2696 = vunpack.c.h.b16 %v466
        %v2697 = vunpack.c.l.b16 %v467
        %v2698 = vunpack.c.h.b16 %v467
        %v2699 = vunpack.c.l.b16 %v468
        %v2700 = vunpack.c.h.b16 %v468
        %v2701 = vunpack.c.l.b16 %v469
        %v2702 = vunpack.c.h.b16 %v469
        %v2703 = vunpack.c.l.b16 %v470
        %v2704 = vunpack.c.h.b16 %v470
        %v2705 = vunpack.c.l.b16 %v471
        %v2706 = vunpack.c.h.b16 %v471
        %v2707 = vunpack.c.l.b16 %v472
        %v2708 = vunpack.c.h.b16 %v472
        %v2709 = vunpack.c.l.b16 %v473
        %v2710 = vunpack.c.h.b16 %v473
        %v2711 = vunpack.c.l.b16 %v474
        %v2712 = vunpack.c.h.b16 %v474
        %v2713 = vunpack.c.l.b16 %v475
        %v2714 = vunpack.c.h.b16 %v475
        %v2715 = vunpack.c.l.b16 %v476
        %v2716 = vunpack.c.h.b16 %v476
        %v2717 = vunpack.c.l.b16 %v477
        %v2718 = vunpack.c.h.b16 %v477
        %v2719 = vunpack.c.l.b16 %v478
        %v2720 = vunpack.c.h.b16 %v478
        %v2721 = vunpack.c.l.b16 %v479
        %v2722 = vunpack.c.h.b16 %v479
        %v2723 = vunpack.c.l.b16 %v480
        %v2724 = vunpack.c.h.b16 %v480
        %v2725 = vunpack.c.l.b16 %v481
        %v2726 = vunpack.c.h.b16 %v481
        %v2727 = vunpack.c.l.b16 %v482
        %v2728 = vunpack.c.h.b16 %v482
        %v2729 = vunpack.c.l.b16 %v483
        %v2730 = vunpack.c.h.b16 %v483
        %v2731 = vunpack.c.l.b16 %v484
        %v2732 = vunpack.c.h.b16 %v484
        %v2733 = vunpack.c.l.b16 %v485
        %v2734 = vunpack.c.h.b16 %v485
        %v2735 = vunpack.c.l.b16 %v486
        %v2736 = vunpack.c.h.b16 %v486
        %v2737 = vunpack.c.l.b16 %v487
        %v2738 = vunpack.c.h.b16 %v487
        %v2739 = vunpack.c.l.b16 %v488
        %v2740 = vunpack.c.h.b16 %v488
        %v2741 = vunpack.c.l.b16 %v489
        %v2742 = vunpack.c.h.b16 %v489
        %v2743 = vunpack.c.l.b16 %v490
        %v2744 = vunpack.c.h.b16 %v490
        %v2745 = vunpack.c.l.b16 %v491
        %v2746 = vunpack.c.h.b16 %v491
        %v2747 = vunpack.c.l.b16 %v492
        %v2748 = vunpack.c.h.b16 %v492
        %v2749 = vunpack.c.l.b16 %v493
        %v2750 = vunpack.c.h.b16 %v493
        %v2751 = vunpack.c.l.b16 %v494
        %v2752 = vunpack.c.h.b16 %v494
        %v2753 = vunpack.c.l.b16 %v495
        %v2754 = vunpack.c.h.b16 %v495
        %v2755 = vunpack.c.l.b16 %v496
        %v2756 = vunpack.c.h.b16 %v496
        %v2757 = vunpack.c.l.b16 %v497
        %v2758 = vunpack.c.h.b16 %v497
        %v2759 = vunpack.c.l.b16 %v498
        %v2760 = vunpack.c.h.b16 %v498
        %v2761 = vunpack.c.l.b16 %v499
        %v2762 = vunpack.c.h.b16 %v499
        %v2763 = vunpack.c.l.b16 %v500
        %v2764 = vunpack.c.h.b16 %v500
        %v2765 = vunpack.c.l.b16 %v501
        %v2766 = vunpack.c.h.b16 %v501
        %v2767 = vunpack.c.l.b16 %v502
        %v2768 = vunpack.c.h.b16 %v502
        %v2769 = vunpack.c.l.b16 %v503
        %v2770 = vunpack.c.h.b16 %v503
        %v2771 = vunpack.c.l.b16 %v504
        %v2772 = vunpack.c.h.b16 %v504
        %v2773 = vunpack.c.l.b16 %v505
        %v2774 = vunpack.c.h.b16 %v505
        %v2775 = vunpack.c.l.b16 %v506
        %v2776 = vunpack.c.h.b16 %v506
        %v2777 = vunpack.c.l.b16 %v507
        %v2778 = vunpack.c.h.b16 %v507
        %v2779 = vunpack.c.l.b16 %v508
        %v2780 = vunpack.c.h.b16 %v508
        %v2781 = vunpack.c.l.b16 %v509
        %v2782 = vunpack.c.h.b16 %v509
        %v2783 = vunpack.c.l.b16 %v510
        %v2784 = vunpack.c.h.b16 %v510
        %v2785 = vunpack.c.l.b16 %v511
        %v2786 = vunpack.c.h.b16 %v511
        %v2787 = vunpack.c.l.b16 %v512
        %v2788 = vunpack.c.h.b16 %v512
        %v2789 = vunpack.c.l.b16 %v513
        %v2790 = vunpack.c.h.b16 %v513
        %v2791 = vunpack.c.l.b16 %v514
        %v2792 = vunpack.c.h.b16 %v514
        %v2793 = vunpack.c.l.b16 %v515
        %v2794 = vunpack.c.h.b16 %v515
        %v2795 = vunpack.c.l.b16 %v516
        %v2796 = vunpack.c.h.b16 %v516
        %v2797 = vunpack.c.l.b16 %v517
        %v2798 = vunpack.c.h.b16 %v517
        %v2799 = vunpack.c.l.b16 %v518
        %v2800 = vunpack.c.h.b16 %v518
        %v2801 = vunpack.c.l.b16 %v519
        %v2802 = vunpack.c.h.b16 %v519
        %v2803 = vunpack.c.l.b16 %v520
        %v2804 = vunpack.c.h.b16 %v520
        %v2805 = vunpack.c.l.b16 %v521
        %v2806 = vunpack.c.h.b16 %v521
        %v2807 = vunpack.c.l.b16 %v522
        %v2808 = vunpack.c.h.b16 %v522
        %v2809 = vunpack.c.l.b16 %v523
        %v2810 = vunpack.c.h.b16 %v523
        %v2811 = vunpack.c.l.b16 %v524
        %v2812 = vunpack.c.h.b16 %v524
        %v2813 = vunpack.c.l.b16 %v525
        %v2814 = vunpack.c.h.b16 %v525
        %v2815 = vunpack.c.l.b16 %v526
        %v2816 = vunpack.c.h.b16 %v526
        %v2817 = vunpack.c.l.b16 %v527
        %v2818 = vunpack.c.h.b16 %v527
        %v2819 = vunpack.c.l.b16 %v528
        %v2820 = vunpack.c.h.b16 %v528
        %v2821 = vunpack.c.l.b16 %v529
        %v2822 = vunpack.c.h.b16 %v529
        %v2823 = vunpack.c.l.b16 %v530
        %v2824 = vunpack.c.h.b16 %v530
        %v2825 = vunpack.c.l.b16 %v531
        %v2826 = vunpack.c.h.b16 %v531
        %v2827 = vunpack.c.l.b16 %v532
        %v2828 = vunpack.c.h.b16 %v532
        %v2829 = vunpack.c.l.b16 %v533
        %v2830 = vunpack.c.h.b16 %v533
        %v2831 = vunpack.c.l.b16 %v534
        %v2832 = vunpack.c.h.b16 %v534
        %v2833 = vunpack.c.l.b16 %v535
        %v2834 = vunpack.c.h.b16 %v535
        %v2835 = vunpack.c.l.b16 %v536
        %v2836 = vunpack.c.h.b16 %v536
        %v2837 = vunpack.c.l.b16 %v537
        %v2838 = vunpack.c.h.b16 %v537
        %v2839 = vunpack.c.l.b16 %v538
        %v2840 = vunpack.c.h.b16 %v538
        %v2841 = vunpack.c.l.b16 %v539
        %v2842 = vunpack.c.h.b16 %v539
        %v2843 = vunpack.c.l.b16 %v540
        %v2844 = vunpack.c.h.b16 %v540
        %v2845 = vunpack.c.l.b16 %v541
        %v2846 = vunpack.c.h.b16 %v541
        %v2847 = vunpack.c.l.b16 %v542
        %v2848 = vunpack.c.h.b16 %v542
        %v2849 = vunpack.c.l.b16 %v543
        %v2850 = vunpack.c.h.b16 %v543
        %v2851 = vunpack.c.l.b16 %v544
        %v2852 = vunpack.c.h.b16 %v544
        %v2853 = vunpack.c.l.b16 %v545
        %v2854 = vunpack.c.h.b16 %v545
        %v2855 = vunpack.c.l.b16 %v546
        %v2856 = vunpack.c.h.b16 %v546
        %v2857 = vunpack.c.l.b16 %v547
        %v2858 = vunpack.c.h.b16 %v547
        %v2859 = vunpack.c.l.b16 %v548
        %v2860 = vunpack.c.h.b16 %v548
        %v2861 = vunpack.c.l.b16 %v549
        %v2862 = vunpack.c.h.b16 %v549
        %v2863 = vunpack.c.l.b16 %v550
        %v2864 = vunpack.c.h.b16 %v550
        %v2865 = vunpack.c.l.b16 %v551
        %v2866 = vunpack.c.h.b16 %v551
        %v2867 = vunpack.c.l.b16 %v552
        %v2868 = vunpack.c.h.b16 %v552
        %v2869 = vunpack.c.l.b16 %v553
        %v2870 = vunpack.c.h.b16 %v553
        %v2871 = vunpack.c.l.b16 %v554
        %v2872 = vunpack.c.h.b16 %v554
        %v2873 = vunpack.c.l.b16 %v555
        %v2874 = vunpack.c.h.b16 %v555
        %v2875 = vunpack.c.l.b16 %v556
        %v2876 = vunpack.c.h.b16 %v556
        %v2877 = vunpack.c.l.b16 %v557
        %v2878 = vunpack.c.h.b16 %v557
        %v2879 = vunpack.c.l.b16 %v558
        %v2880 = vunpack.c.h.b16 %v558
        %v2881 = vunpack.c.l.b16 %v559
        %v2882 = vunpack.c.h.b16 %v559
        %v2883 = vunpack.c.l.b16 %v560
        %v2884 = vunpack.c.h.b16 %v560
        %v2885 = vunpack.c.l.b16 %v561
        %v2886 = vunpack.c.h.b16 %v561
        %v2887 = vunpack.c.l.b16 %v562
        %v2888 = vunpack.c.h.b16 %v562
        %v2889 = vunpack.c.l.b16 %v563
        %v2890 = vunpack.c.h.b16 %v563
        %v2891 = vunpack.c.l.b16 %v564
        %v2892 = vunpack.c.h.b16 %v564
        %v2893 = vunpack.c.l.b16 %v565
        %v2894 = vunpack.c.h.b16 %v565
        %v2895 = vunpack.c.l.b16 %v566
        %v2896 = vunpack.c.h.b16 %v566
        %v2897 = vunpack.c.l.b16 %v567
        %v2898 = vunpack.c.h.b16 %v567
        %v2899 = vunpack.c.l.b16 %v568
        %v2900 = vunpack.c.h.b16 %v568
        %v2901 = vunpack.c.l.b16 %v569
        %v2902 = vunpack.c.h.b16 %v569
        %v2903 = vunpack.c.l.b16 %v570
        %v2904 = vunpack.c.h.b16 %v570
        %v2905 = vunpack.c.l.b16 %v571
        %v2906 = vunpack.c.h.b16 %v571
        %v2907 = vunpack.c.l.b16 %v572
        %v2908 = vunpack.c.h.b16 %v572
        %v2909 = vunpack.c.l.b16 %v573
        %v2910 = vunpack.c.h.b16 %v573
        %v2911 = vunpack.c.l.b16 %v574
        %v2912 = vunpack.c.h.b16 %v574
        %v2913 = vunpack.c.l.b16 %v575
        %v2914 = vunpack.c.h.b16 %v575
        %v2915 = vunpack.c.l.b16 %v576
        %v2916 = vunpack.c.h.b16 %v576
        %v2917 = vunpack.c.l.b16 %v577
        %v2918 = vunpack.c.h.b16 %v577
        %v2919 = vunpack.c.l.b16 %v578
        %v2920 = vunpack.c.h.b16 %v578
        %v2921 = vunpack.c.l.b16 %v579
        %v2922 = vunpack.c.h.b16 %v579
        %v2923 = vunpack.c.l.b16 %v580
        %v2924 = vunpack.c.h.b16 %v580
        %v2925 = vunpack.c.l.b16 %v581
        %v2926 = vunpack.c.h.b16 %v581
        %v2927 = vunpack.c.l.b16 %v582
        %v2928 = vunpack.c.h.b16 %v582
        %v2929 = vunpack.c.l.b16 %v583
        %v2930 = vunpack.c.h.b16 %v583
        %v2931 = vunpack.c.l.b16 %v584
        %v2932 = vunpack.c.h.b16 %v584
        %v2933 = vunpack.c.l.b16 %v585
        %v2934 = vunpack.c.h.b16 %v585
        %v2935 = vunpack.c.l.b16 %v586
        %v2936 = vunpack.c.h.b16 %v586
        %v2937 = vunpack.c.l.b16 %v587
        %v2938 = vunpack.c.h.b16 %v587
        %v2939 = vunpack.c.l.b16 %v588
        %v2940 = vunpack.c.h.b16 %v588
        %v2941 = vunpack.c.l.b16 %v589
        %v2942 = vunpack.c.h.b16 %v589
        %v2943 = vunpack.c.l.b16 %v590
        %v2944 = vunpack.c.h.b16 %v590
        %v2945 = vunpack.c.l.b16 %v591
        %v2946 = vunpack.c.h.b16 %v591
        %v2947 = vunpack.c.l.b16 %v592
        %v2948 = vunpack.c.h.b16 %v592
        %v2949 = vunpack.c.l.b16 %v593
        %v2950 = vunpack.c.h.b16 %v593
        %v2951 = vunpack.c.l.b16 %v594
        %v2952 = vunpack.c.h.b16 %v594
        %v2953 = vunpack.c.l.b16 %v595
        %v2954 = vunpack.c.h.b16 %v595
        %v2955 = vunpack.c.l.b16 %v596
        %v2956 = vunpack.c.h.b16 %v596
        %v2957 = vunpack.c.l.b16 %v597
        %v2958 = vunpack.c.h.b16 %v597
        %v2959 = vunpack.c.l.b16 %v598
        %v2960 = vunpack.c.h.b16 %v598
        %v2961 = vunpack.c.l.b16 %v599
        %v2962 = vunpack.c.h.b16 %v599
        %v2963 = vunpack.c.l.b16 %v600
        %v2964 = vunpack.c.h.b16 %v600
        %v2965 = vunpack.c.l.b16 %v601
        %v2966 = vunpack.c.h.b16 %v601
        %v2967 = vunpack.c.l.b16 %v602
        %v2968 = vunpack.c.h.b16 %v602
        %v2969 = vunpack.c.l.b16 %v603
        %v2970 = vunpack.c.h.b16 %v603
        %v2971 = vunpack.c.l.b16 %v604
        %v2972 = vunpack.c.h.b16 %v604
        %v2973 = vunpack.c.l.b16 %v605
        %v2974 = vunpack.c.h.b16 %v605
        %v2975 = vunpack.c.l.b16 %v606
        %v2976 = vunpack.c.h.b16 %v606
        %v2977 = vunpack.c.l.b16 %v607
        %v2978 = vunpack.c.h.b16 %v607
        %v2979 = vunpack.c.l.b16 %v608
        %v2980 = vunpack.c.h.b16 %v608
        %v2981 = vunpack.c.l.b16 %v609
        %v2982 = vunpack.c.h.b16 %v609
        %v2983 = vunpack.c.l.b16 %v610
        %v2984 = vunpack.c.h.b16 %v610
        %v2985 = vunpack.c.l.b16 %v611
        %v2986 = vunpack.c.h.b16 %v611
        %v2987 = vunpack.c.l.b16 %v612
        %v2988 = vunpack.c.h.b16 %v612
        %v2989 = vunpack.c.l.b16 %v613
        %v2990 = vunpack.c.h.b16 %v613
        %v2991 = vunpack.c.l.b16 %v614
        %v2992 = vunpack.c.h.b16 %v614
        %v2993 = vunpack.c.l.b16 %v615
        %v2994 = vunpack.c.h.b16 %v615
        %v2995 = vunpack.c.l.b16 %v616
        %v2996 = vunpack.c.h.b16 %v616
        %v2997 = vunpack.c.l.b16 %v617
        %v2998 = vunpack.c.h.b16 %v617
        %v2999 = vunpack.c.l.b16 %v618
        %v3000 = vunpack.c.h.b16 %v618
        %v3001 = vunpack.c.l.b16 %v619
        %v3002 = vunpack.c.h.b16 %v619
        %v3003 = vunpack.c.l.b16 %v620
        %v3004 = vunpack.c.h.b16 %v620
        %v3005 = vunpack.c.l.b16 %v621
        %v3006 = vunpack.c.h.b16 %v621
        %v3007 = vunpack.c.l.b16 %v622
        %v3008 = vunpack.c.h.b16 %v622
        %v3009 = vunpack.c.l.b16 %v623
        %v3010 = vunpack.c.h.b16 %v623
        %v3011 = vunpack.c.l.b16 %v624
        %v3012 = vunpack.c.h.b16 %v624
        %v3013 = vunpack.c.l.b16 %v625
        %v3014 = vunpack.c.h.b16 %v625
        %v3015 = vunpack.c.l.b16 %v626
        %v3016 = vunpack.c.h.b16 %v626
        %v3017 = vunpack.c.l.b16 %v627
        %v3018 = vunpack.c.h.b16 %v627
        %v3019 = vunpack.c.l.b16 %v628
        %v3020 = vunpack.c.h.b16 %v628
        %v3021 = vunpack.c.l.b16 %v629
        %v3022 = vunpack.c.h.b16 %v629
        %v3023 = vunpack.c.l.b16 %v630
        %v3024 = vunpack.c.h.b16 %v630
        %v3025 = vunpack.c.l.b16 %v631
        %v3026 = vunpack.c.h.b16 %v631
        %v3027 = vunpack.c.l.b16 %v632
        %v3028 = vunpack.c.h.b16 %v632
        %v3029 = vunpack.c.l.b16 %v633
        %v3030 = vunpack.c.h.b16 %v633
        %v3031 = vunpack.c.l.b16 %v634
        %v3032 = vunpack.c.h.b16 %v634
        %v3033 = vunpack.c.l.b16 %v635
        %v3034 = vunpack.c.h.b16 %v635
        %v3035 = vunpack.c.l.b16 %v636
        %v3036 = vunpack.c.h.b16 %v636
        %v3037 = vunpack.c.l.b16 %v637
        %v3038 = vunpack.c.h.b16 %v637
        %v3039 = vunpack.c.l.b16 %v638
        %v3040 = vunpack.c.h.b16 %v638
        %v3041 = vunpack.c.l.b16 %v639
        %v3042 = vunpack.c.h.b16 %v639
        %v3043 = vunpack.c.l.b16 %v640
        %v3044 = vunpack.c.h.b16 %v640
        %v3045 = vunpack.c.l.b16 %v641
        %v3046 = vunpack.c.h.b16 %v641
        %v3047 = vunpack.c.l.b16 %v642
        %v3048 = vunpack.c.h.b16 %v642
        %v3049 = vunpack.c.l.b16 %v643
        %v3050 = vunpack.c.h.b16 %v643
        %v3051 = vunpack.c.l.b16 %v644
        %v3052 = vunpack.c.h.b16 %v644
        %v3053 = vunpack.c.l.b16 %v645
        %v3054 = vunpack.c.h.b16 %v645
        %v3055 = vunpack.c.l.b16 %v646
        %v3056 = vunpack.c.h.b16 %v646
        %v3057 = vunpack.c.l.b16 %v647
        %v3058 = vunpack.c.h.b16 %v647
        %v3059 = vunpack.c.l.b16 %v648
        %v3060 = vunpack.c.h.b16 %v648
        %v3061 = vunpack.c.l.b16 %v649
        %v3062 = vunpack.c.h.b16 %v649
        %v3063 = vunpack.c.l.b16 %v650
        %v3064 = vunpack.c.h.b16 %v650
        %v3065 = vunpack.c.l.b16 %v651
        %v3066 = vunpack.c.h.b16 %v651
        %v3067 = vunpack.c.l.b16 %v652
        %v3068 = vunpack.c.h.b16 %v652
        %v3069 = vunpack.c.l.b16 %v653
        %v3070 = vunpack.c.h.b16 %v653
        %v3071 = vunpack.c.l.b16 %v654
        %v3072 = vunpack.c.h.b16 %v654
        %v3073 = vunpack.c.l.b16 %v655
        %v3074 = vunpack.c.h.b16 %v655
        %v3075 = vunpack.c.l.b16 %v656
        %v3076 = vunpack.c.h.b16 %v656
        %v3077 = vunpack.c.l.b16 %v657
        %v3078 = vunpack.c.h.b16 %v657
        %v3079 = vunpack.c.l.b16 %v658
        %v3080 = vunpack.c.h.b16 %v658
        %v3081 = vunpack.c.l.b16 %v659
        %v3082 = vunpack.c.h.b16 %v659
        %v3083 = vunpack.c.l.b16 %v660
        %v3084 = vunpack.c.h.b16 %v660
        %v3085 = vunpack.c.l.b16 %v661
        %v3086 = vunpack.c.h.b16 %v661
        %v3087 = vunpack.c.l.b16 %v662
        %v3088 = vunpack.c.h.b16 %v662
        %v3089 = vunpack.c.l.b16 %v663
        %v3090 = vunpack.c.h.b16 %v663
        %v3091 = vunpack.c.l.b16 %v664
        %v3092 = vunpack.c.h.b16 %v664
        %v3093 = vunpack.c.l.b16 %v665
        %v3094 = vunpack.c.h.b16 %v665
        %v3095 = vunpack.c.l.b16 %v666
        %v3096 = vunpack.c.h.b16 %v666
        %v3097 = vunpack.c.l.b16 %v667
        %v3098 = vunpack.c.h.b16 %v667
        %v3099 = vunpack.c.l.b16 %v668
        %v3100 = vunpack.c.h.b16 %v668
        %v3101 = vunpack.c.l.b16 %v669
        %v3102 = vunpack.c.h.b16 %v669
        %v3103 = vunpack.c.l.b16 %v670
        %v3104 = vunpack.c.h.b16 %v670
        %v3105 = vunpack.c.l.b16 %v671
        %v3106 = vunpack.c.h.b16 %v671
        %v3107 = vunpack.c.l.b16 %v672
        %v3108 = vunpack.c.h.b16 %v672
        %v3109 = vunpack.c.l.b16 %v673
        %v3110 = vunpack.c.h.b16 %v673
        %v3111 = vunpack.c.l.b16 %v674
        %v3112 = vunpack.c.h.b16 %v674
        %v3113 = vunpack.c.l.b16 %v675
        %v3114 = vunpack.c.h.b16 %v675
        %v3115 = vunpack.c.l.b16 %v676
        %v3116 = vunpack.c.h.b16 %v676
        %v3117 = vunpack.c.l.b16 %v677
        %v3118 = vunpack.c.h.b16 %v677
        %v3119 = vunpack.c.l.b16 %v678
        %v3120 = vunpack.c.h.b16 %v678
        %v3121 = vunpack.c.l.b16 %v679
        %v3122 = vunpack.c.h.b16 %v679
        %v3123 = vunpack.c.l.b16 %v680
        %v3124 = vunpack.c.h.b16 %v680
        %v3125 = vunpack.c.l.b16 %v681
        %v3126 = vunpack.c.h.b16 %v681
        %v3127 = vunpack.c.l.b16 %v682
        %v3128 = vunpack.c.h.b16 %v682
        %v3129 = vunpack.c.l.b16 %v683
        %v3130 = vunpack.c.h.b16 %v683
        %v3131 = vunpack.c.l.b16 %v684
        %v3132 = vunpack.c.h.b16 %v684
        %v3133 = vunpack.c.l.b16 %v685
        %v3134 = vunpack.c.h.b16 %v685
        %v3135 = vunpack.c.l.b16 %v686
        %v3136 = vunpack.c.h.b16 %v686
        %v3137 = vunpack.c.l.b16 %v687
        %v3138 = vunpack.c.h.b16 %v687
        %v3139 = vunpack.c.l.b16 %v688
        %v3140 = vunpack.c.h.b16 %v688
        %v3141 = vunpack.c.l.b16 %v689
        %v3142 = vunpack.c.h.b16 %v689
        %v3143 = vunpack.c.l.b16 %v690
        %v3144 = vunpack.c.h.b16 %v690
        %v3145 = vunpack.c.l.b16 %v691
        %v3146 = vunpack.c.h.b16 %v691
        %v3147 = vunpack.c.l.b16 %v692
        %v3148 = vunpack.c.h.b16 %v692
        %v3149 = vunpack.c.l.b16 %v693
        %v3150 = vunpack.c.h.b16 %v693
        %v3151 = vunpack.c.l.b16 %v694
        %v3152 = vunpack.c.h.b16 %v694
        %v3153 = vunpack.c.l.b16 %v695
        %v3154 = vunpack.c.h.b16 %v695
        %v3155 = vunpack.c.l.b16 %v696
        %v3156 = vunpack.c.h.b16 %v696
        %v3157 = vunpack.c.l.b16 %v697
        %v3158 = vunpack.c.h.b16 %v697
        %v3159 = vunpack.c.l.b16 %v698
        %v3160 = vunpack.c.h.b16 %v698
        %v3161 = vunpack.c.l.b16 %v699
        %v3162 = vunpack.c.h.b16 %v699
        %v3163 = vunpack.c.l.b16 %v700
        %v3164 = vunpack.c.h.b16 %v700
        %v3165 = vunpack.c.l.b16 %v701
        %v3166 = vunpack.c.h.b16 %v701
        %v3167 = vunpack.c.l.b16 %v702
        %v3168 = vunpack.c.h.b16 %v702
        %v3169 = vunpack.c.l.b16 %v703
        %v3170 = vunpack.c.h.b16 %v703
        %v3171 = vunpack.c.l.b16 %v704
        %v3172 = vunpack.c.h.b16 %v704
        %v3173 = vunpack.c.l.b16 %v705
        %v3174 = vunpack.c.h.b16 %v705
        %v3175 = vunpack.c.l.b16 %v706
        %v3176 = vunpack.c.h.b16 %v706
        %v3177 = vunpack.c.l.b16 %v707
        %v3178 = vunpack.c.h.b16 %v707
        %v3179 = vunpack.c.l.b16 %v708
        %v3180 = vunpack.c.h.b16 %v708
        %v3181 = vunpack.c.l.b16 %v709
        %v3182 = vunpack.c.h.b16 %v709
        %v3183 = vunpack.c.l.b16 %v710
        %v3184 = vunpack.c.h.b16 %v710
        %v3185 = vunpack.c.l.b16 %v711
        %v3186 = vunpack.c.h.b16 %v711
        %v3187 = vunpack.c.l.b16 %v712
        %v3188 = vunpack.c.h.b16 %v712
        %v3189 = vunpack.c.l.b16 %v713
        %v3190 = vunpack.c.h.b16 %v713
        %v3191 = vunpack.c.l.b16 %v714
        %v3192 = vunpack.c.h.b16 %v714
        %v3193 = vunpack.c.l.b16 %v715
        %v3194 = vunpack.c.h.b16 %v715
        %v3195 = vunpack.c.l.b16 %v716
        %v3196 = vunpack.c.h.b16 %v716
        %v3197 = vunpack.c.l.b16 %v717
        %v3198 = vunpack.c.h.b16 %v717
        %v3199 = vunpack.c.l.b16 %v718
        %v3200 = vunpack.c.h.b16 %v718
        %v3201 = vunpack.c.l.b16 %v719
        %v3202 = vunpack.c.h.b16 %v719
        %v3203 = vunpack.c.l.b16 %v720
        %v3204 = vunpack.c.h.b16 %v720
        %v3205 = vunpack.c.l.b16 %v721
        %v3206 = vunpack.c.h.b16 %v721
        %v3207 = vunpack.c.l.b16 %v722
        %v3208 = vunpack.c.h.b16 %v722
        %v3209 = vunpack.c.l.b16 %v723
        %v3210 = vunpack.c.h.b16 %v723
        %v3211 = vunpack.c.l.b16 %v724
        %v3212 = vunpack.c.h.b16 %v724
        %v3213 = vunpack.c.l.b16 %v725
        %v3214 = vunpack.c.h.b16 %v725
        %v3215 = vunpack.c.l.b16 %v726
        %v3216 = vunpack.c.h.b16 %v726
        %v3217 = vunpack.c.l.b16 %v727
        %v3218 = vunpack.c.h.b16 %v727
        %v3219 = vunpack.c.l.b16 %v728
        %v3220 = vunpack.c.h.b16 %v728
        %v3221 = vunpack.c.l.b16 %v729
        %v3222 = vunpack.c.h.b16 %v729
        %v3223 = vunpack.c.l.b16 %v730
        %v3224 = vunpack.c.h.b16 %v730
        %v3225 = vunpack.c.l.b16 %v731
        %v3226 = vunpack.c.h.b16 %v731
        %v3227 = vunpack.c.l.b16 %v732
        %v3228 = vunpack.c.h.b16 %v732
        %v3229 = vunpack.c.l.b16 %v733
        %v3230 = vunpack.c.h.b16 %v733
        %v3231 = vunpack.c.l.b16 %v734
        %v3232 = vunpack.c.h.b16 %v734
        %v3233 = vunpack.c.l.b16 %v735
        %v3234 = vunpack.c.h.b16 %v735
        %v3235 = vunpack.c.l.b16 %v736
        %v3236 = vunpack.c.h.b16 %v736
        %v3237 = vunpack.c.l.b16 %v737
        %v3238 = vunpack.c.h.b16 %v737
        %v3239 = vunpack.c.l.b16 %v738
        %v3240 = vunpack.c.h.b16 %v738
        %v3241 = vunpack.c.l.b16 %v739
        %v3242 = vunpack.c.h.b16 %v739
        %v3243 = vunpack.c.l.b16 %v740
        %v3244 = vunpack.c.h.b16 %v740
        %v3245 = vunpack.c.l.b16 %v741
        %v3246 = vunpack.c.h.b16 %v741
        %v3247 = vunpack.c.l.b16 %v742
        %v3248 = vunpack.c.h.b16 %v742
        %v3249 = vunpack.c.l.b16 %v743
        %v3250 = vunpack.c.h.b16 %v743
        %v3251 = vunpack.c.l.b16 %v744
        %v3252 = vunpack.c.h.b16 %v744
        %v3253 = vunpack.c.l.b16 %v745
        %v3254 = vunpack.c.h.b16 %v745
        %v3255 = vunpack.c.l.b16 %v746
        %v3256 = vunpack.c.h.b16 %v746
        %v3257 = vunpack.c.l.b16 %v747
        %v3258 = vunpack.c.h.b16 %v747
        %v3259 = vunpack.c.l.b16 %v748
        %v3260 = vunpack.c.h.b16 %v748
        %v3261 = vunpack.c.l.b16 %v749
        %v3262 = vunpack.c.h.b16 %v749
        %v3263 = vunpack.c.l.b16 %v750
        %v3264 = vunpack.c.h.b16 %v750
        %v3265 = vunpack.c.l.b16 %v751
        %v3266 = vunpack.c.h.b16 %v751
        %v3267 = vunpack.c.l.b16 %v752
        %v3268 = vunpack.c.h.b16 %v752
        %v3269 = vunpack.c.l.b16 %v753
        %v3270 = vunpack.c.h.b16 %v753
        %v3271 = vunpack.c.l.b16 %v754
        %v3272 = vunpack.c.h.b16 %v754
        %v3273 = vunpack.c.l.b16 %v755
        %v3274 = vunpack.c.h.b16 %v755
        %v3275 = vunpack.c.l.b16 %v756
        %v3276 = vunpack.c.h.b16 %v756
        %v3277 = vunpack.c.l.b16 %v757
        %v3278 = vunpack.c.h.b16 %v757
        %v3279 = vunpack.c.l.b16 %v758
        %v3280 = vunpack.c.h.b16 %v758
        %v3281 = vunpack.c.l.b16 %v759
        %v3282 = vunpack.c.h.b16 %v759
        %v3283 = vunpack.c.l.b16 %v760
        %v3284 = vunpack.c.h.b16 %v760
        %v3285 = vunpack.c.l.b16 %v761
        %v3286 = vunpack.c.h.b16 %v761
        %v3287 = vunpack.c.l.b16 %v762
        %v3288 = vunpack.c.h.b16 %v762
        %v3289 = vunpack.c.l.b16 %v763
        %v3290 = vunpack.c.h.b16 %v763
        %v3291 = vunpack.c.l.b16 %v764
        %v3292 = vunpack.c.h.b16 %v764
        %v3293 = vunpack.c.l.b16 %v765
        %v3294 = vunpack.c.h.b16 %v765
        %v3295 = vunpack.c.l.b16 %v766
        %v3296 = vunpack.c.h.b16 %v766
        %v3297 = vunpack.c.l.b16 %v767
        %v3298 = vunpack.c.h.b16 %v767
        %v3299 = vunpack.c.l.b16 %v768
        %v3300 = vunpack.c.h.b16 %v768
        %v3301 = vunpack.c.l.b16 %v769
        %v3302 = vunpack.c.h.b16 %v769
        %v3303 = vunpack.c.l.b16 %v770
        %v3304 = vunpack.c.h.b16 %v770
        %v3305 = vunpack.c.l.b16 %v771
        %v3306 = vunpack.c.h.b16 %v771
        %v3307 = vunpack.c.l.b16 %v772
        %v3308 = vunpack.c.h.b16 %v772
        %v3309 = vunpack.c.l.b16 %v773
        %v3310 = vunpack.c.h.b16 %v773
        %v3311 = vunpack.c.l.b16 %v774
        %v3312 = vunpack.c.h.b16 %v774
        %v3313 = vunpack.c.l.b16 %v775
        %v3314 = vunpack.c.h.b16 %v775
        %v3315 = vunpack.c.l.b16 %v776
        %v3316 = vunpack.c.h.b16 %v776
        %v3317 = vunpack.c.l.b16 %v777
        %v3318 = vunpack.c.h.b16 %v777
        %v3319 = vunpack.c.l.b16 %v778
        %v3320 = vunpack.c.h.b16 %v778
        %v3321 = vunpack.c.l.b16 %v779
        %v3322 = vunpack.c.h.b16 %v779
        %v3323 = vunpack.c.l.b16 %v780
        %v3324 = vunpack.c.h.b16 %v780
        %v3325 = vunpack.c.l.b16 %v781
        %v3326 = vunpack.c.h.b16 %v781
        %v3327 = vunpack.c.l.b16 %v782
        %v3328 = vunpack.c.h.b16 %v782
        %v3329 = vunpack.c.l.b16 %v783
        %v3330 = vunpack.c.h.b16 %v783
        %v3331 = vunpack.c.l.b16 %v784
        %v3332 = vunpack.c.h.b16 %v784
        %v3333 = vunpack.c.l.b16 %v785
        %v3334 = vunpack.c.h.b16 %v785
        %v3335 = vunpack.c.l.b16 %v786
        %v3336 = vunpack.c.h.b16 %v786
        %v3337 = vunpack.c.l.b16 %v787
        %v3338 = vunpack.c.h.b16 %v787
        %v3339 = vunpack.c.l.b16 %v788
        %v3340 = vunpack.c.h.b16 %v788
        %v3341 = vunpack.c.l.b16 %v789
        %v3342 = vunpack.c.h.b16 %v789
        %v3343 = vunpack.c.l.b16 %v790
        %v3344 = vunpack.c.h.b16 %v790
        %v3345 = vunpack.c.l.b16 %v791
        %v3346 = vunpack.c.h.b16 %v791
        %v3347 = vunpack.c.l.b16 %v792
        %v3348 = vunpack.c.h.b16 %v792
        %v3349 = vunpack.c.l.b16 %v793
        %v3350 = vunpack.c.h.b16 %v793
        %v3351 = vunpack.c.l.b16 %v794
        %v3352 = vunpack.c.h.b16 %v794
        %v3353 = vunpack.c.l.b16 %v795
        %v3354 = vunpack.c.h.b16 %v795
        %v3355 = vunpack.c.l.b16 %v796
        %v3356 = vunpack.c.h.b16 %v796
        %v3357 = vunpack.c.l.b16 %v797
        %v3358 = vunpack.c.h.b16 %v797
        %v3359 = vunpack.c.l.b16 %v798
        %v3360 = vunpack.c.h.b16 %v798
        %v3361 = vunpack.c.l.b16 %v799
        %v3362 = vunpack.c.h.b16 %v799
        %v3363 = vunpack.c.l.b16 %v800
        %v3364 = vunpack.c.h.b16 %v800
        %v3365 = vunpack.c.l.b16 %v801
        %v3366 = vunpack.c.h.b16 %v801
        %v3367 = vunpack.c.l.b16 %v802
        %v3368 = vunpack.c.h.b16 %v802
        %v3369 = vunpack.c.l.b16 %v803
        %v3370 = vunpack.c.h.b16 %v803
        %v3371 = vunpack.c.l.b16 %v804
        %v3372 = vunpack.c.h.b16 %v804
        %v3373 = vunpack.c.l.b16 %v805
        %v3374 = vunpack.c.h.b16 %v805
        %v3375 = vunpack.c.l.b16 %v806
        %v3376 = vunpack.c.h.b16 %v806
        %v3377 = vunpack.c.l.b16 %v807
        %v3378 = vunpack.c.h.b16 %v807
        %v3379 = vunpack.c.l.b16 %v808
        %v3380 = vunpack.c.h.b16 %v808
        %v3381 = vunpack.c.l.b16 %v809
        %v3382 = vunpack.c.h.b16 %v809
        %v3383 = vunpack.c.l.b16 %v810
        %v3384 = vunpack.c.h.b16 %v810
        %v3385 = vunpack.c.l.b16 %v811
        %v3386 = vunpack.c.h.b16 %v811
        %v3387 = vunpack.c.l.b16 %v812
        %v3388 = vunpack.c.h.b16 %v812
        %v3389 = vunpack.c.l.b16 %v813
        %v3390 = vunpack.c.h.b16 %v813
        %v3391 = vunpack.c.l.b16 %v814
        %v3392 = vunpack.c.h.b16 %v814
        %v3393 = vunpack.c.l.b16 %v815
        %v3394 = vunpack.c.h.b16 %v815
        %v3395 = vunpack.c.l.b16 %v816
        %v3396 = vunpack.c.h.b16 %v816
        %v3397 = vunpack.c.l.b16 %v817
        %v3398 = vunpack.c.h.b16 %v817
        %v3399 = vunpack.c.l.b16 %v818
        %v3400 = vunpack.c.h.b16 %v818
        %v3401 = vunpack.c.l.b16 %v819
        %v3402 = vunpack.c.h.b16 %v819
        %v3403 = vunpack.c.l.b16 %v820
        %v3404 = vunpack.c.h.b16 %v820
        %v3405 = vunpack.c.l.b16 %v821
        %v3406 = vunpack.c.h.b16 %v821
        %v3407 = vunpack.c.l.b16 %v822
        %v3408 = vunpack.c.h.b16 %v822
        %v3409 = vunpack.c.l.b16 %v823
        %v3410 = vunpack.c.h.b16 %v823
        %v3411 = vunpack.c.l.b16 %v824
        %v3412 = vunpack.c.h.b16 %v824
        %v3413 = vunpack.c.l.b16 %v825
        %v3414 = vunpack.c.h.b16 %v825
        %v3415 = vunpack.c.l.b16 %v826
        %v3416 = vunpack.c.h.b16 %v826
        %v3417 = vunpack.c.l.b16 %v827
        %v3418 = vunpack.c.h.b16 %v827
        %v3419 = vunpack.c.l.b16 %v828
        %v3420 = vunpack.c.h.b16 %v828
        %v3421 = vunpack.c.l.b16 %v829
        %v3422 = vunpack.c.h.b16 %v829
        %v3423 = vunpack.c.l.b16 %v830
        %v3424 = vunpack.c.h.b16 %v830
        %v3425 = vunpack.c.l.b16 %v831
        %v3426 = vunpack.c.h.b16 %v831
        %v3427 = vunpack.c.l.b16 %v832
        %v3428 = vunpack.c.h.b16 %v832
        %v3429 = vunpack.c.l.b16 %v833
        %v3430 = vunpack.c.h.b16 %v833
        %v3431 = vunpack.c.l.b16 %v834
        %v3432 = vunpack.c.h.b16 %v834
        %v3433 = vunpack.c.l.b16 %v835
        %v3434 = vunpack.c.h.b16 %v835
        %v3435 = vunpack.c.l.b16 %v836
        %v3436 = vunpack.c.h.b16 %v836
        %v3437 = vunpack.c.l.b16 %v837
        %v3438 = vunpack.c.h.b16 %v837
        %v3439 = vunpack.c.l.b16 %v838
        %v3440 = vunpack.c.h.b16 %v838
        %v3441 = vunpack.c.l.b16 %v839
        %v3442 = vunpack.c.h.b16 %v839
        %v3443 = vunpack.c.l.b16 %v840
        %v3444 = vunpack.c.h.b16 %v840
        %v3445 = vunpack.c.l.b16 %v841
        %v3446 = vunpack.c.h.b16 %v841
        %v3447 = vunpack.c.l.b16 %v842
        %v3448 = vunpack.c.h.b16 %v842
        %v3449 = vunpack.c.l.b16 %v843
        %v3450 = vunpack.c.h.b16 %v843
        %v3451 = vunpack.c.l.b16 %v844
        %v3452 = vunpack.c.h.b16 %v844
        %v3453 = vunpack.c.l.b16 %v845
        %v3454 = vunpack.c.h.b16 %v845
        %v3455 = vunpack.c.l.b16 %v846
        %v3456 = vunpack.c.h.b16 %v846
        %v3457 = vunpack.c.l.b16 %v847
        %v3458 = vunpack.c.h.b16 %v847
        %v3459 = vunpack.c.l.b16 %v848
        %v3460 = vunpack.c.h.b16 %v848
        %v3461 = vunpack.c.l.b16 %v849
        %v3462 = vunpack.c.h.b16 %v849
        %v3463 = vunpack.c.l.b16 %v850
        %v3464 = vunpack.c.h.b16 %v850
        %v3465 = vunpack.c.l.b16 %v851
        %v3466 = vunpack.c.h.b16 %v851
        %v3467 = vunpack.c.l.b16 %v852
        %v3468 = vunpack.c.h.b16 %v852
        %v3469 = vunpack.c.l.b16 %v853
        %v3470 = vunpack.c.h.b16 %v853
        %v3471 = vunpack.c.l.b16 %v854
        %v3472 = vunpack.c.h.b16 %v854
        %v3473 = vunpack.c.l.b16 %v855
        %v3474 = vunpack.c.h.b16 %v855
        %v3475 = vunpack.c.l.b16 %v856
        %v3476 = vunpack.c.h.b16 %v856
        %v3477 = vunpack.c.l.b16 %v857
        %v3478 = vunpack.c.h.b16 %v857
        %v3479 = vunpack.c.l.b16 %v858
        %v3480 = vunpack.c.h.b16 %v858
        %v3481 = vunpack.c.l.b16 %v859
        %v3482 = vunpack.c.h.b16 %v859
        %v3483 = vunpack.c.l.b16 %v860
        %v3484 = vunpack.c.h.b16 %v860
        %v3485 = vunpack.c.l.b16 %v861
        %v3486 = vunpack.c.h.b16 %v861
        %v3487 = vunpack.c.l.b16 %v862
        %v3488 = vunpack.c.h.b16 %v862
        %v3489 = vunpack.c.l.b16 %v863
        %v3490 = vunpack.c.h.b16 %v863
        %v3491 = vunpack.c.l.b16 %v864
        %v3492 = vunpack.c.h.b16 %v864
        %v3493 = vunpack.c.l.b16 %v865
        %v3494 = vunpack.c.h.b16 %v865
        %v3495 = vunpack.c.l.b16 %v866
        %v3496 = vunpack.c.h.b16 %v866
        %v3497 = vunpack.c.l.b16 %v867
        %v3498 = vunpack.c.h.b16 %v867
        %v3499 = vunpack.c.l.b16 %v868
        %v3500 = vunpack.c.h.b16 %v868
        %v3501 = vunpack.c.l.b16 %v869
        %v3502 = vunpack.c.h.b16 %v869
        %v3503 = vunpack.c.l.b16 %v870
        %v3504 = vunpack.c.h.b16 %v870
        %v3505 = vunpack.c.l.b16 %v871
        %v3506 = vunpack.c.h.b16 %v871
        %v3507 = vunpack.c.l.b16 %v872
        %v3508 = vunpack.c.h.b16 %v872
        %v3509 = vunpack.c.l.b16 %v873
        %v3510 = vunpack.c.h.b16 %v873
        %v3511 = vunpack.c.l.b16 %v874
        %v3512 = vunpack.c.h.b16 %v874
        %v3513 = vunpack.c.l.b16 %v875
        %v3514 = vunpack.c.h.b16 %v875
        %v3515 = vunpack.c.l.b16 %v876
        %v3516 = vunpack.c.h.b16 %v876
        %v3517 = vunpack.c.l.b16 %v877
        %v3518 = vunpack.c.h.b16 %v877
        %v3519 = vunpack.c.l.b16 %v878
        %v3520 = vunpack.c.h.b16 %v878
        %v3521 = vunpack.c.l.b16 %v879
        %v3522 = vunpack.c.h.b16 %v879
        %v3523 = vunpack.c.l.b16 %v880
        %v3524 = vunpack.c.h.b16 %v880
        %v3525 = vunpack.c.l.b16 %v881
        %v3526 = vunpack.c.h.b16 %v881
        %v3527 = vunpack.c.l.b16 %v882
        %v3528 = vunpack.c.h.b16 %v882
        %v3529 = vunpack.c.l.b16 %v883
        %v3530 = vunpack.c.h.b16 %v883
        %v3531 = vunpack.c.l.b16 %v884
        %v3532 = vunpack.c.h.b16 %v884
        %v3533 = vunpack.c.l.b16 %v885
        %v3534 = vunpack.c.h.b16 %v885
        %v3535 = vunpack.c.l.b16 %v886
        %v3536 = vunpack.c.h.b16 %v886
        %v3537 = vunpack.c.l.b16 %v887
        %v3538 = vunpack.c.h.b16 %v887
        %v3539 = vunpack.c.l.b16 %v888
        %v3540 = vunpack.c.h.b16 %v888
        %v3541 = vunpack.c.l.b16 %v889
        %v3542 = vunpack.c.h.b16 %v889
        %v3543 = vunpack.c.l.b16 %v890
        %v3544 = vunpack.c.h.b16 %v890
        %v3545 = vunpack.c.l.b16 %v891
        %v3546 = vunpack.c.h.b16 %v891
        %v3547 = vunpack.c.l.b16 %v892
        %v3548 = vunpack.c.h.b16 %v892
        %v3549 = vunpack.c.l.b16 %v893
        %v3550 = vunpack.c.h.b16 %v893
        %v3551 = vunpack.c.l.b16 %v894
        %v3552 = vunpack.c.h.b16 %v894
        %v3553 = vunpack.c.l.b16 %v895
        %v3554 = vunpack.c.h.b16 %v895
        %v3555 = vunpack.c.l.b16 %v896
        %v3556 = vunpack.c.h.b16 %v896
        %v3557 = vunpack.c.l.b16 %v897
        %v3558 = vunpack.c.h.b16 %v897
        %v3559 = vunpack.c.l.b16 %v898
        %v3560 = vunpack.c.h.b16 %v898
        %v3561 = vunpack.c.l.b16 %v899
        %v3562 = vunpack.c.h.b16 %v899
        %v3563 = vunpack.c.l.b16 %v900
        %v3564 = vunpack.c.h.b16 %v900
        %v3565 = vunpack.c.l.b16 %v901
        %v3566 = vunpack.c.h.b16 %v901
        %v3567 = vunpack.c.l.b16 %v902
        %v3568 = vunpack.c.h.b16 %v902
        %v3569 = vunpack.c.l.b16 %v903
        %v3570 = vunpack.c.h.b16 %v903
        %v3571 = vunpack.c.l.b16 %v904
        %v3572 = vunpack.c.h.b16 %v904
        %v3573 = vunpack.c.l.b16 %v905
        %v3574 = vunpack.c.h.b16 %v905
        %v3575 = vunpack.c.l.b16 %v906
        %v3576 = vunpack.c.h.b16 %v906
        %v3577 = vunpack.c.l.b16 %v907
        %v3578 = vunpack.c.h.b16 %v907
        %v3579 = vunpack.c.l.b16 %v908
        %v3580 = vunpack.c.h.b16 %v908
        %v3581 = vunpack.c.l.b16 %v909
        %v3582 = vunpack.c.h.b16 %v909
        %v3583 = vunpack.c.l.b16 %v910
        %v3584 = vunpack.c.h.b16 %v910
        %v3585 = vunpack.c.l.b16 %v911
        %v3586 = vunpack.c.h.b16 %v911
        %v3587 = vunpack.c.l.b16 %v912
        %v3588 = vunpack.c.h.b16 %v912
        %v3589 = vunpack.c.l.b16 %v913
        %v3590 = vunpack.c.h.b16 %v913
        %v3591 = vunpack.c.l.b16 %v914
        %v3592 = vunpack.c.h.b16 %v914
        %v3593 = vunpack.c.l.b16 %v915
        %v3594 = vunpack.c.h.b16 %v915
        %v3595 = vunpack.c.l.b16 %v916
        %v3596 = vunpack.c.h.b16 %v916
        %v3597 = vunpack.c.l.b16 %v917
        %v3598 = vunpack.c.h.b16 %v917
        %v3599 = vunpack.c.l.b16 %v918
        %v3600 = vunpack.c.h.b16 %v918
        %v3601 = vunpack.c.l.b16 %v919
        %v3602 = vunpack.c.h.b16 %v919
        %v3603 = vunpack.c.l.b16 %v920
        %v3604 = vunpack.c.h.b16 %v920
        %v3605 = vunpack.c.l.b16 %v921
        %v3606 = vunpack.c.h.b16 %v921
        %v3607 = vunpack.c.l.b16 %v922
        %v3608 = vunpack.c.h.b16 %v922
        %v3609 = vunpack.c.l.b16 %v923
        %v3610 = vunpack.c.h.b16 %v923
        %v3611 = vunpack.c.l.b16 %v924
        %v3612 = vunpack.c.h.b16 %v924
        %v3613 = vunpack.c.l.b16 %v925
        %v3614 = vunpack.c.h.b16 %v925
        %v3615 = vunpack.c.l.b16 %v926
        %v3616 = vunpack.c.h.b16 %v926
        %v3617 = vunpack.c.l.b16 %v927
        %v3618 = vunpack.c.h.b16 %v927
        %v3619 = vunpack.c.l.b16 %v928
        %v3620 = vunpack.c.h.b16 %v928
        %v3621 = vunpack.c.l.b16 %v929
        %v3622 = vunpack.c.h.b16 %v929
        %v3623 = vunpack.c.l.b16 %v930
        %v3624 = vunpack.c.h.b16 %v930
        %v3625 = vunpack.c.l.b16 %v931
        %v3626 = vunpack.c.h.b16 %v931
        %v3627 = vunpack.c.l.b16 %v932
        %v3628 = vunpack.c.h.b16 %v932
        %v3629 = vunpack.c.l.b16 %v933
        %v3630 = vunpack.c.h.b16 %v933
        %v3631 = vunpack.c.l.b16 %v934
        %v3632 = vunpack.c.h.b16 %v934
        %v3633 = vunpack.c.l.b16 %v935
        %v3634 = vunpack.c.h.b16 %v935
        %v3635 = vunpack.c.l.b16 %v936
        %v3636 = vunpack.c.h.b16 %v936
        %v3637 = vunpack.c.l.b16 %v937
        %v3638 = vunpack.c.h.b16 %v937
        %v3639 = vunpack.c.l.b16 %v938
        %v3640 = vunpack.c.h.b16 %v938
        %v3641 = vunpack.c.l.b16 %v939
        %v3642 = vunpack.c.h.b16 %v939
        %v3643 = vunpack.c.l.b16 %v940
        %v3644 = vunpack.c.h.b16 %v940
        %v3645 = vunpack.c.l.b16 %v941
        %v3646 = vunpack.c.h.b16 %v941
        %v3647 = vunpack.c.l.b16 %v942
        %v3648 = vunpack.c.h.b16 %v942
        %v3649 = vunpack.c.l.b16 %v943
        %v3650 = vunpack.c.h.b16 %v943
        %v3651 = vunpack.c.l.b16 %v944
        %v3652 = vunpack.c.h.b16 %v944
        %v3653 = vunpack.c.l.b16 %v945
        %v3654 = vunpack.c.h.b16 %v945
        %v3655 = vunpack.c.l.b16 %v946
        %v3656 = vunpack.c.h.b16 %v946
        %v3657 = vunpack.c.l.b16 %v947
        %v3658 = vunpack.c.h.b16 %v947
        %v3659 = vunpack.c.l.b16 %v948
        %v3660 = vunpack.c.h.b16 %v948
        %v3661 = vunpack.c.l.b16 %v949
        %v3662 = vunpack.c.h.b16 %v949
        %v3663 = vunpack.c.l.b16 %v950
        %v3664 = vunpack.c.h.b16 %v950
        %v3665 = vunpack.c.l.b16 %v951
        %v3666 = vunpack.c.h.b16 %v951
        %v3667 = vunpack.c.l.b16 %v952
        %v3668 = vunpack.c.h.b16 %v952
        %v3669 = vunpack.c.l.b16 %v953
        %v3670 = vunpack.c.h.b16 %v953
        %v3671 = vunpack.c.l.b16 %v954
        %v3672 = vunpack.c.h.b16 %v954
        %v3673 = vunpack.c.l.b16 %v955
        %v3674 = vunpack.c.h.b16 %v955
        %v3675 = vunpack.c.l.b16 %v956
        %v3676 = vunpack.c.h.b16 %v956
        %v3677 = vunpack.c.l.b16 %v957
        %v3678 = vunpack.c.h.b16 %v957
        %v3679 = vunpack.c.l.b16 %v958
        %v3680 = vunpack.c.h.b16 %v958
        %v3681 = vunpack.c.l.b16 %v959
        %v3682 = vunpack.c.h.b16 %v959
        %v3683 = vunpack.c.l.b16 %v960
        %v3684 = vunpack.c.h.b16 %v960
        %v3685 = vunpack.c.l.b16 %v961
        %v3686 = vunpack.c.h.b16 %v961
        %v3687 = vunpack.c.l.b16 %v962
        %v3688 = vunpack.c.h.b16 %v962
        %v3689 = vunpack.c.l.b16 %v963
        %v3690 = vunpack.c.h.b16 %v963
        %v3691 = vunpack.c.l.b16 %v964
        %v3692 = vunpack.c.h.b16 %v964
        %v3693 = vunpack.c.l.b16 %v965
        %v3694 = vunpack.c.h.b16 %v965
        %v3695 = vunpack.c.l.b16 %v966
        %v3696 = vunpack.c.h.b16 %v966
        %v3697 = vunpack.c.l.b16 %v967
        %v3698 = vunpack.c.h.b16 %v967
        %v3699 = vunpack.c.l.b16 %v968
        %v3700 = vunpack.c.h.b16 %v968
        %v3701 = vunpack.c.l.b16 %v969
        %v3702 = vunpack.c.h.b16 %v969
        %v3703 = vunpack.c.l.b16 %v970
        %v3704 = vunpack.c.h.b16 %v970
        %v3705 = vunpack.c.l.b16 %v971
        %v3706 = vunpack.c.h.b16 %v971
        %v3707 = vunpack.c.l.b16 %v972
        %v3708 = vunpack.c.h.b16 %v972
        %v3709 = vunpack.c.l.b16 %v973
        %v3710 = vunpack.c.h.b16 %v973
        %v3711 = vunpack.c.l.b16 %v974
        %v3712 = vunpack.c.h.b16 %v974
        %v3713 = vunpack.c.l.b16 %v975
        %v3714 = vunpack.c.h.b16 %v975
        %v3715 = vunpack.c.l.b16 %v976
        %v3716 = vunpack.c.h.b16 %v976
        %v3717 = vunpack.c.l.b16 %v977
        %v3718 = vunpack.c.h.b16 %v977
        %v3719 = vunpack.c.l.b16 %v978
        %v3720 = vunpack.c.h.b16 %v978
        %v3721 = vunpack.c.l.b16 %v979
        %v3722 = vunpack.c.h.b16 %v979
        %v3723 = vunpack.c.l.b16 %v980
        %v3724 = vunpack.c.h.b16 %v980
        %v3725 = vunpack.c.l.b16 %v981
        %v3726 = vunpack.c.h.b16 %v981
        %v3727 = vunpack.c.l.b16 %v982
        %v3728 = vunpack.c.h.b16 %v982
        %v3729 = vunpack.c.l.b16 %v983
        %v3730 = vunpack.c.h.b16 %v983
        %v3731 = vunpack.c.l.b16 %v984
        %v3732 = vunpack.c.h.b16 %v984
        %v3733 = vunpack.c.l.b16 %v985
        %v3734 = vunpack.c.h.b16 %v985
        %v3735 = vunpack.c.l.b16 %v986
        %v3736 = vunpack.c.h.b16 %v986
        %v3737 = vunpack.c.l.b16 %v987
        %v3738 = vunpack.c.h.b16 %v987
        %v3739 = vunpack.c.l.b16 %v988
        %v3740 = vunpack.c.h.b16 %v988
        %v3741 = vunpack.c.l.b16 %v989
        %v3742 = vunpack.c.h.b16 %v989
        %v3743 = vunpack.c.l.b16 %v990
        %v3744 = vunpack.c.h.b16 %v990
        %v3745 = vunpack.c.l.b16 %v991
        %v3746 = vunpack.c.h.b16 %v991
        %v3747 = vunpack.c.l.b16 %v992
        %v3748 = vunpack.c.h.b16 %v992
        %v3749 = vunpack.c.l.b16 %v993
        %v3750 = vunpack.c.h.b16 %v993
        %v3751 = vunpack.c.l.b16 %v994
        %v3752 = vunpack.c.h.b16 %v994
        %v3753 = vunpack.c.l.b16 %v995
        %v3754 = vunpack.c.h.b16 %v995
        %v3755 = vunpack.c.l.b16 %v996
        %v3756 = vunpack.c.h.b16 %v996
        %v3757 = vunpack.c.l.b16 %v997
        %v3758 = vunpack.c.h.b16 %v997
        %v3759 = vunpack.c.l.b16 %v998
        %v3760 = vunpack.c.h.b16 %v998
        %v3761 = vunpack.c.l.b16 %v999
        %v3762 = vunpack.c.h.b16 %v999
        %v3763 = vunpack.c.l.b16 %v1000
        %v3764 = vunpack.c.h.b16 %v1000
        %v3765 = vunpack.c.l.b16 %v1001
        %v3766 = vunpack.c.h.b16 %v1001
        %v3767 = vunpack.c.l.b16 %v1002
        %v3768 = vunpack.c.h.b16 %v1002
        %v3769 = vunpack.c.l.b16 %v1003
        %v3770 = vunpack.c.h.b16 %v1003
        %v3771 = vunpack.c.l.b16 %v1004
        %v3772 = vunpack.c.h.b16 %v1004
        %v3773 = vunpack.c.l.b16 %v1005
        %v3774 = vunpack.c.h.b16 %v1005
        %v3775 = vunpack.c.l.b16 %v1006
        %v3776 = vunpack.c.h.b16 %v1006
        %v3777 = vunpack.c.l.b16 %v1007
        %v3778 = vunpack.c.h.b16 %v1007
        %v3779 = vunpack.c.l.b16 %v1008
        %v3780 = vunpack.c.h.b16 %v1008
        %v3781 = vunpack.c.l.b16 %v1009
        %v3782 = vunpack.c.h.b16 %v1009
        %v3783 = vunpack.c.l.b16 %v1010
        %v3784 = vunpack.c.h.b16 %v1010
        %v3785 = vunpack.c.l.b16 %v1011
        %v3786 = vunpack.c.h.b16 %v1011
        %v3787 = vunpack.c.l.b16 %v1012
        %v3788 = vunpack.c.h.b16 %v1012
        %v3789 = vunpack.c.l.b16 %v1013
        %v3790 = vunpack.c.h.b16 %v1013
        %v3791 = vunpack.c.l.b16 %v1014
        %v3792 = vunpack.c.h.b16 %v1014
        %v3793 = vunpack.c.l.b16 %v1015
        %v3794 = vunpack.c.h.b16 %v1015
        %v3795 = vunpack.c.l.b16 %v1016
        %v3796 = vunpack.c.h.b16 %v1016
        %v3797 = vunpack.c.l.b16 %v1017
        %v3798 = vunpack.c.h.b16 %v1017
        %v3799 = vunpack.c.l.b16 %v1018
        %v3800 = vunpack.c.h.b16 %v1018
        %v3801 = vunpack.c.l.b16 %v1019
        %v3802 = vunpack.c.h.b16 %v1019
        %v3803 = vunpack.c.l.b16 %v1020
        %v3804 = vunpack.c.h.b16 %v1020
        %v3805 = vunpack.c.l.b16 %v1021
        %v3806 = vunpack.c.h.b16 %v1021
        %v3807 = vunpack.c.l.b16 %v1022
        %v3808 = vunpack.c.h.b16 %v1022
        %v3809 = vunpack.c.l.b16 %v1023
        %v3810 = vunpack.c.h.b16 %v1023
        %v3811 = vunpack.c.l.b16 %v1024
        %v3812 = vunpack.c.h.b16 %v1024
        %v3813 = vunpack.c.l.b16 %v1025
        %v3814 = vunpack.c.h.b16 %v1025
        %v3815 = vunpack.c.l.b16 %v1026
        %v3816 = vunpack.c.h.b16 %v1026
        %v3817 = vunpack.c.l.b16 %v1027
        %v3818 = vunpack.c.h.b16 %v1027
        %v3819 = vunpack.c.l.b16 %v1028
        %v3820 = vunpack.c.h.b16 %v1028
        %v3821 = vunpack.c.l.b16 %v1029
        %v3822 = vunpack.c.h.b16 %v1029
        %v3823 = vunpack.c.l.b16 %v1030
        %v3824 = vunpack.c.h.b16 %v1030
        %v3825 = vunpack.c.l.b16 %v1031
        %v3826 = vunpack.c.h.b16 %v1031
        %v3827 = vunpack.c.l.b16 %v1032
        %v3828 = vunpack.c.h.b16 %v1032
        %v3829 = vunpack.c.l.b16 %v1033
        %v3830 = vunpack.c.h.b16 %v1033
        %v3831 = vunpack.c.l.b16 %v1034
        %v3832 = vunpack.c.h.b16 %v1034
        %v3833 = vunpack.c.l.b16 %v1035
        %v3834 = vunpack.c.h.b16 %v1035
        %v3835 = vunpack.c.l.b16 %v1036
        %v3836 = vunpack.c.h.b16 %v1036
        %v3837 = vunpack.c.l.b16 %v1037
        %v3838 = vunpack.c.h.b16 %v1037
        %v3839 = vunpack.c.l.b16 %v1038
        %v3840 = vunpack.c.h.b16 %v1038
        %v3841 = vunpack.c.l.b16 %v1039
        %v3842 = vunpack.c.h.b16 %v1039
        %v3843 = vunpack.c.l.b16 %v1040
        %v3844 = vunpack.c.h.b16 %v1040
        %v3845 = vunpack.c.l.b16 %v1041
        %v3846 = vunpack.c.h.b16 %v1041
        %v3847 = vunpack.c.l.b16 %v1042
        %v3848 = vunpack.c.h.b16 %v1042
        %v3849 = vunpack.c.l.b16 %v1043
        %v3850 = vunpack.c.h.b16 %v1043
        %v3851 = vunpack.c.l.b16 %v1044
        %v3852 = vunpack.c.h.b16 %v1044
        %v3853 = vunpack.c.l.b16 %v1045
        %v3854 = vunpack.c.h.b16 %v1045
        %v3855 = vunpack.c.l.b16 %v1046
        %v3856 = vunpack.c.h.b16 %v1046
        %v3857 = vunpack.c.l.b16 %v1047
        %v3858 = vunpack.c.h.b16 %v1047
        %v3859 = vunpack.c.l.b16 %v1048
        %v3860 = vunpack.c.h.b16 %v1048
        %v3861 = vunpack.c.l.b16 %v1049
        %v3862 = vunpack.c.h.b16 %v1049
        %v3863 = vunpack.c.l.b16 %v1050
        %v3864 = vunpack.c.h.b16 %v1050
        %v3865 = vunpack.c.l.b16 %v1051
        %v3866 = vunpack.c.h.b16 %v1051
        %v3867 = vunpack.c.l.b16 %v1052
        %v3868 = vunpack.c.h.b16 %v1052
        %v3869 = vunpack.c.l.b16 %v1053
        %v3870 = vunpack.c.h.b16 %v1053
        %v3871 = vunpack.c.l.b16 %v1054
        %v3872 = vunpack.c.h.b16 %v1054
        %v3873 = vunpack.c.l.b16 %v1055
        %v3874 = vunpack.c.h.b16 %v1055
        %v3875 = vunpack.c.l.b16 %v1056
        %v3876 = vunpack.c.h.b16 %v1056
        %v3877 = vunpack.c.l.b16 %v1057
        %v3878 = vunpack.c.h.b16 %v1057
        %v3879 = vunpack.c.l.b16 %v1058
        %v3880 = vunpack.c.h.b16 %v1058
        %v3881 = vunpack.c.l.b16 %v1059
        %v3882 = vunpack.c.h.b16 %v1059
        %v3883 = vunpack.c.l.b16 %v1060
        %v3884 = vunpack.c.h.b16 %v1060
        %v3885 = vunpack.c.l.b16 %v1061
        %v3886 = vunpack.c.h.b16 %v1061
        %v3887 = vunpack.c.l.b16 %v1062
        %v3888 = vunpack.c.h.b16 %v1062
        %v3889 = vunpack.c.l.b16 %v1063
        %v3890 = vunpack.c.h.b16 %v1063
        %v3891 = vunpack.c.l.b16 %v1064
        %v3892 = vunpack.c.h.b16 %v1064
        %v3893 = vunpack.c.l.b16 %v1065
        %v3894 = vunpack.c.h.b16 %v1065
        %v3895 = vunpack.c.l.b16 %v1066
        %v3896 = vunpack.c.h.b16 %v1066
        %v3897 = vunpack.c.l.b16 %v1067
        %v3898 = vunpack.c.h.b16 %v1067
        %v3899 = vunpack.c.l.b16 %v1068
        %v3900 = vunpack.c.h.b16 %v1068
        %v3901 = vunpack.c.l.b16 %v1069
        %v3902 = vunpack.c.h.b16 %v1069
        %v3903 = vunpack.c.l.b16 %v1070
        %v3904 = vunpack.c.h.b16 %v1070
        %v3905 = vunpack.c.l.b16 %v1071
        %v3906 = vunpack.c.h.b16 %v1071
        %v3907 = vunpack.c.l.b16 %v1072
        %v3908 = vunpack.c.h.b16 %v1072
        %v3909 = vunpack.c.l.b16 %v1073
        %v3910 = vunpack.c.h.b16 %v1073
        %v3911 = vunpack.c.l.b16 %v1074
        %v3912 = vunpack.c.h.b16 %v1074
        %v3913 = vunpack.c.l.b16 %v1075
        %v3914 = vunpack.c.h.b16 %v1075
        %v3915 = vunpack.c.l.b16 %v1076
        %v3916 = vunpack.c.h.b16 %v1076
        %v3917 = vunpack.c.l.b16 %v1077
        %v3918 = vunpack.c.h.b16 %v1077
        %v3919 = vunpack.c.l.b16 %v1078
        %v3920 = vunpack.c.h.b16 %v1078
        %v3921 = vunpack.c.l.b16 %v1079
        %v3922 = vunpack.c.h.b16 %v1079
        %v3923 = vunpack.c.l.b16 %v1080
        %v3924 = vunpack.c.h.b16 %v1080
        %v3925 = vunpack.c.l.b16 %v1081
        %v3926 = vunpack.c.h.b16 %v1081
        %v3927 = vunpack.c.l.b16 %v1082
        %v3928 = vunpack.c.h.b16 %v1082
        %v3929 = vunpack.c.l.b16 %v1083
        %v3930 = vunpack.c.h.b16 %v1083
        %v3931 = vunpack.c.l.b16 %v1084
        %v3932 = vunpack.c.h.b16 %v1084
        %v3933 = vunpack.c.l.b16 %v1085
        %v3934 = vunpack.c.h.b16 %v1085
        %v3935 = vunpack.c.l.b16 %v1086
        %v3936 = vunpack.c.h.b16 %v1086
        %v3937 = vunpack.c.l.b16 %v1087
        %v3938 = vunpack.c.h.b16 %v1087
        %v3939 = vunpack.c.l.b16 %v1088
        %v3940 = vunpack.c.h.b16 %v1088
        %v3941 = vunpack.c.l.b16 %v1089
        %v3942 = vunpack.c.h.b16 %v1089
        %v3943 = vunpack.c.l.b16 %v1090
        %v3944 = vunpack.c.h.b16 %v1090
        %v3945 = vunpack.c.l.b16 %v1091
        %v3946 = vunpack.c.h.b16 %v1091
        %v3947 = vunpack.c.l.b16 %v1092
        %v3948 = vunpack.c.h.b16 %v1092
        %v3949 = vunpack.c.l.b16 %v1093
        %v3950 = vunpack.c.h.b16 %v1093
        %v3951 = vunpack.c.l.b16 %v1094
        %v3952 = vunpack.c.h.b16 %v1094
        %v3953 = vunpack.c.l.b16 %v1095
        %v3954 = vunpack.c.h.b16 %v1095
        %v3955 = vunpack.c.l.b16 %v1096
        %v3956 = vunpack.c.h.b16 %v1096
        %v3957 = vunpack.c.l.b16 %v1097
        %v3958 = vunpack.c.h.b16 %v1097
        %v3959 = vunpack.c.l.b16 %v1098
        %v3960 = vunpack.c.h.b16 %v1098
        %v3961 = vunpack.c.l.b16 %v1099
        %v3962 = vunpack.c.h.b16 %v1099
        %v3963 = vunpack.c.l.b16 %v1100
        %v3964 = vunpack.c.h.b16 %v1100
        %v3965 = vunpack.c.l.b16 %v1101
        %v3966 = vunpack.c.h.b16 %v1101
        %v3967 = vunpack.c.l.b16 %v1102
        %v3968 = vunpack.c.h.b16 %v1102
        %v3969 = vunpack.c.l.b16 %v1103
        %v3970 = vunpack.c.h.b16 %v1103
        %v3971 = vunpack.c.l.b16 %v1104
        %v3972 = vunpack.c.h.b16 %v1104
        %v3973 = vunpack.c.l.b16 %v1105
        %v3974 = vunpack.c.h.b16 %v1105
        %v3975 = vunpack.c.l.b16 %v1106
        %v3976 = vunpack.c.h.b16 %v1106
        %v3977 = vunpack.c.l.b16 %v1107
        %v3978 = vunpack.c.h.b16 %v1107
        %v3979 = vunpack.c.l.b16 %v1108
        %v3980 = vunpack.c.h.b16 %v1108
        %v3981 = vunpack.c.l.b16 %v1109
        %v3982 = vunpack.c.h.b16 %v1109
        %v3983 = vunpack.c.l.b16 %v1110
        %v3984 = vunpack.c.h.b16 %v1110
        %v3985 = vunpack.c.l.b16 %v1111
        %v3986 = vunpack.c.h.b16 %v1111
        %v3987 = vunpack.c.l.b16 %v1112
        %v3988 = vunpack.c.h.b16 %v1112
        %v3989 = vunpack.c.l.b16 %v1113
        %v3990 = vunpack.c.h.b16 %v1113
        %v3991 = vunpack.c.l.b16 %v1114
        %v3992 = vunpack.c.h.b16 %v1114
        %v3993 = vunpack.c.l.b16 %v1115
        %v3994 = vunpack.c.h.b16 %v1115
        %v3995 = vunpack.c.l.b16 %v1116
        %v3996 = vunpack.c.h.b16 %v1116
        %v3997 = vunpack.c.l.b16 %v1117
        %v3998 = vunpack.c.h.b16 %v1117
        %v3999 = vunpack.c.l.b16 %v1118
        %v4000 = vunpack.c.h.b16 %v1118
        %v4001 = vunpack.c.l.b16 %v1119
        %v4002 = vunpack.c.h.b16 %v1119
        %v4003 = vunpack.c.l.b16 %v1120
        %v4004 = vunpack.c.h.b16 %v1120
        %v4005 = vunpack.c.l.b16 %v1121
        %v4006 = vunpack.c.h.b16 %v1121
        %v4007 = vunpack.c.l.b16 %v1122
        %v4008 = vunpack.c.h.b16 %v1122
        %v4009 = vunpack.c.l.b16 %v1123
        %v4010 = vunpack.c.h.b16 %v1123
        %v4011 = vunpack.c.l.b16 %v1124
        %v4012 = vunpack.c.h.b16 %v1124
        %v4013 = vunpack.c.l.b16 %v1125
        %v4014 = vunpack.c.h.b16 %v1125
        %v4015 = vunpack.c.l.b16 %v1126
        %v4016 = vunpack.c.h.b16 %v1126
        %v4017 = vunpack.c.l.b16 %v1127
        %v4018 = vunpack.c.h.b16 %v1127
        %v4019 = vunpack.c.l.b16 %v1128
        %v4020 = vunpack.c.h.b16 %v1128
        %v4021 = vunpack.c.l.b16 %v1129
        %v4022 = vunpack.c.h.b16 %v1129
        %v4023 = vunpack.c.l.b16 %v1130
        %v4024 = vunpack.c.h.b16 %v1130
        %v4025 = vunpack.c.l.b16 %v1131
        %v4026 = vunpack.c.h.b16 %v1131
        %v4027 = vunpack.c.l.b16 %v1132
        %v4028 = vunpack.c.h.b16 %v1132
        %v4029 = vunpack.c.l.b16 %v1133
        %v4030 = vunpack.c.h.b16 %v1133
        %v4031 = vunpack.c.l.b16 %v1134
        %v4032 = vunpack.c.h.b16 %v1134
        %v4033 = vunpack.c.l.b16 %v1135
        %v4034 = vunpack.c.h.b16 %v1135
        %v4035 = vunpack.c.l.b16 %v1136
        %v4036 = vunpack.c.h.b16 %v1136
        %v4037 = vunpack.c.l.b16 %v1137
        %v4038 = vunpack.c.h.b16 %v1137
        %v4039 = vunpack.c.l.b16 %v1138
        %v4040 = vunpack.c.h.b16 %v1138
        %v4041 = vunpack.c.l.b16 %v1139
        %v4042 = vunpack.c.h.b16 %v1139
        %v4043 = vunpack.c.l.b16 %v1140
        %v4044 = vunpack.c.h.b16 %v1140
        %v4045 = vunpack.c.l.b16 %v1141
        %v4046 = vunpack.c.h.b16 %v1141
        %v4047 = vunpack.c.l.b16 %v1142
        %v4048 = vunpack.c.h.b16 %v1142
        %v4049 = vunpack.c.l.b16 %v1143
        %v4050 = vunpack.c.h.b16 %v1143
        %v4051 = vunpack.c.l.b16 %v1144
        %v4052 = vunpack.c.h.b16 %v1144
        %v4053 = vunpack.c.l.b16 %v1145
        %v4054 = vunpack.c.h.b16 %v1145
        %v4055 = vunpack.c.l.b16 %v1146
        %v4056 = vunpack.c.h.b16 %v1146
        %v4057 = vunpack.c.l.b16 %v1147
        %v4058 = vunpack.c.h.b16 %v1147
        %v4059 = vunpack.c.l.b16 %v1148
        %v4060 = vunpack.c.h.b16 %v1148
        %v4061 = vunpack.c.l.b16 %v1149
        %v4062 = vunpack.c.h.b16 %v1149
        %v4063 = vunpack.c.l.b16 %v1150
        %v4064 = vunpack.c.h.b16 %v1150
        %v4065 = vunpack.c.l.b16 %v1151
        %v4066 = vunpack.c.h.b16 %v1151
        %v4067 = vunpack.c.l.b16 %v1152
        %v4068 = vunpack.c.h.b16 %v1152
        %v4069 = vunpack.c.l.b16 %v1153
        %v4070 = vunpack.c.h.b16 %v1153
        %v4071 = vunpack.c.l.b16 %v1154
        %v4072 = vunpack.c.h.b16 %v1154
        %v4073 = vunpack.c.l.b16 %v1155
        %v4074 = vunpack.c.h.b16 %v1155
        %v4075 = vunpack.c.l.b16 %v1156
        %v4076 = vunpack.c.h.b16 %v1156
        %v4077 = vunpack.c.l.b16 %v1157
        %v4078 = vunpack.c.h.b16 %v1157
        %v4079 = vunpack.c.l.b16 %v1158
        %v4080 = vunpack.c.h.b16 %v1158
        %v4081 = vunpack.c.l.b16 %v1159
        %v4082 = vunpack.c.h.b16 %v1159
        %v4083 = vunpack.c.l.b16 %v1160
        %v4084 = vunpack.c.h.b16 %v1160
        %v4085 = vunpack.c.l.b16 %v1161
        %v4086 = vunpack.c.h.b16 %v1161
        %v4087 = vunpack.c.l.b16 %v1162
        %v4088 = vunpack.c.h.b16 %v1162
        %v4089 = vunpack.c.l.b16 %v1163
        %v4090 = vunpack.c.h.b16 %v1163
        %v4091 = vunpack.c.l.b16 %v1164
        %v4092 = vunpack.c.h.b16 %v1164
        %v4093 = vunpack.c.l.b16 %v1165
        %v4094 = vunpack.c.h.b16 %v1165
        %v4095 = vunpack.c.l.b16 %v1166
        %v4096 = vunpack.c.h.b16 %v1166
        %v4097 = vunpack.c.l.b16 %v1167
        %v4098 = vunpack.c.h.b16 %v1167
        %v4099 = vunpack.c.l.b16 %v1168
        %v4100 = vunpack.c.h.b16 %v1168
        %v4101 = vunpack.c.l.b16 %v1169
        %v4102 = vunpack.c.h.b16 %v1169
        %v4103 = vunpack.c.l.b16 %v1170
        %v4104 = vunpack.c.h.b16 %v1170
        %v4105 = vunpack.c.l.b16 %v1171
        %v4106 = vunpack.c.h.b16 %v1171
        %v4107 = vunpack.c.l.b16 %v1172
        %v4108 = vunpack.c.h.b16 %v1172
        %v4109 = vunpack.c.l.b16 %v1173
        %v4110 = vunpack.c.h.b16 %v1173
        %v4111 = vunpack.c.l.b16 %v1174
        %v4112 = vunpack.c.h.b16 %v1174
        %v4113 = vunpack.c.l.b16 %v1175
        %v4114 = vunpack.c.h.b16 %v1175
        %v4115 = vunpack.c.l.b16 %v1176
        %v4116 = vunpack.c.h.b16 %v1176
        %v4117 = vunpack.c.l.b16 %v1177
        %v4118 = vunpack.c.h.b16 %v1177
        %v4119 = vunpack.c.l.b16 %v1178
        %v4120 = vunpack.c.h.b16 %v1178
        %v4121 = vunpack.c.l.b16 %v1179
        %v4122 = vunpack.c.h.b16 %v1179
        %v4123 = vunpack.c.l.b16 %v1180
        %v4124 = vunpack.c.h.b16 %v1180
        %v4125 = vunpack.c.l.b16 %v1181
        %v4126 = vunpack.c.h.b16 %v1181
        %v4127 = vunpack.c.l.b16 %v1182
        %v4128 = vunpack.c.h.b16 %v1182
        %v4129 = vunpack.c.l.b16 %v1183
        %v4130 = vunpack.c.h.b16 %v1183
        %v4131 = vunpack.c.l.b16 %v1184
        %v4132 = vunpack.c.h.b16 %v1184
        %v4133 = vunpack.c.l.b16 %v1185
        %v4134 = vunpack.c.h.b16 %v1185
        %v4135 = vunpack.c.l.b16 %v1186
        %v4136 = vunpack.c.h.b16 %v1186
        %v4137 = vunpack.c.l.b16 %v1187
        %v4138 = vunpack.c.h.b16 %v1187
        %v4139 = vunpack.c.l.b16 %v1188
        %v4140 = vunpack.c.h.b16 %v1188
        %v4141 = vunpack.c.l.b16 %v1189
        %v4142 = vunpack.c.h.b16 %v1189
        %v4143 = vunpack.c.l.b16 %v1190
        %v4144 = vunpack.c.h.b16 %v1190
        %v4145 = vunpack.c.l.b16 %v1191
        %v4146 = vunpack.c.h.b16 %v1191
        %v4147 = vunpack.c.l.b16 %v1192
        %v4148 = vunpack.c.h.b16 %v1192
        %v4149 = vunpack.c.l.b16 %v1193
        %v4150 = vunpack.c.h.b16 %v1193
        %v4151 = vunpack.c.l.b16 %v1194
        %v4152 = vunpack.c.h.b16 %v1194
        %v4153 = vunpack.c.l.b16 %v1195
        %v4154 = vunpack.c.h.b16 %v1195
        %v4155 = vunpack.c.l.b16 %v1196
        %v4156 = vunpack.c.h.b16 %v1196
        %v4157 = vunpack.c.l.b16 %v1197
        %v4158 = vunpack.c.h.b16 %v1197
        %v4159 = vunpack.c.l.b16 %v1198
        %v4160 = vunpack.c.h.b16 %v1198
        %v4161 = vunpack.c.l.b16 %v1199
        %v4162 = vunpack.c.h.b16 %v1199
        %v4163 = vunpack.c.l.b16 %v1200
        %v4164 = vunpack.c.h.b16 %v1200
        %v4165 = vunpack.c.l.b16 %v1201
        %v4166 = vunpack.c.h.b16 %v1201
        %v4167 = vunpack.c.l.b16 %v1202
        %v4168 = vunpack.c.h.b16 %v1202
        %v4169 = vunpack.c.l.b16 %v1203
        %v4170 = vunpack.c.h.b16 %v1203
        %v4171 = vunpack.c.l.b16 %v1204
        %v4172 = vunpack.c.h.b16 %v1204
        %v4173 = vunpack.c.l.b16 %v1205
        %v4174 = vunpack.c.h.b16 %v1205
        %v4175 = vunpack.c.l.b16 %v1206
        %v4176 = vunpack.c.h.b16 %v1206
        %v4177 = vunpack.c.l.b16 %v1207
        %v4178 = vunpack.c.h.b16 %v1207
        %v4179 = vunpack.c.l.b16 %v1208
        %v4180 = vunpack.c.h.b16 %v1208
        %v4181 = vunpack.c.l.b16 %v1209
        %v4182 = vunpack.c.h.b16 %v1209
        %v4183 = vunpack.c.l.b16 %v1210
        %v4184 = vunpack.c.h.b16 %v1210
        %v4185 = vunpack.c.l.b16 %v1211
        %v4186 = vunpack.c.h.b16 %v1211
        %v4187 = vunpack.c.l.b16 %v1212
        %v4188 = vunpack.c.h.b16 %v1212
        %v4189 = vunpack.c.l.b16 %v1213
        %v4190 = vunpack.c.h.b16 %v1213
        %v4191 = vunpack.c.l.b16 %v1214
        %v4192 = vunpack.c.h.b16 %v1214
        %v4193 = vunpack.c.l.b16 %v1215
        %v4194 = vunpack.c.h.b16 %v1215
        %v4195 = vunpack.c.l.b16 %v1216
        %v4196 = vunpack.c.h.b16 %v1216
        %v4197 = vunpack.c.l.b16 %v1217
        %v4198 = vunpack.c.h.b16 %v1217
        %v4199 = vunpack.c.l.b16 %v1218
        %v4200 = vunpack.c.h.b16 %v1218
        %v4201 = vunpack.c.l.b16 %v1219
        %v4202 = vunpack.c.h.b16 %v1219
        %v4203 = vunpack.c.l.b16 %v1220
        %v4204 = vunpack.c.h.b16 %v1220
        %v4205 = vunpack.c.l.b16 %v1221
        %v4206 = vunpack.c.h.b16 %v1221
        %v4207 = vunpack.c.l.b16 %v1222
        %v4208 = vunpack.c.h.b16 %v1222
        %v4209 = vunpack.c.l.b16 %v1223
        %v4210 = vunpack.c.h.b16 %v1223
        %v4211 = vunpack.c.l.b16 %v1224
        %v4212 = vunpack.c.h.b16 %v1224
        %v4213 = vunpack.c.l.b16 %v1225
        %v4214 = vunpack.c.h.b16 %v1225
        %v4215 = vunpack.c.l.b16 %v1226
        %v4216 = vunpack.c.h.b16 %v1226
        %v4217 = vunpack.c.l.b16 %v1227
        %v4218 = vunpack.c.h.b16 %v1227
        %v4219 = vunpack.c.l.b16 %v1228
        %v4220 = vunpack.c.h.b16 %v1228
        %v4221 = vunpack.c.l.b16 %v1229
        %v4222 = vunpack.c.h.b16 %v1229
        %v4223 = vunpack.c.l.b16 %v1230
        %v4224 = vunpack.c.h.b16 %v1230
        %v4225 = vunpack.c.l.b16 %v1231
        %v4226 = vunpack.c.h.b16 %v1231
        %v4227 = vunpack.c.l.b16 %v1232
        %v4228 = vunpack.c.h.b16 %v1232
        %v4229 = vunpack.c.l.b16 %v1233
        %v4230 = vunpack.c.h.b16 %v1233
        %v4231 = vunpack.c.l.b16 %v1234
        %v4232 = vunpack.c.h.b16 %v1234
        %v4233 = vunpack.c.l.b16 %v1235
        %v4234 = vunpack.c.h.b16 %v1235
        %v4235 = vunpack.c.l.b16 %v1236
        %v4236 = vunpack.c.h.b16 %v1236
        %v4237 = vunpack.c.l.b16 %v1237
        %v4238 = vunpack.c.h.b16 %v1237
        %v4239 = vunpack.c.l.b16 %v1238
        %v4240 = vunpack.c.h.b16 %v1238
        %v4241 = vunpack.c.l.b16 %v1239
        %v4242 = vunpack.c.h.b16 %v1239
        %v4243 = vunpack.c.l.b16 %v1240
        %v4244 = vunpack.c.h.b16 %v1240
        %v4245 = vunpack.c.l.b16 %v1241
        %v4246 = vunpack.c.h.b16 %v1241
        %v4247 = vunpack.c.l.b16 %v1242
        %v4248 = vunpack.c.h.b16 %v1242
        %v4249 = vunpack.c.l.b16 %v1243
        %v4250 = vunpack.c.h.b16 %v1243
        %v4251 = vunpack.c.l.b16 %v1244
        %v4252 = vunpack.c.h.b16 %v1244
        %v4253 = vunpack.c.l.b16 %v1245
        %v4254 = vunpack.c.h.b16 %v1245
        %v4255 = vunpack.c.l.b16 %v1246
        %v4256 = vunpack.c.h.b16 %v1246
        %v4257 = vunpack.c.l.b16 %v1247
        %v4258 = vunpack.c.h.b16 %v1247
        %v4259 = vunpack.c.l.b16 %v1248
        %v4260 = vunpack.c.h.b16 %v1248
        %v4261 = vunpack.c.l.b16 %v1249
        %v4262 = vunpack.c.h.b16 %v1249
        %v4263 = vunpack.c.l.b16 %v1250
        %v4264 = vunpack.c.h.b16 %v1250
        %v4265 = vunpack.c.l.b16 %v1251
        %v4266 = vunpack.c.h.b16 %v1251
        %v4267 = vunpack.c.l.b16 %v1252
        %v4268 = vunpack.c.h.b16 %v1252
        %v4269 = vunpack.c.l.b16 %v1253
        %v4270 = vunpack.c.h.b16 %v1253
        %v4271 = vunpack.c.l.b16 %v1254
        %v4272 = vunpack.c.h.b16 %v1254
        %v4273 = vunpack.c.l.b16 %v1255
        %v4274 = vunpack.c.h.b16 %v1255
        %v4275 = vunpack.c.l.b16 %v1256
        %v4276 = vunpack.c.h.b16 %v1256
        %v4277 = vunpack.c.l.b16 %v1257
        %v4278 = vunpack.c.h.b16 %v1257
        %v4279 = vunpack.c.l.b16 %v1258
        %v4280 = vunpack.c.h.b16 %v1258
        %v4281 = vunpack.c.l.b16 %v1259
        %v4282 = vunpack.c.h.b16 %v1259
        %v4283 = vunpack.c.l.b16 %v1260
        %v4284 = vunpack.c.h.b16 %v1260
        %v4285 = vunpack.c.l.b16 %v1261
        %v4286 = vunpack.c.h.b16 %v1261
        %v4287 = vunpack.c.l.b16 %v1262
        %v4288 = vunpack.c.h.b16 %v1262
        %v4289 = vunpack.c.l.b16 %v1263
        %v4290 = vunpack.c.h.b16 %v1263
        %v4291 = vunpack.c.l.b16 %v1264
        %v4292 = vunpack.c.h.b16 %v1264
        %v4293 = vunpack.c.l.b16 %v1265
        %v4294 = vunpack.c.h.b16 %v1265
        %v4295 = vunpack.c.l.b16 %v1266
        %v4296 = vunpack.c.h.b16 %v1266
        %v4297 = vunpack.c.l.b16 %v1267
        %v4298 = vunpack.c.h.b16 %v1267
        %v4299 = vunpack.c.l.b16 %v1268
        %v4300 = vunpack.c.h.b16 %v1268
        %v4301 = vunpack.c.l.b16 %v1269
        %v4302 = vunpack.c.h.b16 %v1269
        %v4303 = vunpack.c.l.b16 %v1270
        %v4304 = vunpack.c.h.b16 %v1270
        %v4305 = vunpack.c.l.b16 %v1271
        %v4306 = vunpack.c.h.b16 %v1271
        %v4307 = vunpack.c.l.b16 %v1272
        %v4308 = vunpack.c.h.b16 %v1272
        %v4309 = vunpack.c.l.b16 %v1273
        %v4310 = vunpack.c.h.b16 %v1273
        %v4311 = vunpack.c.l.b16 %v1274
        %v4312 = vunpack.c.h.b16 %v1274
        %v4313 = vunpack.c.l.b16 %v1275
        %v4314 = vunpack.c.h.b16 %v1275
        %v4315 = vunpack.c.l.b16 %v1276
        %v4316 = vunpack.c.h.b16 %v1276
        %v4317 = vunpack.c.l.b16 %v1277
        %v4318 = vunpack.c.h.b16 %v1277
        %v4319 = vunpack.c.l.b16 %v1278
        %v4320 = vunpack.c.h.b16 %v1278
        %v4321 = vunpack.c.l.b16 %v1279
        %v4322 = vunpack.c.h.b16 %v1279
        %v4323 = vunpack.c.l.b16 %v1280
        %v4324 = vunpack.c.h.b16 %v1280
        %v4325 = vunpack.c.l.b16 %v1281
        %v4326 = vunpack.c.h.b16 %v1281
        %v4327 = vunpack.c.l.b16 %v1282
        %v4328 = vunpack.c.h.b16 %v1282
        %v4329 = vunpack.c.l.b16 %v1283
        %v4330 = vunpack.c.h.b16 %v1283
        %v4331 = vunpack.c.l.b16 %v1284
        %v4332 = vunpack.c.h.b16 %v1284
        %v4333 = vunpack.c.l.b16 %v1285
        %v4334 = vunpack.c.h.b16 %v1285
        %v4335 = vunpack.c.l.b16 %v1286
        %v4336 = vunpack.c.h.b16 %v1286
        %v4337 = vunpack.c.l.b16 %v1287
        %v4338 = vunpack.c.h.b16 %v1287
        %v4339 = vunpack.c.l.b16 %v1288
        %v4340 = vunpack.c.h.b16 %v1288
        %v4341 = vunpack.c.l.b16 %v1289
        %v4342 = vunpack.c.h.b16 %v1289
        %v4343 = vunpack.c.l.b16 %v1290
        %v4344 = vunpack.c.h.b16 %v1290
        %v4345 = vunpack.c.l.b16 %v1291
        %v4346 = vunpack.c.h.b16 %v1291
        %v4347 = vunpack.c.l.b16 %v1292
        %v4348 = vunpack.c.h.b16 %v1292
        %v4349 = vunpack.c.l.b16 %v1293
        %v4350 = vunpack.c.h.b16 %v1293
        %v4351 = vunpack.c.l.b16 %v1294
        %v4352 = vunpack.c.h.b16 %v1294
        %v4353 = vunpack.c.l.b16 %v1295
        %v4354 = vunpack.c.h.b16 %v1295
        %v4355 = vunpack.c.l.b16 %v1296
        %v4356 = vunpack.c.h.b16 %v1296
        %v4357 = vunpack.c.l.b16 %v1297
        %v4358 = vunpack.c.h.b16 %v1297
        %v4359 = vunpack.c.l.b16 %v1298
        %v4360 = vunpack.c.h.b16 %v1298
        %v4361 = vunpack.c.l.b16 %v1299
        %v4362 = vunpack.c.h.b16 %v1299
        %v4363 = vunpack.c.l.b16 %v1300
        %v4364 = vunpack.c.h.b16 %v1300
        %v4365 = vunpack.c.l.b16 %v1301
        %v4366 = vunpack.c.h.b16 %v1301
        %v4367 = vunpack.c.l.b16 %v1302
        %v4368 = vunpack.c.h.b16 %v1302
        %v4369 = vunpack.c.l.b16 %v1303
        %v4370 = vunpack.c.h.b16 %v1303
        %v4371 = vunpack.c.l.b16 %v1304
        %v4372 = vunpack.c.h.b16 %v1304
        %v4373 = vunpack.c.l.b16 %v1305
        %v4374 = vunpack.c.h.b16 %v1305
        %v4375 = vunpack.c.l.b16 %v1306
        %v4376 = vunpack.c.h.b16 %v1306
        %v4377 = vunpack.c.l.b16 %v1307
        %v4378 = vunpack.c.h.b16 %v1307
        %v4379 = vunpack.c.l.b16 %v1308
        %v4380 = vunpack.c.h.b16 %v1308
        %v4381 = vunpack.c.l.b16 %v1309
        %v4382 = vunpack.c.h.b16 %v1309
        %v4383 = vunpack.c.l.b16 %v1310
        %v4384 = vunpack.c.h.b16 %v1310
        %v4385 = vunpack.c.l.b16 %v1311
        %v4386 = vunpack.c.h.b16 %v1311
        %v4387 = vunpack.c.l.b16 %v1312
        %v4388 = vunpack.c.h.b16 %v1312
        %v4389 = vunpack.c.l.b16 %v1313
        %v4390 = vunpack.c.h.b16 %v1313
        %v4391 = vunpack.c.l.b16 %v1314
        %v4392 = vunpack.c.h.b16 %v1314
        %v4393 = vunpack.c.l.b16 %v1315
        %v4394 = vunpack.c.h.b16 %v1315
        %v4395 = vunpack.c.l.b16 %v1316
        %v4396 = vunpack.c.h.b16 %v1316
        %v4397 = vunpack.c.l.b16 %v1317
        %v4398 = vunpack.c.h.b16 %v1317
        %v4399 = vunpack.c.l.b16 %v1318
        %v4400 = vunpack.c.h.b16 %v1318
        %v4401 = vunpack.c.l.b16 %v1319
        %v4402 = vunpack.c.h.b16 %v1319
        %v4403 = vunpack.c.l.b16 %v1320
        %v4404 = vunpack.c.h.b16 %v1320
        %v4405 = vunpack.c.l.b16 %v1321
        %v4406 = vunpack.c.h.b16 %v1321
        %v4407 = vunpack.c.l.b16 %v1322
        %v4408 = vunpack.c.h.b16 %v1322
        %v4409 = vunpack.c.l.b16 %v1323
        %v4410 = vunpack.c.h.b16 %v1323
        %v4411 = vunpack.c.l.b16 %v1324
        %v4412 = vunpack.c.h.b16 %v1324
        %v4413 = vunpack.c.l.b16 %v1325
        %v4414 = vunpack.c.h.b16 %v1325
        %v4415 = vunpack.c.l.b16 %v1326
        %v4416 = vunpack.c.h.b16 %v1326
        %v4417 = vunpack.c.l.b16 %v1327
        %v4418 = vunpack.c.h.b16 %v1327
        %v4419 = vunpack.c.l.b16 %v1328
        %v4420 = vunpack.c.h.b16 %v1328
        %v4421 = vunpack.c.l.b16 %v1329
        %v4422 = vunpack.c.h.b16 %v1329
        %v4423 = vunpack.c.l.b16 %v1330
        %v4424 = vunpack.c.h.b16 %v1330
        %v4425 = vunpack.c.l.b16 %v1331
        %v4426 = vunpack.c.h.b16 %v1331
        %v4427 = vunpack.c.l.b16 %v1332
        %v4428 = vunpack.c.h.b16 %v1332
        %v4429 = vunpack.c.l.b16 %v1333
        %v4430 = vunpack.c.h.b16 %v1333
        %v4431 = vunpack.c.l.b16 %v1334
        %v4432 = vunpack.c.h.b16 %v1334
        %v4433 = vunpack.c.l.b16 %v1335
        %v4434 = vunpack.c.h.b16 %v1335
        %v4435 = vunpack.c.l.b16 %v1336
        %v4436 = vunpack.c.h.b16 %v1336
        %v4437 = vunpack.c.l.b16 %v1337
        %v4438 = vunpack.c.h.b16 %v1337
        %v4439 = vunpack.c.l.b16 %v1338
        %v4440 = vunpack.c.h.b16 %v1338
        %v4441 = vunpack.c.l.b16 %v1339
        %v4442 = vunpack.c.h.b16 %v1339
        %v4443 = vunpack.c.l.b16 %v1340
        %v4444 = vunpack.c.h.b16 %v1340
        %v4445 = vunpack.c.l.b16 %v1341
        %v4446 = vunpack.c.h.b16 %v1341
        %v4447 = vunpack.c.l.b16 %v1342
        %v4448 = vunpack.c.h.b16 %v1342
        %v4449 = vunpack.c.l.b16 %v1343
        %v4450 = vunpack.c.h.b16 %v1343
        %v4451 = vunpack.c.l.b16 %v1344
        %v4452 = vunpack.c.h.b16 %v1344
        %v4453 = vunpack.c.l.b16 %v1345
        %v4454 = vunpack.c.h.b16 %v1345
        %v4455 = vunpack.c.l.b16 %v1346
        %v4456 = vunpack.c.h.b16 %v1346
        %v4457 = vunpack.c.l.b16 %v1347
        %v4458 = vunpack.c.h.b16 %v1347
        %v4459 = vunpack.c.l.b16 %v1348
        %v4460 = vunpack.c.h.b16 %v1348
        %v4461 = vunpack.c.l.b16 %v1349
        %v4462 = vunpack.c.h.b16 %v1349
        %v4463 = vunpack.c.l.b16 %v1350
        %v4464 = vunpack.c.h.b16 %v1350
        %v4465 = vunpack.c.l.b16 %v1351
        %v4466 = vunpack.c.h.b16 %v1351
        %v4467 = vunpack.c.l.b16 %v1352
        %v4468 = vunpack.c.h.b16 %v1352
        %v4469 = vunpack.c.l.b16 %v1353
        %v4470 = vunpack.c.h.b16 %v1353
        %v4471 = vunpack.c.l.b16 %v1354
        %v4472 = vunpack.c.h.b16 %v1354
        %v4473 = vunpack.c.l.b16 %v1355
        %v4474 = vunpack.c.h.b16 %v1355
        %v4475 = vunpack.c.l.b16 %v1356
        %v4476 = vunpack.c.h.b16 %v1356
        %v4477 = vunpack.c.l.b16 %v1357
        %v4478 = vunpack.c.h.b16 %v1357
        %v4479 = vunpack.c.l.b16 %v1358
        %v4480 = vunpack.c.h.b16 %v1358
        %v4481 = vunpack.c.l.b16 %v1359
        %v4482 = vunpack.c.h.b16 %v1359
        %v4483 = vunpack.c.l.b16 %v1360
        %v4484 = vunpack.c.h.b16 %v1360
        %v4485 = vunpack.c.l.b16 %v1361
        %v4486 = vunpack.c.h.b16 %v1361
        %v4487 = vunpack.c.l.b16 %v1362
        %v4488 = vunpack.c.h.b16 %v1362
        %v4489 = vunpack.c.l.b16 %v1363
        %v4490 = vunpack.c.h.b16 %v1363
        %v4491 = vunpack.c.l.b16 %v1364
        %v4492 = vunpack.c.h.b16 %v1364
        %v4493 = vunpack.c.l.b16 %v1365
        %v4494 = vunpack.c.h.b16 %v1365
        %v4495 = vunpack.c.l.b16 %v1366
        %v4496 = vunpack.c.h.b16 %v1366
        %v4497 = vpack.c.b16 %v2465, %v2449
        %v4498 = vpack.c.b16 %v2466, %v2450
        %v4499 = vpack.c.b16 %v2467, %v2451
        %v4500 = vpack.c.b16 %v2468, %v2452
        %v4501 = vpack.c.b16 %v2469, %v2453
        %v4502 = vpack.c.b16 %v2470, %v2454
        %v4503 = vpack.c.b16 %v2471, %v2455
        %v4504 = vpack.c.b16 %v2472, %v2456
        %v4505 = vpack.c.b16 %v2473, %v2457
        %v4506 = vpack.c.b16 %v2474, %v2458
        %v4507 = vpack.c.b16 %v2475, %v2459
        %v4508 = vpack.c.b16 %v2476, %v2460
        %v4509 = vpack.c.b16 %v2477, %v2461
        %v4510 = vpack.c.b16 %v2478, %v2462
        %v4511 = vpack.c.b16 %v2479, %v2463
        %v4512 = vpack.c.b16 %v2480, %v2464
        %v4513 = vpack.c.b16 %v2497, %v2481
        %v4514 = vpack.c.b16 %v2498, %v2482
        %v4515 = vpack.c.b16 %v2499, %v2483
        %v4516 = vpack.c.b16 %v2500, %v2484
        %v4517 = vpack.c.b16 %v2501, %v2485
        %v4518 = vpack.c.b16 %v2502, %v2486
        %v4519 = vpack.c.b16 %v2503, %v2487
        %v4520 = vpack.c.b16 %v2504, %v2488
        %v4521 = vpack.c.b16 %v2505, %v2489
        %v4522 = vpack.c.b16 %v2506, %v2490
        %v4523 = vpack.c.b16 %v2507, %v2491
        %v4524 = vpack.c.b16 %v2508, %v2492
        %v4525 = vpack.c.b16 %v2509, %v2493
        %v4526 = vpack.c.b16 %v2510, %v2494
        %v4527 = vpack.c.b16 %v2511, %v2495
        %v4528 = vpack.c.b16 %v2512, %v2496
        %v4529 = vpack.c.b16 %v2529, %v2513
        %v4530 = vpack.c.b16 %v2530, %v2514
        %v4531 = vpack.c.b16 %v2531, %v2515
        %v4532 = vpack.c.b16 %v2532, %v2516
        %v4533 = vpack.c.b16 %v2533, %v2517
        %v4534 = vpack.c.b16 %v2534, %v2518
        %v4535 = vpack.c.b16 %v2535, %v2519
        %v4536 = vpack.c.b16 %v2536, %v2520
        %v4537 = vpack.c.b16 %v2537, %v2521
        %v4538 = vpack.c.b16 %v2538, %v2522
        %v4539 = vpack.c.b16 %v2539, %v2523
        %v4540 = vpack.c.b16 %v2540, %v2524
        %v4541 = vpack.c.b16 %v2541, %v2525
        %v4542 = vpack.c.b16 %v2542, %v2526
        %v4543 = vpack.c.b16 %v2543, %v2527
        %v4544 = vpack.c.b16 %v2544, %v2528
        %v4545 = vpack.c.b16 %v2561, %v2545
        %v4546 = vpack.c.b16 %v2562, %v2546
        %v4547 = vpack.c.b16 %v2563, %v2547
        %v4548 = vpack.c.b16 %v2564, %v2548
        %v4549 = vpack.c.b16 %v2565, %v2549
        %v4550 = vpack.c.b16 %v2566, %v2550
        %v4551 = vpack.c.b16 %v2567, %v2551
        %v4552 = vpack.c.b16 %v2568, %v2552
        %v4553 = vpack.c.b16 %v2569, %v2553
        %v4554 = vpack.c.b16 %v2570, %v2554
        %v4555 = vpack.c.b16 %v2571, %v2555
        %v4556 = vpack.c.b16 %v2572, %v2556
        %v4557 = vpack.c.b16 %v2573, %v2557
        %v4558 = vpack.c.b16 %v2574, %v2558
        %v4559 = vpack.c.b16 %v2575, %v2559
        %v4560 = vpack.c.b16 %v2576, %v2560
        %v4561 = vpack.c.b16 %v2593, %v2577
        %v4562 = vpack.c.b16 %v2594, %v2578
        %v4563 = vpack.c.b16 %v2595, %v2579
        %v4564 = vpack.c.b16 %v2596, %v2580
        %v4565 = vpack.c.b16 %v2597, %v2581
        %v4566 = vpack.c.b16 %v2598, %v2582
        %v4567 = vpack.c.b16 %v2599, %v2583
        %v4568 = vpack.c.b16 %v2600, %v2584
        %v4569 = vpack.c.b16 %v2601, %v2585
        %v4570 = vpack.c.b16 %v2602, %v2586
        %v4571 = vpack.c.b16 %v2603, %v2587
        %v4572 = vpack.c.b16 %v2604, %v2588
        %v4573 = vpack.c.b16 %v2605, %v2589
        %v4574 = vpack.c.b16 %v2606, %v2590
        %v4575 = vpack.c.b16 %v2607, %v2591
        %v4576 = vpack.c.b16 %v2608, %v2592
        %v4577 = vpack.c.b16 %v2625, %v2609
        %v4578 = vpack.c.b16 %v2626, %v2610
        %v4579 = vpack.c.b16 %v2627, %v2611
        %v4580 = vpack.c.b16 %v2628, %v2612
        %v4581 = vpack.c.b16 %v2629, %v2613
        %v4582 = vpack.c.b16 %v2630, %v2614
        %v4583 = vpack.c.b16 %v2631, %v2615
        %v4584 = vpack.c.b16 %v2632, %v2616
        %v4585 = vpack.c.b16 %v2633, %v2617
        %v4586 = vpack.c.b16 %v2634, %v2618
        %v4587 = vpack.c.b16 %v2635, %v2619
        %v4588 = vpack.c.b16 %v2636, %v2620
        %v4589 = vpack.c.b16 %v2637, %v2621
        %v4590 = vpack.c.b16 %v2638, %v2622
        %v4591 = vpack.c.b16 %v2639, %v2623
        %v4592 = vpack.c.b16 %v2640, %v2624
        %v4593 = vpack.c.b16 %v2657, %v2641
        %v4594 = vpack.c.b16 %v2658, %v2642
        %v4595 = vpack.c.b16 %v2659, %v2643
        %v4596 = vpack.c.b16 %v2660, %v2644
        %v4597 = vpack.c.b16 %v2661, %v2645
        %v4598 = vpack.c.b16 %v2662, %v2646
        %v4599 = vpack.c.b16 %v2663, %v2647
        %v4600 = vpack.c.b16 %v2664, %v2648
        %v4601 = vpack.c.b16 %v2665, %v2649
        %v4602 = vpack.c.b16 %v2666, %v2650
        %v4603 = vpack.c.b16 %v2667, %v2651
        %v4604 = vpack.c.b16 %v2668, %v2652
        %v4605 = vpack.c.b16 %v2669, %v2653
        %v4606 = vpack.c.b16 %v2670, %v2654
        %v4607 = vpack.c.b16 %v2671, %v2655
        %v4608 = vpack.c.b16 %v2672, %v2656
        %v4609 = vpack.c.b16 %v2689, %v2673
        %v4610 = vpack.c.b16 %v2690, %v2674
        %v4611 = vpack.c.b16 %v2691, %v2675
        %v4612 = vpack.c.b16 %v2692, %v2676
        %v4613 = vpack.c.b16 %v2693, %v2677
        %v4614 = vpack.c.b16 %v2694, %v2678
        %v4615 = vpack.c.b16 %v2695, %v2679
        %v4616 = vpack.c.b16 %v2696, %v2680
        %v4617 = vpack.c.b16 %v2697, %v2681
        %v4618 = vpack.c.b16 %v2698, %v2682
        %v4619 = vpack.c.b16 %v2699, %v2683
        %v4620 = vpack.c.b16 %v2700, %v2684
        %v4621 = vpack.c.b16 %v2701, %v2685
        %v4622 = vpack.c.b16 %v2702, %v2686
        %v4623 = vpack.c.b16 %v2703, %v2687
        %v4624 = vpack.c.b16 %v2704, %v2688
        %v4625 = vpack.c.b16 %v2721, %v2705
        %v4626 = vpack.c.b16 %v2722, %v2706
        %v4627 = vpack.c.b16 %v2723, %v2707
        %v4628 = vpack.c.b16 %v2724, %v2708
        %v4629 = vpack.c.b16 %v2725, %v2709
        %v4630 = vpack.c.b16 %v2726, %v2710
        %v4631 = vpack.c.b16 %v2727, %v2711
        %v4632 = vpack.c.b16 %v2728, %v2712
        %v4633 = vpack.c.b16 %v2729, %v2713
        %v4634 = vpack.c.b16 %v2730, %v2714
        %v4635 = vpack.c.b16 %v2731, %v2715
        %v4636 = vpack.c.b16 %v2732, %v2716
        %v4637 = vpack.c.b16 %v2733, %v2717
        %v4638 = vpack.c.b16 %v2734, %v2718
        %v4639 = vpack.c.b16 %v2735, %v2719
        %v4640 = vpack.c.b16 %v2736, %v2720
        %v4641 = vpack.c.b16 %v2753, %v2737
        %v4642 = vpack.c.b16 %v2754, %v2738
        %v4643 = vpack.c.b16 %v2755, %v2739
        %v4644 = vpack.c.b16 %v2756, %v2740
        %v4645 = vpack.c.b16 %v2757, %v2741
        %v4646 = vpack.c.b16 %v2758, %v2742
        %v4647 = vpack.c.b16 %v2759, %v2743
        %v4648 = vpack.c.b16 %v2760, %v2744
        %v4649 = vpack.c.b16 %v2761, %v2745
        %v4650 = vpack.c.b16 %v2762, %v2746
        %v4651 = vpack.c.b16 %v2763, %v2747
        %v4652 = vpack.c.b16 %v2764, %v2748
        %v4653 = vpack.c.b16 %v2765, %v2749
        %v4654 = vpack.c.b16 %v2766, %v2750
        %v4655 = vpack.c.b16 %v2767, %v2751
        %v4656 = vpack.c.b16 %v2768, %v2752
        %v4657 = vpack.c.b16 %v2785, %v2769
        %v4658 = vpack.c.b16 %v2786, %v2770
        %v4659 = vpack.c.b16 %v2787, %v2771
        %v4660 = vpack.c.b16 %v2788, %v2772
        %v4661 = vpack.c.b16 %v2789, %v2773
        %v4662 = vpack.c.b16 %v2790, %v2774
        %v4663 = vpack.c.b16 %v2791, %v2775
        %v4664 = vpack.c.b16 %v2792, %v2776
        %v4665 = vpack.c.b16 %v2793, %v2777
        %v4666 = vpack.c.b16 %v2794, %v2778
        %v4667 = vpack.c.b16 %v2795, %v2779
        %v4668 = vpack.c.b16 %v2796, %v2780
        %v4669 = vpack.c.b16 %v2797, %v2781
        %v4670 = vpack.c.b16 %v2798, %v2782
        %v4671 = vpack.c.b16 %v2799, %v2783
        %v4672 = vpack.c.b16 %v2800, %v2784
        %v4673 = vpack.c.b16 %v2817, %v2801
        %v4674 = vpack.c.b16 %v2818, %v2802
        %v4675 = vpack.c.b16 %v2819, %v2803
        %v4676 = vpack.c.b16 %v2820, %v2804
        %v4677 = vpack.c.b16 %v2821, %v2805
        %v4678 = vpack.c.b16 %v2822, %v2806
        %v4679 = vpack.c.b16 %v2823, %v2807
        %v4680 = vpack.c.b16 %v2824, %v2808
        %v4681 = vpack.c.b16 %v2825, %v2809
        %v4682 = vpack.c.b16 %v2826, %v2810
        %v4683 = vpack.c.b16 %v2827, %v2811
        %v4684 = vpack.c.b16 %v2828, %v2812
        %v4685 = vpack.c.b16 %v2829, %v2813
        %v4686 = vpack.c.b16 %v2830, %v2814
        %v4687 = vpack.c.b16 %v2831, %v2815
        %v4688 = vpack.c.b16 %v2832, %v2816
        %v4689 = vpack.c.b16 %v2849, %v2833
        %v4690 = vpack.c.b16 %v2850, %v2834
        %v4691 = vpack.c.b16 %v2851, %v2835
        %v4692 = vpack.c.b16 %v2852, %v2836
        %v4693 = vpack.c.b16 %v2853, %v2837
        %v4694 = vpack.c.b16 %v2854, %v2838
        %v4695 = vpack.c.b16 %v2855, %v2839
        %v4696 = vpack.c.b16 %v2856, %v2840
        %v4697 = vpack.c.b16 %v2857, %v2841
        %v4698 = vpack.c.b16 %v2858, %v2842
        %v4699 = vpack.c.b16 %v2859, %v2843
        %v4700 = vpack.c.b16 %v2860, %v2844
        %v4701 = vpack.c.b16 %v2861, %v2845
        %v4702 = vpack.c.b16 %v2862, %v2846
        %v4703 = vpack.c.b16 %v2863, %v2847
        %v4704 = vpack.c.b16 %v2864, %v2848
        %v4705 = vpack.c.b16 %v2881, %v2865
        %v4706 = vpack.c.b16 %v2882, %v2866
        %v4707 = vpack.c.b16 %v2883, %v2867
        %v4708 = vpack.c.b16 %v2884, %v2868
        %v4709 = vpack.c.b16 %v2885, %v2869
        %v4710 = vpack.c.b16 %v2886, %v2870
        %v4711 = vpack.c.b16 %v2887, %v2871
        %v4712 = vpack.c.b16 %v2888, %v2872
        %v4713 = vpack.c.b16 %v2889, %v2873
        %v4714 = vpack.c.b16 %v2890, %v2874
        %v4715 = vpack.c.b16 %v2891, %v2875
        %v4716 = vpack.c.b16 %v2892, %v2876
        %v4717 = vpack.c.b16 %v2893, %v2877
        %v4718 = vpack.c.b16 %v2894, %v2878
        %v4719 = vpack.c.b16 %v2895, %v2879
        %v4720 = vpack.c.b16 %v2896, %v2880
        %v4721 = vpack.c.b16 %v2913, %v2897
        %v4722 = vpack.c.b16 %v2914, %v2898
        %v4723 = vpack.c.b16 %v2915, %v2899
        %v4724 = vpack.c.b16 %v2916, %v2900
        %v4725 = vpack.c.b16 %v2917, %v2901
        %v4726 = vpack.c.b16 %v2918, %v2902
        %v4727 = vpack.c.b16 %v2919, %v2903
        %v4728 = vpack.c.b16 %v2920, %v2904
        %v4729 = vpack.c.b16 %v2921, %v2905
        %v4730 = vpack.c.b16 %v2922, %v2906
        %v4731 = vpack.c.b16 %v2923, %v2907
        %v4732 = vpack.c.b16 %v2924, %v2908
        %v4733 = vpack.c.b16 %v2925, %v2909
        %v4734 = vpack.c.b16 %v2926, %v2910
        %v4735 = vpack.c.b16 %v2927, %v2911
        %v4736 = vpack.c.b16 %v2928, %v2912
        %v4737 = vpack.c.b16 %v2945, %v2929
        %v4738 = vpack.c.b16 %v2946, %v2930
        %v4739 = vpack.c.b16 %v2947, %v2931
        %v4740 = vpack.c.b16 %v2948, %v2932
        %v4741 = vpack.c.b16 %v2949, %v2933
        %v4742 = vpack.c.b16 %v2950, %v2934
        %v4743 = vpack.c.b16 %v2951, %v2935
        %v4744 = vpack.c.b16 %v2952, %v2936
        %v4745 = vpack.c.b16 %v2953, %v2937
        %v4746 = vpack.c.b16 %v2954, %v2938
        %v4747 = vpack.c.b16 %v2955, %v2939
        %v4748 = vpack.c.b16 %v2956, %v2940
        %v4749 = vpack.c.b16 %v2957, %v2941
        %v4750 = vpack.c.b16 %v2958, %v2942
        %v4751 = vpack.c.b16 %v2959, %v2943
        %v4752 = vpack.c.b16 %v2960, %v2944
        %v4753 = vpack.c.b16 %v2977, %v2961
        %v4754 = vpack.c.b16 %v2978, %v2962
        %v4755 = vpack.c.b16 %v2979, %v2963
        %v4756 = vpack.c.b16 %v2980, %v2964
        %v4757 = vpack.c.b16 %v2981, %v2965
        %v4758 = vpack.c.b16 %v2982, %v2966
        %v4759 = vpack.c.b16 %v2983, %v2967
        %v4760 = vpack.c.b16 %v2984, %v2968
        %v4761 = vpack.c.b16 %v2985, %v2969
        %v4762 = vpack.c.b16 %v2986, %v2970
        %v4763 = vpack.c.b16 %v2987, %v2971
        %v4764 = vpack.c.b16 %v2988, %v2972
        %v4765 = vpack.c.b16 %v2989, %v2973
        %v4766 = vpack.c.b16 %v2990, %v2974
        %v4767 = vpack.c.b16 %v2991, %v2975
        %v4768 = vpack.c.b16 %v2992, %v2976
        %v4769 = vpack.c.b16 %v3009, %v2993
        %v4770 = vpack.c.b16 %v3010, %v2994
        %v4771 = vpack.c.b16 %v3011, %v2995
        %v4772 = vpack.c.b16 %v3012, %v2996
        %v4773 = vpack.c.b16 %v3013, %v2997
        %v4774 = vpack.c.b16 %v3014, %v2998
        %v4775 = vpack.c.b16 %v3015, %v2999
        %v4776 = vpack.c.b16 %v3016, %v3000
        %v4777 = vpack.c.b16 %v3017, %v3001
        %v4778 = vpack.c.b16 %v3018, %v3002
        %v4779 = vpack.c.b16 %v3019, %v3003
        %v4780 = vpack.c.b16 %v3020, %v3004
        %v4781 = vpack.c.b16 %v3021, %v3005
        %v4782 = vpack.c.b16 %v3022, %v3006
        %v4783 = vpack.c.b16 %v3023, %v3007
        %v4784 = vpack.c.b16 %v3024, %v3008
        %v4785 = vpack.c.b16 %v3041, %v3025
        %v4786 = vpack.c.b16 %v3042, %v3026
        %v4787 = vpack.c.b16 %v3043, %v3027
        %v4788 = vpack.c.b16 %v3044, %v3028
        %v4789 = vpack.c.b16 %v3045, %v3029
        %v4790 = vpack.c.b16 %v3046, %v3030
        %v4791 = vpack.c.b16 %v3047, %v3031
        %v4792 = vpack.c.b16 %v3048, %v3032
        %v4793 = vpack.c.b16 %v3049, %v3033
        %v4794 = vpack.c.b16 %v3050, %v3034
        %v4795 = vpack.c.b16 %v3051, %v3035
        %v4796 = vpack.c.b16 %v3052, %v3036
        %v4797 = vpack.c.b16 %v3053, %v3037
        %v4798 = vpack.c.b16 %v3054, %v3038
        %v4799 = vpack.c.b16 %v3055, %v3039
        %v4800 = vpack.c.b16 %v3056, %v3040
        %v4801 = vpack.c.b16 %v3073, %v3057
        %v4802 = vpack.c.b16 %v3074, %v3058
        %v4803 = vpack.c.b16 %v3075, %v3059
        %v4804 = vpack.c.b16 %v3076, %v3060
        %v4805 = vpack.c.b16 %v3077, %v3061
        %v4806 = vpack.c.b16 %v3078, %v3062
        %v4807 = vpack.c.b16 %v3079, %v3063
        %v4808 = vpack.c.b16 %v3080, %v3064
        %v4809 = vpack.c.b16 %v3081, %v3065
        %v4810 = vpack.c.b16 %v3082, %v3066
        %v4811 = vpack.c.b16 %v3083, %v3067
        %v4812 = vpack.c.b16 %v3084, %v3068
        %v4813 = vpack.c.b16 %v3085, %v3069
        %v4814 = vpack.c.b16 %v3086, %v3070
        %v4815 = vpack.c.b16 %v3087, %v3071
        %v4816 = vpack.c.b16 %v3088, %v3072
        %v4817 = vpack.c.b16 %v3105, %v3089
        %v4818 = vpack.c.b16 %v3106, %v3090
        %v4819 = vpack.c.b16 %v3107, %v3091
        %v4820 = vpack.c.b16 %v3108, %v3092
        %v4821 = vpack.c.b16 %v3109, %v3093
        %v4822 = vpack.c.b16 %v3110, %v3094
        %v4823 = vpack.c.b16 %v3111, %v3095
        %v4824 = vpack.c.b16 %v3112, %v3096
        %v4825 = vpack.c.b16 %v3113, %v3097
        %v4826 = vpack.c.b16 %v3114, %v3098
        %v4827 = vpack.c.b16 %v3115, %v3099
        %v4828 = vpack.c.b16 %v3116, %v3100
        %v4829 = vpack.c.b16 %v3117, %v3101
        %v4830 = vpack.c.b16 %v3118, %v3102
        %v4831 = vpack.c.b16 %v3119, %v3103
        %v4832 = vpack.c.b16 %v3120, %v3104
        %v4833 = vpack.c.b16 %v3137, %v3121
        %v4834 = vpack.c.b16 %v3138, %v3122
        %v4835 = vpack.c.b16 %v3139, %v3123
        %v4836 = vpack.c.b16 %v3140, %v3124
        %v4837 = vpack.c.b16 %v3141, %v3125
        %v4838 = vpack.c.b16 %v3142, %v3126
        %v4839 = vpack.c.b16 %v3143, %v3127
        %v4840 = vpack.c.b16 %v3144, %v3128
        %v4841 = vpack.c.b16 %v3145, %v3129
        %v4842 = vpack.c.b16 %v3146, %v3130
        %v4843 = vpack.c.b16 %v3147, %v3131
        %v4844 = vpack.c.b16 %v3148, %v3132
        %v4845 = vpack.c.b16 %v3149, %v3133
        %v4846 = vpack.c.b16 %v3150, %v3134
        %v4847 = vpack.c.b16 %v3151, %v3135
        %v4848 = vpack.c.b16 %v3152, %v3136
        %v4849 = vpack.c.b16 %v3169, %v3153
        %v4850 = vpack.c.b16 %v3170, %v3154
        %v4851 = vpack.c.b16 %v3171, %v3155
        %v4852 = vpack.c.b16 %v3172, %v3156
        %v4853 = vpack.c.b16 %v3173, %v3157
        %v4854 = vpack.c.b16 %v3174, %v3158
        %v4855 = vpack.c.b16 %v3175, %v3159
        %v4856 = vpack.c.b16 %v3176, %v3160
        %v4857 = vpack.c.b16 %v3177, %v3161
        %v4858 = vpack.c.b16 %v3178, %v3162
        %v4859 = vpack.c.b16 %v3179, %v3163
        %v4860 = vpack.c.b16 %v3180, %v3164
        %v4861 = vpack.c.b16 %v3181, %v3165
        %v4862 = vpack.c.b16 %v3182, %v3166
        %v4863 = vpack.c.b16 %v3183, %v3167
        %v4864 = vpack.c.b16 %v3184, %v3168
        %v4865 = vpack.c.b16 %v3201, %v3185
        %v4866 = vpack.c.b16 %v3202, %v3186
        %v4867 = vpack.c.b16 %v3203, %v3187
        %v4868 = vpack.c.b16 %v3204, %v3188
        %v4869 = vpack.c.b16 %v3205, %v3189
        %v4870 = vpack.c.b16 %v3206, %v3190
        %v4871 = vpack.c.b16 %v3207, %v3191
        %v4872 = vpack.c.b16 %v3208, %v3192
        %v4873 = vpack.c.b16 %v3209, %v3193
        %v4874 = vpack.c.b16 %v3210, %v3194
        %v4875 = vpack.c.b16 %v3211, %v3195
        %v4876 = vpack.c.b16 %v3212, %v3196
        %v4877 = vpack.c.b16 %v3213, %v3197
        %v4878 = vpack.c.b16 %v3214, %v3198
        %v4879 = vpack.c.b16 %v3215, %v3199
        %v4880 = vpack.c.b16 %v3216, %v3200
        %v4881 = vpack.c.b16 %v3233, %v3217
        %v4882 = vpack.c.b16 %v3234, %v3218
        %v4883 = vpack.c.b16 %v3235, %v3219
        %v4884 = vpack.c.b16 %v3236, %v3220
        %v4885 = vpack.c.b16 %v3237, %v3221
        %v4886 = vpack.c.b16 %v3238, %v3222
        %v4887 = vpack.c.b16 %v3239, %v3223
        %v4888 = vpack.c.b16 %v3240, %v3224
        %v4889 = vpack.c.b16 %v3241, %v3225
        %v4890 = vpack.c.b16 %v3242, %v3226
        %v4891 = vpack.c.b16 %v3243, %v3227
        %v4892 = vpack.c.b16 %v3244, %v3228
        %v4893 = vpack.c.b16 %v3245, %v3229
        %v4894 = vpack.c.b16 %v3246, %v3230
        %v4895 = vpack.c.b16 %v3247, %v3231
        %v4896 = vpack.c.b16 %v3248, %v3232
        %v4897 = vpack.c.b16 %v3265, %v3249
        %v4898 = vpack.c.b16 %v3266, %v3250
        %v4899 = vpack.c.b16 %v3267, %v3251
        %v4900 = vpack.c.b16 %v3268, %v3252
        %v4901 = vpack.c.b16 %v3269, %v3253
        %v4902 = vpack.c.b16 %v3270, %v3254
        %v4903 = vpack.c.b16 %v3271, %v3255
        %v4904 = vpack.c.b16 %v3272, %v3256
        %v4905 = vpack.c.b16 %v3273, %v3257
        %v4906 = vpack.c.b16 %v3274, %v3258
        %v4907 = vpack.c.b16 %v3275, %v3259
        %v4908 = vpack.c.b16 %v3276, %v3260
        %v4909 = vpack.c.b16 %v3277, %v3261
        %v4910 = vpack.c.b16 %v3278, %v3262
        %v4911 = vpack.c.b16 %v3279, %v3263
        %v4912 = vpack.c.b16 %v3280, %v3264
        %v4913 = vpack.c.b16 %v3297, %v3281
        %v4914 = vpack.c.b16 %v3298, %v3282
        %v4915 = vpack.c.b16 %v3299, %v3283
        %v4916 = vpack.c.b16 %v3300, %v3284
        %v4917 = vpack.c.b16 %v3301, %v3285
        %v4918 = vpack.c.b16 %v3302, %v3286
        %v4919 = vpack.c.b16 %v3303, %v3287
        %v4920 = vpack.c.b16 %v3304, %v3288
        %v4921 = vpack.c.b16 %v3305, %v3289
        %v4922 = vpack.c.b16 %v3306, %v3290
        %v4923 = vpack.c.b16 %v3307, %v3291
        %v4924 = vpack.c.b16 %v3308, %v3292
        %v4925 = vpack.c.b16 %v3309, %v3293
        %v4926 = vpack.c.b16 %v3310, %v3294
        %v4927 = vpack.c.b16 %v3311, %v3295
        %v4928 = vpack.c.b16 %v3312, %v3296
        %v4929 = vpack.c.b16 %v3329, %v3313
        %v4930 = vpack.c.b16 %v3330, %v3314
        %v4931 = vpack.c.b16 %v3331, %v3315
        %v4932 = vpack.c.b16 %v3332, %v3316
        %v4933 = vpack.c.b16 %v3333, %v3317
        %v4934 = vpack.c.b16 %v3334, %v3318
        %v4935 = vpack.c.b16 %v3335, %v3319
        %v4936 = vpack.c.b16 %v3336, %v3320
        %v4937 = vpack.c.b16 %v3337, %v3321
        %v4938 = vpack.c.b16 %v3338, %v3322
        %v4939 = vpack.c.b16 %v3339, %v3323
        %v4940 = vpack.c.b16 %v3340, %v3324
        %v4941 = vpack.c.b16 %v3341, %v3325
        %v4942 = vpack.c.b16 %v3342, %v3326
        %v4943 = vpack.c.b16 %v3343, %v3327
        %v4944 = vpack.c.b16 %v3344, %v3328
        %v4945 = vpack.c.b16 %v3361, %v3345
        %v4946 = vpack.c.b16 %v3362, %v3346
        %v4947 = vpack.c.b16 %v3363, %v3347
        %v4948 = vpack.c.b16 %v3364, %v3348
        %v4949 = vpack.c.b16 %v3365, %v3349
        %v4950 = vpack.c.b16 %v3366, %v3350
        %v4951 = vpack.c.b16 %v3367, %v3351
        %v4952 = vpack.c.b16 %v3368, %v3352
        %v4953 = vpack.c.b16 %v3369, %v3353
        %v4954 = vpack.c.b16 %v3370, %v3354
        %v4955 = vpack.c.b16 %v3371, %v3355
        %v4956 = vpack.c.b16 %v3372, %v3356
        %v4957 = vpack.c.b16 %v3373, %v3357
        %v4958 = vpack.c.b16 %v3374, %v3358
        %v4959 = vpack.c.b16 %v3375, %v3359
        %v4960 = vpack.c.b16 %v3376, %v3360
        %v4961 = vpack.c.b16 %v3393, %v3377
        %v4962 = vpack.c.b16 %v3394, %v3378
        %v4963 = vpack.c.b16 %v3395, %v3379
        %v4964 = vpack.c.b16 %v3396, %v3380
        %v4965 = vpack.c.b16 %v3397, %v3381
        %v4966 = vpack.c.b16 %v3398, %v3382
        %v4967 = vpack.c.b16 %v3399, %v3383
        %v4968 = vpack.c.b16 %v3400, %v3384
        %v4969 = vpack.c.b16 %v3401, %v3385
        %v4970 = vpack.c.b16 %v3402, %v3386
        %v4971 = vpack.c.b16 %v3403, %v3387
        %v4972 = vpack.c.b16 %v3404, %v3388
        %v4973 = vpack.c.b16 %v3405, %v3389
        %v4974 = vpack.c.b16 %v3406, %v3390
        %v4975 = vpack.c.b16 %v3407, %v3391
        %v4976 = vpack.c.b16 %v3408, %v3392
        %v4977 = vpack.c.b16 %v3425, %v3409
        %v4978 = vpack.c.b16 %v3426, %v3410
        %v4979 = vpack.c.b16 %v3427, %v3411
        %v4980 = vpack.c.b16 %v3428, %v3412
        %v4981 = vpack.c.b16 %v3429, %v3413
        %v4982 = vpack.c.b16 %v3430, %v3414
        %v4983 = vpack.c.b16 %v3431, %v3415
        %v4984 = vpack.c.b16 %v3432, %v3416
        %v4985 = vpack.c.b16 %v3433, %v3417
        %v4986 = vpack.c.b16 %v3434, %v3418
        %v4987 = vpack.c.b16 %v3435, %v3419
        %v4988 = vpack.c.b16 %v3436, %v3420
        %v4989 = vpack.c.b16 %v3437, %v3421
        %v4990 = vpack.c.b16 %v3438, %v3422
        %v4991 = vpack.c.b16 %v3439, %v3423
        %v4992 = vpack.c.b16 %v3440, %v3424
        %v4993 = vpack.c.b16 %v3457, %v3441
        %v4994 = vpack.c.b16 %v3458, %v3442
        %v4995 = vpack.c.b16 %v3459, %v3443
        %v4996 = vpack.c.b16 %v3460, %v3444
        %v4997 = vpack.c.b16 %v3461, %v3445
        %v4998 = vpack.c.b16 %v3462, %v3446
        %v4999 = vpack.c.b16 %v3463, %v3447
        %v5000 = vpack.c.b16 %v3464, %v3448
        %v5001 = vpack.c.b16 %v3465, %v3449
        %v5002 = vpack.c.b16 %v3466, %v3450
        %v5003 = vpack.c.b16 %v3467, %v3451
        %v5004 = vpack.c.b16 %v3468, %v3452
        %v5005 = vpack.c.b16 %v3469, %v3453
        %v5006 = vpack.c.b16 %v3470, %v3454
        %v5007 = vpack.c.b16 %v3471, %v3455
        %v5008 = vpack.c.b16 %v3472, %v3456
        %v5009 = vpack.c.b16 %v3489, %v3473
        %v5010 = vpack.c.b16 %v3490, %v3474
        %v5011 = vpack.c.b16 %v3491, %v3475
        %v5012 = vpack.c.b16 %v3492, %v3476
        %v5013 = vpack.c.b16 %v3493, %v3477
        %v5014 = vpack.c.b16 %v3494, %v3478
        %v5015 = vpack.c.b16 %v3495, %v3479
        %v5016 = vpack.c.b16 %v3496, %v3480
        %v5017 = vpack.c.b16 %v3497, %v3481
        %v5018 = vpack.c.b16 %v3498, %v3482
        %v5019 = vpack.c.b16 %v3499, %v3483
        %v5020 = vpack.c.b16 %v3500, %v3484
        %v5021 = vpack.c.b16 %v3501, %v3485
        %v5022 = vpack.c.b16 %v3502, %v3486
        %v5023 = vpack.c.b16 %v3503, %v3487
        %v5024 = vpack.c.b16 %v3504, %v3488
        %v5025 = vpack.c.b16 %v3521, %v3505
        %v5026 = vpack.c.b16 %v3522, %v3506
        %v5027 = vpack.c.b16 %v3523, %v3507
        %v5028 = vpack.c.b16 %v3524, %v3508
        %v5029 = vpack.c.b16 %v3525, %v3509
        %v5030 = vpack.c.b16 %v3526, %v3510
        %v5031 = vpack.c.b16 %v3527, %v3511
        %v5032 = vpack.c.b16 %v3528, %v3512
        %v5033 = vpack.c.b16 %v3529, %v3513
        %v5034 = vpack.c.b16 %v3530, %v3514
        %v5035 = vpack.c.b16 %v3531, %v3515
        %v5036 = vpack.c.b16 %v3532, %v3516
        %v5037 = vpack.c.b16 %v3533, %v3517
        %v5038 = vpack.c.b16 %v3534, %v3518
        %v5039 = vpack.c.b16 %v3535, %v3519
        %v5040 = vpack.c.b16 %v3536, %v3520
        %v5041 = vpack.c.b16 %v3553, %v3537
        %v5042 = vpack.c.b16 %v3554, %v3538
        %v5043 = vpack.c.b16 %v3555, %v3539
        %v5044 = vpack.c.b16 %v3556, %v3540
        %v5045 = vpack.c.b16 %v3557, %v3541
        %v5046 = vpack.c.b16 %v3558, %v3542
        %v5047 = vpack.c.b16 %v3559, %v3543
        %v5048 = vpack.c.b16 %v3560, %v3544
        %v5049 = vpack.c.b16 %v3561, %v3545
        %v5050 = vpack.c.b16 %v3562, %v3546
        %v5051 = vpack.c.b16 %v3563, %v3547
        %v5052 = vpack.c.b16 %v3564, %v3548
        %v5053 = vpack.c.b16 %v3565, %v3549
        %v5054 = vpack.c.b16 %v3566, %v3550
        %v5055 = vpack.c.b16 %v3567, %v3551
        %v5056 = vpack.c.b16 %v3568, %v3552
        %v5057 = vpack.c.b16 %v3585, %v3569
        %v5058 = vpack.c.b16 %v3586, %v3570
        %v5059 = vpack.c.b16 %v3587, %v3571
        %v5060 = vpack.c.b16 %v3588, %v3572
        %v5061 = vpack.c.b16 %v3589, %v3573
        %v5062 = vpack.c.b16 %v3590, %v3574
        %v5063 = vpack.c.b16 %v3591, %v3575
        %v5064 = vpack.c.b16 %v3592, %v3576
        %v5065 = vpack.c.b16 %v3593, %v3577
        %v5066 = vpack.c.b16 %v3594, %v3578
        %v5067 = vpack.c.b16 %v3595, %v3579
        %v5068 = vpack.c.b16 %v3596, %v3580
        %v5069 = vpack.c.b16 %v3597, %v3581
        %v5070 = vpack.c.b16 %v3598, %v3582
        %v5071 = vpack.c.b16 %v3599, %v3583
        %v5072 = vpack.c.b16 %v3600, %v3584
        %v5073 = vpack.c.b16 %v3617, %v3601
        %v5074 = vpack.c.b16 %v3618, %v3602
        %v5075 = vpack.c.b16 %v3619, %v3603
        %v5076 = vpack.c.b16 %v3620, %v3604
        %v5077 = vpack.c.b16 %v3621, %v3605
        %v5078 = vpack.c.b16 %v3622, %v3606
        %v5079 = vpack.c.b16 %v3623, %v3607
        %v5080 = vpack.c.b16 %v3624, %v3608
        %v5081 = vpack.c.b16 %v3625, %v3609
        %v5082 = vpack.c.b16 %v3626, %v3610
        %v5083 = vpack.c.b16 %v3627, %v3611
        %v5084 = vpack.c.b16 %v3628, %v3612
        %v5085 = vpack.c.b16 %v3629, %v3613
        %v5086 = vpack.c.b16 %v3630, %v3614
        %v5087 = vpack.c.b16 %v3631, %v3615
        %v5088 = vpack.c.b16 %v3632, %v3616
        %v5089 = vpack.c.b16 %v3649, %v3633
        %v5090 = vpack.c.b16 %v3650, %v3634
        %v5091 = vpack.c.b16 %v3651, %v3635
        %v5092 = vpack.c.b16 %v3652, %v3636
        %v5093 = vpack.c.b16 %v3653, %v3637
        %v5094 = vpack.c.b16 %v3654, %v3638
        %v5095 = vpack.c.b16 %v3655, %v3639
        %v5096 = vpack.c.b16 %v3656, %v3640
        %v5097 = vpack.c.b16 %v3657, %v3641
        %v5098 = vpack.c.b16 %v3658, %v3642
        %v5099 = vpack.c.b16 %v3659, %v3643
        %v5100 = vpack.c.b16 %v3660, %v3644
        %v5101 = vpack.c.b16 %v3661, %v3645
        %v5102 = vpack.c.b16 %v3662, %v3646
        %v5103 = vpack.c.b16 %v3663, %v3647
        %v5104 = vpack.c.b16 %v3664, %v3648
        %v5105 = vpack.c.b16 %v3681, %v3665
        %v5106 = vpack.c.b16 %v3682, %v3666
        %v5107 = vpack.c.b16 %v3683, %v3667
        %v5108 = vpack.c.b16 %v3684, %v3668
        %v5109 = vpack.c.b16 %v3685, %v3669
        %v5110 = vpack.c.b16 %v3686, %v3670
        %v5111 = vpack.c.b16 %v3687, %v3671
        %v5112 = vpack.c.b16 %v3688, %v3672
        %v5113 = vpack.c.b16 %v3689, %v3673
        %v5114 = vpack.c.b16 %v3690, %v3674
        %v5115 = vpack.c.b16 %v3691, %v3675
        %v5116 = vpack.c.b16 %v3692, %v3676
        %v5117 = vpack.c.b16 %v3693, %v3677
        %v5118 = vpack.c.b16 %v3694, %v3678
        %v5119 = vpack.c.b16 %v3695, %v3679
        %v5120 = vpack.c.b16 %v3696, %v3680
        %v5121 = vpack.c.b16 %v3713, %v3697
        %v5122 = vpack.c.b16 %v3714, %v3698
        %v5123 = vpack.c.b16 %v3715, %v3699
        %v5124 = vpack.c.b16 %v3716, %v3700
        %v5125 = vpack.c.b16 %v3717, %v3701
        %v5126 = vpack.c.b16 %v3718, %v3702
        %v5127 = vpack.c.b16 %v3719, %v3703
        %v5128 = vpack.c.b16 %v3720, %v3704
        %v5129 = vpack.c.b16 %v3721, %v3705
        %v5130 = vpack.c.b16 %v3722, %v3706
        %v5131 = vpack.c.b16 %v3723, %v3707
        %v5132 = vpack.c.b16 %v3724, %v3708
        %v5133 = vpack.c.b16 %v3725, %v3709
        %v5134 = vpack.c.b16 %v3726, %v3710
        %v5135 = vpack.c.b16 %v3727, %v3711
        %v5136 = vpack.c.b16 %v3728, %v3712
        %v5137 = vpack.c.b16 %v3745, %v3729
        %v5138 = vpack.c.b16 %v3746, %v3730
        %v5139 = vpack.c.b16 %v3747, %v3731
        %v5140 = vpack.c.b16 %v3748, %v3732
        %v5141 = vpack.c.b16 %v3749, %v3733
        %v5142 = vpack.c.b16 %v3750, %v3734
        %v5143 = vpack.c.b16 %v3751, %v3735
        %v5144 = vpack.c.b16 %v3752, %v3736
        %v5145 = vpack.c.b16 %v3753, %v3737
        %v5146 = vpack.c.b16 %v3754, %v3738
        %v5147 = vpack.c.b16 %v3755, %v3739
        %v5148 = vpack.c.b16 %v3756, %v3740
        %v5149 = vpack.c.b16 %v3757, %v3741
        %v5150 = vpack.c.b16 %v3758, %v3742
        %v5151 = vpack.c.b16 %v3759, %v3743
        %v5152 = vpack.c.b16 %v3760, %v3744
        %v5153 = vpack.c.b16 %v3777, %v3761
        %v5154 = vpack.c.b16 %v3778, %v3762
        %v5155 = vpack.c.b16 %v3779, %v3763
        %v5156 = vpack.c.b16 %v3780, %v3764
        %v5157 = vpack.c.b16 %v3781, %v3765
        %v5158 = vpack.c.b16 %v3782, %v3766
        %v5159 = vpack.c.b16 %v3783, %v3767
        %v5160 = vpack.c.b16 %v3784, %v3768
        %v5161 = vpack.c.b16 %v3785, %v3769
        %v5162 = vpack.c.b16 %v3786, %v3770
        %v5163 = vpack.c.b16 %v3787, %v3771
        %v5164 = vpack.c.b16 %v3788, %v3772
        %v5165 = vpack.c.b16 %v3789, %v3773
        %v5166 = vpack.c.b16 %v3790, %v3774
        %v5167 = vpack.c.b16 %v3791, %v3775
        %v5168 = vpack.c.b16 %v3792, %v3776
        %v5169 = vpack.c.b16 %v3809, %v3793
        %v5170 = vpack.c.b16 %v3810, %v3794
        %v5171 = vpack.c.b16 %v3811, %v3795
        %v5172 = vpack.c.b16 %v3812, %v3796
        %v5173 = vpack.c.b16 %v3813, %v3797
        %v5174 = vpack.c.b16 %v3814, %v3798
        %v5175 = vpack.c.b16 %v3815, %v3799
        %v5176 = vpack.c.b16 %v3816, %v3800
        %v5177 = vpack.c.b16 %v3817, %v3801
        %v5178 = vpack.c.b16 %v3818, %v3802
        %v5179 = vpack.c.b16 %v3819, %v3803
        %v5180 = vpack.c.b16 %v3820, %v3804
        %v5181 = vpack.c.b16 %v3821, %v3805
        %v5182 = vpack.c.b16 %v3822, %v3806
        %v5183 = vpack.c.b16 %v3823, %v3807
        %v5184 = vpack.c.b16 %v3824, %v3808
        %v5185 = vpack.c.b16 %v3841, %v3825
        %v5186 = vpack.c.b16 %v3842, %v3826
        %v5187 = vpack.c.b16 %v3843, %v3827
        %v5188 = vpack.c.b16 %v3844, %v3828
        %v5189 = vpack.c.b16 %v3845, %v3829
        %v5190 = vpack.c.b16 %v3846, %v3830
        %v5191 = vpack.c.b16 %v3847, %v3831
        %v5192 = vpack.c.b16 %v3848, %v3832
        %v5193 = vpack.c.b16 %v3849, %v3833
        %v5194 = vpack.c.b16 %v3850, %v3834
        %v5195 = vpack.c.b16 %v3851, %v3835
        %v5196 = vpack.c.b16 %v3852, %v3836
        %v5197 = vpack.c.b16 %v3853, %v3837
        %v5198 = vpack.c.b16 %v3854, %v3838
        %v5199 = vpack.c.b16 %v3855, %v3839
        %v5200 = vpack.c.b16 %v3856, %v3840
        %v5201 = vpack.c.b16 %v3873, %v3857
        %v5202 = vpack.c.b16 %v3874, %v3858
        %v5203 = vpack.c.b16 %v3875, %v3859
        %v5204 = vpack.c.b16 %v3876, %v3860
        %v5205 = vpack.c.b16 %v3877, %v3861
        %v5206 = vpack.c.b16 %v3878, %v3862
        %v5207 = vpack.c.b16 %v3879, %v3863
        %v5208 = vpack.c.b16 %v3880, %v3864
        %v5209 = vpack.c.b16 %v3881, %v3865
        %v5210 = vpack.c.b16 %v3882, %v3866
        %v5211 = vpack.c.b16 %v3883, %v3867
        %v5212 = vpack.c.b16 %v3884, %v3868
        %v5213 = vpack.c.b16 %v3885, %v3869
        %v5214 = vpack.c.b16 %v3886, %v3870
        %v5215 = vpack.c.b16 %v3887, %v3871
        %v5216 = vpack.c.b16 %v3888, %v3872
        %v5217 = vpack.c.b16 %v3905, %v3889
        %v5218 = vpack.c.b16 %v3906, %v3890
        %v5219 = vpack.c.b16 %v3907, %v3891
        %v5220 = vpack.c.b16 %v3908, %v3892
        %v5221 = vpack.c.b16 %v3909, %v3893
        %v5222 = vpack.c.b16 %v3910, %v3894
        %v5223 = vpack.c.b16 %v3911, %v3895
        %v5224 = vpack.c.b16 %v3912, %v3896
        %v5225 = vpack.c.b16 %v3913, %v3897
        %v5226 = vpack.c.b16 %v3914, %v3898
        %v5227 = vpack.c.b16 %v3915, %v3899
        %v5228 = vpack.c.b16 %v3916, %v3900
        %v5229 = vpack.c.b16 %v3917, %v3901
        %v5230 = vpack.c.b16 %v3918, %v3902
        %v5231 = vpack.c.b16 %v3919, %v3903
        %v5232 = vpack.c.b16 %v3920, %v3904
        %v5233 = vpack.c.b16 %v3937, %v3921
        %v5234 = vpack.c.b16 %v3938, %v3922
        %v5235 = vpack.c.b16 %v3939, %v3923
        %v5236 = vpack.c.b16 %v3940, %v3924
        %v5237 = vpack.c.b16 %v3941, %v3925
        %v5238 = vpack.c.b16 %v3942, %v3926
        %v5239 = vpack.c.b16 %v3943, %v3927
        %v5240 = vpack.c.b16 %v3944, %v3928
        %v5241 = vpack.c.b16 %v3945, %v3929
        %v5242 = vpack.c.b16 %v3946, %v3930
        %v5243 = vpack.c.b16 %v3947, %v3931
        %v5244 = vpack.c.b16 %v3948, %v3932
        %v5245 = vpack.c.b16 %v3949, %v3933
        %v5246 = vpack.c.b16 %v3950, %v3934
        %v5247 = vpack.c.b16 %v3951, %v3935
        %v5248 = vpack.c.b16 %v3952, %v3936
        %v5249 = vpack.c.b16 %v3969, %v3953
        %v5250 = vpack.c.b16 %v3970, %v3954
        %v5251 = vpack.c.b16 %v3971, %v3955
        %v5252 = vpack.c.b16 %v3972, %v3956
        %v5253 = vpack.c.b16 %v3973, %v3957
        %v5254 = vpack.c.b16 %v3974, %v3958
        %v5255 = vpack.c.b16 %v3975, %v3959
        %v5256 = vpack.c.b16 %v3976, %v3960
        %v5257 = vpack.c.b16 %v3977, %v3961
        %v5258 = vpack.c.b16 %v3978, %v3962
        %v5259 = vpack.c.b16 %v3979, %v3963
        %v5260 = vpack.c.b16 %v3980, %v3964
        %v5261 = vpack.c.b16 %v3981, %v3965
        %v5262 = vpack.c.b16 %v3982, %v3966
        %v5263 = vpack.c.b16 %v3983, %v3967
        %v5264 = vpack.c.b16 %v3984, %v3968
        %v5265 = vpack.c.b16 %v4001, %v3985
        %v5266 = vpack.c.b16 %v4002, %v3986
        %v5267 = vpack.c.b16 %v4003, %v3987
        %v5268 = vpack.c.b16 %v4004, %v3988
        %v5269 = vpack.c.b16 %v4005, %v3989
        %v5270 = vpack.c.b16 %v4006, %v3990
        %v5271 = vpack.c.b16 %v4007, %v3991
        %v5272 = vpack.c.b16 %v4008, %v3992
        %v5273 = vpack.c.b16 %v4009, %v3993
        %v5274 = vpack.c.b16 %v4010, %v3994
        %v5275 = vpack.c.b16 %v4011, %v3995
        %v5276 = vpack.c.b16 %v4012, %v3996
        %v5277 = vpack.c.b16 %v4013, %v3997
        %v5278 = vpack.c.b16 %v4014, %v3998
        %v5279 = vpack.c.b16 %v4015, %v3999
        %v5280 = vpack.c.b16 %v4016, %v4000
        %v5281 = vpack.c.b16 %v4033, %v4017
        %v5282 = vpack.c.b16 %v4034, %v4018
        %v5283 = vpack.c.b16 %v4035, %v4019
        %v5284 = vpack.c.b16 %v4036, %v4020
        %v5285 = vpack.c.b16 %v4037, %v4021
        %v5286 = vpack.c.b16 %v4038, %v4022
        %v5287 = vpack.c.b16 %v4039, %v4023
        %v5288 = vpack.c.b16 %v4040, %v4024
        %v5289 = vpack.c.b16 %v4041, %v4025
        %v5290 = vpack.c.b16 %v4042, %v4026
        %v5291 = vpack.c.b16 %v4043, %v4027
        %v5292 = vpack.c.b16 %v4044, %v4028
        %v5293 = vpack.c.b16 %v4045, %v4029
        %v5294 = vpack.c.b16 %v4046, %v4030
        %v5295 = vpack.c.b16 %v4047, %v4031
        %v5296 = vpack.c.b16 %v4048, %v4032
        %v5297 = vpack.c.b16 %v4065, %v4049
        %v5298 = vpack.c.b16 %v4066, %v4050
        %v5299 = vpack.c.b16 %v4067, %v4051
        %v5300 = vpack.c.b16 %v4068, %v4052
        %v5301 = vpack.c.b16 %v4069, %v4053
        %v5302 = vpack.c.b16 %v4070, %v4054
        %v5303 = vpack.c.b16 %v4071, %v4055
        %v5304 = vpack.c.b16 %v4072, %v4056
        %v5305 = vpack.c.b16 %v4073, %v4057
        %v5306 = vpack.c.b16 %v4074, %v4058
        %v5307 = vpack.c.b16 %v4075, %v4059
        %v5308 = vpack.c.b16 %v4076, %v4060
        %v5309 = vpack.c.b16 %v4077, %v4061
        %v5310 = vpack.c.b16 %v4078, %v4062
        %v5311 = vpack.c.b16 %v4079, %v4063
        %v5312 = vpack.c.b16 %v4080, %v4064
        %v5313 = vpack.c.b16 %v4097, %v4081
        %v5314 = vpack.c.b16 %v4098, %v4082
        %v5315 = vpack.c.b16 %v4099, %v4083
        %v5316 = vpack.c.b16 %v4100, %v4084
        %v5317 = vpack.c.b16 %v4101, %v4085
        %v5318 = vpack.c.b16 %v4102, %v4086
        %v5319 = vpack.c.b16 %v4103, %v4087
        %v5320 = vpack.c.b16 %v4104, %v4088
        %v5321 = vpack.c.b16 %v4105, %v4089
        %v5322 = vpack.c.b16 %v4106, %v4090
        %v5323 = vpack.c.b16 %v4107, %v4091
        %v5324 = vpack.c.b16 %v4108, %v4092
        %v5325 = vpack.c.b16 %v4109, %v4093
        %v5326 = vpack.c.b16 %v4110, %v4094
        %v5327 = vpack.c.b16 %v4111, %v4095
        %v5328 = vpack.c.b16 %v4112, %v4096
        %v5329 = vpack.c.b16 %v4129, %v4113
        %v5330 = vpack.c.b16 %v4130, %v4114
        %v5331 = vpack.c.b16 %v4131, %v4115
        %v5332 = vpack.c.b16 %v4132, %v4116
        %v5333 = vpack.c.b16 %v4133, %v4117
        %v5334 = vpack.c.b16 %v4134, %v4118
        %v5335 = vpack.c.b16 %v4135, %v4119
        %v5336 = vpack.c.b16 %v4136, %v4120
        %v5337 = vpack.c.b16 %v4137, %v4121
        %v5338 = vpack.c.b16 %v4138, %v4122
        %v5339 = vpack.c.b16 %v4139, %v4123
        %v5340 = vpack.c.b16 %v4140, %v4124
        %v5341 = vpack.c.b16 %v4141, %v4125
        %v5342 = vpack.c.b16 %v4142, %v4126
        %v5343 = vpack.c.b16 %v4143, %v4127
        %v5344 = vpack.c.b16 %v4144, %v4128
        %v5345 = vpack.c.b16 %v4161, %v4145
        %v5346 = vpack.c.b16 %v4162, %v4146
        %v5347 = vpack.c.b16 %v4163, %v4147
        %v5348 = vpack.c.b16 %v4164, %v4148
        %v5349 = vpack.c.b16 %v4165, %v4149
        %v5350 = vpack.c.b16 %v4166, %v4150
        %v5351 = vpack.c.b16 %v4167, %v4151
        %v5352 = vpack.c.b16 %v4168, %v4152
        %v5353 = vpack.c.b16 %v4169, %v4153
        %v5354 = vpack.c.b16 %v4170, %v4154
        %v5355 = vpack.c.b16 %v4171, %v4155
        %v5356 = vpack.c.b16 %v4172, %v4156
        %v5357 = vpack.c.b16 %v4173, %v4157
        %v5358 = vpack.c.b16 %v4174, %v4158
        %v5359 = vpack.c.b16 %v4175, %v4159
        %v5360 = vpack.c.b16 %v4176, %v4160
        %v5361 = vpack.c.b16 %v4193, %v4177
        %v5362 = vpack.c.b16 %v4194, %v4178
        %v5363 = vpack.c.b16 %v4195, %v4179
        %v5364 = vpack.c.b16 %v4196, %v4180
        %v5365 = vpack.c.b16 %v4197, %v4181
        %v5366 = vpack.c.b16 %v4198, %v4182
        %v5367 = vpack.c.b16 %v4199, %v4183
        %v5368 = vpack.c.b16 %v4200, %v4184
        %v5369 = vpack.c.b16 %v4201, %v4185
        %v5370 = vpack.c.b16 %v4202, %v4186
        %v5371 = vpack.c.b16 %v4203, %v4187
        %v5372 = vpack.c.b16 %v4204, %v4188
        %v5373 = vpack.c.b16 %v4205, %v4189
        %v5374 = vpack.c.b16 %v4206, %v4190
        %v5375 = vpack.c.b16 %v4207, %v4191
        %v5376 = vpack.c.b16 %v4208, %v4192
        %v5377 = vpack.c.b16 %v4225, %v4209
        %v5378 = vpack.c.b16 %v4226, %v4210
        %v5379 = vpack.c.b16 %v4227, %v4211
        %v5380 = vpack.c.b16 %v4228, %v4212
        %v5381 = vpack.c.b16 %v4229, %v4213
        %v5382 = vpack.c.b16 %v4230, %v4214
        %v5383 = vpack.c.b16 %v4231, %v4215
        %v5384 = vpack.c.b16 %v4232, %v4216
        %v5385 = vpack.c.b16 %v4233, %v4217
        %v5386 = vpack.c.b16 %v4234, %v4218
        %v5387 = vpack.c.b16 %v4235, %v4219
        %v5388 = vpack.c.b16 %v4236, %v4220
        %v5389 = vpack.c.b16 %v4237, %v4221
        %v5390 = vpack.c.b16 %v4238, %v4222
        %v5391 = vpack.c.b16 %v4239, %v4223
        %v5392 = vpack.c.b16 %v4240, %v4224
        %v5393 = vpack.c.b16 %v4257, %v4241
        %v5394 = vpack.c.b16 %v4258, %v4242
        %v5395 = vpack.c.b16 %v4259, %v4243
        %v5396 = vpack.c.b16 %v4260, %v4244
        %v5397 = vpack.c.b16 %v4261, %v4245
        %v5398 = vpack.c.b16 %v4262, %v4246
        %v5399 = vpack.c.b16 %v4263, %v4247
        %v5400 = vpack.c.b16 %v4264, %v4248
        %v5401 = vpack.c.b16 %v4265, %v4249
        %v5402 = vpack.c.b16 %v4266, %v4250
        %v5403 = vpack.c.b16 %v4267, %v4251
        %v5404 = vpack.c.b16 %v4268, %v4252
        %v5405 = vpack.c.b16 %v4269, %v4253
        %v5406 = vpack.c.b16 %v4270, %v4254
        %v5407 = vpack.c.b16 %v4271, %v4255
        %v5408 = vpack.c.b16 %v4272, %v4256
        %v5409 = vpack.c.b16 %v4289, %v4273
        %v5410 = vpack.c.b16 %v4290, %v4274
        %v5411 = vpack.c.b16 %v4291, %v4275
        %v5412 = vpack.c.b16 %v4292, %v4276
        %v5413 = vpack.c.b16 %v4293, %v4277
        %v5414 = vpack.c.b16 %v4294, %v4278
        %v5415 = vpack.c.b16 %v4295, %v4279
        %v5416 = vpack.c.b16 %v4296, %v4280
        %v5417 = vpack.c.b16 %v4297, %v4281
        %v5418 = vpack.c.b16 %v4298, %v4282
        %v5419 = vpack.c.b16 %v4299, %v4283
        %v5420 = vpack.c.b16 %v4300, %v4284
        %v5421 = vpack.c.b16 %v4301, %v4285
        %v5422 = vpack.c.b16 %v4302, %v4286
        %v5423 = vpack.c.b16 %v4303, %v4287
        %v5424 = vpack.c.b16 %v4304, %v4288
        %v5425 = vpack.c.b16 %v4321, %v4305
        %v5426 = vpack.c.b16 %v4322, %v4306
        %v5427 = vpack.c.b16 %v4323, %v4307
        %v5428 = vpack.c.b16 %v4324, %v4308
        %v5429 = vpack.c.b16 %v4325, %v4309
        %v5430 = vpack.c.b16 %v4326, %v4310
        %v5431 = vpack.c.b16 %v4327, %v4311
        %v5432 = vpack.c.b16 %v4328, %v4312
        %v5433 = vpack.c.b16 %v4329, %v4313
        %v5434 = vpack.c.b16 %v4330, %v4314
        %v5435 = vpack.c.b16 %v4331, %v4315
        %v5436 = vpack.c.b16 %v4332, %v4316
        %v5437 = vpack.c.b16 %v4333, %v4317
        %v5438 = vpack.c.b16 %v4334, %v4318
        %v5439 = vpack.c.b16 %v4335, %v4319
        %v5440 = vpack.c.b16 %v4336, %v4320
        %v5441 = vpack.c.b16 %v4353, %v4337
        %v5442 = vpack.c.b16 %v4354, %v4338
        %v5443 = vpack.c.b16 %v4355, %v4339
        %v5444 = vpack.c.b16 %v4356, %v4340
        %v5445 = vpack.c.b16 %v4357, %v4341
        %v5446 = vpack.c.b16 %v4358, %v4342
        %v5447 = vpack.c.b16 %v4359, %v4343
        %v5448 = vpack.c.b16 %v4360, %v4344
        %v5449 = vpack.c.b16 %v4361, %v4345
        %v5450 = vpack.c.b16 %v4362, %v4346
        %v5451 = vpack.c.b16 %v4363, %v4347
        %v5452 = vpack.c.b16 %v4364, %v4348
        %v5453 = vpack.c.b16 %v4365, %v4349
        %v5454 = vpack.c.b16 %v4366, %v4350
        %v5455 = vpack.c.b16 %v4367, %v4351
        %v5456 = vpack.c.b16 %v4368, %v4352
        %v5457 = vpack.c.b16 %v4385, %v4369
        %v5458 = vpack.c.b16 %v4386, %v4370
        %v5459 = vpack.c.b16 %v4387, %v4371
        %v5460 = vpack.c.b16 %v4388, %v4372
        %v5461 = vpack.c.b16 %v4389, %v4373
        %v5462 = vpack.c.b16 %v4390, %v4374
        %v5463 = vpack.c.b16 %v4391, %v4375
        %v5464 = vpack.c.b16 %v4392, %v4376
        %v5465 = vpack.c.b16 %v4393, %v4377
        %v5466 = vpack.c.b16 %v4394, %v4378
        %v5467 = vpack.c.b16 %v4395, %v4379
        %v5468 = vpack.c.b16 %v4396, %v4380
        %v5469 = vpack.c.b16 %v4397, %v4381
        %v5470 = vpack.c.b16 %v4398, %v4382
        %v5471 = vpack.c.b16 %v4399, %v4383
        %v5472 = vpack.c.b16 %v4400, %v4384
        %v5473 = vpack.c.b16 %v4417, %v4401
        %v5474 = vpack.c.b16 %v4418, %v4402
        %v5475 = vpack.c.b16 %v4419, %v4403
        %v5476 = vpack.c.b16 %v4420, %v4404
        %v5477 = vpack.c.b16 %v4421, %v4405
        %v5478 = vpack.c.b16 %v4422, %v4406
        %v5479 = vpack.c.b16 %v4423, %v4407
        %v5480 = vpack.c.b16 %v4424, %v4408
        %v5481 = vpack.c.b16 %v4425, %v4409
        %v5482 = vpack.c.b16 %v4426, %v4410
        %v5483 = vpack.c.b16 %v4427, %v4411
        %v5484 = vpack.c.b16 %v4428, %v4412
        %v5485 = vpack.c.b16 %v4429, %v4413
        %v5486 = vpack.c.b16 %v4430, %v4414
        %v5487 = vpack.c.b16 %v4431, %v4415
        %v5488 = vpack.c.b16 %v4432, %v4416
        %v5489 = vpack.c.b16 %v4449, %v4433
        %v5490 = vpack.c.b16 %v4450, %v4434
        %v5491 = vpack.c.b16 %v4451, %v4435
        %v5492 = vpack.c.b16 %v4452, %v4436
        %v5493 = vpack.c.b16 %v4453, %v4437
        %v5494 = vpack.c.b16 %v4454, %v4438
        %v5495 = vpack.c.b16 %v4455, %v4439
        %v5496 = vpack.c.b16 %v4456, %v4440
        %v5497 = vpack.c.b16 %v4457, %v4441
        %v5498 = vpack.c.b16 %v4458, %v4442
        %v5499 = vpack.c.b16 %v4459, %v4443
        %v5500 = vpack.c.b16 %v4460, %v4444
        %v5501 = vpack.c.b16 %v4461, %v4445
        %v5502 = vpack.c.b16 %v4462, %v4446
        %v5503 = vpack.c.b16 %v4463, %v4447
        %v5504 = vpack.c.b16 %v4464, %v4448
        %v5505 = vpack.c.b16 %v4481, %v4465
        %v5506 = vpack.c.b16 %v4482, %v4466
        %v5507 = vpack.c.b16 %v4483, %v4467
        %v5508 = vpack.c.b16 %v4484, %v4468
        %v5509 = vpack.c.b16 %v4485, %v4469
        %v5510 = vpack.c.b16 %v4486, %v4470
        %v5511 = vpack.c.b16 %v4487, %v4471
        %v5512 = vpack.c.b16 %v4488, %v4472
        %v5513 = vpack.c.b16 %v4489, %v4473
        %v5514 = vpack.c.b16 %v4490, %v4474
        %v5515 = vpack.c.b16 %v4491, %v4475
        %v5516 = vpack.c.b16 %v4492, %v4476
        %v5517 = vpack.c.b16 %v4493, %v4477
        %v5518 = vpack.c.b16 %v4494, %v4478
        %v5519 = vpack.c.b16 %v4495, %v4479
        %v5520 = vpack.c.b16 %v4496, %v4480
        %6545 = vmatprep.subr.bf16.mxu0 %v4610
        %6546 = vmatpush1.bf16.msra.mxu0 %v4609
        %6547 = vmatprep.subr.bf16.mxu0 %v4594
        %6548 = vmatpush1.bf16.msra.mxu0 %v4593
        %6549 = vmatprep.subr.bf16.mxu0 %v4578
        %6550 = vmatpush1.bf16.msra.mxu0 %v4577
        %6551 = vmatprep.subr.bf16.mxu0 %v4562
        %6552 = vmatpush1.bf16.msra.mxu0 %v4561
        %6553 = vmatprep.subr.bf16.mxu0 %v4546
        %6554 = vmatpush1.bf16.msra.mxu0 %v4545
        %6555 = vmatprep.subr.bf16.mxu0 %v4530
        %6556 = vmatpush1.bf16.msra.mxu0 %v4529
        %6557 = vmatprep.subr.bf16.mxu0 %v4514
        %6558 = vmatpush1.bf16.msra.mxu0 %v4513
        %6559 = vmatprep.subr.bf16.mxu0 %v4498
        %6560 = vmatpush1.bf16.msra.mxu0 %v4497
        %6561 = vmatprep.subr.bf16.mxu0 %v4738
        %6562 = vmatpush2.bf16.msra.mxu0 %v4737
        %6563 = vmatprep.subr.bf16.mxu0 %v4722
        %6564 = vmatpush2.bf16.msra.mxu0 %v4721
        %6565 = vmatprep.subr.bf16.mxu0 %v4706
        %6566 = vmatpush2.bf16.msra.mxu0 %v4705
        %6567 = vmatprep.subr.bf16.mxu0 %v4690
        %6568 = vmatpush2.bf16.msra.mxu0 %v4689
        %6569 = vmatprep.subr.bf16.mxu0 %v4674
        %6570 = vmatpush2.bf16.msra.mxu0 %v4673
        %6571 = vmatprep.subr.bf16.mxu0 %v4658
        %6572 = vmatpush2.bf16.msra.mxu0 %v4657
        %6573 = vmatprep.subr.bf16.mxu0 %v4642
        %6574 = vmatpush2.bf16.msra.mxu0 %v4641
        %6575 = vmatprep.subr.bf16.mxu0 %v4626
        %6576 = vmatpush2.bf16.msra.mxu0 %v4625
        %6577 = vmatprep.mubr.bf16.mxu0 %v1405
        %6578 = vmatmul.mubr.bf16.gmra.mxu0 %v1391
        %v6579 = vpop.f32.mrf.mxu0
        %v6580 = vadd.f32 0.0, %v6579
        %v6581 = vpop.f32.mrf.mxu0
        %v6582 = vadd.f32 0.0, %v6581
        %v6583 = vpop.f32.mrf.mxu0
        %v6584 = vpop.f32.mrf.mxu0
        %6585 = vdwg.mxu0
        %6586 = vmatprep.subr.bf16.mxu0 %v4866
        %6587 = vmatpush1.bf16.msra.mxu0 %v4865
        %6588 = vmatprep.subr.bf16.mxu0 %v4850
        %6589 = vmatpush1.bf16.msra.mxu0 %v4849
        %6590 = vmatprep.subr.bf16.mxu0 %v4834
        %6591 = vmatpush1.bf16.msra.mxu0 %v4833
        %6592 = vmatprep.subr.bf16.mxu0 %v4818
        %6593 = vmatpush1.bf16.msra.mxu0 %v4817
        %6594 = vmatprep.subr.bf16.mxu0 %v4802
        %6595 = vmatpush1.bf16.msra.mxu0 %v4801
        %6596 = vmatprep.subr.bf16.mxu0 %v4786
        %6597 = vmatpush1.bf16.msra.mxu0 %v4785
        %6598 = vmatprep.subr.bf16.mxu0 %v4770
        %6599 = vmatpush1.bf16.msra.mxu0 %v4769
        %6600 = vmatprep.subr.bf16.mxu0 %v4754
        %6601 = vmatpush1.bf16.msra.mxu0 %v4753
        %6602 = vmatprep.subr.bf16.mxu0 %v4994
        %6603 = vmatpush2.bf16.msra.mxu0 %v4993
        %6604 = vmatprep.subr.bf16.mxu0 %v4978
        %6605 = vmatpush2.bf16.msra.mxu0 %v4977
        %6606 = vmatprep.subr.bf16.mxu0 %v4962
        %6607 = vmatpush2.bf16.msra.mxu0 %v4961
        %6608 = vmatprep.subr.bf16.mxu0 %v4946
        %6609 = vmatpush2.bf16.msra.mxu0 %v4945
        %6610 = vmatprep.subr.bf16.mxu0 %v4930
        %6611 = vmatpush2.bf16.msra.mxu0 %v4929
        %6612 = vmatprep.subr.bf16.mxu0 %v4914
        %6613 = vmatpush2.bf16.msra.mxu0 %v4913
        %6614 = vmatprep.subr.bf16.mxu0 %v4898
        %6615 = vmatpush2.bf16.msra.mxu0 %v4897
        %6616 = vmatprep.subr.bf16.mxu0 %v4882
        %6617 = vmatpush2.bf16.msra.mxu0 %v4881
        %6618 = vmatprep.mubr.bf16.mxu0 %v1415
        %6619 = vmatmul.mubr.bf16.gmra.mxu0 %v1413
        %v6620 = vpop.f32.mrf.mxu0
        %v6621 = vadd.f32 %v6580, %v6620
        %v6622 = vpop.f32.mrf.mxu0
        %v6623 = vadd.f32 %v6582, %v6622
        %v6624 = vpop.f32.mrf.mxu0
        %v6625 = vpop.f32.mrf.mxu0
        %6626 = vdwg.mxu0
        %6627 = vmatprep.subr.bf16.mxu0 %v5122
        %6628 = vmatpush1.bf16.msra.mxu0 %v5121
        %6629 = vmatprep.subr.bf16.mxu0 %v5106
        %6630 = vmatpush1.bf16.msra.mxu0 %v5105
        %6631 = vmatprep.subr.bf16.mxu0 %v5090
        %6632 = vmatpush1.bf16.msra.mxu0 %v5089
        %6633 = vmatprep.subr.bf16.mxu0 %v5074
        %6634 = vmatpush1.bf16.msra.mxu0 %v5073
        %6635 = vmatprep.subr.bf16.mxu0 %v5058
        %6636 = vmatpush1.bf16.msra.mxu0 %v5057
        %6637 = vmatprep.subr.bf16.mxu0 %v5042
        %6638 = vmatpush1.bf16.msra.mxu0 %v5041
        %6639 = vmatprep.subr.bf16.mxu0 %v5026
        %6640 = vmatpush1.bf16.msra.mxu0 %v5025
        %6641 = vmatprep.subr.bf16.mxu0 %v5010
        %6642 = vmatpush1.bf16.msra.mxu0 %v5009
        %6643 = vmatprep.subr.bf16.mxu0 %v5250
        %6644 = vmatpush2.bf16.msra.mxu0 %v5249
        %6645 = vmatprep.subr.bf16.mxu0 %v5234
        %6646 = vmatpush2.bf16.msra.mxu0 %v5233
        %6647 = vmatprep.subr.bf16.mxu0 %v5218
        %6648 = vmatpush2.bf16.msra.mxu0 %v5217
        %6649 = vmatprep.subr.bf16.mxu0 %v5202
        %6650 = vmatpush2.bf16.msra.mxu0 %v5201
        %6651 = vmatprep.subr.bf16.mxu0 %v5186
        %6652 = vmatpush2.bf16.msra.mxu0 %v5185
        %6653 = vmatprep.subr.bf16.mxu0 %v5170
        %6654 = vmatpush2.bf16.msra.mxu0 %v5169
        %6655 = vmatprep.subr.bf16.mxu0 %v5154
        %6656 = vmatpush2.bf16.msra.mxu0 %v5153
        %6657 = vmatprep.subr.bf16.mxu0 %v5138
        %6658 = vmatpush2.bf16.msra.mxu0 %v5137
        %6659 = vmatprep.mubr.bf16.mxu0 %v1412
        %6660 = vmatmul.mubr.bf16.gmra.mxu0 %v1398
        %v6661 = vpop.f32.mrf.mxu0
        %v6662 = vadd.f32 %v6621, %v6661
        %v6663 = vpop.f32.mrf.mxu0
        %v6664 = vadd.f32 %v6623, %v6663
        %v6665 = vpop.f32.mrf.mxu0
        %v6666 = vpop.f32.mrf.mxu0
        %6667 = vdwg.mxu0
        %6668 = vmatprep.subr.bf16.mxu0 %v5378
        %6669 = vmatpush1.bf16.msra.mxu0 %v5377
        %6670 = vmatprep.subr.bf16.mxu0 %v5362
        %6671 = vmatpush1.bf16.msra.mxu0 %v5361
        %6672 = vmatprep.subr.bf16.mxu0 %v5346
        %6673 = vmatpush1.bf16.msra.mxu0 %v5345
        %6674 = vmatprep.subr.bf16.mxu0 %v5330
        %6675 = vmatpush1.bf16.msra.mxu0 %v5329
        %6676 = vmatprep.subr.bf16.mxu0 %v5314
        %6677 = vmatpush1.bf16.msra.mxu0 %v5313
        %6678 = vmatprep.subr.bf16.mxu0 %v5298
        %6679 = vmatpush1.bf16.msra.mxu0 %v5297
        %6680 = vmatprep.subr.bf16.mxu0 %v5282
        %6681 = vmatpush1.bf16.msra.mxu0 %v5281
        %6682 = vmatprep.subr.bf16.mxu0 %v5266
        %6683 = vmatpush1.bf16.msra.mxu0 %v5265
        %6684 = vmatprep.subr.bf16.mxu0 %v5506
        %6685 = vmatpush2.bf16.msra.mxu0 %v5505
        %6686 = vmatprep.subr.bf16.mxu0 %v5490
        %6687 = vmatpush2.bf16.msra.mxu0 %v5489
        %6688 = vmatprep.subr.bf16.mxu0 %v5474
        %6689 = vmatpush2.bf16.msra.mxu0 %v5473
        %6690 = vmatprep.subr.bf16.mxu0 %v5458
        %6691 = vmatpush2.bf16.msra.mxu0 %v5457
        %6692 = vmatprep.subr.bf16.mxu0 %v5442
        %6693 = vmatpush2.bf16.msra.mxu0 %v5441
        %6694 = vmatprep.subr.bf16.mxu0 %v5426
        %6695 = vmatpush2.bf16.msra.mxu0 %v5425
        %6696 = vmatprep.subr.bf16.mxu0 %v5410
        %6697 = vmatpush2.bf16.msra.mxu0 %v5409
        %6698 = vmatprep.subr.bf16.mxu0 %v5394
        %6699 = vmatpush2.bf16.msra.mxu0 %v5393
        %6700 = vmatprep.mubr.bf16.mxu0 %v1416
        %6701 = vmatmul.mubr.bf16.gmra.mxu0 %v1414
        %v6702 = vpop.f32.mrf.mxu0
        %v6703 = vadd.f32 %v6662, %v6702
        %v6704 = vpop.f32.mrf.mxu0
        %v6705 = vadd.f32 %v6664, %v6704
        %v6706 = vpop.f32.mrf.mxu0
        %v6707 = vpop.f32.mrf.mxu0
        %6708 = vdwg.mxu0
        %6709 = vmatprep.subr.bf16.mxu0 %v4612
        %6710 = vmatpush1.bf16.msra.mxu0 %v4611
        %6711 = vmatprep.subr.bf16.mxu0 %v4596
        %6712 = vmatpush1.bf16.msra.mxu0 %v4595
        %6713 = vmatprep.subr.bf16.mxu0 %v4580
        %6714 = vmatpush1.bf16.msra.mxu0 %v4579
        %6715 = vmatprep.subr.bf16.mxu0 %v4564
        %6716 = vmatpush1.bf16.msra.mxu0 %v4563
        %6717 = vmatprep.subr.bf16.mxu0 %v4548
        %6718 = vmatpush1.bf16.msra.mxu0 %v4547
        %6719 = vmatprep.subr.bf16.mxu0 %v4532
        %6720 = vmatpush1.bf16.msra.mxu0 %v4531
        %6721 = vmatprep.subr.bf16.mxu0 %v4516
        %6722 = vmatpush1.bf16.msra.mxu0 %v4515
        %6723 = vmatprep.subr.bf16.mxu0 %v4500
        %6724 = vmatpush1.bf16.msra.mxu0 %v4499
        %6725 = vmatprep.subr.bf16.mxu0 %v4740
        %6726 = vmatpush2.bf16.msra.mxu0 %v4739
        %6727 = vmatprep.subr.bf16.mxu0 %v4724
        %6728 = vmatpush2.bf16.msra.mxu0 %v4723
        %6729 = vmatprep.subr.bf16.mxu0 %v4708
        %6730 = vmatpush2.bf16.msra.mxu0 %v4707
        %6731 = vmatprep.subr.bf16.mxu0 %v4692
        %6732 = vmatpush2.bf16.msra.mxu0 %v4691
        %6733 = vmatprep.subr.bf16.mxu0 %v4676
        %6734 = vmatpush2.bf16.msra.mxu0 %v4675
        %6735 = vmatprep.subr.bf16.mxu0 %v4660
        %6736 = vmatpush2.bf16.msra.mxu0 %v4659
        %6737 = vmatprep.subr.bf16.mxu0 %v4644
        %6738 = vmatpush2.bf16.msra.mxu0 %v4643
        %6739 = vmatprep.subr.bf16.mxu0 %v4628
        %6740 = vmatpush2.bf16.msra.mxu0 %v4627
        %6741 = vmatprep.mubr.bf16.mxu0 %v1405
        %6742 = vmatmul.mubr.bf16.gmra.mxu0 %v1391
        %v6743 = vpop.f32.mrf.mxu0
        %v6744 = vadd.f32 0.0, %v6743
        %v6745 = vpop.f32.mrf.mxu0
        %v6746 = vadd.f32 0.0, %v6745
        %v6747 = vpop.f32.mrf.mxu0
        %v6748 = vpop.f32.mrf.mxu0
        %6749 = vdwg.mxu0
        %6750 = vmatprep.subr.bf16.mxu0 %v4868
        %6751 = vmatpush1.bf16.msra.mxu0 %v4867
        %6752 = vmatprep.subr.bf16.mxu0 %v4852
        %6753 = vmatpush1.bf16.msra.mxu0 %v4851
        %6754 = vmatprep.subr.bf16.mxu0 %v4836
        %6755 = vmatpush1.bf16.msra.mxu0 %v4835
        %6756 = vmatprep.subr.bf16.mxu0 %v4820
        %6757 = vmatpush1.bf16.msra.mxu0 %v4819
        %6758 = vmatprep.subr.bf16.mxu0 %v4804
        %6759 = vmatpush1.bf16.msra.mxu0 %v4803
        %6760 = vmatprep.subr.bf16.mxu0 %v4788
        %6761 = vmatpush1.bf16.msra.mxu0 %v4787
        %6762 = vmatprep.subr.bf16.mxu0 %v4772
        %6763 = vmatpush1.bf16.msra.mxu0 %v4771
        %6764 = vmatprep.subr.bf16.mxu0 %v4756
        %6765 = vmatpush1.bf16.msra.mxu0 %v4755
        %6766 = vmatprep.subr.bf16.mxu0 %v4996
        %6767 = vmatpush2.bf16.msra.mxu0 %v4995
        %6768 = vmatprep.subr.bf16.mxu0 %v4980
        %6769 = vmatpush2.bf16.msra.mxu0 %v4979
        %6770 = vmatprep.subr.bf16.mxu0 %v4964
        %6771 = vmatpush2.bf16.msra.mxu0 %v4963
        %6772 = vmatprep.subr.bf16.mxu0 %v4948
        %6773 = vmatpush2.bf16.msra.mxu0 %v4947
        %6774 = vmatprep.subr.bf16.mxu0 %v4932
        %6775 = vmatpush2.bf16.msra.mxu0 %v4931
        %6776 = vmatprep.subr.bf16.mxu0 %v4916
        %6777 = vmatpush2.bf16.msra.mxu0 %v4915
        %6778 = vmatprep.subr.bf16.mxu0 %v4900
        %6779 = vmatpush2.bf16.msra.mxu0 %v4899
        %6780 = vmatprep.subr.bf16.mxu0 %v4884
        %6781 = vmatpush2.bf16.msra.mxu0 %v4883
        %6782 = vmatprep.mubr.bf16.mxu0 %v1415
        %6783 = vmatmul.mubr.bf16.gmra.mxu0 %v1413
        %v6784 = vpop.f32.mrf.mxu0
        %v6785 = vadd.f32 %v6744, %v6784
        %v6786 = vpop.f32.mrf.mxu0
        %v6787 = vadd.f32 %v6746, %v6786
        %v6788 = vpop.f32.mrf.mxu0
        %v6789 = vpop.f32.mrf.mxu0
        %6790 = vdwg.mxu0
        %6791 = vmatprep.subr.bf16.mxu0 %v5124
        %6792 = vmatpush1.bf16.msra.mxu0 %v5123
        %6793 = vmatprep.subr.bf16.mxu0 %v5108
        %6794 = vmatpush1.bf16.msra.mxu0 %v5107
        %6795 = vmatprep.subr.bf16.mxu0 %v5092
        %6796 = vmatpush1.bf16.msra.mxu0 %v5091
        %6797 = vmatprep.subr.bf16.mxu0 %v5076
        %6798 = vmatpush1.bf16.msra.mxu0 %v5075
        %6799 = vmatprep.subr.bf16.mxu0 %v5060
        %6800 = vmatpush1.bf16.msra.mxu0 %v5059
        %6801 = vmatprep.subr.bf16.mxu0 %v5044
        %6802 = vmatpush1.bf16.msra.mxu0 %v5043
        %6803 = vmatprep.subr.bf16.mxu0 %v5028
        %6804 = vmatpush1.bf16.msra.mxu0 %v5027
        %6805 = vmatprep.subr.bf16.mxu0 %v5012
        %6806 = vmatpush1.bf16.msra.mxu0 %v5011
        %6807 = vmatprep.subr.bf16.mxu0 %v5252
        %6808 = vmatpush2.bf16.msra.mxu0 %v5251
        %6809 = vmatprep.subr.bf16.mxu0 %v5236
        %6810 = vmatpush2.bf16.msra.mxu0 %v5235
        %6811 = vmatprep.subr.bf16.mxu0 %v5220
        %6812 = vmatpush2.bf16.msra.mxu0 %v5219
        %6813 = vmatprep.subr.bf16.mxu0 %v5204
        %6814 = vmatpush2.bf16.msra.mxu0 %v5203
        %6815 = vmatprep.subr.bf16.mxu0 %v5188
        %6816 = vmatpush2.bf16.msra.mxu0 %v5187
        %6817 = vmatprep.subr.bf16.mxu0 %v5172
        %6818 = vmatpush2.bf16.msra.mxu0 %v5171
        %6819 = vmatprep.subr.bf16.mxu0 %v5156
        %6820 = vmatpush2.bf16.msra.mxu0 %v5155
        %6821 = vmatprep.subr.bf16.mxu0 %v5140
        %6822 = vmatpush2.bf16.msra.mxu0 %v5139
        %6823 = vmatprep.mubr.bf16.mxu0 %v1412
        %6824 = vmatmul.mubr.bf16.gmra.mxu0 %v1398
        %v6825 = vpop.f32.mrf.mxu0
        %v6826 = vadd.f32 %v6785, %v6825
        %v6827 = vpop.f32.mrf.mxu0
        %v6828 = vadd.f32 %v6787, %v6827
        %v6829 = vpop.f32.mrf.mxu0
        %v6830 = vpop.f32.mrf.mxu0
        %6831 = vdwg.mxu0
        %6832 = vmatprep.subr.bf16.mxu0 %v5380
        %6833 = vmatpush1.bf16.msra.mxu0 %v5379
        %6834 = vmatprep.subr.bf16.mxu0 %v5364
        %6835 = vmatpush1.bf16.msra.mxu0 %v5363
        %6836 = vmatprep.subr.bf16.mxu0 %v5348
        %6837 = vmatpush1.bf16.msra.mxu0 %v5347
        %6838 = vmatprep.subr.bf16.mxu0 %v5332
        %6839 = vmatpush1.bf16.msra.mxu0 %v5331
        %6840 = vmatprep.subr.bf16.mxu0 %v5316
        %6841 = vmatpush1.bf16.msra.mxu0 %v5315
        %6842 = vmatprep.subr.bf16.mxu0 %v5300
        %6843 = vmatpush1.bf16.msra.mxu0 %v5299
        %6844 = vmatprep.subr.bf16.mxu0 %v5284
        %6845 = vmatpush1.bf16.msra.mxu0 %v5283
        %6846 = vmatprep.subr.bf16.mxu0 %v5268
        %6847 = vmatpush1.bf16.msra.mxu0 %v5267
        %6848 = vmatprep.subr.bf16.mxu0 %v5508
        %6849 = vmatpush2.bf16.msra.mxu0 %v5507
        %6850 = vmatprep.subr.bf16.mxu0 %v5492
        %6851 = vmatpush2.bf16.msra.mxu0 %v5491
        %6852 = vmatprep.subr.bf16.mxu0 %v5476
        %6853 = vmatpush2.bf16.msra.mxu0 %v5475
        %6854 = vmatprep.subr.bf16.mxu0 %v5460
        %6855 = vmatpush2.bf16.msra.mxu0 %v5459
        %6856 = vmatprep.subr.bf16.mxu0 %v5444
        %6857 = vmatpush2.bf16.msra.mxu0 %v5443
        %6858 = vmatprep.subr.bf16.mxu0 %v5428
        %6859 = vmatpush2.bf16.msra.mxu0 %v5427
        %6860 = vmatprep.subr.bf16.mxu0 %v5412
        %6861 = vmatpush2.bf16.msra.mxu0 %v5411
        %6862 = vmatprep.subr.bf16.mxu0 %v5396
        %6863 = vmatpush2.bf16.msra.mxu0 %v5395
        %6864 = vmatprep.mubr.bf16.mxu0 %v1416
        %6865 = vmatmul.mubr.bf16.gmra.mxu0 %v1414
        %v6866 = vpop.f32.mrf.mxu0
        %v6867 = vadd.f32 %v6826, %v6866
        %v6868 = vpop.f32.mrf.mxu0
        %v6869 = vadd.f32 %v6828, %v6868
        %v6870 = vpop.f32.mrf.mxu0
        %v6871 = vpop.f32.mrf.mxu0
        %6872 = vdwg.mxu0
        %6873 = vmatprep.subr.bf16.mxu0 %v4614
        %6874 = vmatpush1.bf16.msra.mxu0 %v4613
        %6875 = vmatprep.subr.bf16.mxu0 %v4598
        %6876 = vmatpush1.bf16.msra.mxu0 %v4597
        %6877 = vmatprep.subr.bf16.mxu0 %v4582
        %6878 = vmatpush1.bf16.msra.mxu0 %v4581
        %6879 = vmatprep.subr.bf16.mxu0 %v4566
        %6880 = vmatpush1.bf16.msra.mxu0 %v4565
        %6881 = vmatprep.subr.bf16.mxu0 %v4550
        %6882 = vmatpush1.bf16.msra.mxu0 %v4549
        %6883 = vmatprep.subr.bf16.mxu0 %v4534
        %6884 = vmatpush1.bf16.msra.mxu0 %v4533
        %6885 = vmatprep.subr.bf16.mxu0 %v4518
        %6886 = vmatpush1.bf16.msra.mxu0 %v4517
        %6887 = vmatprep.subr.bf16.mxu0 %v4502
        %6888 = vmatpush1.bf16.msra.mxu0 %v4501
        %6889 = vmatprep.subr.bf16.mxu0 %v4742
        %6890 = vmatpush2.bf16.msra.mxu0 %v4741
        %6891 = vmatprep.subr.bf16.mxu0 %v4726
        %6892 = vmatpush2.bf16.msra.mxu0 %v4725
        %6893 = vmatprep.subr.bf16.mxu0 %v4710
        %6894 = vmatpush2.bf16.msra.mxu0 %v4709
        %6895 = vmatprep.subr.bf16.mxu0 %v4694
        %6896 = vmatpush2.bf16.msra.mxu0 %v4693
        %6897 = vmatprep.subr.bf16.mxu0 %v4678
        %6898 = vmatpush2.bf16.msra.mxu0 %v4677
        %6899 = vmatprep.subr.bf16.mxu0 %v4662
        %6900 = vmatpush2.bf16.msra.mxu0 %v4661
        %6901 = vmatprep.subr.bf16.mxu0 %v4646
        %6902 = vmatpush2.bf16.msra.mxu0 %v4645
        %6903 = vmatprep.subr.bf16.mxu0 %v4630
        %6904 = vmatpush2.bf16.msra.mxu0 %v4629
        %6905 = vmatprep.mubr.bf16.mxu0 %v1405
        %6906 = vmatmul.mubr.bf16.gmra.mxu0 %v1391
        %v6907 = vpop.f32.mrf.mxu0
        %v6908 = vadd.f32 0.0, %v6907
        %v6909 = vpop.f32.mrf.mxu0
        %v6910 = vadd.f32 0.0, %v6909
        %v6911 = vpop.f32.mrf.mxu0
        %v6912 = vpop.f32.mrf.mxu0
        %6913 = vdwg.mxu0
        %6914 = vmatprep.subr.bf16.mxu0 %v4870
        %6915 = vmatpush1.bf16.msra.mxu0 %v4869
        %6916 = vmatprep.subr.bf16.mxu0 %v4854
        %6917 = vmatpush1.bf16.msra.mxu0 %v4853
        %6918 = vmatprep.subr.bf16.mxu0 %v4838
        %6919 = vmatpush1.bf16.msra.mxu0 %v4837
        %6920 = vmatprep.subr.bf16.mxu0 %v4822
        %6921 = vmatpush1.bf16.msra.mxu0 %v4821
        %6922 = vmatprep.subr.bf16.mxu0 %v4806
        %6923 = vmatpush1.bf16.msra.mxu0 %v4805
        %6924 = vmatprep.subr.bf16.mxu0 %v4790
        %6925 = vmatpush1.bf16.msra.mxu0 %v4789
        %6926 = vmatprep.subr.bf16.mxu0 %v4774
        %6927 = vmatpush1.bf16.msra.mxu0 %v4773
        %6928 = vmatprep.subr.bf16.mxu0 %v4758
        %6929 = vmatpush1.bf16.msra.mxu0 %v4757
        %6930 = vmatprep.subr.bf16.mxu0 %v4998
        %6931 = vmatpush2.bf16.msra.mxu0 %v4997
        %6932 = vmatprep.subr.bf16.mxu0 %v4982
        %6933 = vmatpush2.bf16.msra.mxu0 %v4981
        %6934 = vmatprep.subr.bf16.mxu0 %v4966
        %6935 = vmatpush2.bf16.msra.mxu0 %v4965
        %6936 = vmatprep.subr.bf16.mxu0 %v4950
        %6937 = vmatpush2.bf16.msra.mxu0 %v4949
        %6938 = vmatprep.subr.bf16.mxu0 %v4934
        %6939 = vmatpush2.bf16.msra.mxu0 %v4933
        %6940 = vmatprep.subr.bf16.mxu0 %v4918
        %6941 = vmatpush2.bf16.msra.mxu0 %v4917
        %6942 = vmatprep.subr.bf16.mxu0 %v4902
        %6943 = vmatpush2.bf16.msra.mxu0 %v4901
        %6944 = vmatprep.subr.bf16.mxu0 %v4886
        %6945 = vmatpush2.bf16.msra.mxu0 %v4885
        %6946 = vmatprep.mubr.bf16.mxu0 %v1415
        %6947 = vmatmul.mubr.bf16.gmra.mxu0 %v1413
        %v6948 = vpop.f32.mrf.mxu0
        %v6949 = vadd.f32 %v6908, %v6948
        %v6950 = vpop.f32.mrf.mxu0
        %v6951 = vadd.f32 %v6910, %v6950
        %v6952 = vpop.f32.mrf.mxu0
        %v6953 = vpop.f32.mrf.mxu0
        %6954 = vdwg.mxu0
        %6955 = vmatprep.subr.bf16.mxu0 %v5126
        %6956 = vmatpush1.bf16.msra.mxu0 %v5125
        %6957 = vmatprep.subr.bf16.mxu0 %v5110
        %6958 = vmatpush1.bf16.msra.mxu0 %v5109
        %6959 = vmatprep.subr.bf16.mxu0 %v5094
        %6960 = vmatpush1.bf16.msra.mxu0 %v5093
        %6961 = vmatprep.subr.bf16.mxu0 %v5078
        %6962 = vmatpush1.bf16.msra.mxu0 %v5077
        %6963 = vmatprep.subr.bf16.mxu0 %v5062
        %6964 = vmatpush1.bf16.msra.mxu0 %v5061
        %6965 = vmatprep.subr.bf16.mxu0 %v5046
        %6966 = vmatpush1.bf16.msra.mxu0 %v5045
        %6967 = vmatprep.subr.bf16.mxu0 %v5030
        %6968 = vmatpush1.bf16.msra.mxu0 %v5029
        %6969 = vmatprep.subr.bf16.mxu0 %v5014
        %6970 = vmatpush1.bf16.msra.mxu0 %v5013
        %6971 = vmatprep.subr.bf16.mxu0 %v5254
        %6972 = vmatpush2.bf16.msra.mxu0 %v5253
        %6973 = vmatprep.subr.bf16.mxu0 %v5238
        %6974 = vmatpush2.bf16.msra.mxu0 %v5237
        %6975 = vmatprep.subr.bf16.mxu0 %v5222
        %6976 = vmatpush2.bf16.msra.mxu0 %v5221
        %6977 = vmatprep.subr.bf16.mxu0 %v5206
        %6978 = vmatpush2.bf16.msra.mxu0 %v5205
        %6979 = vmatprep.subr.bf16.mxu0 %v5190
        %6980 = vmatpush2.bf16.msra.mxu0 %v5189
        %6981 = vmatprep.subr.bf16.mxu0 %v5174
        %6982 = vmatpush2.bf16.msra.mxu0 %v5173
        %6983 = vmatprep.subr.bf16.mxu0 %v5158
        %6984 = vmatpush2.bf16.msra.mxu0 %v5157
        %6985 = vmatprep.subr.bf16.mxu0 %v5142
        %6986 = vmatpush2.bf16.msra.mxu0 %v5141
        %6987 = vmatprep.mubr.bf16.mxu0 %v1412
        %6988 = vmatmul.mubr.bf16.gmra.mxu0 %v1398
        %v6989 = vpop.f32.mrf.mxu0
        %v6990 = vadd.f32 %v6949, %v6989
        %v6991 = vpop.f32.mrf.mxu0
        %v6992 = vadd.f32 %v6951, %v6991
        %v6993 = vpop.f32.mrf.mxu0
        %v6994 = vpop.f32.mrf.mxu0
        %6995 = vdwg.mxu0
        %6996 = vmatprep.subr.bf16.mxu0 %v5382
        %6997 = vmatpush1.bf16.msra.mxu0 %v5381
        %6998 = vmatprep.subr.bf16.mxu0 %v5366
        %6999 = vmatpush1.bf16.msra.mxu0 %v5365
        %7000 = vmatprep.subr.bf16.mxu0 %v5350
        %7001 = vmatpush1.bf16.msra.mxu0 %v5349
        %7002 = vmatprep.subr.bf16.mxu0 %v5334
        %7003 = vmatpush1.bf16.msra.mxu0 %v5333
        %7004 = vmatprep.subr.bf16.mxu0 %v5318
        %7005 = vmatpush1.bf16.msra.mxu0 %v5317
        %7006 = vmatprep.subr.bf16.mxu0 %v5302
        %7007 = vmatpush1.bf16.msra.mxu0 %v5301
        %7008 = vmatprep.subr.bf16.mxu0 %v5286
        %7009 = vmatpush1.bf16.msra.mxu0 %v5285
        %7010 = vmatprep.subr.bf16.mxu0 %v5270
        %7011 = vmatpush1.bf16.msra.mxu0 %v5269
        %7012 = vmatprep.subr.bf16.mxu0 %v5510
        %7013 = vmatpush2.bf16.msra.mxu0 %v5509
        %7014 = vmatprep.subr.bf16.mxu0 %v5494
        %7015 = vmatpush2.bf16.msra.mxu0 %v5493
        %7016 = vmatprep.subr.bf16.mxu0 %v5478
        %7017 = vmatpush2.bf16.msra.mxu0 %v5477
        %7018 = vmatprep.subr.bf16.mxu0 %v5462
        %7019 = vmatpush2.bf16.msra.mxu0 %v5461
        %7020 = vmatprep.subr.bf16.mxu0 %v5446
        %7021 = vmatpush2.bf16.msra.mxu0 %v5445
        %7022 = vmatprep.subr.bf16.mxu0 %v5430
        %7023 = vmatpush2.bf16.msra.mxu0 %v5429
        %7024 = vmatprep.subr.bf16.mxu0 %v5414
        %7025 = vmatpush2.bf16.msra.mxu0 %v5413
        %7026 = vmatprep.subr.bf16.mxu0 %v5398
        %7027 = vmatpush2.bf16.msra.mxu0 %v5397
        %7028 = vmatprep.mubr.bf16.mxu0 %v1416
        %7029 = vmatmul.mubr.bf16.gmra.mxu0 %v1414
        %v7030 = vpop.f32.mrf.mxu0
        %v7031 = vadd.f32 %v6990, %v7030
        %v7032 = vpop.f32.mrf.mxu0
        %v7033 = vadd.f32 %v6992, %v7032
        %v7034 = vpop.f32.mrf.mxu0
        %v7035 = vpop.f32.mrf.mxu0
        %7036 = vdwg.mxu0
        %7037 = vmatprep.subr.bf16.mxu0 %v4616
        %7038 = vmatpush1.bf16.msra.mxu0 %v4615
        %7039 = vmatprep.subr.bf16.mxu0 %v4600
        %7040 = vmatpush1.bf16.msra.mxu0 %v4599
        %7041 = vmatprep.subr.bf16.mxu0 %v4584
        %7042 = vmatpush1.bf16.msra.mxu0 %v4583
        %7043 = vmatprep.subr.bf16.mxu0 %v4568
        %7044 = vmatpush1.bf16.msra.mxu0 %v4567
        %7045 = vmatprep.subr.bf16.mxu0 %v4552
        %7046 = vmatpush1.bf16.msra.mxu0 %v4551
        %7047 = vmatprep.subr.bf16.mxu0 %v4536
        %7048 = vmatpush1.bf16.msra.mxu0 %v4535
        %7049 = vmatprep.subr.bf16.mxu0 %v4520
        %7050 = vmatpush1.bf16.msra.mxu0 %v4519
        %7051 = vmatprep.subr.bf16.mxu0 %v4504
        %7052 = vmatpush1.bf16.msra.mxu0 %v4503
        %7053 = vmatprep.subr.bf16.mxu0 %v4744
        %7054 = vmatpush2.bf16.msra.mxu0 %v4743
        %7055 = vmatprep.subr.bf16.mxu0 %v4728
        %7056 = vmatpush2.bf16.msra.mxu0 %v4727
        %7057 = vmatprep.subr.bf16.mxu0 %v4712
        %7058 = vmatpush2.bf16.msra.mxu0 %v4711
        %7059 = vmatprep.subr.bf16.mxu0 %v4696
        %7060 = vmatpush2.bf16.msra.mxu0 %v4695
        %7061 = vmatprep.subr.bf16.mxu0 %v4680
        %7062 = vmatpush2.bf16.msra.mxu0 %v4679
        %7063 = vmatprep.subr.bf16.mxu0 %v4664
        %7064 = vmatpush2.bf16.msra.mxu0 %v4663
        %7065 = vmatprep.subr.bf16.mxu0 %v4648
        %7066 = vmatpush2.bf16.msra.mxu0 %v4647
        %7067 = vmatprep.subr.bf16.mxu0 %v4632
        %7068 = vmatpush2.bf16.msra.mxu0 %v4631
        %7069 = vmatprep.mubr.bf16.mxu0 %v1405
        %7070 = vmatmul.mubr.bf16.gmra.mxu0 %v1391
        %v7071 = vpop.f32.mrf.mxu0
        %v7072 = vadd.f32 0.0, %v7071
        %v7073 = vpop.f32.mrf.mxu0
        %v7074 = vadd.f32 0.0, %v7073
        %v7075 = vpop.f32.mrf.mxu0
        %v7076 = vpop.f32.mrf.mxu0
        %7077 = vdwg.mxu0
        %7078 = vmatprep.subr.bf16.mxu0 %v4872
        %7079 = vmatpush1.bf16.msra.mxu0 %v4871
        %7080 = vmatprep.subr.bf16.mxu0 %v4856
        %7081 = vmatpush1.bf16.msra.mxu0 %v4855
        %7082 = vmatprep.subr.bf16.mxu0 %v4840
        %7083 = vmatpush1.bf16.msra.mxu0 %v4839
        %7084 = vmatprep.subr.bf16.mxu0 %v4824
        %7085 = vmatpush1.bf16.msra.mxu0 %v4823
        %7086 = vmatprep.subr.bf16.mxu0 %v4808
        %7087 = vmatpush1.bf16.msra.mxu0 %v4807
        %7088 = vmatprep.subr.bf16.mxu0 %v4792
        %7089 = vmatpush1.bf16.msra.mxu0 %v4791
        %7090 = vmatprep.subr.bf16.mxu0 %v4776
        %7091 = vmatpush1.bf16.msra.mxu0 %v4775
        %7092 = vmatprep.subr.bf16.mxu0 %v4760
        %7093 = vmatpush1.bf16.msra.mxu0 %v4759
        %7094 = vmatprep.subr.bf16.mxu0 %v5000
        %7095 = vmatpush2.bf16.msra.mxu0 %v4999
        %7096 = vmatprep.subr.bf16.mxu0 %v4984
        %7097 = vmatpush2.bf16.msra.mxu0 %v4983
        %7098 = vmatprep.subr.bf16.mxu0 %v4968
        %7099 = vmatpush2.bf16.msra.mxu0 %v4967
        %7100 = vmatprep.subr.bf16.mxu0 %v4952
        %7101 = vmatpush2.bf16.msra.mxu0 %v4951
        %7102 = vmatprep.subr.bf16.mxu0 %v4936
        %7103 = vmatpush2.bf16.msra.mxu0 %v4935
        %7104 = vmatprep.subr.bf16.mxu0 %v4920
        %7105 = vmatpush2.bf16.msra.mxu0 %v4919
        %7106 = vmatprep.subr.bf16.mxu0 %v4904
        %7107 = vmatpush2.bf16.msra.mxu0 %v4903
        %7108 = vmatprep.subr.bf16.mxu0 %v4888
        %7109 = vmatpush2.bf16.msra.mxu0 %v4887
        %7110 = vmatprep.mubr.bf16.mxu0 %v1415
        %7111 = vmatmul.mubr.bf16.gmra.mxu0 %v1413
        %v7112 = vpop.f32.mrf.mxu0
        %v7113 = vadd.f32 %v7072, %v7112
        %v7114 = vpop.f32.mrf.mxu0
        %v7115 = vadd.f32 %v7074, %v7114
        %v7116 = vpop.f32.mrf.mxu0
        %v7117 = vpop.f32.mrf.mxu0
        %7118 = vdwg.mxu0
        %7119 = vmatprep.subr.bf16.mxu0 %v5128
        %7120 = vmatpush1.bf16.msra.mxu0 %v5127
        %7121 = vmatprep.subr.bf16.mxu0 %v5112
        %7122 = vmatpush1.bf16.msra.mxu0 %v5111
        %7123 = vmatprep.subr.bf16.mxu0 %v5096
        %7124 = vmatpush1.bf16.msra.mxu0 %v5095
        %7125 = vmatprep.subr.bf16.mxu0 %v5080
        %7126 = vmatpush1.bf16.msra.mxu0 %v5079
        %7127 = vmatprep.subr.bf16.mxu0 %v5064
        %7128 = vmatpush1.bf16.msra.mxu0 %v5063
        %7129 = vmatprep.subr.bf16.mxu0 %v5048
        %7130 = vmatpush1.bf16.msra.mxu0 %v5047
        %7131 = vmatprep.subr.bf16.mxu0 %v5032
        %7132 = vmatpush1.bf16.msra.mxu0 %v5031
        %7133 = vmatprep.subr.bf16.mxu0 %v5016
        %7134 = vmatpush1.bf16.msra.mxu0 %v5015
        %7135 = vmatprep.subr.bf16.mxu0 %v5256
        %7136 = vmatpush2.bf16.msra.mxu0 %v5255
        %7137 = vmatprep.subr.bf16.mxu0 %v5240
        %7138 = vmatpush2.bf16.msra.mxu0 %v5239
        %7139 = vmatprep.subr.bf16.mxu0 %v5224
        %7140 = vmatpush2.bf16.msra.mxu0 %v5223
        %7141 = vmatprep.subr.bf16.mxu0 %v5208
        %7142 = vmatpush2.bf16.msra.mxu0 %v5207
        %7143 = vmatprep.subr.bf16.mxu0 %v5192
        %7144 = vmatpush2.bf16.msra.mxu0 %v5191
        %7145 = vmatprep.subr.bf16.mxu0 %v5176
        %7146 = vmatpush2.bf16.msra.mxu0 %v5175
        %7147 = vmatprep.subr.bf16.mxu0 %v5160
        %7148 = vmatpush2.bf16.msra.mxu0 %v5159
        %7149 = vmatprep.subr.bf16.mxu0 %v5144
        %7150 = vmatpush2.bf16.msra.mxu0 %v5143
        %7151 = vmatprep.mubr.bf16.mxu0 %v1412
        %7152 = vmatmul.mubr.bf16.gmra.mxu0 %v1398
        %v7153 = vpop.f32.mrf.mxu0
        %v7154 = vadd.f32 %v7113, %v7153
        %v7155 = vpop.f32.mrf.mxu0
        %v7156 = vadd.f32 %v7115, %v7155
        %v7157 = vpop.f32.mrf.mxu0
        %v7158 = vpop.f32.mrf.mxu0
        %7159 = vdwg.mxu0
        %7160 = vmatprep.subr.bf16.mxu0 %v5384
        %7161 = vmatpush1.bf16.msra.mxu0 %v5383
        %7162 = vmatprep.subr.bf16.mxu0 %v5368
        %7163 = vmatpush1.bf16.msra.mxu0 %v5367
        %7164 = vmatprep.subr.bf16.mxu0 %v5352
        %7165 = vmatpush1.bf16.msra.mxu0 %v5351
        %7166 = vmatprep.subr.bf16.mxu0 %v5336
        %7167 = vmatpush1.bf16.msra.mxu0 %v5335
        %7168 = vmatprep.subr.bf16.mxu0 %v5320
        %7169 = vmatpush1.bf16.msra.mxu0 %v5319
        %7170 = vmatprep.subr.bf16.mxu0 %v5304
        %7171 = vmatpush1.bf16.msra.mxu0 %v5303
        %7172 = vmatprep.subr.bf16.mxu0 %v5288
        %7173 = vmatpush1.bf16.msra.mxu0 %v5287
        %7174 = vmatprep.subr.bf16.mxu0 %v5272
        %7175 = vmatpush1.bf16.msra.mxu0 %v5271
        %7176 = vmatprep.subr.bf16.mxu0 %v5512
        %7177 = vmatpush2.bf16.msra.mxu0 %v5511
        %7178 = vmatprep.subr.bf16.mxu0 %v5496
        %7179 = vmatpush2.bf16.msra.mxu0 %v5495
        %7180 = vmatprep.subr.bf16.mxu0 %v5480
        %7181 = vmatpush2.bf16.msra.mxu0 %v5479
        %7182 = vmatprep.subr.bf16.mxu0 %v5464
        %7183 = vmatpush2.bf16.msra.mxu0 %v5463
        %7184 = vmatprep.subr.bf16.mxu0 %v5448
        %7185 = vmatpush2.bf16.msra.mxu0 %v5447
        %7186 = vmatprep.subr.bf16.mxu0 %v5432
        %7187 = vmatpush2.bf16.msra.mxu0 %v5431
        %7188 = vmatprep.subr.bf16.mxu0 %v5416
        %7189 = vmatpush2.bf16.msra.mxu0 %v5415
        %7190 = vmatprep.subr.bf16.mxu0 %v5400
        %7191 = vmatpush2.bf16.msra.mxu0 %v5399
        %7192 = vmatprep.mubr.bf16.mxu0 %v1416
        %7193 = vmatmul.mubr.bf16.gmra.mxu0 %v1414
        %v7194 = vpop.f32.mrf.mxu0
        %v7195 = vadd.f32 %v7154, %v7194
        %v7196 = vpop.f32.mrf.mxu0
        %v7197 = vadd.f32 %v7156, %v7196
        %v7198 = vpop.f32.mrf.mxu0
        %v7199 = vpop.f32.mrf.mxu0
        %7200 = vdwg.mxu0
        %7201 = vmatprep.subr.bf16.mxu0 %v4618
        %7202 = vmatpush1.bf16.msra.mxu0 %v4617
        %7203 = vmatprep.subr.bf16.mxu0 %v4602
        %7204 = vmatpush1.bf16.msra.mxu0 %v4601
        %7205 = vmatprep.subr.bf16.mxu0 %v4586
        %7206 = vmatpush1.bf16.msra.mxu0 %v4585
        %7207 = vmatprep.subr.bf16.mxu0 %v4570
        %7208 = vmatpush1.bf16.msra.mxu0 %v4569
        %7209 = vmatprep.subr.bf16.mxu0 %v4554
        %7210 = vmatpush1.bf16.msra.mxu0 %v4553
        %7211 = vmatprep.subr.bf16.mxu0 %v4538
        %7212 = vmatpush1.bf16.msra.mxu0 %v4537
        %7213 = vmatprep.subr.bf16.mxu0 %v4522
        %7214 = vmatpush1.bf16.msra.mxu0 %v4521
        %7215 = vmatprep.subr.bf16.mxu0 %v4506
        %7216 = vmatpush1.bf16.msra.mxu0 %v4505
        %7217 = vmatprep.subr.bf16.mxu0 %v4746
        %7218 = vmatpush2.bf16.msra.mxu0 %v4745
        %7219 = vmatprep.subr.bf16.mxu0 %v4730
        %7220 = vmatpush2.bf16.msra.mxu0 %v4729
        %7221 = vmatprep.subr.bf16.mxu0 %v4714
        %7222 = vmatpush2.bf16.msra.mxu0 %v4713
        %7223 = vmatprep.subr.bf16.mxu0 %v4698
        %7224 = vmatpush2.bf16.msra.mxu0 %v4697
        %7225 = vmatprep.subr.bf16.mxu0 %v4682
        %7226 = vmatpush2.bf16.msra.mxu0 %v4681
        %7227 = vmatprep.subr.bf16.mxu0 %v4666
        %7228 = vmatpush2.bf16.msra.mxu0 %v4665
        %7229 = vmatprep.subr.bf16.mxu0 %v4650
        %7230 = vmatpush2.bf16.msra.mxu0 %v4649
        %7231 = vmatprep.subr.bf16.mxu0 %v4634
        %7232 = vmatpush2.bf16.msra.mxu0 %v4633
        %7233 = vmatprep.mubr.bf16.mxu0 %v1405
        %7234 = vmatmul.mubr.bf16.gmra.mxu0 %v1391
        %v7235 = vpop.f32.mrf.mxu0
        %v7236 = vadd.f32 0.0, %v7235
        %v7237 = vpop.f32.mrf.mxu0
        %v7238 = vadd.f32 0.0, %v7237
        %v7239 = vpop.f32.mrf.mxu0
        %v7240 = vpop.f32.mrf.mxu0
        %7241 = vdwg.mxu0
        %7242 = vmatprep.subr.bf16.mxu0 %v4874
        %7243 = vmatpush1.bf16.msra.mxu0 %v4873
        %7244 = vmatprep.subr.bf16.mxu0 %v4858
        %7245 = vmatpush1.bf16.msra.mxu0 %v4857
        %7246 = vmatprep.subr.bf16.mxu0 %v4842
        %7247 = vmatpush1.bf16.msra.mxu0 %v4841
        %7248 = vmatprep.subr.bf16.mxu0 %v4826
        %7249 = vmatpush1.bf16.msra.mxu0 %v4825
        %7250 = vmatprep.subr.bf16.mxu0 %v4810
        %7251 = vmatpush1.bf16.msra.mxu0 %v4809
        %7252 = vmatprep.subr.bf16.mxu0 %v4794
        %7253 = vmatpush1.bf16.msra.mxu0 %v4793
        %7254 = vmatprep.subr.bf16.mxu0 %v4778
        %7255 = vmatpush1.bf16.msra.mxu0 %v4777
        %7256 = vmatprep.subr.bf16.mxu0 %v4762
        %7257 = vmatpush1.bf16.msra.mxu0 %v4761
        %7258 = vmatprep.subr.bf16.mxu0 %v5002
        %7259 = vmatpush2.bf16.msra.mxu0 %v5001
        %7260 = vmatprep.subr.bf16.mxu0 %v4986
        %7261 = vmatpush2.bf16.msra.mxu0 %v4985
        %7262 = vmatprep.subr.bf16.mxu0 %v4970
        %7263 = vmatpush2.bf16.msra.mxu0 %v4969
        %7264 = vmatprep.subr.bf16.mxu0 %v4954
        %7265 = vmatpush2.bf16.msra.mxu0 %v4953
        %7266 = vmatprep.subr.bf16.mxu0 %v4938
        %7267 = vmatpush2.bf16.msra.mxu0 %v4937
        %7268 = vmatprep.subr.bf16.mxu0 %v4922
        %7269 = vmatpush2.bf16.msra.mxu0 %v4921
        %7270 = vmatprep.subr.bf16.mxu0 %v4906
        %7271 = vmatpush2.bf16.msra.mxu0 %v4905
        %7272 = vmatprep.subr.bf16.mxu0 %v4890
        %7273 = vmatpush2.bf16.msra.mxu0 %v4889
        %7274 = vmatprep.mubr.bf16.mxu0 %v1415
        %7275 = vmatmul.mubr.bf16.gmra.mxu0 %v1413
        %v7276 = vpop.f32.mrf.mxu0
        %v7277 = vadd.f32 %v7236, %v7276
        %v7278 = vpop.f32.mrf.mxu0
        %v7279 = vadd.f32 %v7238, %v7278
        %v7280 = vpop.f32.mrf.mxu0
        %v7281 = vpop.f32.mrf.mxu0
        %7282 = vdwg.mxu0
        %7283 = vmatprep.subr.bf16.mxu0 %v5130
        %7284 = vmatpush1.bf16.msra.mxu0 %v5129
        %7285 = vmatprep.subr.bf16.mxu0 %v5114
        %7286 = vmatpush1.bf16.msra.mxu0 %v5113
        %7287 = vmatprep.subr.bf16.mxu0 %v5098
        %7288 = vmatpush1.bf16.msra.mxu0 %v5097
        %7289 = vmatprep.subr.bf16.mxu0 %v5082
        %7290 = vmatpush1.bf16.msra.mxu0 %v5081
        %7291 = vmatprep.subr.bf16.mxu0 %v5066
        %7292 = vmatpush1.bf16.msra.mxu0 %v5065
        %7293 = vmatprep.subr.bf16.mxu0 %v5050
        %7294 = vmatpush1.bf16.msra.mxu0 %v5049
        %7295 = vmatprep.subr.bf16.mxu0 %v5034
        %7296 = vmatpush1.bf16.msra.mxu0 %v5033
        %7297 = vmatprep.subr.bf16.mxu0 %v5018
        %7298 = vmatpush1.bf16.msra.mxu0 %v5017
        %7299 = vmatprep.subr.bf16.mxu0 %v5258
        %7300 = vmatpush2.bf16.msra.mxu0 %v5257
        %7301 = vmatprep.subr.bf16.mxu0 %v5242
        %7302 = vmatpush2.bf16.msra.mxu0 %v5241
        %7303 = vmatprep.subr.bf16.mxu0 %v5226
        %7304 = vmatpush2.bf16.msra.mxu0 %v5225
        %7305 = vmatprep.subr.bf16.mxu0 %v5210
        %7306 = vmatpush2.bf16.msra.mxu0 %v5209
        %7307 = vmatprep.subr.bf16.mxu0 %v5194
        %7308 = vmatpush2.bf16.msra.mxu0 %v5193
        %7309 = vmatprep.subr.bf16.mxu0 %v5178
        %7310 = vmatpush2.bf16.msra.mxu0 %v5177
        %7311 = vmatprep.subr.bf16.mxu0 %v5162
        %7312 = vmatpush2.bf16.msra.mxu0 %v5161
        %7313 = vmatprep.subr.bf16.mxu0 %v5146
        %7314 = vmatpush2.bf16.msra.mxu0 %v5145
        %7315 = vmatprep.mubr.bf16.mxu0 %v1412
        %7316 = vmatmul.mubr.bf16.gmra.mxu0 %v1398
        %v7317 = vpop.f32.mrf.mxu0
        %v7318 = vadd.f32 %v7277, %v7317
        %v7319 = vpop.f32.mrf.mxu0
        %v7320 = vadd.f32 %v7279, %v7319
        %v7321 = vpop.f32.mrf.mxu0
        %v7322 = vpop.f32.mrf.mxu0
        %7323 = vdwg.mxu0
        %7324 = vmatprep.subr.bf16.mxu0 %v5386
        %7325 = vmatpush1.bf16.msra.mxu0 %v5385
        %7326 = vmatprep.subr.bf16.mxu0 %v5370
        %7327 = vmatpush1.bf16.msra.mxu0 %v5369
        %7328 = vmatprep.subr.bf16.mxu0 %v5354
        %7329 = vmatpush1.bf16.msra.mxu0 %v5353
        %7330 = vmatprep.subr.bf16.mxu0 %v5338
        %7331 = vmatpush1.bf16.msra.mxu0 %v5337
        %7332 = vmatprep.subr.bf16.mxu0 %v5322
        %7333 = vmatpush1.bf16.msra.mxu0 %v5321
        %7334 = vmatprep.subr.bf16.mxu0 %v5306
        %7335 = vmatpush1.bf16.msra.mxu0 %v5305
        %7336 = vmatprep.subr.bf16.mxu0 %v5290
        %7337 = vmatpush1.bf16.msra.mxu0 %v5289
        %7338 = vmatprep.subr.bf16.mxu0 %v5274
        %7339 = vmatpush1.bf16.msra.mxu0 %v5273
        %7340 = vmatprep.subr.bf16.mxu0 %v5514
        %7341 = vmatpush2.bf16.msra.mxu0 %v5513
        %7342 = vmatprep.subr.bf16.mxu0 %v5498
        %7343 = vmatpush2.bf16.msra.mxu0 %v5497
        %7344 = vmatprep.subr.bf16.mxu0 %v5482
        %7345 = vmatpush2.bf16.msra.mxu0 %v5481
        %7346 = vmatprep.subr.bf16.mxu0 %v5466
        %7347 = vmatpush2.bf16.msra.mxu0 %v5465
        %7348 = vmatprep.subr.bf16.mxu0 %v5450
        %7349 = vmatpush2.bf16.msra.mxu0 %v5449
        %7350 = vmatprep.subr.bf16.mxu0 %v5434
        %7351 = vmatpush2.bf16.msra.mxu0 %v5433
        %7352 = vmatprep.subr.bf16.mxu0 %v5418
        %7353 = vmatpush2.bf16.msra.mxu0 %v5417
        %7354 = vmatprep.subr.bf16.mxu0 %v5402
        %7355 = vmatpush2.bf16.msra.mxu0 %v5401
        %7356 = vmatprep.mubr.bf16.mxu0 %v1416
        %7357 = vmatmul.mubr.bf16.gmra.mxu0 %v1414
        %v7358 = vpop.f32.mrf.mxu0
        %v7359 = vadd.f32 %v7318, %v7358
        %v7360 = vpop.f32.mrf.mxu0
        %v7361 = vadd.f32 %v7320, %v7360
        %v7362 = vpop.f32.mrf.mxu0
        %v7363 = vpop.f32.mrf.mxu0
        %7364 = vdwg.mxu0
        %7365 = vmatprep.subr.bf16.mxu0 %v4620
        %7366 = vmatpush1.bf16.msra.mxu0 %v4619
        %7367 = vmatprep.subr.bf16.mxu0 %v4604
        %7368 = vmatpush1.bf16.msra.mxu0 %v4603
        %7369 = vmatprep.subr.bf16.mxu0 %v4588
        %7370 = vmatpush1.bf16.msra.mxu0 %v4587
        %7371 = vmatprep.subr.bf16.mxu0 %v4572
        %7372 = vmatpush1.bf16.msra.mxu0 %v4571
        %7373 = vmatprep.subr.bf16.mxu0 %v4556
        %7374 = vmatpush1.bf16.msra.mxu0 %v4555
        %7375 = vmatprep.subr.bf16.mxu0 %v4540
        %7376 = vmatpush1.bf16.msra.mxu0 %v4539
        %7377 = vmatprep.subr.bf16.mxu0 %v4524
        %7378 = vmatpush1.bf16.msra.mxu0 %v4523
        %7379 = vmatprep.subr.bf16.mxu0 %v4508
        %7380 = vmatpush1.bf16.msra.mxu0 %v4507
        %7381 = vmatprep.subr.bf16.mxu0 %v4748
        %7382 = vmatpush2.bf16.msra.mxu0 %v4747
        %7383 = vmatprep.subr.bf16.mxu0 %v4732
        %7384 = vmatpush2.bf16.msra.mxu0 %v4731
        %7385 = vmatprep.subr.bf16.mxu0 %v4716
        %7386 = vmatpush2.bf16.msra.mxu0 %v4715
        %7387 = vmatprep.subr.bf16.mxu0 %v4700
        %7388 = vmatpush2.bf16.msra.mxu0 %v4699
        %7389 = vmatprep.subr.bf16.mxu0 %v4684
        %7390 = vmatpush2.bf16.msra.mxu0 %v4683
        %7391 = vmatprep.subr.bf16.mxu0 %v4668
        %7392 = vmatpush2.bf16.msra.mxu0 %v4667
        %7393 = vmatprep.subr.bf16.mxu0 %v4652
        %7394 = vmatpush2.bf16.msra.mxu0 %v4651
        %7395 = vmatprep.subr.bf16.mxu0 %v4636
        %7396 = vmatpush2.bf16.msra.mxu0 %v4635
        %7397 = vmatprep.mubr.bf16.mxu0 %v1405
        %7398 = vmatmul.mubr.bf16.gmra.mxu0 %v1391
        %v7399 = vpop.f32.mrf.mxu0
        %v7400 = vadd.f32 0.0, %v7399
        %v7401 = vpop.f32.mrf.mxu0
        %v7402 = vadd.f32 0.0, %v7401
        %v7403 = vpop.f32.mrf.mxu0
        %v7404 = vpop.f32.mrf.mxu0
        %7405 = vdwg.mxu0
        %7406 = vmatprep.subr.bf16.mxu0 %v4876
        %7407 = vmatpush1.bf16.msra.mxu0 %v4875
        %7408 = vmatprep.subr.bf16.mxu0 %v4860
        %7409 = vmatpush1.bf16.msra.mxu0 %v4859
        %7410 = vmatprep.subr.bf16.mxu0 %v4844
        %7411 = vmatpush1.bf16.msra.mxu0 %v4843
        %7412 = vmatprep.subr.bf16.mxu0 %v4828
        %7413 = vmatpush1.bf16.msra.mxu0 %v4827
        %7414 = vmatprep.subr.bf16.mxu0 %v4812
        %7415 = vmatpush1.bf16.msra.mxu0 %v4811
        %7416 = vmatprep.subr.bf16.mxu0 %v4796
        %7417 = vmatpush1.bf16.msra.mxu0 %v4795
        %7418 = vmatprep.subr.bf16.mxu0 %v4780
        %7419 = vmatpush1.bf16.msra.mxu0 %v4779
        %7420 = vmatprep.subr.bf16.mxu0 %v4764
        %7421 = vmatpush1.bf16.msra.mxu0 %v4763
        %7422 = vmatprep.subr.bf16.mxu0 %v5004
        %7423 = vmatpush2.bf16.msra.mxu0 %v5003
        %7424 = vmatprep.subr.bf16.mxu0 %v4988
        %7425 = vmatpush2.bf16.msra.mxu0 %v4987
        %7426 = vmatprep.subr.bf16.mxu0 %v4972
        %7427 = vmatpush2.bf16.msra.mxu0 %v4971
        %7428 = vmatprep.subr.bf16.mxu0 %v4956
        %7429 = vmatpush2.bf16.msra.mxu0 %v4955
        %7430 = vmatprep.subr.bf16.mxu0 %v4940
        %7431 = vmatpush2.bf16.msra.mxu0 %v4939
        %7432 = vmatprep.subr.bf16.mxu0 %v4924
        %7433 = vmatpush2.bf16.msra.mxu0 %v4923
        %7434 = vmatprep.subr.bf16.mxu0 %v4908
        %7435 = vmatpush2.bf16.msra.mxu0 %v4907
        %7436 = vmatprep.subr.bf16.mxu0 %v4892
        %7437 = vmatpush2.bf16.msra.mxu0 %v4891
        %7438 = vmatprep.mubr.bf16.mxu0 %v1415
        %7439 = vmatmul.mubr.bf16.gmra.mxu0 %v1413
        %v7440 = vpop.f32.mrf.mxu0
        %v7441 = vadd.f32 %v7400, %v7440
        %v7442 = vpop.f32.mrf.mxu0
        %v7443 = vadd.f32 %v7402, %v7442
        %v7444 = vpop.f32.mrf.mxu0
        %v7445 = vpop.f32.mrf.mxu0
        %7446 = vdwg.mxu0
        %7447 = vmatprep.subr.bf16.mxu0 %v5132
        %7448 = vmatpush1.bf16.msra.mxu0 %v5131
        %7449 = vmatprep.subr.bf16.mxu0 %v5116
        %7450 = vmatpush1.bf16.msra.mxu0 %v5115
        %7451 = vmatprep.subr.bf16.mxu0 %v5100
        %7452 = vmatpush1.bf16.msra.mxu0 %v5099
        %7453 = vmatprep.subr.bf16.mxu0 %v5084
        %7454 = vmatpush1.bf16.msra.mxu0 %v5083
        %7455 = vmatprep.subr.bf16.mxu0 %v5068
        %7456 = vmatpush1.bf16.msra.mxu0 %v5067
        %7457 = vmatprep.subr.bf16.mxu0 %v5052
        %7458 = vmatpush1.bf16.msra.mxu0 %v5051
        %7459 = vmatprep.subr.bf16.mxu0 %v5036
        %7460 = vmatpush1.bf16.msra.mxu0 %v5035
        %7461 = vmatprep.subr.bf16.mxu0 %v5020
        %7462 = vmatpush1.bf16.msra.mxu0 %v5019
        %7463 = vmatprep.subr.bf16.mxu0 %v5260
        %7464 = vmatpush2.bf16.msra.mxu0 %v5259
        %7465 = vmatprep.subr.bf16.mxu0 %v5244
        %7466 = vmatpush2.bf16.msra.mxu0 %v5243
        %7467 = vmatprep.subr.bf16.mxu0 %v5228
        %7468 = vmatpush2.bf16.msra.mxu0 %v5227
        %7469 = vmatprep.subr.bf16.mxu0 %v5212
        %7470 = vmatpush2.bf16.msra.mxu0 %v5211
        %7471 = vmatprep.subr.bf16.mxu0 %v5196
        %7472 = vmatpush2.bf16.msra.mxu0 %v5195
        %7473 = vmatprep.subr.bf16.mxu0 %v5180
        %7474 = vmatpush2.bf16.msra.mxu0 %v5179
        %7475 = vmatprep.subr.bf16.mxu0 %v5164
        %7476 = vmatpush2.bf16.msra.mxu0 %v5163
        %7477 = vmatprep.subr.bf16.mxu0 %v5148
        %7478 = vmatpush2.bf16.msra.mxu0 %v5147
        %7479 = vmatprep.mubr.bf16.mxu0 %v1412
        %7480 = vmatmul.mubr.bf16.gmra.mxu0 %v1398
        %v7481 = vpop.f32.mrf.mxu0
        %v7482 = vadd.f32 %v7441, %v7481
        %v7483 = vpop.f32.mrf.mxu0
        %v7484 = vadd.f32 %v7443, %v7483
        %v7485 = vpop.f32.mrf.mxu0
        %v7486 = vpop.f32.mrf.mxu0
        %7487 = vdwg.mxu0
        %7488 = vmatprep.subr.bf16.mxu0 %v5388
        %7489 = vmatpush1.bf16.msra.mxu0 %v5387
        %7490 = vmatprep.subr.bf16.mxu0 %v5372
        %7491 = vmatpush1.bf16.msra.mxu0 %v5371
        %7492 = vmatprep.subr.bf16.mxu0 %v5356
        %7493 = vmatpush1.bf16.msra.mxu0 %v5355
        %7494 = vmatprep.subr.bf16.mxu0 %v5340
        %7495 = vmatpush1.bf16.msra.mxu0 %v5339
        %7496 = vmatprep.subr.bf16.mxu0 %v5324
        %7497 = vmatpush1.bf16.msra.mxu0 %v5323
        %7498 = vmatprep.subr.bf16.mxu0 %v5308
        %7499 = vmatpush1.bf16.msra.mxu0 %v5307
        %7500 = vmatprep.subr.bf16.mxu0 %v5292
        %7501 = vmatpush1.bf16.msra.mxu0 %v5291
        %7502 = vmatprep.subr.bf16.mxu0 %v5276
        %7503 = vmatpush1.bf16.msra.mxu0 %v5275
        %7504 = vmatprep.subr.bf16.mxu0 %v5516
        %7505 = vmatpush2.bf16.msra.mxu0 %v5515
        %7506 = vmatprep.subr.bf16.mxu0 %v5500
        %7507 = vmatpush2.bf16.msra.mxu0 %v5499
        %7508 = vmatprep.subr.bf16.mxu0 %v5484
        %7509 = vmatpush2.bf16.msra.mxu0 %v5483
        %7510 = vmatprep.subr.bf16.mxu0 %v5468
        %7511 = vmatpush2.bf16.msra.mxu0 %v5467
        %7512 = vmatprep.subr.bf16.mxu0 %v5452
        %7513 = vmatpush2.bf16.msra.mxu0 %v5451
        %7514 = vmatprep.subr.bf16.mxu0 %v5436
        %7515 = vmatpush2.bf16.msra.mxu0 %v5435
        %7516 = vmatprep.subr.bf16.mxu0 %v5420
        %7517 = vmatpush2.bf16.msra.mxu0 %v5419
        %7518 = vmatprep.subr.bf16.mxu0 %v5404
        %7519 = vmatpush2.bf16.msra.mxu0 %v5403
        %7520 = vmatprep.mubr.bf16.mxu0 %v1416
        %7521 = vmatmul.mubr.bf16.gmra.mxu0 %v1414
        %v7522 = vpop.f32.mrf.mxu0
        %v7523 = vadd.f32 %v7482, %v7522
        %v7524 = vpop.f32.mrf.mxu0
        %v7525 = vadd.f32 %v7484, %v7524
        %v7526 = vpop.f32.mrf.mxu0
        %v7527 = vpop.f32.mrf.mxu0
        %7528 = vdwg.mxu0
        %7529 = vmatprep.subr.bf16.mxu0 %v4622
        %7530 = vmatpush1.bf16.msra.mxu0 %v4621
        %7531 = vmatprep.subr.bf16.mxu0 %v4606
        %7532 = vmatpush1.bf16.msra.mxu0 %v4605
        %7533 = vmatprep.subr.bf16.mxu0 %v4590
        %7534 = vmatpush1.bf16.msra.mxu0 %v4589
        %7535 = vmatprep.subr.bf16.mxu0 %v4574
        %7536 = vmatpush1.bf16.msra.mxu0 %v4573
        %7537 = vmatprep.subr.bf16.mxu0 %v4558
        %7538 = vmatpush1.bf16.msra.mxu0 %v4557
        %7539 = vmatprep.subr.bf16.mxu0 %v4542
        %7540 = vmatpush1.bf16.msra.mxu0 %v4541
        %7541 = vmatprep.subr.bf16.mxu0 %v4526
        %7542 = vmatpush1.bf16.msra.mxu0 %v4525
        %7543 = vmatprep.subr.bf16.mxu0 %v4510
        %7544 = vmatpush1.bf16.msra.mxu0 %v4509
        %7545 = vmatprep.subr.bf16.mxu0 %v4750
        %7546 = vmatpush2.bf16.msra.mxu0 %v4749
        %7547 = vmatprep.subr.bf16.mxu0 %v4734
        %7548 = vmatpush2.bf16.msra.mxu0 %v4733
        %7549 = vmatprep.subr.bf16.mxu0 %v4718
        %7550 = vmatpush2.bf16.msra.mxu0 %v4717
        %7551 = vmatprep.subr.bf16.mxu0 %v4702
        %7552 = vmatpush2.bf16.msra.mxu0 %v4701
        %7553 = vmatprep.subr.bf16.mxu0 %v4686
        %7554 = vmatpush2.bf16.msra.mxu0 %v4685
        %7555 = vmatprep.subr.bf16.mxu0 %v4670
        %7556 = vmatpush2.bf16.msra.mxu0 %v4669
        %7557 = vmatprep.subr.bf16.mxu0 %v4654
        %7558 = vmatpush2.bf16.msra.mxu0 %v4653
        %7559 = vmatprep.subr.bf16.mxu0 %v4638
        %7560 = vmatpush2.bf16.msra.mxu0 %v4637
        %7561 = vmatprep.mubr.bf16.mxu0 %v1405
        %7562 = vmatmul.mubr.bf16.gmra.mxu0 %v1391
        %v7563 = vpop.f32.mrf.mxu0
        %v7564 = vadd.f32 0.0, %v7563
        %v7565 = vpop.f32.mrf.mxu0
        %v7566 = vadd.f32 0.0, %v7565
        %v7567 = vpop.f32.mrf.mxu0
        %v7568 = vpop.f32.mrf.mxu0
        %7569 = vdwg.mxu0
        %7570 = vmatprep.subr.bf16.mxu0 %v4878
        %7571 = vmatpush1.bf16.msra.mxu0 %v4877
        %7572 = vmatprep.subr.bf16.mxu0 %v4862
        %7573 = vmatpush1.bf16.msra.mxu0 %v4861
        %7574 = vmatprep.subr.bf16.mxu0 %v4846
        %7575 = vmatpush1.bf16.msra.mxu0 %v4845
        %7576 = vmatprep.subr.bf16.mxu0 %v4830
        %7577 = vmatpush1.bf16.msra.mxu0 %v4829
        %7578 = vmatprep.subr.bf16.mxu0 %v4814
        %7579 = vmatpush1.bf16.msra.mxu0 %v4813
        %7580 = vmatprep.subr.bf16.mxu0 %v4798
        %7581 = vmatpush1.bf16.msra.mxu0 %v4797
        %7582 = vmatprep.subr.bf16.mxu0 %v4782
        %7583 = vmatpush1.bf16.msra.mxu0 %v4781
        %7584 = vmatprep.subr.bf16.mxu0 %v4766
        %7585 = vmatpush1.bf16.msra.mxu0 %v4765
        %7586 = vmatprep.subr.bf16.mxu0 %v5006
        %7587 = vmatpush2.bf16.msra.mxu0 %v5005
        %7588 = vmatprep.subr.bf16.mxu0 %v4990
        %7589 = vmatpush2.bf16.msra.mxu0 %v4989
        %7590 = vmatprep.subr.bf16.mxu0 %v4974
        %7591 = vmatpush2.bf16.msra.mxu0 %v4973
        %7592 = vmatprep.subr.bf16.mxu0 %v4958
        %7593 = vmatpush2.bf16.msra.mxu0 %v4957
        %7594 = vmatprep.subr.bf16.mxu0 %v4942
        %7595 = vmatpush2.bf16.msra.mxu0 %v4941
        %7596 = vmatprep.subr.bf16.mxu0 %v4926
        %7597 = vmatpush2.bf16.msra.mxu0 %v4925
        %7598 = vmatprep.subr.bf16.mxu0 %v4910
        %7599 = vmatpush2.bf16.msra.mxu0 %v4909
        %7600 = vmatprep.subr.bf16.mxu0 %v4894
        %7601 = vmatpush2.bf16.msra.mxu0 %v4893
        %7602 = vmatprep.mubr.bf16.mxu0 %v1415
        %7603 = vmatmul.mubr.bf16.gmra.mxu0 %v1413
        %v7604 = vpop.f32.mrf.mxu0
        %v7605 = vadd.f32 %v7564, %v7604
        %v7606 = vpop.f32.mrf.mxu0
        %v7607 = vadd.f32 %v7566, %v7606
        %v7608 = vpop.f32.mrf.mxu0
        %v7609 = vpop.f32.mrf.mxu0
        %7610 = vdwg.mxu0
        %7611 = vmatprep.subr.bf16.mxu0 %v5134
        %7612 = vmatpush1.bf16.msra.mxu0 %v5133
        %7613 = vmatprep.subr.bf16.mxu0 %v5118
        %7614 = vmatpush1.bf16.msra.mxu0 %v5117
        %7615 = vmatprep.subr.bf16.mxu0 %v5102
        %7616 = vmatpush1.bf16.msra.mxu0 %v5101
        %7617 = vmatprep.subr.bf16.mxu0 %v5086
        %7618 = vmatpush1.bf16.msra.mxu0 %v5085
        %7619 = vmatprep.subr.bf16.mxu0 %v5070
        %7620 = vmatpush1.bf16.msra.mxu0 %v5069
        %7621 = vmatprep.subr.bf16.mxu0 %v5054
        %7622 = vmatpush1.bf16.msra.mxu0 %v5053
        %7623 = vmatprep.subr.bf16.mxu0 %v5038
        %7624 = vmatpush1.bf16.msra.mxu0 %v5037
        %7625 = vmatprep.subr.bf16.mxu0 %v5022
        %7626 = vmatpush1.bf16.msra.mxu0 %v5021
        %7627 = vmatprep.subr.bf16.mxu0 %v5262
        %7628 = vmatpush2.bf16.msra.mxu0 %v5261
        %7629 = vmatprep.subr.bf16.mxu0 %v5246
        %7630 = vmatpush2.bf16.msra.mxu0 %v5245
        %7631 = vmatprep.subr.bf16.mxu0 %v5230
        %7632 = vmatpush2.bf16.msra.mxu0 %v5229
        %7633 = vmatprep.subr.bf16.mxu0 %v5214
        %7634 = vmatpush2.bf16.msra.mxu0 %v5213
        %7635 = vmatprep.subr.bf16.mxu0 %v5198
        %7636 = vmatpush2.bf16.msra.mxu0 %v5197
        %7637 = vmatprep.subr.bf16.mxu0 %v5182
        %7638 = vmatpush2.bf16.msra.mxu0 %v5181
        %7639 = vmatprep.subr.bf16.mxu0 %v5166
        %7640 = vmatpush2.bf16.msra.mxu0 %v5165
        %7641 = vmatprep.subr.bf16.mxu0 %v5150
        %7642 = vmatpush2.bf16.msra.mxu0 %v5149
        %7643 = vmatprep.mubr.bf16.mxu0 %v1412
        %7644 = vmatmul.mubr.bf16.gmra.mxu0 %v1398
        %v7645 = vpop.f32.mrf.mxu0
        %v7646 = vadd.f32 %v7605, %v7645
        %v7647 = vpop.f32.mrf.mxu0
        %v7648 = vadd.f32 %v7607, %v7647
        %v7649 = vpop.f32.mrf.mxu0
        %v7650 = vpop.f32.mrf.mxu0
        %7651 = vdwg.mxu0
        %7652 = vmatprep.subr.bf16.mxu0 %v5390
        %7653 = vmatpush1.bf16.msra.mxu0 %v5389
        %7654 = vmatprep.subr.bf16.mxu0 %v5374
        %7655 = vmatpush1.bf16.msra.mxu0 %v5373
        %7656 = vmatprep.subr.bf16.mxu0 %v5358
        %7657 = vmatpush1.bf16.msra.mxu0 %v5357
        %7658 = vmatprep.subr.bf16.mxu0 %v5342
        %7659 = vmatpush1.bf16.msra.mxu0 %v5341
        %7660 = vmatprep.subr.bf16.mxu0 %v5326
        %7661 = vmatpush1.bf16.msra.mxu0 %v5325
        %7662 = vmatprep.subr.bf16.mxu0 %v5310
        %7663 = vmatpush1.bf16.msra.mxu0 %v5309
        %7664 = vmatprep.subr.bf16.mxu0 %v5294
        %7665 = vmatpush1.bf16.msra.mxu0 %v5293
        %7666 = vmatprep.subr.bf16.mxu0 %v5278
        %7667 = vmatpush1.bf16.msra.mxu0 %v5277
        %7668 = vmatprep.subr.bf16.mxu0 %v5518
        %7669 = vmatpush2.bf16.msra.mxu0 %v5517
        %7670 = vmatprep.subr.bf16.mxu0 %v5502
        %7671 = vmatpush2.bf16.msra.mxu0 %v5501
        %7672 = vmatprep.subr.bf16.mxu0 %v5486
        %7673 = vmatpush2.bf16.msra.mxu0 %v5485
        %7674 = vmatprep.subr.bf16.mxu0 %v5470
        %7675 = vmatpush2.bf16.msra.mxu0 %v5469
        %7676 = vmatprep.subr.bf16.mxu0 %v5454
        %7677 = vmatpush2.bf16.msra.mxu0 %v5453
        %7678 = vmatprep.subr.bf16.mxu0 %v5438
        %7679 = vmatpush2.bf16.msra.mxu0 %v5437
        %7680 = vmatprep.subr.bf16.mxu0 %v5422
        %7681 = vmatpush2.bf16.msra.mxu0 %v5421
        %7682 = vmatprep.subr.bf16.mxu0 %v5406
        %7683 = vmatpush2.bf16.msra.mxu0 %v5405
        %7684 = vmatprep.mubr.bf16.mxu0 %v1416
        %7685 = vmatmul.mubr.bf16.gmra.mxu0 %v1414
        %v7686 = vpop.f32.mrf.mxu0
        %v7687 = vadd.f32 %v7646, %v7686
        %v7688 = vpop.f32.mrf.mxu0
        %v7689 = vadd.f32 %v7648, %v7688
        %v7690 = vpop.f32.mrf.mxu0
        %v7691 = vpop.f32.mrf.mxu0
        %7692 = vdwg.mxu0
        %7693 = vmatprep.subr.bf16.mxu0 %v4624
        %7694 = vmatpush1.bf16.msra.mxu0 %v4623
        %7695 = vmatprep.subr.bf16.mxu0 %v4608
        %7696 = vmatpush1.bf16.msra.mxu0 %v4607
        %7697 = vmatprep.subr.bf16.mxu0 %v4592
        %7698 = vmatpush1.bf16.msra.mxu0 %v4591
        %7699 = vmatprep.subr.bf16.mxu0 %v4576
        %7700 = vmatpush1.bf16.msra.mxu0 %v4575
        %7701 = vmatprep.subr.bf16.mxu0 %v4560
        %7702 = vmatpush1.bf16.msra.mxu0 %v4559
        %7703 = vmatprep.subr.bf16.mxu0 %v4544
        %7704 = vmatpush1.bf16.msra.mxu0 %v4543
        %7705 = vmatprep.subr.bf16.mxu0 %v4528
        %7706 = vmatpush1.bf16.msra.mxu0 %v4527
        %7707 = vmatprep.subr.bf16.mxu0 %v4512
        %7708 = vmatpush1.bf16.msra.mxu0 %v4511
        %7709 = vmatprep.subr.bf16.mxu0 %v4752
        %7710 = vmatpush2.bf16.msra.mxu0 %v4751
        %7711 = vmatprep.subr.bf16.mxu0 %v4736
        %7712 = vmatpush2.bf16.msra.mxu0 %v4735
        %7713 = vmatprep.subr.bf16.mxu0 %v4720
        %7714 = vmatpush2.bf16.msra.mxu0 %v4719
        %7715 = vmatprep.subr.bf16.mxu0 %v4704
        %7716 = vmatpush2.bf16.msra.mxu0 %v4703
        %7717 = vmatprep.subr.bf16.mxu0 %v4688
        %7718 = vmatpush2.bf16.msra.mxu0 %v4687
        %7719 = vmatprep.subr.bf16.mxu0 %v4672
        %7720 = vmatpush2.bf16.msra.mxu0 %v4671
        %7721 = vmatprep.subr.bf16.mxu0 %v4656
        %7722 = vmatpush2.bf16.msra.mxu0 %v4655
        %7723 = vmatprep.subr.bf16.mxu0 %v4640
        %7724 = vmatpush2.bf16.msra.mxu0 %v4639
        %7725 = vmatprep.mubr.bf16.mxu0 %v1405
        %7726 = vmatmul.mubr.bf16.gmra.mxu0 %v1391
        %v7727 = vpop.f32.mrf.mxu0
        %v7728 = vadd.f32 0.0, %v7727
        %v7729 = vpop.f32.mrf.mxu0
        %v7730 = vadd.f32 0.0, %v7729
        %v7731 = vpop.f32.mrf.mxu0
        %v7732 = vpop.f32.mrf.mxu0
        %7733 = vdwg.mxu0
        %7734 = vmatprep.subr.bf16.mxu0 %v4880
        %7735 = vmatpush1.bf16.msra.mxu0 %v4879
        %7736 = vmatprep.subr.bf16.mxu0 %v4864
        %7737 = vmatpush1.bf16.msra.mxu0 %v4863
        %7738 = vmatprep.subr.bf16.mxu0 %v4848
        %7739 = vmatpush1.bf16.msra.mxu0 %v4847
        %7740 = vmatprep.subr.bf16.mxu0 %v4832
        %7741 = vmatpush1.bf16.msra.mxu0 %v4831
        %7742 = vmatprep.subr.bf16.mxu0 %v4816
        %7743 = vmatpush1.bf16.msra.mxu0 %v4815
        %7744 = vmatprep.subr.bf16.mxu0 %v4800
        %7745 = vmatpush1.bf16.msra.mxu0 %v4799
        %7746 = vmatprep.subr.bf16.mxu0 %v4784
        %7747 = vmatpush1.bf16.msra.mxu0 %v4783
        %7748 = vmatprep.subr.bf16.mxu0 %v4768
        %7749 = vmatpush1.bf16.msra.mxu0 %v4767
        %7750 = vmatprep.subr.bf16.mxu0 %v5008
        %7751 = vmatpush2.bf16.msra.mxu0 %v5007
        %7752 = vmatprep.subr.bf16.mxu0 %v4992
        %7753 = vmatpush2.bf16.msra.mxu0 %v4991
        %7754 = vmatprep.subr.bf16.mxu0 %v4976
        %7755 = vmatpush2.bf16.msra.mxu0 %v4975
        %7756 = vmatprep.subr.bf16.mxu0 %v4960
        %7757 = vmatpush2.bf16.msra.mxu0 %v4959
        %7758 = vmatprep.subr.bf16.mxu0 %v4944
        %7759 = vmatpush2.bf16.msra.mxu0 %v4943
        %7760 = vmatprep.subr.bf16.mxu0 %v4928
        %7761 = vmatpush2.bf16.msra.mxu0 %v4927
        %7762 = vmatprep.subr.bf16.mxu0 %v4912
        %7763 = vmatpush2.bf16.msra.mxu0 %v4911
        %7764 = vmatprep.subr.bf16.mxu0 %v4896
        %7765 = vmatpush2.bf16.msra.mxu0 %v4895
        %7766 = vmatprep.mubr.bf16.mxu0 %v1415
        %7767 = vmatmul.mubr.bf16.gmra.mxu0 %v1413
        %v7768 = vpop.f32.mrf.mxu0
        %v7769 = vadd.f32 %v7728, %v7768
        %v7770 = vpop.f32.mrf.mxu0
        %v7771 = vadd.f32 %v7730, %v7770
        %v7772 = vpop.f32.mrf.mxu0
        %v7773 = vpop.f32.mrf.mxu0
        %7774 = vdwg.mxu0
        %7775 = vmatprep.subr.bf16.mxu0 %v5136
        %7776 = vmatpush1.bf16.msra.mxu0 %v5135
        %7777 = vmatprep.subr.bf16.mxu0 %v5120
        %7778 = vmatpush1.bf16.msra.mxu0 %v5119
        %7779 = vmatprep.subr.bf16.mxu0 %v5104
        %7780 = vmatpush1.bf16.msra.mxu0 %v5103
        %7781 = vmatprep.subr.bf16.mxu0 %v5088
        %7782 = vmatpush1.bf16.msra.mxu0 %v5087
        %7783 = vmatprep.subr.bf16.mxu0 %v5072
        %7784 = vmatpush1.bf16.msra.mxu0 %v5071
        %7785 = vmatprep.subr.bf16.mxu0 %v5056
        %7786 = vmatpush1.bf16.msra.mxu0 %v5055
        %7787 = vmatprep.subr.bf16.mxu0 %v5040
        %7788 = vmatpush1.bf16.msra.mxu0 %v5039
        %7789 = vmatprep.subr.bf16.mxu0 %v5024
        %7790 = vmatpush1.bf16.msra.mxu0 %v5023
        %7791 = vmatprep.subr.bf16.mxu0 %v5264
        %7792 = vmatpush2.bf16.msra.mxu0 %v5263
        %7793 = vmatprep.subr.bf16.mxu0 %v5248
        %7794 = vmatpush2.bf16.msra.mxu0 %v5247
        %7795 = vmatprep.subr.bf16.mxu0 %v5232
        %7796 = vmatpush2.bf16.msra.mxu0 %v5231
        %7797 = vmatprep.subr.bf16.mxu0 %v5216
        %7798 = vmatpush2.bf16.msra.mxu0 %v5215
        %7799 = vmatprep.subr.bf16.mxu0 %v5200
        %7800 = vmatpush2.bf16.msra.mxu0 %v5199
        %7801 = vmatprep.subr.bf16.mxu0 %v5184
        %7802 = vmatpush2.bf16.msra.mxu0 %v5183
        %7803 = vmatprep.subr.bf16.mxu0 %v5168
        %7804 = vmatpush2.bf16.msra.mxu0 %v5167
        %7805 = vmatprep.subr.bf16.mxu0 %v5152
        %7806 = vmatpush2.bf16.msra.mxu0 %v5151
        %7807 = vmatprep.mubr.bf16.mxu0 %v1412
        %7808 = vmatmul.mubr.bf16.gmra.mxu0 %v1398
        %v7809 = vpop.f32.mrf.mxu0
        %v7810 = vadd.f32 %v7769, %v7809
        %v7811 = vpop.f32.mrf.mxu0
        %v7812 = vadd.f32 %v7771, %v7811
        %v7813 = vpop.f32.mrf.mxu0
        %v7814 = vpop.f32.mrf.mxu0
        %7815 = vdwg.mxu0
        %7816 = vmatprep.subr.bf16.mxu0 %v5392
        %7817 = vmatpush1.bf16.msra.mxu0 %v5391
        %7818 = vmatprep.subr.bf16.mxu0 %v5376
        %7819 = vmatpush1.bf16.msra.mxu0 %v5375
        %7820 = vmatprep.subr.bf16.mxu0 %v5360
        %7821 = vmatpush1.bf16.msra.mxu0 %v5359
        %7822 = vmatprep.subr.bf16.mxu0 %v5344
        %7823 = vmatpush1.bf16.msra.mxu0 %v5343
        %7824 = vmatprep.subr.bf16.mxu0 %v5328
        %7825 = vmatpush1.bf16.msra.mxu0 %v5327
        %7826 = vmatprep.subr.bf16.mxu0 %v5312
        %7827 = vmatpush1.bf16.msra.mxu0 %v5311
        %7828 = vmatprep.subr.bf16.mxu0 %v5296
        %7829 = vmatpush1.bf16.msra.mxu0 %v5295
        %7830 = vmatprep.subr.bf16.mxu0 %v5280
        %7831 = vmatpush1.bf16.msra.mxu0 %v5279
        %7832 = vmatprep.subr.bf16.mxu0 %v5520
        %7833 = vmatpush2.bf16.msra.mxu0 %v5519
        %7834 = vmatprep.subr.bf16.mxu0 %v5504
        %7835 = vmatpush2.bf16.msra.mxu0 %v5503
        %7836 = vmatprep.subr.bf16.mxu0 %v5488
        %7837 = vmatpush2.bf16.msra.mxu0 %v5487
        %7838 = vmatprep.subr.bf16.mxu0 %v5472
        %7839 = vmatpush2.bf16.msra.mxu0 %v5471
        %7840 = vmatprep.subr.bf16.mxu0 %v5456
        %7841 = vmatpush2.bf16.msra.mxu0 %v5455
        %7842 = vmatprep.subr.bf16.mxu0 %v5440
        %7843 = vmatpush2.bf16.msra.mxu0 %v5439
        %7844 = vmatprep.subr.bf16.mxu0 %v5424
        %7845 = vmatpush2.bf16.msra.mxu0 %v5423
        %7846 = vmatprep.subr.bf16.mxu0 %v5408
        %7847 = vmatpush2.bf16.msra.mxu0 %v5407
        %7848 = vmatprep.mubr.bf16.mxu0 %v1416
        %7849 = vmatmul.mubr.bf16.gmra.mxu0 %v1414
        %v7850 = vpop.f32.mrf.mxu0
        %v7851 = vadd.f32 %v7810, %v7850
        %v7852 = vpop.f32.mrf.mxu0
        %v7853 = vadd.f32 %v7812, %v7852
        %v7854 = vpop.f32.mrf.mxu0
        %v7855 = vpop.f32.mrf.mxu0
        %7856 = vdwg.mxu0
        %v7873 = vcombine.low %v6703, %v6705
        %v7874 = vcombine.low %v6867, %v6869
        %v7876 = vunpack.c.l.s4 1983009808
        %v7877 = vunpack.c.0.s8 %v7876
        %v7878 = vlaneseq
        %v7879 = vshrl.u32 %v7878, 7
        %v7880 = vsub.s32 %v7877, %v7879
        %v7881 = vrot.slane %v7873, %v7880
        %v7883 = vunpack.c.l.s4 1983009808
        %v7884 = vunpack.c.0.s8 %v7883
        %v7885 = vlaneseq
        %v7886 = vshrl.u32 %v7885, 7
        %v7887 = vsub.s32 %v7884, %v7886
        %v7888 = vrot.slane %v7874, %v7887
        %v7889 = vcombine.low %v7881, %v7888
        %v7890 = vcombine.low %v7031, %v7033
        %v7891 = vcombine.low %v7195, %v7197
        %v7893 = vunpack.c.l.s4 1983009808
        %v7894 = vunpack.c.0.s8 %v7893
        %v7895 = vlaneseq
        %v7896 = vshrl.u32 %v7895, 7
        %v7897 = vsub.s32 %v7894, %v7896
        %v7898 = vrot.slane %v7890, %v7897
        %v7900 = vunpack.c.l.s4 1983009808
        %v7901 = vunpack.c.0.s8 %v7900
        %v7902 = vlaneseq
        %v7903 = vshrl.u32 %v7902, 7
        %v7904 = vsub.s32 %v7901, %v7903
        %v7905 = vrot.slane %v7891, %v7904
        %v7906 = vcombine.low %v7898, %v7905
        %v7907 = vcombine.low %v7359, %v7361
        %v7908 = vcombine.low %v7523, %v7525
        %v7910 = vunpack.c.l.s4 1983009808
        %v7911 = vunpack.c.0.s8 %v7910
        %v7912 = vlaneseq
        %v7913 = vshrl.u32 %v7912, 7
        %v7914 = vsub.s32 %v7911, %v7913
        %v7915 = vrot.slane %v7907, %v7914
        %v7917 = vunpack.c.l.s4 1983009808
        %v7918 = vunpack.c.0.s8 %v7917
        %v7919 = vlaneseq
        %v7920 = vshrl.u32 %v7919, 7
        %v7921 = vsub.s32 %v7918, %v7920
        %v7922 = vrot.slane %v7908, %v7921
        %v7923 = vcombine.low %v7915, %v7922
        %v7924 = vcombine.low %v7687, %v7689
        %v7925 = vcombine.low %v7851, %v7853
        %v7927 = vunpack.c.l.s4 1983009808
        %v7928 = vunpack.c.0.s8 %v7927
        %v7929 = vlaneseq
        %v7930 = vshrl.u32 %v7929, 7
        %v7931 = vsub.s32 %v7928, %v7930
        %v7932 = vrot.slane %v7924, %v7931
        %v7934 = vunpack.c.l.s4 1983009808
        %v7935 = vunpack.c.0.s8 %v7934
        %v7936 = vlaneseq
        %v7937 = vshrl.u32 %v7936, 7
        %v7938 = vsub.s32 %v7935, %v7937
        %v7939 = vrot.slane %v7925, %v7938
        %v7940 = vcombine.low %v7932, %v7939
        %v7945 = vadd.f32 %v339, %v7889
        %v7946 = vadd.f32 %v340, %v7906
        %v7947 = vadd.f32 %v341, %v7923
        %v7948 = vadd.f32 %v342, %v7940
        %7949 = vst [vmem:[#allocation2] sm:$0xff] %v7945
        %7950 = vst [vmem:[#allocation2 + $0x8] sm:$0xff] %v7946
        %7951 = vst [vmem:[#allocation2 + $0x10] sm:$0xff] %v7947
        %7952 = vst [vmem:[#allocation2 + $0x18] sm:$0xff] %v7948
        %p7953 = scmp.eq.s32.totalorder %s30, 3
        // Predicated region
        $region57: #{tpu_custom_call.1} parent=35 // pred_check
          %p7954 = pneg %p7953
        $region58: #{tpu_custom_call.1} parent=35 // pred_check_branch
          %7956 = sbr.rel (%p7954) target = $region60
        $region59: #{tpu_custom_call.1} parent=35 // pred_region
          %v7957 = vld [vmem:[#allocation2] sm:$0xff]
          %v7958 = vld [vmem:[#allocation2 + $0x8] sm:$0xff]
          %v7959 = vld [vmem:[#allocation2 + $0x10] sm:$0xff]
          %v7960 = vld [vmem:[#allocation2 + $0x18] sm:$0xff]
          %v7961 = vld [vmem:[%s277] sm:$0xff]
          %v7962 = vld [vmem:[%s277 + $0x8] sm:$0xff]
          %v7965 = vlaneseq
          %v7966 = vshrl.u32 %v7965, 7
          %v7967 = vsub.s32 0, %v7966
          %v7968 = vrot.slane %v7961, %v7967
          %v7969 = vlaneseq
          %v7970 = vshrl.u32 %v7969, 7
          %v7971 = vsub.s32 1, %v7970
          %v7972 = vrot.slane %v7961, %v7971
          %v7973 = vlaneseq
          %v7974 = vshrl.u32 %v7973, 7
          %v7975 = vsub.s32 2, %v7974
          %v7976 = vrot.slane %v7961, %v7975
          %v7977 = vlaneseq
          %v7978 = vshrl.u32 %v7977, 7
          %v7979 = vsub.s32 3, %v7978
          %v7980 = vrot.slane %v7961, %v7979
          %v7981 = vlaneseq
          %v7982 = vshrl.u32 %v7981, 7
          %v7983 = vsub.s32 4, %v7982
          %v7984 = vrot.slane %v7961, %v7983
          %v7985 = vlaneseq
          %v7986 = vshrl.u32 %v7985, 7
          %v7987 = vsub.s32 5, %v7986
          %v7988 = vrot.slane %v7961, %v7987
          %v7989 = vlaneseq
          %v7990 = vshrl.u32 %v7989, 7
          %v7991 = vsub.s32 6, %v7990
          %v7992 = vrot.slane %v7961, %v7991
          %v7993 = vlaneseq
          %v7994 = vshrl.u32 %v7993, 7
          %v7995 = vsub.s32 7, %v7994
          %v7996 = vrot.slane %v7961, %v7995
          %v7997 = vlaneseq
          %v7998 = vshrl.u32 %v7997, 7
          %v7999 = vsub.s32 0, %v7998
          %v8000 = vrot.slane %v7962, %v7999
          %v8001 = vlaneseq
          %v8002 = vshrl.u32 %v8001, 7
          %v8003 = vsub.s32 1, %v8002
          %v8004 = vrot.slane %v7962, %v8003
          %v8005 = vlaneseq
          %v8006 = vshrl.u32 %v8005, 7
          %v8007 = vsub.s32 2, %v8006
          %v8008 = vrot.slane %v7962, %v8007
          %v8009 = vlaneseq
          %v8010 = vshrl.u32 %v8009, 7
          %v8011 = vsub.s32 3, %v8010
          %v8012 = vrot.slane %v7962, %v8011
          %v8013 = vlaneseq
          %v8014 = vshrl.u32 %v8013, 7
          %v8015 = vsub.s32 4, %v8014
          %v8016 = vrot.slane %v7962, %v8015
          %v8017 = vlaneseq
          %v8018 = vshrl.u32 %v8017, 7
          %v8019 = vsub.s32 5, %v8018
          %v8020 = vrot.slane %v7962, %v8019
          %v8021 = vlaneseq
          %v8022 = vshrl.u32 %v8021, 7
          %v8023 = vsub.s32 6, %v8022
          %v8024 = vrot.slane %v7962, %v8023
          %v8025 = vlaneseq
          %v8026 = vshrl.u32 %v8025, 7
          %v8027 = vsub.s32 7, %v8026
          %v8028 = vrot.slane %v7962, %v8027
          %v8029 = vcombine.low %v7968, %v7972
          %v8030 = vcombine.low %v7976, %v7980
          %v8032 = vunpack.c.l.s4 1983009808
          %v8033 = vunpack.c.0.s8 %v8032
          %v8034 = vlaneseq
          %v8035 = vshrl.u32 %v8034, 7
          %v8036 = vsub.s32 %v8033, %v8035
          %v8037 = vrot.slane %v8029, %v8036
          %v8039 = vunpack.c.l.s4 1983009808
          %v8040 = vunpack.c.0.s8 %v8039
          %v8041 = vlaneseq
          %v8042 = vshrl.u32 %v8041, 7
          %v8043 = vsub.s32 %v8040, %v8042
          %v8044 = vrot.slane %v8030, %v8043
          %v8045 = vcombine.low %v8037, %v8044
          %v8046 = vcombine.low %v7984, %v7988
          %v8047 = vcombine.low %v7992, %v7996
          %v8049 = vunpack.c.l.s4 1983009808
          %v8050 = vunpack.c.0.s8 %v8049
          %v8051 = vlaneseq
          %v8052 = vshrl.u32 %v8051, 7
          %v8053 = vsub.s32 %v8050, %v8052
          %v8054 = vrot.slane %v8046, %v8053
          %v8056 = vunpack.c.l.s4 1983009808
          %v8057 = vunpack.c.0.s8 %v8056
          %v8058 = vlaneseq
          %v8059 = vshrl.u32 %v8058, 7
          %v8060 = vsub.s32 %v8057, %v8059
          %v8061 = vrot.slane %v8047, %v8060
          %v8062 = vcombine.low %v8054, %v8061
          %v8063 = vcombine.low %v8000, %v8004
          %v8064 = vcombine.low %v8008, %v8012
          %v8066 = vunpack.c.l.s4 1983009808
          %v8067 = vunpack.c.0.s8 %v8066
          %v8068 = vlaneseq
          %v8069 = vshrl.u32 %v8068, 7
          %v8070 = vsub.s32 %v8067, %v8069
          %v8071 = vrot.slane %v8063, %v8070
          %v8073 = vunpack.c.l.s4 1983009808
          %v8074 = vunpack.c.0.s8 %v8073
          %v8075 = vlaneseq
          %v8076 = vshrl.u32 %v8075, 7
          %v8077 = vsub.s32 %v8074, %v8076
          %v8078 = vrot.slane %v8064, %v8077
          %v8079 = vcombine.low %v8071, %v8078
          %v8080 = vcombine.low %v8016, %v8020
          %v8081 = vcombine.low %v8024, %v8028
          %v8083 = vunpack.c.l.s4 1983009808
          %v8084 = vunpack.c.0.s8 %v8083
          %v8085 = vlaneseq
          %v8086 = vshrl.u32 %v8085, 7
          %v8087 = vsub.s32 %v8084, %v8086
          %v8088 = vrot.slane %v8080, %v8087
          %v8090 = vunpack.c.l.s4 1983009808
          %v8091 = vunpack.c.0.s8 %v8090
          %v8092 = vlaneseq
          %v8093 = vshrl.u32 %v8092, 7
          %v8094 = vsub.s32 %v8091, %v8093
          %v8095 = vrot.slane %v8081, %v8094
          %v8096 = vcombine.low %v8088, %v8095
          %v8101 = vadd.f32 %v7957, %v8045
          %v8102 = vadd.f32 %v7958, %v8062
          %v8103 = vadd.f32 %v7959, %v8079
          %v8104 = vadd.f32 %v7960, %v8096
          %v8105 = vmax.f32 %v8101, 0.0
          %v8106 = vmax.f32 %v8102, 0.0
          %v8107 = vmax.f32 %v8103, 0.0
          %v8108 = vmax.f32 %v8104, 0.0
          %v8113 = vcombine.high %v8105, %v8105
          %v8115 = vunpack.c.l.s4 1983009808
          %v8116 = vunpack.c.0.s8 %v8115
          %v8117 = vlaneseq
          %v8118 = vshrl.u32 %v8117, 7
          %v8119 = vsub.s32 %v8116, %v8118
          %v8120 = vrot.slane %v8105, %v8119
          %v8122 = vunpack.c.l.s4 1983009808
          %v8123 = vunpack.c.0.s8 %v8122
          %v8124 = vlaneseq
          %v8125 = vshrl.u32 %v8124, 7
          %v8126 = vsub.s32 %v8123, %v8125
          %v8127 = vrot.slane %v8113, %v8126
          %v8128 = vcombine.high %v8120, %v8120
          %v8129 = vcombine.high %v8127, %v8127
          %v8130 = vcombine.high %v8106, %v8106
          %v8132 = vunpack.c.l.s4 1983009808
          %v8133 = vunpack.c.0.s8 %v8132
          %v8134 = vlaneseq
          %v8135 = vshrl.u32 %v8134, 7
          %v8136 = vsub.s32 %v8133, %v8135
          %v8137 = vrot.slane %v8106, %v8136
          %v8139 = vunpack.c.l.s4 1983009808
          %v8140 = vunpack.c.0.s8 %v8139
          %v8141 = vlaneseq
          %v8142 = vshrl.u32 %v8141, 7
          %v8143 = vsub.s32 %v8140, %v8142
          %v8144 = vrot.slane %v8130, %v8143
          %v8145 = vcombine.high %v8137, %v8137
          %v8146 = vcombine.high %v8144, %v8144
          %v8147 = vcombine.high %v8107, %v8107
          %v8149 = vunpack.c.l.s4 1983009808
          %v8150 = vunpack.c.0.s8 %v8149
          %v8151 = vlaneseq
          %v8152 = vshrl.u32 %v8151, 7
          %v8153 = vsub.s32 %v8150, %v8152
          %v8154 = vrot.slane %v8107, %v8153
          %v8156 = vunpack.c.l.s4 1983009808
          %v8157 = vunpack.c.0.s8 %v8156
          %v8158 = vlaneseq
          %v8159 = vshrl.u32 %v8158, 7
          %v8160 = vsub.s32 %v8157, %v8159
          %v8161 = vrot.slane %v8147, %v8160
          %v8162 = vcombine.high %v8154, %v8154
          %v8163 = vcombine.high %v8161, %v8161
          %v8164 = vcombine.high %v8108, %v8108
          %v8166 = vunpack.c.l.s4 1983009808
          %v8167 = vunpack.c.0.s8 %v8166
          %v8168 = vlaneseq
          %v8169 = vshrl.u32 %v8168, 7
          %v8170 = vsub.s32 %v8167, %v8169
          %v8171 = vrot.slane %v8108, %v8170
          %v8173 = vunpack.c.l.s4 1983009808
          %v8174 = vunpack.c.0.s8 %v8173
          %v8175 = vlaneseq
          %v8176 = vshrl.u32 %v8175, 7
          %v8177 = vsub.s32 %v8174, %v8176
          %v8178 = vrot.slane %v8164, %v8177
          %v8179 = vcombine.high %v8171, %v8171
          %v8180 = vcombine.high %v8178, %v8178
          %v8197 = vpack.c.bf16 %v8120, %v8120
          %v8198 = vpack.c.bf16 %v8128, %v8128
          %v8199 = vpack.c.bf16 %v8127, %v8127
          %v8200 = vpack.c.bf16 %v8129, %v8129
          %v8201 = vpack.c.bf16 %v8137, %v8137
          %v8202 = vpack.c.bf16 %v8145, %v8145
          %v8203 = vpack.c.bf16 %v8144, %v8144
          %v8204 = vpack.c.bf16 %v8146, %v8146
          %v8205 = vpack.c.bf16 %v8154, %v8154
          %v8206 = vpack.c.bf16 %v8162, %v8162
          %v8207 = vpack.c.bf16 %v8161, %v8161
          %v8208 = vpack.c.bf16 %v8163, %v8163
          %v8209 = vpack.c.bf16 %v8171, %v8171
          %v8210 = vpack.c.bf16 %v8179, %v8179
          %v8211 = vpack.c.bf16 %v8178, %v8178
          %v8212 = vpack.c.bf16 %v8180, %v8180
          %v8213 = vld [vmem:[%s286] sm:$0xf]
          %v8214 = vld [vmem:[%s286 + $0x4] sm:$0xf]
          %v8215 = vld [vmem:[%s286 + $0x8] sm:$0xf]
          %v8216 = vld [vmem:[%s286 + $0xc] sm:$0xf]
          %v8217 = vld [vmem:[%s286 + $0x10] sm:$0xf]
          %v8218 = vld [vmem:[%s286 + $0x14] sm:$0xf]
          %v8219 = vld [vmem:[%s286 + $0x18] sm:$0xf]
          %v8220 = vld [vmem:[%s286 + $0x1c] sm:$0xf]
          %v8221 = vld [vmem:[%s286 + $0x20] sm:$0xf]
          %v8222 = vld [vmem:[%s286 + $0x24] sm:$0xf]
          %v8223 = vld [vmem:[%s286 + $0x28] sm:$0xf]
          %v8224 = vld [vmem:[%s286 + $0x2c] sm:$0xf]
          %v8225 = vld [vmem:[%s286 + $0x30] sm:$0xf]
          %v8226 = vld [vmem:[%s286 + $0x34] sm:$0xf]
          %v8227 = vld [vmem:[%s286 + $0x38] sm:$0xf]
          %v8228 = vld [vmem:[%s286 + $0x3c] sm:$0xf]
          %v8229 = vld [vmem:[%s286 + $0x40] sm:$0xf]
          %v8230 = vld [vmem:[%s286 + $0x44] sm:$0xf]
          %v8231 = vld [vmem:[%s286 + $0x48] sm:$0xf]
          %v8232 = vld [vmem:[%s286 + $0x4c] sm:$0xf]
          %v8233 = vld [vmem:[%s286 + $0x50] sm:$0xf]
          %v8234 = vld [vmem:[%s286 + $0x54] sm:$0xf]
          %v8235 = vld [vmem:[%s286 + $0x58] sm:$0xf]
          %v8236 = vld [vmem:[%s286 + $0x5c] sm:$0xf]
          %v8237 = vld [vmem:[%s286 + $0x60] sm:$0xf]
          %v8238 = vld [vmem:[%s286 + $0x64] sm:$0xf]
          %v8239 = vld [vmem:[%s286 + $0x68] sm:$0xf]
          %v8240 = vld [vmem:[%s286 + $0x6c] sm:$0xf]
          %v8241 = vld [vmem:[%s286 + $0x70] sm:$0xf]
          %v8242 = vld [vmem:[%s286 + $0x74] sm:$0xf]
          %v8243 = vld [vmem:[%s286 + $0x78] sm:$0xf]
          %v8244 = vld [vmem:[%s286 + $0x7c] sm:$0xf]
          %v8245 = vld [vmem:[%s286 + $0x80] sm:$0xf]
          %v8246 = vld [vmem:[%s286 + $0x84] sm:$0xf]
          %v8247 = vld [vmem:[%s286 + $0x88] sm:$0xf]
          %v8248 = vld [vmem:[%s286 + $0x8c] sm:$0xf]
          %v8249 = vld [vmem:[%s286 + $0x90] sm:$0xf]
          %v8250 = vld [vmem:[%s286 + $0x94] sm:$0xf]
          %v8251 = vld [vmem:[%s286 + $0x98] sm:$0xf]
          %v8252 = vld [vmem:[%s286 + $0x9c] sm:$0xf]
          %v8253 = vld [vmem:[%s286 + $0xa0] sm:$0xf]
          %v8254 = vld [vmem:[%s286 + $0xa4] sm:$0xf]
          %v8255 = vld [vmem:[%s286 + $0xa8] sm:$0xf]
          %v8256 = vld [vmem:[%s286 + $0xac] sm:$0xf]
          %v8257 = vld [vmem:[%s286 + $0xb0] sm:$0xf]
          %v8258 = vld [vmem:[%s286 + $0xb4] sm:$0xf]
          %v8259 = vld [vmem:[%s286 + $0xb8] sm:$0xf]
          %v8260 = vld [vmem:[%s286 + $0xbc] sm:$0xf]
          %v8261 = vld [vmem:[%s286 + $0xc0] sm:$0xf]
          %v8262 = vld [vmem:[%s286 + $0xc4] sm:$0xf]
          %v8263 = vld [vmem:[%s286 + $0xc8] sm:$0xf]
          %v8264 = vld [vmem:[%s286 + $0xcc] sm:$0xf]
          %v8265 = vld [vmem:[%s286 + $0xd0] sm:$0xf]
          %v8266 = vld [vmem:[%s286 + $0xd4] sm:$0xf]
          %v8267 = vld [vmem:[%s286 + $0xd8] sm:$0xf]
          %v8268 = vld [vmem:[%s286 + $0xdc] sm:$0xf]
          %v8269 = vld [vmem:[%s286 + $0xe0] sm:$0xf]
          %v8270 = vld [vmem:[%s286 + $0xe4] sm:$0xf]
          %v8271 = vld [vmem:[%s286 + $0xe8] sm:$0xf]
          %v8272 = vld [vmem:[%s286 + $0xec] sm:$0xf]
          %v8273 = vld [vmem:[%s286 + $0xf0] sm:$0xf]
          %v8274 = vld [vmem:[%s286 + $0xf4] sm:$0xf]
          %v8275 = vld [vmem:[%s286 + $0xf8] sm:$0xf]
          %v8276 = vld [vmem:[%s286 + $0xfc] sm:$0xf]
          %v8277 = vld [vmem:[%s286 + $0x100] sm:$0xf]
          %v8278 = vld [vmem:[%s286 + $0x104] sm:$0xf]
          %v8279 = vld [vmem:[%s286 + $0x108] sm:$0xf]
          %v8280 = vld [vmem:[%s286 + $0x10c] sm:$0xf]
          %v8281 = vld [vmem:[%s286 + $0x110] sm:$0xf]
          %v8282 = vld [vmem:[%s286 + $0x114] sm:$0xf]
          %v8283 = vld [vmem:[%s286 + $0x118] sm:$0xf]
          %v8284 = vld [vmem:[%s286 + $0x11c] sm:$0xf]
          %v8285 = vld [vmem:[%s286 + $0x120] sm:$0xf]
          %v8286 = vld [vmem:[%s286 + $0x124] sm:$0xf]
          %v8287 = vld [vmem:[%s286 + $0x128] sm:$0xf]
          %v8288 = vld [vmem:[%s286 + $0x12c] sm:$0xf]
          %v8289 = vld [vmem:[%s286 + $0x130] sm:$0xf]
          %v8290 = vld [vmem:[%s286 + $0x134] sm:$0xf]
          %v8291 = vld [vmem:[%s286 + $0x138] sm:$0xf]
          %v8292 = vld [vmem:[%s286 + $0x13c] sm:$0xf]
          %v8293 = vld [vmem:[%s286 + $0x140] sm:$0xf]
          %v8294 = vld [vmem:[%s286 + $0x144] sm:$0xf]
          %v8295 = vld [vmem:[%s286 + $0x148] sm:$0xf]
          %v8296 = vld [vmem:[%s286 + $0x14c] sm:$0xf]
          %v8297 = vld [vmem:[%s286 + $0x150] sm:$0xf]
          %v8298 = vld [vmem:[%s286 + $0x154] sm:$0xf]
          %v8299 = vld [vmem:[%s286 + $0x158] sm:$0xf]
          %v8300 = vld [vmem:[%s286 + $0x15c] sm:$0xf]
          %v8301 = vld [vmem:[%s286 + $0x160] sm:$0xf]
          %v8302 = vld [vmem:[%s286 + $0x164] sm:$0xf]
          %v8303 = vld [vmem:[%s286 + $0x168] sm:$0xf]
          %v8304 = vld [vmem:[%s286 + $0x16c] sm:$0xf]
          %v8305 = vld [vmem:[%s286 + $0x170] sm:$0xf]
          %v8306 = vld [vmem:[%s286 + $0x174] sm:$0xf]
          %v8307 = vld [vmem:[%s286 + $0x178] sm:$0xf]
          %v8308 = vld [vmem:[%s286 + $0x17c] sm:$0xf]
          %v8309 = vld [vmem:[%s286 + $0x180] sm:$0xf]
          %v8310 = vld [vmem:[%s286 + $0x184] sm:$0xf]
          %v8311 = vld [vmem:[%s286 + $0x188] sm:$0xf]
          %v8312 = vld [vmem:[%s286 + $0x18c] sm:$0xf]
          %v8313 = vld [vmem:[%s286 + $0x190] sm:$0xf]
          %v8314 = vld [vmem:[%s286 + $0x194] sm:$0xf]
          %v8315 = vld [vmem:[%s286 + $0x198] sm:$0xf]
          %v8316 = vld [vmem:[%s286 + $0x19c] sm:$0xf]
          %v8317 = vld [vmem:[%s286 + $0x1a0] sm:$0xf]
          %v8318 = vld [vmem:[%s286 + $0x1a4] sm:$0xf]
          %v8319 = vld [vmem:[%s286 + $0x1a8] sm:$0xf]
          %v8320 = vld [vmem:[%s286 + $0x1ac] sm:$0xf]
          %v8321 = vld [vmem:[%s286 + $0x1b0] sm:$0xf]
          %v8322 = vld [vmem:[%s286 + $0x1b4] sm:$0xf]
          %v8323 = vld [vmem:[%s286 + $0x1b8] sm:$0xf]
          %v8324 = vld [vmem:[%s286 + $0x1bc] sm:$0xf]
          %v8325 = vld [vmem:[%s286 + $0x1c0] sm:$0xf]
          %v8326 = vld [vmem:[%s286 + $0x1c4] sm:$0xf]
          %v8327 = vld [vmem:[%s286 + $0x1c8] sm:$0xf]
          %v8328 = vld [vmem:[%s286 + $0x1cc] sm:$0xf]
          %v8329 = vld [vmem:[%s286 + $0x1d0] sm:$0xf]
          %v8330 = vld [vmem:[%s286 + $0x1d4] sm:$0xf]
          %v8331 = vld [vmem:[%s286 + $0x1d8] sm:$0xf]
          %v8332 = vld [vmem:[%s286 + $0x1dc] sm:$0xf]
          %v8333 = vld [vmem:[%s286 + $0x1e0] sm:$0xf]
          %v8334 = vld [vmem:[%s286 + $0x1e4] sm:$0xf]
          %v8335 = vld [vmem:[%s286 + $0x1e8] sm:$0xf]
          %v8336 = vld [vmem:[%s286 + $0x1ec] sm:$0xf]
          %v8337 = vld [vmem:[%s286 + $0x1f0] sm:$0xf]
          %v8338 = vld [vmem:[%s286 + $0x1f4] sm:$0xf]
          %v8339 = vld [vmem:[%s286 + $0x1f8] sm:$0xf]
          %v8340 = vld [vmem:[%s286 + $0x1fc] sm:$0xf]
          %v8341 = vld [vmem:[%s286 + $0x200] sm:$0xf]
          %v8342 = vld [vmem:[%s286 + $0x204] sm:$0xf]
          %v8343 = vld [vmem:[%s286 + $0x208] sm:$0xf]
          %v8344 = vld [vmem:[%s286 + $0x20c] sm:$0xf]
          %v8345 = vld [vmem:[%s286 + $0x210] sm:$0xf]
          %v8346 = vld [vmem:[%s286 + $0x214] sm:$0xf]
          %v8347 = vld [vmem:[%s286 + $0x218] sm:$0xf]
          %v8348 = vld [vmem:[%s286 + $0x21c] sm:$0xf]
          %v8349 = vld [vmem:[%s286 + $0x220] sm:$0xf]
          %v8350 = vld [vmem:[%s286 + $0x224] sm:$0xf]
          %v8351 = vld [vmem:[%s286 + $0x228] sm:$0xf]
          %v8352 = vld [vmem:[%s286 + $0x22c] sm:$0xf]
          %v8353 = vld [vmem:[%s286 + $0x230] sm:$0xf]
          %v8354 = vld [vmem:[%s286 + $0x234] sm:$0xf]
          %v8355 = vld [vmem:[%s286 + $0x238] sm:$0xf]
          %v8356 = vld [vmem:[%s286 + $0x23c] sm:$0xf]
          %v8357 = vld [vmem:[%s286 + $0x240] sm:$0xf]
          %v8358 = vld [vmem:[%s286 + $0x244] sm:$0xf]
          %v8359 = vld [vmem:[%s286 + $0x248] sm:$0xf]
          %v8360 = vld [vmem:[%s286 + $0x24c] sm:$0xf]
          %v8361 = vld [vmem:[%s286 + $0x250] sm:$0xf]
          %v8362 = vld [vmem:[%s286 + $0x254] sm:$0xf]
          %v8363 = vld [vmem:[%s286 + $0x258] sm:$0xf]
          %v8364 = vld [vmem:[%s286 + $0x25c] sm:$0xf]
          %v8365 = vld [vmem:[%s286 + $0x260] sm:$0xf]
          %v8366 = vld [vmem:[%s286 + $0x264] sm:$0xf]
          %v8367 = vld [vmem:[%s286 + $0x268] sm:$0xf]
          %v8368 = vld [vmem:[%s286 + $0x26c] sm:$0xf]
          %v8369 = vld [vmem:[%s286 + $0x270] sm:$0xf]
          %v8370 = vld [vmem:[%s286 + $0x274] sm:$0xf]
          %v8371 = vld [vmem:[%s286 + $0x278] sm:$0xf]
          %v8372 = vld [vmem:[%s286 + $0x27c] sm:$0xf]
          %v8373 = vld [vmem:[%s286 + $0x280] sm:$0xf]
          %v8374 = vld [vmem:[%s286 + $0x284] sm:$0xf]
          %v8375 = vld [vmem:[%s286 + $0x288] sm:$0xf]
          %v8376 = vld [vmem:[%s286 + $0x28c] sm:$0xf]
          %v8377 = vld [vmem:[%s286 + $0x290] sm:$0xf]
          %v8378 = vld [vmem:[%s286 + $0x294] sm:$0xf]
          %v8379 = vld [vmem:[%s286 + $0x298] sm:$0xf]
          %v8380 = vld [vmem:[%s286 + $0x29c] sm:$0xf]
          %v8381 = vld [vmem:[%s286 + $0x2a0] sm:$0xf]
          %v8382 = vld [vmem:[%s286 + $0x2a4] sm:$0xf]
          %v8383 = vld [vmem:[%s286 + $0x2a8] sm:$0xf]
          %v8384 = vld [vmem:[%s286 + $0x2ac] sm:$0xf]
          %v8385 = vld [vmem:[%s286 + $0x2b0] sm:$0xf]
          %v8386 = vld [vmem:[%s286 + $0x2b4] sm:$0xf]
          %v8387 = vld [vmem:[%s286 + $0x2b8] sm:$0xf]
          %v8388 = vld [vmem:[%s286 + $0x2bc] sm:$0xf]
          %v8389 = vld [vmem:[%s286 + $0x2c0] sm:$0xf]
          %v8390 = vld [vmem:[%s286 + $0x2c4] sm:$0xf]
          %v8391 = vld [vmem:[%s286 + $0x2c8] sm:$0xf]
          %v8392 = vld [vmem:[%s286 + $0x2cc] sm:$0xf]
          %v8393 = vld [vmem:[%s286 + $0x2d0] sm:$0xf]
          %v8394 = vld [vmem:[%s286 + $0x2d4] sm:$0xf]
          %v8395 = vld [vmem:[%s286 + $0x2d8] sm:$0xf]
          %v8396 = vld [vmem:[%s286 + $0x2dc] sm:$0xf]
          %v8397 = vld [vmem:[%s286 + $0x2e0] sm:$0xf]
          %v8398 = vld [vmem:[%s286 + $0x2e4] sm:$0xf]
          %v8399 = vld [vmem:[%s286 + $0x2e8] sm:$0xf]
          %v8400 = vld [vmem:[%s286 + $0x2ec] sm:$0xf]
          %v8401 = vld [vmem:[%s286 + $0x2f0] sm:$0xf]
          %v8402 = vld [vmem:[%s286 + $0x2f4] sm:$0xf]
          %v8403 = vld [vmem:[%s286 + $0x2f8] sm:$0xf]
          %v8404 = vld [vmem:[%s286 + $0x2fc] sm:$0xf]
          %v8405 = vld [vmem:[%s286 + $0x300] sm:$0xf]
          %v8406 = vld [vmem:[%s286 + $0x304] sm:$0xf]
          %v8407 = vld [vmem:[%s286 + $0x308] sm:$0xf]
          %v8408 = vld [vmem:[%s286 + $0x30c] sm:$0xf]
          %v8409 = vld [vmem:[%s286 + $0x310] sm:$0xf]
          %v8410 = vld [vmem:[%s286 + $0x314] sm:$0xf]
          %v8411 = vld [vmem:[%s286 + $0x318] sm:$0xf]
          %v8412 = vld [vmem:[%s286 + $0x31c] sm:$0xf]
          %v8413 = vld [vmem:[%s286 + $0x320] sm:$0xf]
          %v8414 = vld [vmem:[%s286 + $0x324] sm:$0xf]
          %v8415 = vld [vmem:[%s286 + $0x328] sm:$0xf]
          %v8416 = vld [vmem:[%s286 + $0x32c] sm:$0xf]
          %v8417 = vld [vmem:[%s286 + $0x330] sm:$0xf]
          %v8418 = vld [vmem:[%s286 + $0x334] sm:$0xf]
          %v8419 = vld [vmem:[%s286 + $0x338] sm:$0xf]
          %v8420 = vld [vmem:[%s286 + $0x33c] sm:$0xf]
          %v8421 = vld [vmem:[%s286 + $0x340] sm:$0xf]
          %v8422 = vld [vmem:[%s286 + $0x344] sm:$0xf]
          %v8423 = vld [vmem:[%s286 + $0x348] sm:$0xf]
          %v8424 = vld [vmem:[%s286 + $0x34c] sm:$0xf]
          %v8425 = vld [vmem:[%s286 + $0x350] sm:$0xf]
          %v8426 = vld [vmem:[%s286 + $0x354] sm:$0xf]
          %v8427 = vld [vmem:[%s286 + $0x358] sm:$0xf]
          %v8428 = vld [vmem:[%s286 + $0x35c] sm:$0xf]
          %v8429 = vld [vmem:[%s286 + $0x360] sm:$0xf]
          %v8430 = vld [vmem:[%s286 + $0x364] sm:$0xf]
          %v8431 = vld [vmem:[%s286 + $0x368] sm:$0xf]
          %v8432 = vld [vmem:[%s286 + $0x36c] sm:$0xf]
          %v8433 = vld [vmem:[%s286 + $0x370] sm:$0xf]
          %v8434 = vld [vmem:[%s286 + $0x374] sm:$0xf]
          %v8435 = vld [vmem:[%s286 + $0x378] sm:$0xf]
          %v8436 = vld [vmem:[%s286 + $0x37c] sm:$0xf]
          %v8437 = vld [vmem:[%s286 + $0x380] sm:$0xf]
          %v8438 = vld [vmem:[%s286 + $0x384] sm:$0xf]
          %v8439 = vld [vmem:[%s286 + $0x388] sm:$0xf]
          %v8440 = vld [vmem:[%s286 + $0x38c] sm:$0xf]
          %v8441 = vld [vmem:[%s286 + $0x390] sm:$0xf]
          %v8442 = vld [vmem:[%s286 + $0x394] sm:$0xf]
          %v8443 = vld [vmem:[%s286 + $0x398] sm:$0xf]
          %v8444 = vld [vmem:[%s286 + $0x39c] sm:$0xf]
          %v8445 = vld [vmem:[%s286 + $0x3a0] sm:$0xf]
          %v8446 = vld [vmem:[%s286 + $0x3a4] sm:$0xf]
          %v8447 = vld [vmem:[%s286 + $0x3a8] sm:$0xf]
          %v8448 = vld [vmem:[%s286 + $0x3ac] sm:$0xf]
          %v8449 = vld [vmem:[%s286 + $0x3b0] sm:$0xf]
          %v8450 = vld [vmem:[%s286 + $0x3b4] sm:$0xf]
          %v8451 = vld [vmem:[%s286 + $0x3b8] sm:$0xf]
          %v8452 = vld [vmem:[%s286 + $0x3bc] sm:$0xf]
          %v8453 = vld [vmem:[%s286 + $0x3c0] sm:$0xf]
          %v8454 = vld [vmem:[%s286 + $0x3c4] sm:$0xf]
          %v8455 = vld [vmem:[%s286 + $0x3c8] sm:$0xf]
          %v8456 = vld [vmem:[%s286 + $0x3cc] sm:$0xf]
          %v8457 = vld [vmem:[%s286 + $0x3d0] sm:$0xf]
          %v8458 = vld [vmem:[%s286 + $0x3d4] sm:$0xf]
          %v8459 = vld [vmem:[%s286 + $0x3d8] sm:$0xf]
          %v8460 = vld [vmem:[%s286 + $0x3dc] sm:$0xf]
          %v8461 = vld [vmem:[%s286 + $0x3e0] sm:$0xf]
          %v8462 = vld [vmem:[%s286 + $0x3e4] sm:$0xf]
          %v8463 = vld [vmem:[%s286 + $0x3e8] sm:$0xf]
          %v8464 = vld [vmem:[%s286 + $0x3ec] sm:$0xf]
          %v8465 = vld [vmem:[%s286 + $0x3f0] sm:$0xf]
          %v8466 = vld [vmem:[%s286 + $0x3f4] sm:$0xf]
          %v8467 = vld [vmem:[%s286 + $0x3f8] sm:$0xf]
          %v8468 = vld [vmem:[%s286 + $0x3fc] sm:$0xf]
          %v8725 = vunpack.c.l.b16 %v8213
          %v8726 = vunpack.c.l.b16 %v8214
          %v8727 = vunpack.c.l.b16 %v8215
          %v8728 = vunpack.c.l.b16 %v8216
          %v8729 = vunpack.c.l.b16 %v8217
          %v8730 = vunpack.c.l.b16 %v8218
          %v8731 = vunpack.c.l.b16 %v8219
          %v8732 = vunpack.c.l.b16 %v8220
          %v8733 = vunpack.c.l.b16 %v8221
          %v8734 = vunpack.c.l.b16 %v8222
          %v8735 = vunpack.c.l.b16 %v8223
          %v8736 = vunpack.c.l.b16 %v8224
          %v8737 = vunpack.c.l.b16 %v8225
          %v8738 = vunpack.c.l.b16 %v8226
          %v8739 = vunpack.c.l.b16 %v8227
          %v8740 = vunpack.c.l.b16 %v8228
          %v8741 = vunpack.c.l.b16 %v8229
          %v8742 = vunpack.c.l.b16 %v8230
          %v8743 = vunpack.c.l.b16 %v8231
          %v8744 = vunpack.c.l.b16 %v8232
          %v8745 = vunpack.c.l.b16 %v8233
          %v8746 = vunpack.c.l.b16 %v8234
          %v8747 = vunpack.c.l.b16 %v8235
          %v8748 = vunpack.c.l.b16 %v8236
          %v8749 = vunpack.c.l.b16 %v8237
          %v8750 = vunpack.c.l.b16 %v8238
          %v8751 = vunpack.c.l.b16 %v8239
          %v8752 = vunpack.c.l.b16 %v8240
          %v8753 = vunpack.c.l.b16 %v8241
          %v8754 = vunpack.c.l.b16 %v8242
          %v8755 = vunpack.c.l.b16 %v8243
          %v8756 = vunpack.c.l.b16 %v8244
          %v8757 = vunpack.c.l.b16 %v8245
          %v8758 = vunpack.c.l.b16 %v8246
          %v8759 = vunpack.c.l.b16 %v8247
          %v8760 = vunpack.c.l.b16 %v8248
          %v8761 = vunpack.c.l.b16 %v8249
          %v8762 = vunpack.c.l.b16 %v8250
          %v8763 = vunpack.c.l.b16 %v8251
          %v8764 = vunpack.c.l.b16 %v8252
          %v8765 = vunpack.c.l.b16 %v8253
          %v8766 = vunpack.c.l.b16 %v8254
          %v8767 = vunpack.c.l.b16 %v8255
          %v8768 = vunpack.c.l.b16 %v8256
          %v8769 = vunpack.c.l.b16 %v8257
          %v8770 = vunpack.c.l.b16 %v8258
          %v8771 = vunpack.c.l.b16 %v8259
          %v8772 = vunpack.c.l.b16 %v8260
          %v8773 = vunpack.c.l.b16 %v8261
          %v8774 = vunpack.c.l.b16 %v8262
          %v8775 = vunpack.c.l.b16 %v8263
          %v8776 = vunpack.c.l.b16 %v8264
          %v8777 = vunpack.c.l.b16 %v8265
          %v8778 = vunpack.c.l.b16 %v8266
          %v8779 = vunpack.c.l.b16 %v8267
          %v8780 = vunpack.c.l.b16 %v8268
          %v8781 = vunpack.c.l.b16 %v8269
          %v8782 = vunpack.c.l.b16 %v8270
          %v8783 = vunpack.c.l.b16 %v8271
          %v8784 = vunpack.c.l.b16 %v8272
          %v8785 = vunpack.c.l.b16 %v8273
          %v8786 = vunpack.c.l.b16 %v8274
          %v8787 = vunpack.c.l.b16 %v8275
          %v8788 = vunpack.c.l.b16 %v8276
          %v8789 = vunpack.c.l.b16 %v8277
          %v8790 = vunpack.c.l.b16 %v8278
          %v8791 = vunpack.c.l.b16 %v8279
          %v8792 = vunpack.c.l.b16 %v8280
          %v8793 = vunpack.c.l.b16 %v8281
          %v8794 = vunpack.c.l.b16 %v8282
          %v8795 = vunpack.c.l.b16 %v8283
          %v8796 = vunpack.c.l.b16 %v8284
          %v8797 = vunpack.c.l.b16 %v8285
          %v8798 = vunpack.c.l.b16 %v8286
          %v8799 = vunpack.c.l.b16 %v8287
          %v8800 = vunpack.c.l.b16 %v8288
          %v8801 = vunpack.c.l.b16 %v8289
          %v8802 = vunpack.c.l.b16 %v8290
          %v8803 = vunpack.c.l.b16 %v8291
          %v8804 = vunpack.c.l.b16 %v8292
          %v8805 = vunpack.c.l.b16 %v8293
          %v8806 = vunpack.c.l.b16 %v8294
          %v8807 = vunpack.c.l.b16 %v8295
          %v8808 = vunpack.c.l.b16 %v8296
          %v8809 = vunpack.c.l.b16 %v8297
          %v8810 = vunpack.c.l.b16 %v8298
          %v8811 = vunpack.c.l.b16 %v8299
          %v8812 = vunpack.c.l.b16 %v8300
          %v8813 = vunpack.c.l.b16 %v8301
          %v8814 = vunpack.c.l.b16 %v8302
          %v8815 = vunpack.c.l.b16 %v8303
          %v8816 = vunpack.c.l.b16 %v8304
          %v8817 = vunpack.c.l.b16 %v8305
          %v8818 = vunpack.c.l.b16 %v8306
          %v8819 = vunpack.c.l.b16 %v8307
          %v8820 = vunpack.c.l.b16 %v8308
          %v8821 = vunpack.c.l.b16 %v8309
          %v8822 = vunpack.c.l.b16 %v8310
          %v8823 = vunpack.c.l.b16 %v8311
          %v8824 = vunpack.c.l.b16 %v8312
          %v8825 = vunpack.c.l.b16 %v8313
          %v8826 = vunpack.c.l.b16 %v8314
          %v8827 = vunpack.c.l.b16 %v8315
          %v8828 = vunpack.c.l.b16 %v8316
          %v8829 = vunpack.c.l.b16 %v8317
          %v8830 = vunpack.c.l.b16 %v8318
          %v8831 = vunpack.c.l.b16 %v8319
          %v8832 = vunpack.c.l.b16 %v8320
          %v8833 = vunpack.c.l.b16 %v8321
          %v8834 = vunpack.c.l.b16 %v8322
          %v8835 = vunpack.c.l.b16 %v8323
          %v8836 = vunpack.c.l.b16 %v8324
          %v8837 = vunpack.c.l.b16 %v8325
          %v8838 = vunpack.c.l.b16 %v8326
          %v8839 = vunpack.c.l.b16 %v8327
          %v8840 = vunpack.c.l.b16 %v8328
          %v8841 = vunpack.c.l.b16 %v8329
          %v8842 = vunpack.c.l.b16 %v8330
          %v8843 = vunpack.c.l.b16 %v8331
          %v8844 = vunpack.c.l.b16 %v8332
          %v8845 = vunpack.c.l.b16 %v8333
          %v8846 = vunpack.c.l.b16 %v8334
          %v8847 = vunpack.c.l.b16 %v8335
          %v8848 = vunpack.c.l.b16 %v8336
          %v8849 = vunpack.c.l.b16 %v8337
          %v8850 = vunpack.c.l.b16 %v8338
          %v8851 = vunpack.c.l.b16 %v8339
          %v8852 = vunpack.c.l.b16 %v8340
          %v8853 = vunpack.c.l.b16 %v8341
          %v8854 = vunpack.c.l.b16 %v8342
          %v8855 = vunpack.c.l.b16 %v8343
          %v8856 = vunpack.c.l.b16 %v8344
          %v8857 = vunpack.c.l.b16 %v8345
          %v8858 = vunpack.c.l.b16 %v8346
          %v8859 = vunpack.c.l.b16 %v8347
          %v8860 = vunpack.c.l.b16 %v8348
          %v8861 = vunpack.c.l.b16 %v8349
          %v8862 = vunpack.c.l.b16 %v8350
          %v8863 = vunpack.c.l.b16 %v8351
          %v8864 = vunpack.c.l.b16 %v8352
          %v8865 = vunpack.c.l.b16 %v8353
          %v8866 = vunpack.c.l.b16 %v8354
          %v8867 = vunpack.c.l.b16 %v8355
          %v8868 = vunpack.c.l.b16 %v8356
          %v8869 = vunpack.c.l.b16 %v8357
          %v8870 = vunpack.c.l.b16 %v8358
          %v8871 = vunpack.c.l.b16 %v8359
          %v8872 = vunpack.c.l.b16 %v8360
          %v8873 = vunpack.c.l.b16 %v8361
          %v8874 = vunpack.c.l.b16 %v8362
          %v8875 = vunpack.c.l.b16 %v8363
          %v8876 = vunpack.c.l.b16 %v8364
          %v8877 = vunpack.c.l.b16 %v8365
          %v8878 = vunpack.c.l.b16 %v8366
          %v8879 = vunpack.c.l.b16 %v8367
          %v8880 = vunpack.c.l.b16 %v8368
          %v8881 = vunpack.c.l.b16 %v8369
          %v8882 = vunpack.c.l.b16 %v8370
          %v8883 = vunpack.c.l.b16 %v8371
          %v8884 = vunpack.c.l.b16 %v8372
          %v8885 = vunpack.c.l.b16 %v8373
          %v8886 = vunpack.c.l.b16 %v8374
          %v8887 = vunpack.c.l.b16 %v8375
          %v8888 = vunpack.c.l.b16 %v8376
          %v8889 = vunpack.c.l.b16 %v8377
          %v8890 = vunpack.c.l.b16 %v8378
          %v8891 = vunpack.c.l.b16 %v8379
          %v8892 = vunpack.c.l.b16 %v8380
          %v8893 = vunpack.c.l.b16 %v8381
          %v8894 = vunpack.c.l.b16 %v8382
          %v8895 = vunpack.c.l.b16 %v8383
          %v8896 = vunpack.c.l.b16 %v8384
          %v8897 = vunpack.c.l.b16 %v8385
          %v8898 = vunpack.c.l.b16 %v8386
          %v8899 = vunpack.c.l.b16 %v8387
          %v8900 = vunpack.c.l.b16 %v8388
          %v8901 = vunpack.c.l.b16 %v8389
          %v8902 = vunpack.c.l.b16 %v8390
          %v8903 = vunpack.c.l.b16 %v8391
          %v8904 = vunpack.c.l.b16 %v8392
          %v8905 = vunpack.c.l.b16 %v8393
          %v8906 = vunpack.c.l.b16 %v8394
          %v8907 = vunpack.c.l.b16 %v8395
          %v8908 = vunpack.c.l.b16 %v8396
          %v8909 = vunpack.c.l.b16 %v8397
          %v8910 = vunpack.c.l.b16 %v8398
          %v8911 = vunpack.c.l.b16 %v8399
          %v8912 = vunpack.c.l.b16 %v8400
          %v8913 = vunpack.c.l.b16 %v8401
          %v8914 = vunpack.c.l.b16 %v8402
          %v8915 = vunpack.c.l.b16 %v8403
          %v8916 = vunpack.c.l.b16 %v8404
          %v8917 = vunpack.c.l.b16 %v8405
          %v8918 = vunpack.c.l.b16 %v8406
          %v8919 = vunpack.c.l.b16 %v8407
          %v8920 = vunpack.c.l.b16 %v8408
          %v8921 = vunpack.c.l.b16 %v8409
          %v8922 = vunpack.c.l.b16 %v8410
          %v8923 = vunpack.c.l.b16 %v8411
          %v8924 = vunpack.c.l.b16 %v8412
          %v8925 = vunpack.c.l.b16 %v8413
          %v8926 = vunpack.c.l.b16 %v8414
          %v8927 = vunpack.c.l.b16 %v8415
          %v8928 = vunpack.c.l.b16 %v8416
          %v8929 = vunpack.c.l.b16 %v8417
          %v8930 = vunpack.c.l.b16 %v8418
          %v8931 = vunpack.c.l.b16 %v8419
          %v8932 = vunpack.c.l.b16 %v8420
          %v8933 = vunpack.c.l.b16 %v8421
          %v8934 = vunpack.c.l.b16 %v8422
          %v8935 = vunpack.c.l.b16 %v8423
          %v8936 = vunpack.c.l.b16 %v8424
          %v8937 = vunpack.c.l.b16 %v8425
          %v8938 = vunpack.c.l.b16 %v8426
          %v8939 = vunpack.c.l.b16 %v8427
          %v8940 = vunpack.c.l.b16 %v8428
          %v8941 = vunpack.c.l.b16 %v8429
          %v8942 = vunpack.c.l.b16 %v8430
          %v8943 = vunpack.c.l.b16 %v8431
          %v8944 = vunpack.c.l.b16 %v8432
          %v8945 = vunpack.c.l.b16 %v8433
          %v8946 = vunpack.c.l.b16 %v8434
          %v8947 = vunpack.c.l.b16 %v8435
          %v8948 = vunpack.c.l.b16 %v8436
          %v8949 = vunpack.c.l.b16 %v8437
          %v8950 = vunpack.c.l.b16 %v8438
          %v8951 = vunpack.c.l.b16 %v8439
          %v8952 = vunpack.c.l.b16 %v8440
          %v8953 = vunpack.c.l.b16 %v8441
          %v8954 = vunpack.c.l.b16 %v8442
          %v8955 = vunpack.c.l.b16 %v8443
          %v8956 = vunpack.c.l.b16 %v8444
          %v8957 = vunpack.c.l.b16 %v8445
          %v8958 = vunpack.c.l.b16 %v8446
          %v8959 = vunpack.c.l.b16 %v8447
          %v8960 = vunpack.c.l.b16 %v8448
          %v8961 = vunpack.c.l.b16 %v8449
          %v8962 = vunpack.c.l.b16 %v8450
          %v8963 = vunpack.c.l.b16 %v8451
          %v8964 = vunpack.c.l.b16 %v8452
          %v8965 = vunpack.c.l.b16 %v8453
          %v8966 = vunpack.c.l.b16 %v8454
          %v8967 = vunpack.c.l.b16 %v8455
          %v8968 = vunpack.c.l.b16 %v8456
          %v8969 = vunpack.c.l.b16 %v8457
          %v8970 = vunpack.c.l.b16 %v8458
          %v8971 = vunpack.c.l.b16 %v8459
          %v8972 = vunpack.c.l.b16 %v8460
          %v8973 = vunpack.c.l.b16 %v8461
          %v8974 = vunpack.c.l.b16 %v8462
          %v8975 = vunpack.c.l.b16 %v8463
          %v8976 = vunpack.c.l.b16 %v8464
          %v8977 = vunpack.c.l.b16 %v8465
          %v8978 = vunpack.c.l.b16 %v8466
          %v8979 = vunpack.c.l.b16 %v8467
          %v8980 = vunpack.c.l.b16 %v8468
          %v8981 = vpack.c.b16 %v8726, %v8725
          %v8982 = vpack.c.b16 %v8728, %v8727
          %v8983 = vpack.c.b16 %v8730, %v8729
          %v8984 = vpack.c.b16 %v8732, %v8731
          %v8985 = vpack.c.b16 %v8734, %v8733
          %v8986 = vpack.c.b16 %v8736, %v8735
          %v8987 = vpack.c.b16 %v8738, %v8737
          %v8988 = vpack.c.b16 %v8740, %v8739
          %v8989 = vpack.c.b16 %v8742, %v8741
          %v8990 = vpack.c.b16 %v8744, %v8743
          %v8991 = vpack.c.b16 %v8746, %v8745
          %v8992 = vpack.c.b16 %v8748, %v8747
          %v8993 = vpack.c.b16 %v8750, %v8749
          %v8994 = vpack.c.b16 %v8752, %v8751
          %v8995 = vpack.c.b16 %v8754, %v8753
          %v8996 = vpack.c.b16 %v8756, %v8755
          %v8997 = vpack.c.b16 %v8758, %v8757
          %v8998 = vpack.c.b16 %v8760, %v8759
          %v8999 = vpack.c.b16 %v8762, %v8761
          %v9000 = vpack.c.b16 %v8764, %v8763
          %v9001 = vpack.c.b16 %v8766, %v8765
          %v9002 = vpack.c.b16 %v8768, %v8767
          %v9003 = vpack.c.b16 %v8770, %v8769
          %v9004 = vpack.c.b16 %v8772, %v8771
          %v9005 = vpack.c.b16 %v8774, %v8773
          %v9006 = vpack.c.b16 %v8776, %v8775
          %v9007 = vpack.c.b16 %v8778, %v8777
          %v9008 = vpack.c.b16 %v8780, %v8779
          %v9009 = vpack.c.b16 %v8782, %v8781
          %v9010 = vpack.c.b16 %v8784, %v8783
          %v9011 = vpack.c.b16 %v8786, %v8785
          %v9012 = vpack.c.b16 %v8788, %v8787
          %v9013 = vpack.c.b16 %v8790, %v8789
          %v9014 = vpack.c.b16 %v8792, %v8791
          %v9015 = vpack.c.b16 %v8794, %v8793
          %v9016 = vpack.c.b16 %v8796, %v8795
          %v9017 = vpack.c.b16 %v8798, %v8797
          %v9018 = vpack.c.b16 %v8800, %v8799
          %v9019 = vpack.c.b16 %v8802, %v8801
          %v9020 = vpack.c.b16 %v8804, %v8803
          %v9021 = vpack.c.b16 %v8806, %v8805
          %v9022 = vpack.c.b16 %v8808, %v8807
          %v9023 = vpack.c.b16 %v8810, %v8809
          %v9024 = vpack.c.b16 %v8812, %v8811
          %v9025 = vpack.c.b16 %v8814, %v8813
          %v9026 = vpack.c.b16 %v8816, %v8815
          %v9027 = vpack.c.b16 %v8818, %v8817
          %v9028 = vpack.c.b16 %v8820, %v8819
          %v9029 = vpack.c.b16 %v8822, %v8821
          %v9030 = vpack.c.b16 %v8824, %v8823
          %v9031 = vpack.c.b16 %v8826, %v8825
          %v9032 = vpack.c.b16 %v8828, %v8827
          %v9033 = vpack.c.b16 %v8830, %v8829
          %v9034 = vpack.c.b16 %v8832, %v8831
          %v9035 = vpack.c.b16 %v8834, %v8833
          %v9036 = vpack.c.b16 %v8836, %v8835
          %v9037 = vpack.c.b16 %v8838, %v8837
          %v9038 = vpack.c.b16 %v8840, %v8839
          %v9039 = vpack.c.b16 %v8842, %v8841
          %v9040 = vpack.c.b16 %v8844, %v8843
          %v9041 = vpack.c.b16 %v8846, %v8845
          %v9042 = vpack.c.b16 %v8848, %v8847
          %v9043 = vpack.c.b16 %v8850, %v8849
          %v9044 = vpack.c.b16 %v8852, %v8851
          %v9045 = vpack.c.b16 %v8854, %v8853
          %v9046 = vpack.c.b16 %v8856, %v8855
          %v9047 = vpack.c.b16 %v8858, %v8857
          %v9048 = vpack.c.b16 %v8860, %v8859
          %v9049 = vpack.c.b16 %v8862, %v8861
          %v9050 = vpack.c.b16 %v8864, %v8863
          %v9051 = vpack.c.b16 %v8866, %v8865
          %v9052 = vpack.c.b16 %v8868, %v8867
          %v9053 = vpack.c.b16 %v8870, %v8869
          %v9054 = vpack.c.b16 %v8872, %v8871
          %v9055 = vpack.c.b16 %v8874, %v8873
          %v9056 = vpack.c.b16 %v8876, %v8875
          %v9057 = vpack.c.b16 %v8878, %v8877
          %v9058 = vpack.c.b16 %v8880, %v8879
          %v9059 = vpack.c.b16 %v8882, %v8881
          %v9060 = vpack.c.b16 %v8884, %v8883
          %v9061 = vpack.c.b16 %v8886, %v8885
          %v9062 = vpack.c.b16 %v8888, %v8887
          %v9063 = vpack.c.b16 %v8890, %v8889
          %v9064 = vpack.c.b16 %v8892, %v8891
          %v9065 = vpack.c.b16 %v8894, %v8893
          %v9066 = vpack.c.b16 %v8896, %v8895
          %v9067 = vpack.c.b16 %v8898, %v8897
          %v9068 = vpack.c.b16 %v8900, %v8899
          %v9069 = vpack.c.b16 %v8902, %v8901
          %v9070 = vpack.c.b16 %v8904, %v8903
          %v9071 = vpack.c.b16 %v8906, %v8905
          %v9072 = vpack.c.b16 %v8908, %v8907
          %v9073 = vpack.c.b16 %v8910, %v8909
          %v9074 = vpack.c.b16 %v8912, %v8911
          %v9075 = vpack.c.b16 %v8914, %v8913
          %v9076 = vpack.c.b16 %v8916, %v8915
          %v9077 = vpack.c.b16 %v8918, %v8917
          %v9078 = vpack.c.b16 %v8920, %v8919
          %v9079 = vpack.c.b16 %v8922, %v8921
          %v9080 = vpack.c.b16 %v8924, %v8923
          %v9081 = vpack.c.b16 %v8926, %v8925
          %v9082 = vpack.c.b16 %v8928, %v8927
          %v9083 = vpack.c.b16 %v8930, %v8929
          %v9084 = vpack.c.b16 %v8932, %v8931
          %v9085 = vpack.c.b16 %v8934, %v8933
          %v9086 = vpack.c.b16 %v8936, %v8935
          %v9087 = vpack.c.b16 %v8938, %v8937
          %v9088 = vpack.c.b16 %v8940, %v8939
          %v9089 = vpack.c.b16 %v8942, %v8941
          %v9090 = vpack.c.b16 %v8944, %v8943
          %v9091 = vpack.c.b16 %v8946, %v8945
          %v9092 = vpack.c.b16 %v8948, %v8947
          %v9093 = vpack.c.b16 %v8950, %v8949
          %v9094 = vpack.c.b16 %v8952, %v8951
          %v9095 = vpack.c.b16 %v8954, %v8953
          %v9096 = vpack.c.b16 %v8956, %v8955
          %v9097 = vpack.c.b16 %v8958, %v8957
          %v9098 = vpack.c.b16 %v8960, %v8959
          %v9099 = vpack.c.b16 %v8962, %v8961
          %v9100 = vpack.c.b16 %v8964, %v8963
          %v9101 = vpack.c.b16 %v8966, %v8965
          %v9102 = vpack.c.b16 %v8968, %v8967
          %v9103 = vpack.c.b16 %v8970, %v8969
          %v9104 = vpack.c.b16 %v8972, %v8971
          %v9105 = vpack.c.b16 %v8974, %v8973
          %v9106 = vpack.c.b16 %v8976, %v8975
          %v9107 = vpack.c.b16 %v8978, %v8977
          %v9108 = vpack.c.b16 %v8980, %v8979
          %9237 = vmatprep.subr.bf16.mxu0 0
          %9238 = vmatpush1.bf16.msra.mxu0 %v8988
          %9239 = vmatprep.subr.bf16.mxu0 0
          %9240 = vmatpush1.bf16.msra.mxu0 %v8987
          %9241 = vmatprep.subr.bf16.mxu0 0
          %9242 = vmatpush1.bf16.msra.mxu0 %v8986
          %9243 = vmatprep.subr.bf16.mxu0 0
          %9244 = vmatpush1.bf16.msra.mxu0 %v8985
          %9245 = vmatprep.subr.bf16.mxu0 0
          %9246 = vmatpush1.bf16.msra.mxu0 %v8984
          %9247 = vmatprep.subr.bf16.mxu0 0
          %9248 = vmatpush1.bf16.msra.mxu0 %v8983
          %9249 = vmatprep.subr.bf16.mxu0 0
          %9250 = vmatpush1.bf16.msra.mxu0 %v8982
          %9251 = vmatprep.subr.bf16.mxu0 0
          %9252 = vmatpush1.bf16.msra.mxu0 %v8981
          %9253 = vmatprep.subr.bf16.mxu0 0
          %9254 = vmatpush2.bf16.msra.mxu0 %v8996
          %9255 = vmatprep.subr.bf16.mxu0 0
          %9256 = vmatpush2.bf16.msra.mxu0 %v8995
          %9257 = vmatprep.subr.bf16.mxu0 0
          %9258 = vmatpush2.bf16.msra.mxu0 %v8994
          %9259 = vmatprep.subr.bf16.mxu0 0
          %9260 = vmatpush2.bf16.msra.mxu0 %v8993
          %9261 = vmatprep.subr.bf16.mxu0 0
          %9262 = vmatpush2.bf16.msra.mxu0 %v8992
          %9263 = vmatprep.subr.bf16.mxu0 0
          %9264 = vmatpush2.bf16.msra.mxu0 %v8991
          %9265 = vmatprep.subr.bf16.mxu0 0
          %9266 = vmatpush2.bf16.msra.mxu0 %v8990
          %9267 = vmatprep.subr.bf16.mxu0 0
          %9268 = vmatpush2.bf16.msra.mxu0 %v8989
          %9269 = vmatprep.mubr.bf16.mxu0 %v8198
          %9270 = vmatmul.mubr.bf16.gmra.mxu0 %v8197
          %v9271 = vpop.f32.mrf.mxu0
          %v9272 = vadd.f32 0.0, %v9271
          %v9273 = vpop.f32.mrf.mxu0
          %v9274 = vpop.f32.mrf.mxu0
          %v9275 = vpop.f32.mrf.mxu0
          %9276 = vdwg.mxu0
          %9277 = vmatprep.subr.bf16.mxu0 0
          %9278 = vmatpush1.bf16.msra.mxu0 %v9004
          %9279 = vmatprep.subr.bf16.mxu0 0
          %9280 = vmatpush1.bf16.msra.mxu0 %v9003
          %9281 = vmatprep.subr.bf16.mxu0 0
          %9282 = vmatpush1.bf16.msra.mxu0 %v9002
          %9283 = vmatprep.subr.bf16.mxu0 0
          %9284 = vmatpush1.bf16.msra.mxu0 %v9001
          %9285 = vmatprep.subr.bf16.mxu0 0
          %9286 = vmatpush1.bf16.msra.mxu0 %v9000
          %9287 = vmatprep.subr.bf16.mxu0 0
          %9288 = vmatpush1.bf16.msra.mxu0 %v8999
          %9289 = vmatprep.subr.bf16.mxu0 0
          %9290 = vmatpush1.bf16.msra.mxu0 %v8998
          %9291 = vmatprep.subr.bf16.mxu0 0
          %9292 = vmatpush1.bf16.msra.mxu0 %v8997
          %9293 = vmatprep.subr.bf16.mxu0 0
          %9294 = vmatpush2.bf16.msra.mxu0 %v9012
          %9295 = vmatprep.subr.bf16.mxu0 0
          %9296 = vmatpush2.bf16.msra.mxu0 %v9011
          %9297 = vmatprep.subr.bf16.mxu0 0
          %9298 = vmatpush2.bf16.msra.mxu0 %v9010
          %9299 = vmatprep.subr.bf16.mxu0 0
          %9300 = vmatpush2.bf16.msra.mxu0 %v9009
          %9301 = vmatprep.subr.bf16.mxu0 0
          %9302 = vmatpush2.bf16.msra.mxu0 %v9008
          %9303 = vmatprep.subr.bf16.mxu0 0
          %9304 = vmatpush2.bf16.msra.mxu0 %v9007
          %9305 = vmatprep.subr.bf16.mxu0 0
          %9306 = vmatpush2.bf16.msra.mxu0 %v9006
          %9307 = vmatprep.subr.bf16.mxu0 0
          %9308 = vmatpush2.bf16.msra.mxu0 %v9005
          %9309 = vmatprep.mubr.bf16.mxu0 %v8200
          %9310 = vmatmul.mubr.bf16.gmra.mxu0 %v8199
          %v9311 = vpop.f32.mrf.mxu0
          %v9312 = vadd.f32 %v9272, %v9311
          %v9313 = vpop.f32.mrf.mxu0
          %v9314 = vpop.f32.mrf.mxu0
          %v9315 = vpop.f32.mrf.mxu0
          %9316 = vdwg.mxu0
          %9317 = vmatprep.subr.bf16.mxu0 0
          %9318 = vmatpush1.bf16.msra.mxu0 %v9020
          %9319 = vmatprep.subr.bf16.mxu0 0
          %9320 = vmatpush1.bf16.msra.mxu0 %v9019
          %9321 = vmatprep.subr.bf16.mxu0 0
          %9322 = vmatpush1.bf16.msra.mxu0 %v9018
          %9323 = vmatprep.subr.bf16.mxu0 0
          %9324 = vmatpush1.bf16.msra.mxu0 %v9017
          %9325 = vmatprep.subr.bf16.mxu0 0
          %9326 = vmatpush1.bf16.msra.mxu0 %v9016
          %9327 = vmatprep.subr.bf16.mxu0 0
          %9328 = vmatpush1.bf16.msra.mxu0 %v9015
          %9329 = vmatprep.subr.bf16.mxu0 0
          %9330 = vmatpush1.bf16.msra.mxu0 %v9014
          %9331 = vmatprep.subr.bf16.mxu0 0
          %9332 = vmatpush1.bf16.msra.mxu0 %v9013
          %9333 = vmatprep.subr.bf16.mxu0 0
          %9334 = vmatpush2.bf16.msra.mxu0 %v9028
          %9335 = vmatprep.subr.bf16.mxu0 0
          %9336 = vmatpush2.bf16.msra.mxu0 %v9027
          %9337 = vmatprep.subr.bf16.mxu0 0
          %9338 = vmatpush2.bf16.msra.mxu0 %v9026
          %9339 = vmatprep.subr.bf16.mxu0 0
          %9340 = vmatpush2.bf16.msra.mxu0 %v9025
          %9341 = vmatprep.subr.bf16.mxu0 0
          %9342 = vmatpush2.bf16.msra.mxu0 %v9024
          %9343 = vmatprep.subr.bf16.mxu0 0
          %9344 = vmatpush2.bf16.msra.mxu0 %v9023
          %9345 = vmatprep.subr.bf16.mxu0 0
          %9346 = vmatpush2.bf16.msra.mxu0 %v9022
          %9347 = vmatprep.subr.bf16.mxu0 0
          %9348 = vmatpush2.bf16.msra.mxu0 %v9021
          %9349 = vmatprep.mubr.bf16.mxu0 %v8202
          %9350 = vmatmul.mubr.bf16.gmra.mxu0 %v8201
          %v9351 = vpop.f32.mrf.mxu0
          %v9352 = vadd.f32 %v9312, %v9351
          %v9353 = vpop.f32.mrf.mxu0
          %v9354 = vpop.f32.mrf.mxu0
          %v9355 = vpop.f32.mrf.mxu0
          %9356 = vdwg.mxu0
          %9357 = vmatprep.subr.bf16.mxu0 0
          %9358 = vmatpush1.bf16.msra.mxu0 %v9036
          %9359 = vmatprep.subr.bf16.mxu0 0
          %9360 = vmatpush1.bf16.msra.mxu0 %v9035
          %9361 = vmatprep.subr.bf16.mxu0 0
          %9362 = vmatpush1.bf16.msra.mxu0 %v9034
          %9363 = vmatprep.subr.bf16.mxu0 0
          %9364 = vmatpush1.bf16.msra.mxu0 %v9033
          %9365 = vmatprep.subr.bf16.mxu0 0
          %9366 = vmatpush1.bf16.msra.mxu0 %v9032
          %9367 = vmatprep.subr.bf16.mxu0 0
          %9368 = vmatpush1.bf16.msra.mxu0 %v9031
          %9369 = vmatprep.subr.bf16.mxu0 0
          %9370 = vmatpush1.bf16.msra.mxu0 %v9030
          %9371 = vmatprep.subr.bf16.mxu0 0
          %9372 = vmatpush1.bf16.msra.mxu0 %v9029
          %9373 = vmatprep.subr.bf16.mxu0 0
          %9374 = vmatpush2.bf16.msra.mxu0 %v9044
          %9375 = vmatprep.subr.bf16.mxu0 0
          %9376 = vmatpush2.bf16.msra.mxu0 %v9043
          %9377 = vmatprep.subr.bf16.mxu0 0
          %9378 = vmatpush2.bf16.msra.mxu0 %v9042
          %9379 = vmatprep.subr.bf16.mxu0 0
          %9380 = vmatpush2.bf16.msra.mxu0 %v9041
          %9381 = vmatprep.subr.bf16.mxu0 0
          %9382 = vmatpush2.bf16.msra.mxu0 %v9040
          %9383 = vmatprep.subr.bf16.mxu0 0
          %9384 = vmatpush2.bf16.msra.mxu0 %v9039
          %9385 = vmatprep.subr.bf16.mxu0 0
          %9386 = vmatpush2.bf16.msra.mxu0 %v9038
          %9387 = vmatprep.subr.bf16.mxu0 0
          %9388 = vmatpush2.bf16.msra.mxu0 %v9037
          %9389 = vmatprep.mubr.bf16.mxu0 %v8204
          %9390 = vmatmul.mubr.bf16.gmra.mxu0 %v8203
          %v9391 = vpop.f32.mrf.mxu0
          %v9392 = vadd.f32 %v9352, %v9391
          %v9393 = vpop.f32.mrf.mxu0
          %v9394 = vpop.f32.mrf.mxu0
          %v9395 = vpop.f32.mrf.mxu0
          %9396 = vdwg.mxu0
          %9397 = vmatprep.subr.bf16.mxu0 0
          %9398 = vmatpush1.bf16.msra.mxu0 %v9052
          %9399 = vmatprep.subr.bf16.mxu0 0
          %9400 = vmatpush1.bf16.msra.mxu0 %v9051
          %9401 = vmatprep.subr.bf16.mxu0 0
          %9402 = vmatpush1.bf16.msra.mxu0 %v9050
          %9403 = vmatprep.subr.bf16.mxu0 0
          %9404 = vmatpush1.bf16.msra.mxu0 %v9049
          %9405 = vmatprep.subr.bf16.mxu0 0
          %9406 = vmatpush1.bf16.msra.mxu0 %v9048
          %9407 = vmatprep.subr.bf16.mxu0 0
          %9408 = vmatpush1.bf16.msra.mxu0 %v9047
          %9409 = vmatprep.subr.bf16.mxu0 0
          %9410 = vmatpush1.bf16.msra.mxu0 %v9046
          %9411 = vmatprep.subr.bf16.mxu0 0
          %9412 = vmatpush1.bf16.msra.mxu0 %v9045
          %9413 = vmatprep.subr.bf16.mxu0 0
          %9414 = vmatpush2.bf16.msra.mxu0 %v9060
          %9415 = vmatprep.subr.bf16.mxu0 0
          %9416 = vmatpush2.bf16.msra.mxu0 %v9059
          %9417 = vmatprep.subr.bf16.mxu0 0
          %9418 = vmatpush2.bf16.msra.mxu0 %v9058
          %9419 = vmatprep.subr.bf16.mxu0 0
          %9420 = vmatpush2.bf16.msra.mxu0 %v9057
          %9421 = vmatprep.subr.bf16.mxu0 0
          %9422 = vmatpush2.bf16.msra.mxu0 %v9056
          %9423 = vmatprep.subr.bf16.mxu0 0
          %9424 = vmatpush2.bf16.msra.mxu0 %v9055
          %9425 = vmatprep.subr.bf16.mxu0 0
          %9426 = vmatpush2.bf16.msra.mxu0 %v9054
          %9427 = vmatprep.subr.bf16.mxu0 0
          %9428 = vmatpush2.bf16.msra.mxu0 %v9053
          %9429 = vmatprep.mubr.bf16.mxu0 %v8206
          %9430 = vmatmul.mubr.bf16.gmra.mxu0 %v8205
          %v9431 = vpop.f32.mrf.mxu0
          %v9432 = vadd.f32 %v9392, %v9431
          %v9433 = vpop.f32.mrf.mxu0
          %v9434 = vpop.f32.mrf.mxu0
          %v9435 = vpop.f32.mrf.mxu0
          %9436 = vdwg.mxu0
          %9437 = vmatprep.subr.bf16.mxu0 0
          %9438 = vmatpush1.bf16.msra.mxu0 %v9068
          %9439 = vmatprep.subr.bf16.mxu0 0
          %9440 = vmatpush1.bf16.msra.mxu0 %v9067
          %9441 = vmatprep.subr.bf16.mxu0 0
          %9442 = vmatpush1.bf16.msra.mxu0 %v9066
          %9443 = vmatprep.subr.bf16.mxu0 0
          %9444 = vmatpush1.bf16.msra.mxu0 %v9065
          %9445 = vmatprep.subr.bf16.mxu0 0
          %9446 = vmatpush1.bf16.msra.mxu0 %v9064
          %9447 = vmatprep.subr.bf16.mxu0 0
          %9448 = vmatpush1.bf16.msra.mxu0 %v9063
          %9449 = vmatprep.subr.bf16.mxu0 0
          %9450 = vmatpush1.bf16.msra.mxu0 %v9062
          %9451 = vmatprep.subr.bf16.mxu0 0
          %9452 = vmatpush1.bf16.msra.mxu0 %v9061
          %9453 = vmatprep.subr.bf16.mxu0 0
          %9454 = vmatpush2.bf16.msra.mxu0 %v9076
          %9455 = vmatprep.subr.bf16.mxu0 0
          %9456 = vmatpush2.bf16.msra.mxu0 %v9075
          %9457 = vmatprep.subr.bf16.mxu0 0
          %9458 = vmatpush2.bf16.msra.mxu0 %v9074
          %9459 = vmatprep.subr.bf16.mxu0 0
          %9460 = vmatpush2.bf16.msra.mxu0 %v9073
          %9461 = vmatprep.subr.bf16.mxu0 0
          %9462 = vmatpush2.bf16.msra.mxu0 %v9072
          %9463 = vmatprep.subr.bf16.mxu0 0
          %9464 = vmatpush2.bf16.msra.mxu0 %v9071
          %9465 = vmatprep.subr.bf16.mxu0 0
          %9466 = vmatpush2.bf16.msra.mxu0 %v9070
          %9467 = vmatprep.subr.bf16.mxu0 0
          %9468 = vmatpush2.bf16.msra.mxu0 %v9069
          %9469 = vmatprep.mubr.bf16.mxu0 %v8208
          %9470 = vmatmul.mubr.bf16.gmra.mxu0 %v8207
          %v9471 = vpop.f32.mrf.mxu0
          %v9472 = vadd.f32 %v9432, %v9471
          %v9473 = vpop.f32.mrf.mxu0
          %v9474 = vpop.f32.mrf.mxu0
          %v9475 = vpop.f32.mrf.mxu0
          %9476 = vdwg.mxu0
          %9477 = vmatprep.subr.bf16.mxu0 0
          %9478 = vmatpush1.bf16.msra.mxu0 %v9084
          %9479 = vmatprep.subr.bf16.mxu0 0
          %9480 = vmatpush1.bf16.msra.mxu0 %v9083
          %9481 = vmatprep.subr.bf16.mxu0 0
          %9482 = vmatpush1.bf16.msra.mxu0 %v9082
          %9483 = vmatprep.subr.bf16.mxu0 0
          %9484 = vmatpush1.bf16.msra.mxu0 %v9081
          %9485 = vmatprep.subr.bf16.mxu0 0
          %9486 = vmatpush1.bf16.msra.mxu0 %v9080
          %9487 = vmatprep.subr.bf16.mxu0 0
          %9488 = vmatpush1.bf16.msra.mxu0 %v9079
          %9489 = vmatprep.subr.bf16.mxu0 0
          %9490 = vmatpush1.bf16.msra.mxu0 %v9078
          %9491 = vmatprep.subr.bf16.mxu0 0
          %9492 = vmatpush1.bf16.msra.mxu0 %v9077
          %9493 = vmatprep.subr.bf16.mxu0 0
          %9494 = vmatpush2.bf16.msra.mxu0 %v9092
          %9495 = vmatprep.subr.bf16.mxu0 0
          %9496 = vmatpush2.bf16.msra.mxu0 %v9091
          %9497 = vmatprep.subr.bf16.mxu0 0
          %9498 = vmatpush2.bf16.msra.mxu0 %v9090
          %9499 = vmatprep.subr.bf16.mxu0 0
          %9500 = vmatpush2.bf16.msra.mxu0 %v9089
          %9501 = vmatprep.subr.bf16.mxu0 0
          %9502 = vmatpush2.bf16.msra.mxu0 %v9088
          %9503 = vmatprep.subr.bf16.mxu0 0
          %9504 = vmatpush2.bf16.msra.mxu0 %v9087
          %9505 = vmatprep.subr.bf16.mxu0 0
          %9506 = vmatpush2.bf16.msra.mxu0 %v9086
          %9507 = vmatprep.subr.bf16.mxu0 0
          %9508 = vmatpush2.bf16.msra.mxu0 %v9085
          %9509 = vmatprep.mubr.bf16.mxu0 %v8210
          %9510 = vmatmul.mubr.bf16.gmra.mxu0 %v8209
          %v9511 = vpop.f32.mrf.mxu0
          %v9512 = vadd.f32 %v9472, %v9511
          %v9513 = vpop.f32.mrf.mxu0
          %v9514 = vpop.f32.mrf.mxu0
          %v9515 = vpop.f32.mrf.mxu0
          %9516 = vdwg.mxu0
          %9517 = vmatprep.subr.bf16.mxu0 0
          %9518 = vmatpush1.bf16.msra.mxu0 %v9100
          %9519 = vmatprep.subr.bf16.mxu0 0
          %9520 = vmatpush1.bf16.msra.mxu0 %v9099
          %9521 = vmatprep.subr.bf16.mxu0 0
          %9522 = vmatpush1.bf16.msra.mxu0 %v9098
          %9523 = vmatprep.subr.bf16.mxu0 0
          %9524 = vmatpush1.bf16.msra.mxu0 %v9097
          %9525 = vmatprep.subr.bf16.mxu0 0
          %9526 = vmatpush1.bf16.msra.mxu0 %v9096
          %9527 = vmatprep.subr.bf16.mxu0 0
          %9528 = vmatpush1.bf16.msra.mxu0 %v9095
          %9529 = vmatprep.subr.bf16.mxu0 0
          %9530 = vmatpush1.bf16.msra.mxu0 %v9094
          %9531 = vmatprep.subr.bf16.mxu0 0
          %9532 = vmatpush1.bf16.msra.mxu0 %v9093
          %9533 = vmatprep.subr.bf16.mxu0 0
          %9534 = vmatpush2.bf16.msra.mxu0 %v9108
          %9535 = vmatprep.subr.bf16.mxu0 0
          %9536 = vmatpush2.bf16.msra.mxu0 %v9107
          %9537 = vmatprep.subr.bf16.mxu0 0
          %9538 = vmatpush2.bf16.msra.mxu0 %v9106
          %9539 = vmatprep.subr.bf16.mxu0 0
          %9540 = vmatpush2.bf16.msra.mxu0 %v9105
          %9541 = vmatprep.subr.bf16.mxu0 0
          %9542 = vmatpush2.bf16.msra.mxu0 %v9104
          %9543 = vmatprep.subr.bf16.mxu0 0
          %9544 = vmatpush2.bf16.msra.mxu0 %v9103
          %9545 = vmatprep.subr.bf16.mxu0 0
          %9546 = vmatpush2.bf16.msra.mxu0 %v9102
          %9547 = vmatprep.subr.bf16.mxu0 0
          %9548 = vmatpush2.bf16.msra.mxu0 %v9101
          %9549 = vmatprep.mubr.bf16.mxu0 %v8212
          %9550 = vmatmul.mubr.bf16.gmra.mxu0 %v8211
          %v9551 = vpop.f32.mrf.mxu0
          %v9552 = vadd.f32 %v9512, %v9551
          %v9553 = vpop.f32.mrf.mxu0
          %v9554 = vpop.f32.mrf.mxu0
          %v9555 = vpop.f32.mrf.mxu0
          %9556 = vdwg.mxu0
          %9557 = vst [vmem:[%s320] sm:$0x3] %v9552
        $region60: #{tpu_custom_call.1} parent=35 // pred_fallthru
          _
        %s9558 = sand.u32 %s146, 1
        %s9559 = scalar_lea.sflag [#allocation5], %s9558
        %s9560 = sand.u32 %s146, 1
        %s9561 = smul.addr %s9560, 2
        %s9562 = scalar_lea.vmem [#allocation11], %s9561
        // Predicated region
        $region61: #{tpu_custom_call.1} parent=35 // pred_check
          %p9563 = pneg %p156
        $region62: #{tpu_custom_call.1} parent=35 // pred_check_branch
          %9565 = sbr.rel (%p9563) target = $region64
        $region63: #{tpu_custom_call.1} parent=35 // pred_region
          %s9567 = ssub.s32 32, 32
          %9568 = vsyncadd %s9559, %s9567
          %s9569 = smul.addr %s29, 32
          %s9570 = scalar_lea.hbm %s4, %s9569
          %s9572 = sshll.u32 %s9562, 4
          %s9573 = int_to_ptr.vmem [resolvable:$true] %s9572
          %9575 = dma.vmem_to_hbm [thread:$0]  %s9573, 32, %s9570, %s9559
        $region64: #{tpu_custom_call.1} parent=35 // pred_fallthru
          _
      $region36: #{tpu_custom_call.1} parent=5 // pred_fallthru
        _
      %p9576 = scmp.le.s32.totalorder 2, %s20
      // Predicated region
      $region65: #{tpu_custom_call.1} parent=5 // pred_check
        %p9577 = pneg %p9576
      $region66: #{tpu_custom_call.1} parent=5 // pred_check_branch
        %9579 = sbr.rel (%p9577) target = $region68
      $region67: #{tpu_custom_call.1} parent=5 // pred_region
        %s9580 = ssub.s32 %s20, 2
        // Predicated region
        $region69: #{tpu_custom_call.1} parent=67 // pred_check
          %p9581 = pneg %p162
        $region70: #{tpu_custom_call.1} parent=67 // pred_check_branch
          %9583 = sbr.rel (%p9581) target = $region72
        $region71: #{tpu_custom_call.1} parent=67 // pred_region
          %s9584 = sand.u32 %s147, 1
          %s9585 = scalar_lea.sflag [#allocation5], %s9584
          %s9586 = sand.u32 %s147, 1
          %s9587 = smul.addr %s9586, 2
          %s9588 = scalar_lea.vmem [#allocation11], %s9587
          %9589 = dma.done %s9585, 32
        $region72: #{tpu_custom_call.1} parent=67 // pred_fallthru
          _
      $region68: #{tpu_custom_call.1} parent=5 // pred_fallthru
        _
    $region6: #{tpu_custom_call.1} parent=1 // loop_footer
      %s24 = sadd.s32 1, %s20
    $region7: #{tpu_custom_call.1} parent=1 // loop_footer_branch
      %19 = sbr.rel target = $region3
    $region8: #{tpu_custom_call.1} parent=1 // loop_exit
      _
    %9590 = vsyncpa [#allocation4], 1
    %s9591 = scalar_lea.sflag [#allocation4], 1
    %9592 = vsyncpa %s9591, 1
    %9593 = vsyncpa [#allocation7], 1
    %s9594 = scalar_lea.sflag [#allocation7], 1
    %9595 = vsyncpa %s9594, 1
    %9596 = vsyncpa [#allocation10], 1
    %s9597 = scalar_lea.sflag [#allocation10], 1
    %9598 = vsyncpa %s9597, 1
    %9599 = vsyncpa [#allocation5], 1
    %s9600 = scalar_lea.sflag [#allocation5], 1
    %9601 = vsyncpa %s9600, 1

</llo_original>
